<compile_context>
chip_gen: v6e
topology: v6e:2x2x1
jax: 0.10.0
libtpu: 0.0.40
codegen_flags: <defaults>
</compile_context>

<pallas_src>
import functools
import math

import jax
import jax.numpy as jnp
from jax.experimental import pallas as pl
from jax.experimental.pallas import tpu as pltpu

LANE = 128


def _rup(x, m=LANE):
    return ((x + m - 1) // m) * m


# ------------------------------ stem kernel --------------------------------

def _stem_kernel(a_ref, w_ref, s_ref, t_ref, o_ref):
    y = jnp.dot(a_ref[...].astype(jnp.bfloat16), w_ref[...],
                preferred_element_type=jnp.float32)
    o_ref[...] = jnp.maximum(y * s_ref[...] + t_ref[...], 0.0)


def stem_conv0(patches, w_bf16, scale, shift, *, n_split=2):
    """conv0 as an im2col GEMM with fused norm0+relu0 epilogue.

    M is split into `n_split` tiles so v7x runs both TensorCores; single-core
    chips just loop over the two tiles (negligible overhead)."""
    M, K = patches.shape
    N = w_bf16.shape[1]
    tm = max(8, ((pl.cdiv(M, n_split) + 7) // 8) * 8)
    return pl.pallas_call(
        _stem_kernel,
        out_shape=jax.ShapeDtypeStruct((M, N), jnp.float32),
        grid=(pl.cdiv(M, tm),),
        in_specs=[pl.BlockSpec((tm, K), lambda i: (i, 0)),
                  pl.BlockSpec((K, N), lambda i: (0, 0)),
                  pl.BlockSpec((1, N), lambda i: (0, 0)),
                  pl.BlockSpec((1, N), lambda i: (0, 0))],
        out_specs=pl.BlockSpec((tm, N), lambda i: (i, 0)),
        compiler_params=pltpu.CompilerParams(
            dimension_semantics=("parallel",)),
    )(patches, w_bf16, scale, shift)


# --------------------------- fused dense block ------------------------------

def _make_block_kernel(L, H, W, NBK, tail):
    """One whole dense block (plus its transition / classifier-head tail) in a
    single kernel.  The grid iterates over the batch; feat / bottleneck stay in
    VMEM for the entire block."""
    Wp = W + 1              # +1 always-zero "pitch" column => conv zero padding
    Mp = H * Wp             # padded row count per sample
    HW = H * W              # real pixel count

    def run_layers(f, mask, s1_ref, t1_ref, w1_ref, s2_ref, t2_ref, w2_ref,
                   im_ref):
        # rows of the im2col scratch that are never written stay zero (they are
        # the conv's spatial zero-padding positions).
        im_ref[...] = jnp.zeros_like(im_ref)
        for li in range(L):
            # norm1 + relu1 (lanes >= this layer's input width have scale=0)
            a1 = jnp.maximum(f * s1_ref[li] + t1_ref[li], 0.0)
            # conv1 (1x1 bottleneck) + norm2 + relu2, all in registers;
            # the mask keeps the pitch column exactly zero (conv padding).
            bott = jnp.dot(a1.astype(jnp.bfloat16), w1_ref[li],
                           preferred_element_type=jnp.float32)
            a2 = jnp.maximum(bott * s2_ref[li] + t2_ref[li], 0.0) * mask
            # scatter the 9 conv taps: thanks to the zero pitch column every
            # tap is one contiguous row-range copy with a constant row shift.
            for ki in range(3):
                for kj in range(3):
                    sh = (ki - 1) * Wp + (kj - 1)
                    d0, d1 = max(0, -sh), Mp - max(0, sh)
                    if d0 >= d1:
                        continue
                    t = ki * 3 + kj
                    im_ref[d0:d1, t * NBK:(t + 1) * NBK] = a2[d0 + sh:d1 + sh, :]
            # conv2 (3x3) as ONE GEMM (K = 9*NBK).  Weight columns outside this
            # layer's growth slot are zero, so `+=` only touches its own
            # channels of the block feature buffer (replaces torch.cat).
            patches = im_ref[...].astype(jnp.bfloat16)
            f = f + jnp.dot(patches, w2_ref[li],
                            preferred_element_type=jnp.float32)
        return f

    if tail == "transition":
        def kernel(feat_ref, mask_ref, s1_ref, t1_ref, w1_ref, s2_ref, t2_ref,
                   w2_ref, st_ref, tt_ref, wt_ref, o_ref, im_ref):
            mask = mask_ref[...]
            f = run_layers(feat_ref[0], mask, s1_ref, t1_ref, w1_ref,
                           s2_ref, t2_ref, w2_ref, im_ref)
            # transition: norm + relu + 1x1 conv (2x2 avg-pool done outside)
            a = jnp.maximum(f * st_ref[...] + tt_ref[...], 0.0)
            o_ref[0, :, :] = jnp.dot(a.astype(jnp.bfloat16), wt_ref[...],
                                     preferred_element_type=jnp.float32)
    else:  # classifier head
        def kernel(feat_ref, mask_ref, s1_ref, t1_ref, w1_ref, s2_ref, t2_ref,
                   w2_ref, st_ref, tt_ref, wt_ref, bt_ref, o_ref, im_ref):
            mask = mask_ref[...]
            f = run_layers(feat_ref[0], mask, s1_ref, t1_ref, w1_ref,
                           s2_ref, t2_ref, w2_ref, im_ref)
            # norm5 + relu + global average pool (VPU reduction) + Linear
            a = jnp.maximum(f * st_ref[...] + tt_ref[...], 0.0) * mask
            pooled = jnp.sum(a, axis=0, keepdims=True) * (1.0 / HW)
            o_ref[0, :, :] = (jnp.dot(pooled.astype(jnp.bfloat16), wt_ref[...],
                                      preferred_element_type=jnp.float32)
                              + bt_ref[...])
    return kernel


def dense_block(feat_p, lp, tp, tail, H, W):
    """feat_p: [N, H*(W+1), CB] pitched block-input features (pitch column 0)."""
    N, Mp, CB = feat_p.shape
    L, _, NBK = lp["w1"].shape
    mask = _to_pitched(jnp.ones((1, H, W, 1), jnp.float32))[0]      # [Mp, 1]

    in_specs = [
        pl.BlockSpec((1, Mp, CB), lambda n: (n, 0, 0)),
        pl.BlockSpec((Mp, 1), lambda n: (0, 0)),
        pl.BlockSpec((L, 1, CB), lambda n: (0, 0, 0)),
        pl.BlockSpec((L, 1, CB), lambda n: (0, 0, 0)),
        pl.BlockSpec((L, CB, NBK), lambda n: (0, 0, 0)),
        pl.BlockSpec((L, 1, NBK), lambda n: (0, 0, 0)),
        pl.BlockSpec((L, 1, NBK), lambda n: (0, 0, 0)),
        pl.BlockSpec((L, 9 * NBK, CB), lambda n: (0, 0, 0)),
        pl.BlockSpec((1, CB), lambda n: (0, 0)),
        pl.BlockSpec((1, CB), lambda n: (0, 0)),
        pl.BlockSpec(tp["w"].shape, lambda n: (0, 0)),
    ]
    args = [feat_p, mask, lp["s1"], lp["t1"], lp["w1"], lp["s2"], lp["t2"],
            lp["w2"], tp["s"], tp["t"], tp["w"]]

    if tail == "transition":
        CBn = tp["w"].shape[1]
        out_shape = jax.ShapeDtypeStruct((N, Mp, CBn), jnp.float32)
        out_spec = pl.BlockSpec((1, Mp, CBn), lambda n: (n, 0, 0))
    else:
        NC = tp["w"].shape[1]
        in_specs.append(pl.BlockSpec((1, NC), lambda n: (0, 0)))
        args.append(tp["b"])
        out_shape = jax.ShapeDtypeStruct((N, 1, NC), jnp.float32)
        out_spec = pl.BlockSpec((1, 1, NC), lambda n: (n, 0, 0))

    return pl.pallas_call(
        _make_block_kernel(L, H, W, NBK, tail),
        out_shape=out_shape,
        grid=(N,),                                   # batch-parallel (v7x 2 TCs)
        in_specs=in_specs,
        out_specs=out_spec,
        scratch_shapes=[pltpu.VMEM((Mp, 9 * NBK), jnp.float32)],
        compiler_params=pltpu.CompilerParams(
            dimension_semantics=("parallel",)),
    )(*args)


# ------------------------------ JAX glue ops --------------------------------

def im2col(x, kh, kw, stride, padding):
    """Patch extraction for the one-time 7x7 stem conv (Cin=3, tiny)."""
    N, H, W, C = x.shape
    xp = jnp.pad(x, ((0, 0), (padding, padding), (padding, padding), (0, 0)))
    Ho = (H + 2 * padding - kh) // stride + 1
    Wo = (W + 2 * padding - kw) // stride + 1
    cols = []
    for i in range(kh):
        for j in range(kw):
            cols.append(xp[:, i:i + (Ho - 1) * stride + 1:stride,
                            j:j + (Wo - 1) * stride + 1:stride, :])
    patches = jnp.concatenate(cols, axis=-1)
    return patches.reshape(N * Ho * Wo, kh * kw * C), Ho, Wo


def maxpool_3x3_s2_p1(x):
    # TODO(synk): MaxPool2d(3,2,1) kept as a plain-JAX reduce_window.
    return jax.lax.reduce_window(
        x, -jnp.inf, jax.lax.max,
        (1, 3, 3, 1), (1, 2, 2, 1),
        ((0, 0), (1, 1), (1, 1), (0, 0)))


def avgpool_2x2(x):
    # TODO(synk): AvgPool2d(2,2) kept as a plain-JAX reshape-mean.
    N, H, W, C = x.shape
    return x.reshape(N, H // 2, 2, W // 2, 2, C).mean(axis=(2, 4))


def _to_pitched(x):
    """[N,H,W,C] -> [N, H*(W+1), C], appending one zero column per image row."""
    N, H, W, C = x.shape
    xp = jnp.pad(x, ((0, 0), (0, 0), (0, 1), (0, 0)))
    return xp.reshape(N, H * (W + 1), C)


def _from_pitched(x, H, W):
    """[N, H*(W+1), C] -> [N,H,W,C] (drops the zero pitch column)."""
    N, _, C = x.shape
    return x.reshape(N, H, W + 1, C)[:, :, :W, :]


# ----------------------------- parameter init -------------------------------

def _bn_vec(c_valid, c_pad, eps=1e-5):
    # Eval-mode BN, PyTorch defaults (gamma=1, beta=0, mean=0, var=1); padded
    # lanes get scale=shift=0 so they stay exactly zero through the ReLU.
    scale = jnp.zeros((c_pad,), jnp.float32).at[:c_valid].set(
        1.0 / math.sqrt(1.0 + eps))
    shift = jnp.zeros((c_pad,), jnp.float32)
    return scale, shift


def init_densenet_params(key, growth_rate, block_config, num_init_features,
                         bn_size, num_classes):
    keys = iter(jax.random.split(key, 256))
    g = growth_rate
    nb_valid = bn_size * g
    NBK = ((nb_valid + 7) // 8) * 8          # true bottleneck width (no 128 pad)

    f_in, f_out, CBs = [], [], []
    nf = num_init_features
    for L in block_config:
        f_in.append(nf)
        nf = nf + L * g
        f_out.append(nf)
        CBs.append(_rup(nf))
        nf = nf // 2

    p = {}
    # stem conv0 (7x7) laid out for the im2col GEMM: [7*7*3, CB0]
    std0 = math.sqrt(2.0 / (3 * 7 * 7))      # kaiming_normal_, fan_in
    w0 = std0 * jax.random.normal(next(keys), (7, 7, 3, num_init_features),
                                  jnp.float32)
    w0p = jnp.zeros((7, 7, 3, CBs[0]), jnp.float32)
    w0p = w0p.at[..., :num_init_features].set(w0)
    p["conv0_w"] = w0p.reshape(7 * 7 * 3, CBs[0]).astype(jnp.bfloat16)
    s0, t0 = _bn_vec(num_init_features, CBs[0])
    p["norm0_scale"] = s0.reshape(1, CBs[0])
    p["norm0_shift"] = t0.reshape(1, CBs[0])

    p["blocks"], p["tails"] = [], []
    for b, L in enumerate(block_config):
        CB = CBs[b]
        s1 = jnp.zeros((L, 1, CB), jnp.float32)
        t1 = jnp.zeros((L, 1, CB), jnp.float32)
        w1 = jnp.zeros((L, CB, NBK), jnp.float32)
        s2 = jnp.zeros((L, 1, NBK), jnp.float32)
        t2 = jnp.zeros((L, 1, NBK), jnp.float32)
        w2 = jnp.zeros((L, 9 * NBK, CB), jnp.float32)
        for li in range(L):
            cin = f_in[b] + li * g
            c_off = cin                      # this layer's slot in the buffer
            sa, _ = _bn_vec(cin, CB)
            s1 = s1.at[li, 0].set(sa)
            std1 = math.sqrt(2.0 / cin)
            w1_l = std1 * jax.random.normal(next(keys), (cin, nb_valid),
                                            jnp.float32)
            w1 = w1.at[li, :cin, :nb_valid].set(w1_l)
            sb, _ = _bn_vec(nb_valid, NBK)
            s2 = s2.at[li, 0].set(sb)
            std2 = math.sqrt(2.0 / (nb_valid * 9))
            w2_l = std2 * jax.random.normal(next(keys), (3, 3, nb_valid, g),
                                            jnp.float32)
            w2_hwio = jnp.zeros((3, 3, NBK, g), jnp.float32)
            w2_hwio = w2_hwio.at[:, :, :nb_valid, :].set(w2_l)
            w2 = w2.at[li, :, c_off:c_off + g].set(w2_hwio.reshape(9 * NBK, g))
        p["blocks"].append({
            "s1": s1, "t1": t1, "w1": w1.astype(jnp.bfloat16),
            "s2": s2, "t2": t2, "w2": w2.astype(jnp.bfloat16),
        })
        if b != len(block_config) - 1:
            cin, cout, CBn = f_out[b], f_out[b] // 2, CBs[b + 1]
            st, tt = _bn_vec(cin, CB)
            stdt = math.sqrt(2.0 / cin)
            wt = stdt * jax.random.normal(next(keys), (cin, cout), jnp.float32)
            wtp = jnp.zeros((CB, CBn), jnp.float32).at[:cin, :cout].set(wt)
            p["tails"].append({"s": st.reshape(1, CB), "t": tt.reshape(1, CB),
                               "w": wtp.astype(jnp.bfloat16)})
        else:
            NC = _rup(num_classes)           # lane-dense logits store
            s5, t5 = _bn_vec(f_out[b], CB)
            bound = 1.0 / math.sqrt(f_out[b])
            wc = jax.random.uniform(next(keys), (f_out[b], num_classes),
                                    jnp.float32, -bound, bound)
            wcp = jnp.zeros((CB, NC), jnp.float32)
            wcp = wcp.at[:f_out[b], :num_classes].set(wc)
            p["tails"].append({"s": s5.reshape(1, CB), "t": t5.reshape(1, CB),
                               "w": wcp.astype(jnp.bfloat16),
                               "b": jnp.zeros((1, NC), jnp.float32)})
    return p


# --------------------------------- forward ----------------------------------

def densenet_forward(params, x_nchw, num_classes):
    # NCHW (PyTorch) -> NHWC (kernel layout)
    x = jnp.transpose(x_nchw, (0, 2, 3, 1)).astype(jnp.float32)
    N = x.shape[0]

    # stem: conv0(7x7,s2,p3) with fused norm0+relu0 epilogue, then maxpool.
    patches, Ho, Wo = im2col(x, 7, 7, 2, 3)
    y = stem_conv0(patches, params["conv0_w"],
                   params["norm0_scale"], params["norm0_shift"])
    feat = maxpool_3x3_s2_p1(y.reshape(N, Ho, Wo, -1))

    n_blocks = len(params["blocks"])
    logits = None
    for b in range(n_blocks):
        _, H, W, _ = feat.shape
        tail = "transition" if b < n_blocks - 1 else "head"
        out = dense_block(_to_pitched(feat), params["blocks"][b],
                          params["tails"][b], tail, H, W)
        if tail == "transition":
            feat = avgpool_2x2(_from_pitched(out, H, W))
        else:
            logits = out.reshape(N, -1)[:, :num_classes]
    return logits


# ----------------------------------- main ------------------------------------

if __name__ == "__main__":
    # Small DenseNet-BC configuration (same forward structure as the module).
    growth_rate = 8
    block_config = (2, 2, 2, 2)
    num_init_features = 16
    bn_size = 4
    num_classes = 4

    key = jax.random.PRNGKey(0)
    kp, kx = jax.random.split(key)
    params = init_densenet_params(kp, growth_rate, block_config,
                                  num_init_features, bn_size, num_classes)

    # NCHW input, as the PyTorch module expects (3 input channels).
    x = jax.random.normal(kx, (2, 3, 32, 32), jnp.float32)

    fwd = jax.jit(functools.partial(densenet_forward, num_classes=num_classes))
    out = jax.block_until_ready(fwd(params, x))

    assert out.shape == (2, num_classes), out.shape
    assert bool(jnp.all(jnp.isfinite(out)))
    print("KERNEL_OK")
</pallas_src>

<mosaic_0001>
module attributes {stable_mosaic.version = 11 : i64} {
  func.func @_stem_kernel(%arg0: i32, %arg1: memref<256x147xf32, #tpu.memory_space<vmem>>, %arg2: memref<147x128xbf16, #tpu.memory_space<vmem>>, %arg3: memref<1x128xf32, #tpu.memory_space<vmem>>, %arg4: memref<1x128xf32, #tpu.memory_space<vmem>>, %arg5: memref<256x128xf32, #tpu.memory_space<vmem>>) attributes {dimension_semantics = [#tpu.dimension_semantics<parallel>], iteration_bounds = array<i64: 2>, scalar_prefetch = 0 : i64, scratch_operands = 0 : i64, tpu.core_type = #tpu.core_type<tc>, window_params = [{transform_indices = @transform_0, window_bounds = array<i64: 256, 147>}, {pipeline_mode = #tpu.pipeline_mode<synchronous>, transform_indices = @transform_1, window_bounds = array<i64: 147, 128>}, {pipeline_mode = #tpu.pipeline_mode<synchronous>, transform_indices = @transform_2, window_bounds = array<i64: 1, 128>}, {pipeline_mode = #tpu.pipeline_mode<synchronous>, transform_indices = @transform_3, window_bounds = array<i64: 1, 128>}, {transform_indices = @transform_4, window_bounds = array<i64: 256, 128>}]} {
    %c0 = arith.constant 0 : index
    %c0_0 = arith.constant 0 : index
    %0 = vector.load %arg1[%c0, %c0_0] : memref<256x147xf32, #tpu.memory_space<vmem>>, vector<256x147xf32>
    %1 = arith.truncf %0 : vector<256x147xf32> to vector<256x147xbf16>
    %c0_1 = arith.constant 0 : index
    %c0_2 = arith.constant 0 : index
    %2 = vector.load %arg2[%c0_1, %c0_2] : memref<147x128xbf16, #tpu.memory_space<vmem>>, vector<147x128xbf16>
    %cst = arith.constant dense<0.000000e+00> : vector<256x128xf32>
    %3 = tpu.matmul %1, %2, %cst {dimension_numbers = #tpu.dot_dimension_numbers<[1], [0], [0], [1], [0, 0, 1, 1], [], []>} : vector<256x147xbf16>, vector<147x128xbf16>, vector<256x128xf32> -> vector<256x128xf32>
    %c0_3 = arith.constant 0 : index
    %c0_4 = arith.constant 0 : index
    %4 = vector.load %arg3[%c0_3, %c0_4] : memref<1x128xf32, #tpu.memory_space<vmem>>, vector<1x128xf32>
    %5 = vector.broadcast %4 : vector<1x128xf32> to vector<256x128xf32>
    %6 = arith.mulf %3, %5 : vector<256x128xf32>
    %c0_5 = arith.constant 0 : index
    %c0_6 = arith.constant 0 : index
    %7 = vector.load %arg4[%c0_5, %c0_6] : memref<1x128xf32, #tpu.memory_space<vmem>>, vector<1x128xf32>
    %8 = vector.broadcast %7 : vector<1x128xf32> to vector<256x128xf32>
    %9 = arith.addf %6, %8 : vector<256x128xf32>
    %cst_7 = arith.constant 0.000000e+00 : f32
    %10 = vector.broadcast %cst_7 : f32 to vector<256x128xf32>
    %11 = arith.maximumf %9, %10 : vector<256x128xf32>
    %c0_8 = arith.constant 0 : index
    %c0_9 = arith.constant 0 : index
    %12 = vector.load %arg5[%c0_8, %c0_9] : memref<256x128xf32, #tpu.memory_space<vmem>>, vector<256x128xf32>
    tpu.vector_store %arg5[%c0_8, %c0_9], %11 {strides = array<i32>} : memref<256x128xf32, #tpu.memory_space<vmem>>, vector<256x128xf32>,
    return
  }
  func.func @transform_0(%arg0: i32) -> (i32, i32) {
    %c0_i32 = arith.constant 0 : i32
    %c0_i32_0 = arith.constant 0 : i32
    return %arg0, %c0_i32 : i32, i32
  }
  func.func @transform_1(%arg0: i32) -> (i32, i32) {
    %c0_i32 = arith.constant 0 : i32
    %c0_i32_0 = arith.constant 0 : i32
    %c0_i32_1 = arith.constant 0 : i32
    return %c0_i32, %c0_i32_0 : i32, i32
  }
  func.func @transform_2(%arg0: i32) -> (i32, i32) {
    %c0_i32 = arith.constant 0 : i32
    %c0_i32_0 = arith.constant 0 : i32
    %c0_i32_1 = arith.constant 0 : i32
    return %c0_i32, %c0_i32_0 : i32, i32
  }
  func.func @transform_3(%arg0: i32) -> (i32, i32) {
    %c0_i32 = arith.constant 0 : i32
    %c0_i32_0 = arith.constant 0 : i32
    %c0_i32_1 = arith.constant 0 : i32
    return %c0_i32, %c0_i32_0 : i32, i32
  }
  func.func @transform_4(%arg0: i32) -> (i32, i32) {
    %c0_i32 = arith.constant 0 : i32
    %c0_i32_0 = arith.constant 0 : i32
    return %arg0, %c0_i32 : i32, i32
  }
}

module attributes {stable_mosaic.version = 11 : i64} {
  func.func @kernel(%arg0: i32, %arg1: memref<1x72x128xf32, #tpu.memory_space<vmem>>, %arg2: memref<72x1xf32, #tpu.memory_space<vmem>>, %arg3: memref<2x1x128xf32, #tpu.memory_space<vmem>>, %arg4: memref<2x1x128xf32, #tpu.memory_space<vmem>>, %arg5: memref<2x128x32xbf16, #tpu.memory_space<vmem>>, %arg6: memref<2x1x32xf32, #tpu.memory_space<vmem>>, %arg7: memref<2x1x32xf32, #tpu.memory_space<vmem>>, %arg8: memref<2x288x128xbf16, #tpu.memory_space<vmem>>, %arg9: memref<1x128xf32, #tpu.memory_space<vmem>>, %arg10: memref<1x128xf32, #tpu.memory_space<vmem>>, %arg11: memref<128x128xbf16, #tpu.memory_space<vmem>>, %arg12: memref<1x72x128xf32, #tpu.memory_space<vmem>>, %arg13: memref<72x288xf32, #tpu.memory_space<vmem>>) attributes {dimension_semantics = [#tpu.dimension_semantics<parallel>], iteration_bounds = array<i64: 2>, scalar_prefetch = 0 : i64, scratch_operands = 1 : i64, tpu.core_type = #tpu.core_type<tc>, window_params = [{transform_indices = @transform_0, window_bounds = array<i64: 1, 72, 128>}, {pipeline_mode = #tpu.pipeline_mode<synchronous>, transform_indices = @transform_1, window_bounds = array<i64: 72, 1>}, {pipeline_mode = #tpu.pipeline_mode<synchronous>, transform_indices = @transform_2, window_bounds = array<i64: 2, 1, 128>}, {pipeline_mode = #tpu.pipeline_mode<synchronous>, transform_indices = @transform_3, window_bounds = array<i64: 2, 1, 128>}, {pipeline_mode = #tpu.pipeline_mode<synchronous>, transform_indices = @transform_4, window_bounds = array<i64: 2, 128, 32>}, {pipeline_mode = #tpu.pipeline_mode<synchronous>, transform_indices = @transform_5, window_bounds = array<i64: 2, 1, 32>}, {pipeline_mode = #tpu.pipeline_mode<synchronous>, transform_indices = @transform_6, window_bounds = array<i64: 2, 1, 32>}, {pipeline_mode = #tpu.pipeline_mode<synchronous>, transform_indices = @transform_7, window_bounds = array<i64: 2, 288, 128>}, {pipeline_mode = #tpu.pipeline_mode<synchronous>, transform_indices = @transform_8, window_bounds = array<i64: 1, 128>}, {pipeline_mode = #tpu.pipeline_mode<synchronous>, transform_indices = @transform_9, window_bounds = array<i64: 1, 128>}, {pipeline_mode = #tpu.pipeline_mode<synchronous>, transform_indices = @transform_10, window_bounds = array<i64: 128, 128>}, {transform_indices = @transform_11, window_bounds = array<i64: 1, 72, 128>}]} {
    %c0 = arith.constant 0 : index
    %c0_0 = arith.constant 0 : index
    %0 = vector.load %arg2[%c0, %c0_0] : memref<72x1xf32, #tpu.memory_space<vmem>>, vector<72x1xf32>
    %c0_1 = arith.constant 0 : index
    %c0_2 = arith.constant 0 : index
    %c0_3 = arith.constant 0 : index
    %1 = vector.load %arg1[%c0_1, %c0_2, %c0_3] : memref<1x72x128xf32, #tpu.memory_space<vmem>>, vector<1x72x128xf32>
    %2 = vector.shape_cast %1 : vector<1x72x128xf32> to vector<72x128xf32>
    %cst = arith.constant 0.000000e+00 : f32
    %3 = vector.broadcast %cst : f32 to vector<72x288xf32>
    %c0_4 = arith.constant 0 : index
    %c0_5 = arith.constant 0 : index
    %4 = vector.load %arg13[%c0_4, %c0_5] : memref<72x288xf32, #tpu.memory_space<vmem>>, vector<72x288xf32>
    tpu.vector_store %arg13[%c0_4, %c0_5], %3 {strides = array<i32>} : memref<72x288xf32, #tpu.memory_space<vmem>>, vector<72x288xf32>,
    %c0_6 = arith.constant 0 : index
    %c0_7 = arith.constant 0 : index
    %c0_8 = arith.constant 0 : index
    %5 = vector.load %arg3[%c0_6, %c0_7, %c0_8] : memref<2x1x128xf32, #tpu.memory_space<vmem>>, vector<1x1x128xf32>
    %6 = vector.shape_cast %5 : vector<1x1x128xf32> to vector<1x128xf32>
    %7 = vector.broadcast %6 : vector<1x128xf32> to vector<72x128xf32>
    %8 = arith.mulf %2, %7 : vector<72x128xf32>
    %c0_9 = arith.constant 0 : index
    %c0_10 = arith.constant 0 : index
    %c0_11 = arith.constant 0 : index
    %9 = vector.load %arg4[%c0_9, %c0_10, %c0_11] : memref<2x1x128xf32, #tpu.memory_space<vmem>>, vector<1x1x128xf32>
    %10 = vector.shape_cast %9 : vector<1x1x128xf32> to vector<1x128xf32>
    %11 = vector.broadcast %10 : vector<1x128xf32> to vector<72x128xf32>
    %12 = arith.addf %8, %11 : vector<72x128xf32>
    %cst_12 = arith.constant 0.000000e+00 : f32
    %13 = vector.broadcast %cst_12 : f32 to vector<72x128xf32>
    %14 = arith.maximumf %12, %13 : vector<72x128xf32>
    %15 = arith.truncf %14 : vector<72x128xf32> to vector<72x128xbf16>
    %c0_13 = arith.constant 0 : index
    %c0_14 = arith.constant 0 : index
    %c0_15 = arith.constant 0 : index
    %16 = vector.load %arg5[%c0_13, %c0_14, %c0_15] : memref<2x128x32xbf16, #tpu.memory_space<vmem>>, vector<1x128x32xbf16>
    %17 = vector.shape_cast %16 : vector<1x128x32xbf16> to vector<128x32xbf16>
    %cst_16 = arith.constant dense<0.000000e+00> : vector<72x32xf32>
    %18 = tpu.matmul %15, %17, %cst_16 {dimension_numbers = #tpu.dot_dimension_numbers<[1], [0], [0], [1], [0, 0, 1, 1], [], []>} : vector<72x128xbf16>, vector<128x32xbf16>, vector<72x32xf32> -> vector<72x32xf32>
    %c0_17 = arith.constant 0 : index
    %c0_18 = arith.constant 0 : index
    %c0_19 = arith.constant 0 : index
    %19 = vector.load %arg6[%c0_17, %c0_18, %c0_19] : memref<2x1x32xf32, #tpu.memory_space<vmem>>, vector<1x1x32xf32>
    %20 = vector.shape_cast %19 : vector<1x1x32xf32> to vector<1x32xf32>
    %21 = vector.broadcast %20 : vector<1x32xf32> to vector<72x32xf32>
    %22 = arith.mulf %18, %21 : vector<72x32xf32>
    %c0_20 = arith.constant 0 : index
    %c0_21 = arith.constant 0 : index
    %c0_22 = arith.constant 0 : index
    %23 = vector.load %arg7[%c0_20, %c0_21, %c0_22] : memref<2x1x32xf32, #tpu.memory_space<vmem>>, vector<1x1x32xf32>
    %24 = vector.shape_cast %23 : vector<1x1x32xf32> to vector<1x32xf32>
    %25 = vector.broadcast %24 : vector<1x32xf32> to vector<72x32xf32>
    %26 = arith.addf %22, %25 : vector<72x32xf32>
    %cst_23 = arith.constant 0.000000e+00 : f32
    %27 = vector.broadcast %cst_23 : f32 to vector<72x32xf32>
    %28 = arith.maximumf %26, %27 : vector<72x32xf32>
    %29 = vector.broadcast %0 : vector<72x1xf32> to vector<72x32xf32>
    %30 = arith.mulf %28, %29 : vector<72x32xf32>
    %31 = vector.extract_strided_slice %30 {offsets = [0, 0], sizes = [62, 32], strides = [1, 1]} : vector<72x32xf32> to vector<62x32xf32>
    %c10 = arith.constant 10 : index
    %c0_24 = arith.constant 0 : index
    %32 = vector.load %arg13[%c10, %c0_24] : memref<72x288xf32, #tpu.memory_space<vmem>>, vector<62x32xf32>
    tpu.vector_store %arg13[%c10, %c0_24], %31 {strides = array<i32>} : memref<72x288xf32, #tpu.memory_space<vmem>>, vector<62x32xf32>,
    %33 = vector.extract_strided_slice %30 {offsets = [0, 0], sizes = [63, 32], strides = [1, 1]} : vector<72x32xf32> to vector<63x32xf32>
    %c9 = arith.constant 9 : index
    %c32 = arith.constant 32 : index
    %34 = vector.load %arg13[%c9, %c32] : memref<72x288xf32, #tpu.memory_space<vmem>>, vector<63x32xf32>
    tpu.vector_store %arg13[%c9, %c32], %33 {strides = array<i32>} : memref<72x288xf32, #tpu.memory_space<vmem>>, vector<63x32xf32>,
    %35 = vector.extract_strided_slice %30 {offsets = [0, 0], sizes = [64, 32], strides = [1, 1]} : vector<72x32xf32> to vector<64x32xf32>
    %c8 = arith.constant 8 : index
    %c64 = arith.constant 64 : index
    %36 = vector.load %arg13[%c8, %c64] : memref<72x288xf32, #tpu.memory_space<vmem>>, vector<64x32xf32>
    tpu.vector_store %arg13[%c8, %c64], %35 {strides = array<i32>} : memref<72x288xf32, #tpu.memory_space<vmem>>, vector<64x32xf32>,
    %37 = vector.extract_strided_slice %30 {offsets = [0, 0], sizes = [71, 32], strides = [1, 1]} : vector<72x32xf32> to vector<71x32xf32>
    %c1 = arith.constant 1 : index
    %c96 = arith.constant 96 : index
    %38 = vector.load %arg13[%c1, %c96] : memref<72x288xf32, #tpu.memory_space<vmem>>, vector<71x32xf32>
    tpu.vector_store %arg13[%c1, %c96], %37 {strides = array<i32>} : memref<72x288xf32, #tpu.memory_space<vmem>>, vector<71x32xf32>,
    %c0_25 = arith.constant 0 : index
    %c128 = arith.constant 128 : index
    %39 = vector.load %arg13[%c0_25, %c128] : memref<72x288xf32, #tpu.memory_space<vmem>>, vector<72x32xf32>
    tpu.vector_store %arg13[%c0_25, %c128], %30 {strides = array<i32>} : memref<72x288xf32, #tpu.memory_space<vmem>>, vector<72x32xf32>,
    %40 = vector.extract_strided_slice %30 {offsets = [1, 0], sizes = [71, 32], strides = [1, 1]} : vector<72x32xf32> to vector<71x32xf32>
    %c0_26 = arith.constant 0 : index
    %c160 = arith.constant 160 : index
    %41 = vector.load %arg13[%c0_26, %c160] : memref<72x288xf32, #tpu.memory_space<vmem>>, vector<71x32xf32>
    tpu.vector_store %arg13[%c0_26, %c160], %40 {strides = array<i32>} : memref<72x288xf32, #tpu.memory_space<vmem>>, vector<71x32xf32>,
    %42 = vector.extract_strided_slice %30 {offsets = [8, 0], sizes = [64, 32], strides = [1, 1]} : vector<72x32xf32> to vector<64x32xf32>
    %c0_27 = arith.constant 0 : index
    %c192 = arith.constant 192 : index
    %43 = vector.load %arg13[%c0_27, %c192] : memref<72x288xf32, #tpu.memory_space<vmem>>, vector<64x32xf32>
    tpu.vector_store %arg13[%c0_27, %c192], %42 {strides = array<i32>} : memref<72x288xf32, #tpu.memory_space<vmem>>, vector<64x32xf32>,
    %44 = vector.extract_strided_slice %30 {offsets = [9, 0], sizes = [63, 32], strides = [1, 1]} : vector<72x32xf32> to vector<63x32xf32>
    %c0_28 = arith.constant 0 : index
    %c224 = arith.constant 224 : index
    %45 = vector.load %arg13[%c0_28, %c224] : memref<72x288xf32, #tpu.memory_space<vmem>>, vector<63x32xf32>
    tpu.vector_store %arg13[%c0_28, %c224], %44 {strides = array<i32>} : memref<72x288xf32, #tpu.memory_space<vmem>>, vector<63x32xf32>,
    %46 = vector.extract_strided_slice %30 {offsets = [10, 0], sizes = [62, 32], strides = [1, 1]} : vector<72x32xf32> to vector<62x32xf32>
    %c0_29 = arith.constant 0 : index
    %c256 = arith.constant 256 : index
    %47 = vector.load %arg13[%c0_29, %c256] : memref<72x288xf32, #tpu.memory_space<vmem>>, vector<62x32xf32>
    tpu.vector_store %arg13[%c0_29, %c256], %46 {strides = array<i32>} : memref<72x288xf32, #tpu.memory_space<vmem>>, vector<62x32xf32>,
    %c0_30 = arith.constant 0 : index
    %c0_31 = arith.constant 0 : index
    %48 = vector.load %arg13[%c0_30, %c0_31] : memref<72x288xf32, #tpu.memory_space<vmem>>, vector<72x288xf32>
    %49 = arith.truncf %48 : vector<72x288xf32> to vector<72x288xbf16>
    %c0_32 = arith.constant 0 : index
    %c0_33 = arith.constant 0 : index
    %c0_34 = arith.constant 0 : index
    %50 = vector.load %arg8[%c0_32, %c0_33, %c0_34] : memref<2x288x128xbf16, #tpu.memory_space<vmem>>, vector<1x288x128xbf16>
    %51 = vector.shape_cast %50 : vector<1x288x128xbf16> to vector<288x128xbf16>
    %cst_35 = arith.constant dense<0.000000e+00> : vector<72x128xf32>
    %52 = tpu.matmul %49, %51, %cst_35 {dimension_numbers = #tpu.dot_dimension_numbers<[1], [0], [0], [1], [0, 0, 1, 1], [], []>} : vector<72x288xbf16>, vector<288x128xbf16>, vector<72x128xf32> -> vector<72x128xf32>
    %53 = arith.addf %2, %52 : vector<72x128xf32>
    %c1_36 = arith.constant 1 : index
    %c0_37 = arith.constant 0 : index
    %c0_38 = arith.constant 0 : index
    %54 = vector.load %arg3[%c1_36, %c0_37, %c0_38] : memref<2x1x128xf32, #tpu.memory_space<vmem>>, vector<1x1x128xf32>
    %55 = vector.shape_cast %54 : vector<1x1x128xf32> to vector<1x128xf32>
    %56 = vector.broadcast %55 : vector<1x128xf32> to vector<72x128xf32>
    %57 = arith.mulf %53, %56 : vector<72x128xf32>
    %c1_39 = arith.constant 1 : index
    %c0_40 = arith.constant 0 : index
    %c0_41 = arith.constant 0 : index
    %58 = vector.load %arg4[%c1_39, %c0_40, %c0_41] : memref<2x1x128xf32, #tpu.memory_space<vmem>>, vector<1x1x128xf32>
    %59 = vector.shape_cast %58 : vector<1x1x128xf32> to vector<1x128xf32>
    %60 = vector.broadcast %59 : vector<1x128xf32> to vector<72x128xf32>
    %61 = arith.addf %57, %60 : vector<72x128xf32>
    %cst_42 = arith.constant 0.000000e+00 : f32
    %62 = vector.broadcast %cst_42 : f32 to vector<72x128xf32>
    %63 = arith.maximumf %61, %62 : vector<72x128xf32>
    %64 = arith.truncf %63 : vector<72x128xf32> to vector<72x128xbf16>
    %c1_43 = arith.constant 1 : index
    %c0_44 = arith.constant 0 : index
    %c0_45 = arith.constant 0 : index
    %65 = vector.load %arg5[%c1_43, %c0_44, %c0_45] : memref<2x128x32xbf16, #tpu.memory_space<vmem>>, vector<1x128x32xbf16>
    %66 = vector.shape_cast %65 : vector<1x128x32xbf16> to vector<128x32xbf16>
    %cst_46 = arith.constant dense<0.000000e+00> : vector<72x32xf32>
    %67 = tpu.matmul %64, %66, %cst_46 {dimension_numbers = #tpu.dot_dimension_numbers<[1], [0], [0], [1], [0, 0, 1, 1], [], []>} : vector<72x128xbf16>, vector<128x32xbf16>, vector<72x32xf32> -> vector<72x32xf32>
    %c1_47 = arith.constant 1 : index
    %c0_48 = arith.constant 0 : index
    %c0_49 = arith.constant 0 : index
    %68 = vector.load %arg6[%c1_47, %c0_48, %c0_49] : memref<2x1x32xf32, #tpu.memory_space<vmem>>, vector<1x1x32xf32>
    %69 = vector.shape_cast %68 : vector<1x1x32xf32> to vector<1x32xf32>
    %70 = vector.broadcast %69 : vector<1x32xf32> to vector<72x32xf32>
    %71 = arith.mulf %67, %70 : vector<72x32xf32>
    %c1_50 = arith.constant 1 : index
    %c0_51 = arith.constant 0 : index
    %c0_52 = arith.constant 0 : index
    %72 = vector.load %arg7[%c1_50, %c0_51, %c0_52] : memref<2x1x32xf32, #tpu.memory_space<vmem>>, vector<1x1x32xf32>
    %73 = vector.shape_cast %72 : vector<1x1x32xf32> to vector<1x32xf32>
    %74 = vector.broadcast %73 : vector<1x32xf32> to vector<72x32xf32>
    %75 = arith.addf %71, %74 : vector<72x32xf32>
    %cst_53 = arith.constant 0.000000e+00 : f32
    %76 = vector.broadcast %cst_53 : f32 to vector<72x32xf32>
    %77 = arith.maximumf %75, %76 : vector<72x32xf32>
    %78 = vector.broadcast %0 : vector<72x1xf32> to vector<72x32xf32>
    %79 = arith.mulf %77, %78 : vector<72x32xf32>
    %80 = vector.extract_strided_slice %79 {offsets = [0, 0], sizes = [62, 32], strides = [1, 1]} : vector<72x32xf32> to vector<62x32xf32>
    %c10_54 = arith.constant 10 : index
    %c0_55 = arith.constant 0 : index
    %81 = vector.load %arg13[%c10_54, %c0_55] : memref<72x288xf32, #tpu.memory_space<vmem>>, vector<62x32xf32>
    tpu.vector_store %arg13[%c10_54, %c0_55], %80 {strides = array<i32>} : memref<72x288xf32, #tpu.memory_space<vmem>>, vector<62x32xf32>,
    %82 = vector.extract_strided_slice %79 {offsets = [0, 0], sizes = [63, 32], strides = [1, 1]} : vector<72x32xf32> to vector<63x32xf32>
    %c9_56 = arith.constant 9 : index
    %c32_57 = arith.constant 32 : index
    %83 = vector.load %arg13[%c9_56, %c32_57] : memref<72x288xf32, #tpu.memory_space<vmem>>, vector<63x32xf32>
    tpu.vector_store %arg13[%c9_56, %c32_57], %82 {strides = array<i32>} : memref<72x288xf32, #tpu.memory_space<vmem>>, vector<63x32xf32>,
    %84 = vector.extract_strided_slice %79 {offsets = [0, 0], sizes = [64, 32], strides = [1, 1]} : vector<72x32xf32> to vector<64x32xf32>
    %c8_58 = arith.constant 8 : index
    %c64_59 = arith.constant 64 : index
    %85 = vector.load %arg13[%c8_58, %c64_59] : memref<72x288xf32, #tpu.memory_space<vmem>>, vector<64x32xf32>
    tpu.vector_store %arg13[%c8_58, %c64_59], %84 {strides = array<i32>} : memref<72x288xf32, #tpu.memory_space<vmem>>, vector<64x32xf32>,
    %86 = vector.extract_strided_slice %79 {offsets = [0, 0], sizes = [71, 32], strides = [1, 1]} : vector<72x32xf32> to vector<71x32xf32>
    %c1_60 = arith.constant 1 : index
    %c96_61 = arith.constant 96 : index
    %87 = vector.load %arg13[%c1_60, %c96_61] : memref<72x288xf32, #tpu.memory_space<vmem>>, vector<71x32xf32>
    tpu.vector_store %arg13[%c1_60, %c96_61], %86 {strides = array<i32>} : memref<72x288xf32, #tpu.memory_space<vmem>>, vector<71x32xf32>,
    %c0_62 = arith.constant 0 : index
    %c128_63 = arith.constant 128 : index
    %88 = vector.load %arg13[%c0_62, %c128_63] : memref<72x288xf32, #tpu.memory_space<vmem>>, vector<72x32xf32>
    tpu.vector_store %arg13[%c0_62, %c128_63], %79 {strides = array<i32>} : memref<72x288xf32, #tpu.memory_space<vmem>>, vector<72x32xf32>,
    %89 = vector.extract_strided_slice %79 {offsets = [1, 0], sizes = [71, 32], strides = [1, 1]} : vector<72x32xf32> to vector<71x32xf32>
    %c0_64 = arith.constant 0 : index
    %c160_65 = arith.constant 160 : index
    %90 = vector.load %arg13[%c0_64, %c160_65] : memref<72x288xf32, #tpu.memory_space<vmem>>, vector<71x32xf32>
    tpu.vector_store %arg13[%c0_64, %c160_65], %89 {strides = array<i32>} : memref<72x288xf32, #tpu.memory_space<vmem>>, vector<71x32xf32>,
    %91 = vector.extract_strided_slice %79 {offsets = [8, 0], sizes = [64, 32], strides = [1, 1]} : vector<72x32xf32> to vector<64x32xf32>
    %c0_66 = arith.constant 0 : index
    %c192_67 = arith.constant 192 : index
    %92 = vector.load %arg13[%c0_66, %c192_67] : memref<72x288xf32, #tpu.memory_space<vmem>>, vector<64x32xf32>
    tpu.vector_store %arg13[%c0_66, %c192_67], %91 {strides = array<i32>} : memref<72x288xf32, #tpu.memory_space<vmem>>, vector<64x32xf32>,
    %93 = vector.extract_strided_slice %79 {offsets = [9, 0], sizes = [63, 32], strides = [1, 1]} : vector<72x32xf32> to vector<63x32xf32>
    %c0_68 = arith.constant 0 : index
    %c224_69 = arith.constant 224 : index
    %94 = vector.load %arg13[%c0_68, %c224_69] : memref<72x288xf32, #tpu.memory_space<vmem>>, vector<63x32xf32>
    tpu.vector_store %arg13[%c0_68, %c224_69], %93 {strides = array<i32>} : memref<72x288xf32, #tpu.memory_space<vmem>>, vector<63x32xf32>,
    %95 = vector.extract_strided_slice %79 {offsets = [10, 0], sizes = [62, 32], strides = [1, 1]} : vector<72x32xf32> to vector<62x32xf32>
    %c0_70 = arith.constant 0 : index
    %c256_71 = arith.constant 256 : index
    %96 = vector.load %arg13[%c0_70, %c256_71] : memref<72x288xf32, #tpu.memory_space<vmem>>, vector<62x32xf32>
    tpu.vector_store %arg13[%c0_70, %c256_71], %95 {strides = array<i32>} : memref<72x288xf32, #tpu.memory_space<vmem>>, vector<62x32xf32>,
    %c0_72 = arith.constant 0 : index
    %c0_73 = arith.constant 0 : index
    %97 = vector.load %arg13[%c0_72, %c0_73] : memref<72x288xf32, #tpu.memory_space<vmem>>, vector<72x288xf32>
    %98 = arith.truncf %97 : vector<72x288xf32> to vector<72x288xbf16>
    %c1_74 = arith.constant 1 : index
    %c0_75 = arith.constant 0 : index
    %c0_76 = arith.constant 0 : index
    %99 = vector.load %arg8[%c1_74, %c0_75, %c0_76] : memref<2x288x128xbf16, #tpu.memory_space<vmem>>, vector<1x288x128xbf16>
    %100 = vector.shape_cast %99 : vector<1x288x128xbf16> to vector<288x128xbf16>
    %cst_77 = arith.constant dense<0.000000e+00> : vector<72x128xf32>
    %101 = tpu.matmul %98, %100, %cst_77 {dimension_numbers = #tpu.dot_dimension_numbers<[1], [0], [0], [1], [0, 0, 1, 1], [], []>} : vector<72x288xbf16>, vector<288x128xbf16>, vector<72x128xf32> -> vector<72x128xf32>
    %102 = arith.addf %53, %101 : vector<72x128xf32>
    %c0_78 = arith.constant 0 : index
    %c0_79 = arith.constant 0 : index
    %103 = vector.load %arg9[%c0_78, %c0_79] : memref<1x128xf32, #tpu.memory_space<vmem>>, vector<1x128xf32>
    %104 = vector.broadcast %103 : vector<1x128xf32> to vector<72x128xf32>
    %105 = arith.mulf %102, %104 : vector<72x128xf32>
    %c0_80 = arith.constant 0 : index
    %c0_81 = arith.constant 0 : index
    %106 = vector.load %arg10[%c0_80, %c0_81] : memref<1x128xf32, #tpu.memory_space<vmem>>, vector<1x128xf32>
    %107 = vector.broadcast %106 : vector<1x128xf32> to vector<72x128xf32>
    %108 = arith.addf %105, %107 : vector<72x128xf32>
    %cst_82 = arith.constant 0.000000e+00 : f32
    %109 = vector.broadcast %cst_82 : f32 to vector<72x128xf32>
    %110 = arith.maximumf %108, %109 : vector<72x128xf32>
    %111 = arith.truncf %110 : vector<72x128xf32> to vector<72x128xbf16>
    %c0_83 = arith.constant 0 : index
    %c0_84 = arith.constant 0 : index
    %112 = vector.load %arg11[%c0_83, %c0_84] : memref<128x128xbf16, #tpu.memory_space<vmem>>, vector<128x128xbf16>
    %cst_85 = arith.constant dense<0.000000e+00> : vector<72x128xf32>
    %113 = tpu.matmul %111, %112, %cst_85 {dimension_numbers = #tpu.dot_dimension_numbers<[1], [0], [0], [1], [0, 0, 1, 1], [], []>} : vector<72x128xbf16>, vector<128x128xbf16>, vector<72x128xf32> -> vector<72x128xf32>
    %c0_86 = arith.constant 0 : index
    %c0_87 = arith.constant 0 : index
    %c0_88 = arith.constant 0 : index
    %114 = vector.load %arg12[%c0_86, %c0_87, %c0_88] : memref<1x72x128xf32, #tpu.memory_space<vmem>>, vector<1x72x128xf32>
    %115 = vector.shape_cast %114 : vector<1x72x128xf32> to vector<72x128xf32>
    %116 = vector.shape_cast %113 : vector<72x128xf32> to vector<1x72x128xf32>
    tpu.vector_store %arg12[%c0_86, %c0_87, %c0_88], %116 {strides = array<i32>} : memref<1x72x128xf32, #tpu.memory_space<vmem>>, vector<1x72x128xf32>,
    return
  }
  func.func @transform_0(%arg0: i32) -> (i32, i32, i32) {
    %c0_i32 = arith.constant 0 : i32
    %c0_i32_0 = arith.constant 0 : i32
    %c0_i32_1 = arith.constant 0 : i32
    return %arg0, %c0_i32, %c0_i32_0 : i32, i32, i32
  }
  func.func @transform_1(%arg0: i32) -> (i32, i32) {
    %c0_i32 = arith.constant 0 : i32
    %c0_i32_0 = arith.constant 0 : i32
    %c0_i32_1 = arith.constant 0 : i32
    return %c0_i32, %c0_i32_0 : i32, i32
  }
  func.func @transform_2(%arg0: i32) -> (i32, i32, i32) {
    %c0_i32 = arith.constant 0 : i32
    %c0_i32_0 = arith.constant 0 : i32
    %c0_i32_1 = arith.constant 0 : i32
    %c0_i32_2 = arith.constant 0 : i32
    return %c0_i32, %c0_i32_0, %c0_i32_1 : i32, i32, i32
  }
  func.func @transform_3(%arg0: i32) -> (i32, i32, i32) {
    %c0_i32 = arith.constant 0 : i32
    %c0_i32_0 = arith.constant 0 : i32
    %c0_i32_1 = arith.constant 0 : i32
    %c0_i32_2 = arith.constant 0 : i32
    return %c0_i32, %c0_i32_0, %c0_i32_1 : i32, i32, i32
  }
  func.func @transform_4(%arg0: i32) -> (i32, i32, i32) {
    %c0_i32 = arith.constant 0 : i32
    %c0_i32_0 = arith.constant 0 : i32
    %c0_i32_1 = arith.constant 0 : i32
    %c0_i32_2 = arith.constant 0 : i32
    return %c0_i32, %c0_i32_0, %c0_i32_1 : i32, i32, i32
  }
  func.func @transform_5(%arg0: i32) -> (i32, i32, i32) {
    %c0_i32 = arith.constant 0 : i32
    %c0_i32_0 = arith.constant 0 : i32
    %c0_i32_1 = arith.constant 0 : i32
    %c0_i32_2 = arith.constant 0 : i32
    return %c0_i32, %c0_i32_0, %c0_i32_1 : i32, i32, i32
  }
  func.func @transform_6(%arg0: i32) -> (i32, i32, i32) {
    %c0_i32 = arith.constant 0 : i32
    %c0_i32_0 = arith.constant 0 : i32
    %c0_i32_1 = arith.constant 0 : i32
    %c0_i32_2 = arith.constant 0 : i32
    return %c0_i32, %c0_i32_0, %c0_i32_1 : i32, i32, i32
  }
  func.func @transform_7(%arg0: i32) -> (i32, i32, i32) {
    %c0_i32 = arith.constant 0 : i32
    %c0_i32_0 = arith.constant 0 : i32
    %c0_i32_1 = arith.constant 0 : i32
    %c0_i32_2 = arith.constant 0 : i32
    return %c0_i32, %c0_i32_0, %c0_i32_1 : i32, i32, i32
  }
  func.func @transform_8(%arg0: i32) -> (i32, i32) {
    %c0_i32 = arith.constant 0 : i32
    %c0_i32_0 = arith.constant 0 : i32
    %c0_i32_1 = arith.constant 0 : i32
    return %c0_i32, %c0_i32_0 : i32, i32
  }
  func.func @transform_9(%arg0: i32) -> (i32, i32) {
    %c0_i32 = arith.constant 0 : i32
    %c0_i32_0 = arith.constant 0 : i32
    %c0_i32_1 = arith.constant 0 : i32
    return %c0_i32, %c0_i32_0 : i32, i32
  }
  func.func @transform_10(%arg0: i32) -> (i32, i32) {
    %c0_i32 = arith.constant 0 : i32
    %c0_i32_0 = arith.constant 0 : i32
    %c0_i32_1 = arith.constant 0 : i32
    return %c0_i32, %c0_i32_0 : i32, i32
  }
  func.func @transform_11(%arg0: i32) -> (i32, i32, i32) {
    %c0_i32 = arith.constant 0 : i32
    %c0_i32_0 = arith.constant 0 : i32
    %c0_i32_1 = arith.constant 0 : i32
    return %arg0, %c0_i32, %c0_i32_0 : i32, i32, i32
  }
}

module attributes {stable_mosaic.version = 11 : i64} {
  func.func @kernel(%arg0: i32, %arg1: memref<1x20x128xf32, #tpu.memory_space<vmem>>, %arg2: memref<20x1xf32, #tpu.memory_space<vmem>>, %arg3: memref<2x1x128xf32, #tpu.memory_space<vmem>>, %arg4: memref<2x1x128xf32, #tpu.memory_space<vmem>>, %arg5: memref<2x128x32xbf16, #tpu.memory_space<vmem>>, %arg6: memref<2x1x32xf32, #tpu.memory_space<vmem>>, %arg7: memref<2x1x32xf32, #tpu.memory_space<vmem>>, %arg8: memref<2x288x128xbf16, #tpu.memory_space<vmem>>, %arg9: memref<1x128xf32, #tpu.memory_space<vmem>>, %arg10: memref<1x128xf32, #tpu.memory_space<vmem>>, %arg11: memref<128x128xbf16, #tpu.memory_space<vmem>>, %arg12: memref<1x20x128xf32, #tpu.memory_space<vmem>>, %arg13: memref<20x288xf32, #tpu.memory_space<vmem>>) attributes {dimension_semantics = [#tpu.dimension_semantics<parallel>], iteration_bounds = array<i64: 2>, scalar_prefetch = 0 : i64, scratch_operands = 1 : i64, tpu.core_type = #tpu.core_type<tc>, window_params = [{transform_indices = @transform_0, window_bounds = array<i64: 1, 20, 128>}, {pipeline_mode = #tpu.pipeline_mode<synchronous>, transform_indices = @transform_1, window_bounds = array<i64: 20, 1>}, {pipeline_mode = #tpu.pipeline_mode<synchronous>, transform_indices = @transform_2, window_bounds = array<i64: 2, 1, 128>}, {pipeline_mode = #tpu.pipeline_mode<synchronous>, transform_indices = @transform_3, window_bounds = array<i64: 2, 1, 128>}, {pipeline_mode = #tpu.pipeline_mode<synchronous>, transform_indices = @transform_4, window_bounds = array<i64: 2, 128, 32>}, {pipeline_mode = #tpu.pipeline_mode<synchronous>, transform_indices = @transform_5, window_bounds = array<i64: 2, 1, 32>}, {pipeline_mode = #tpu.pipeline_mode<synchronous>, transform_indices = @transform_6, window_bounds = array<i64: 2, 1, 32>}, {pipeline_mode = #tpu.pipeline_mode<synchronous>, transform_indices = @transform_7, window_bounds = array<i64: 2, 288, 128>}, {pipeline_mode = #tpu.pipeline_mode<synchronous>, transform_indices = @transform_8, window_bounds = array<i64: 1, 128>}, {pipeline_mode = #tpu.pipeline_mode<synchronous>, transform_indices = @transform_9, window_bounds = array<i64: 1, 128>}, {pipeline_mode = #tpu.pipeline_mode<synchronous>, transform_indices = @transform_10, window_bounds = array<i64: 128, 128>}, {transform_indices = @transform_11, window_bounds = array<i64: 1, 20, 128>}]} {
    %c0 = arith.constant 0 : index
    %c0_0 = arith.constant 0 : index
    %0 = vector.load %arg2[%c0, %c0_0] : memref<20x1xf32, #tpu.memory_space<vmem>>, vector<20x1xf32>
    %c0_1 = arith.constant 0 : index
    %c0_2 = arith.constant 0 : index
    %c0_3 = arith.constant 0 : index
    %1 = vector.load %arg1[%c0_1, %c0_2, %c0_3] : memref<1x20x128xf32, #tpu.memory_space<vmem>>, vector<1x20x128xf32>
    %2 = vector.shape_cast %1 : vector<1x20x128xf32> to vector<20x128xf32>
    %cst = arith.constant 0.000000e+00 : f32
    %3 = vector.broadcast %cst : f32 to vector<20x288xf32>
    %c0_4 = arith.constant 0 : index
    %c0_5 = arith.constant 0 : index
    %4 = vector.load %arg13[%c0_4, %c0_5] : memref<20x288xf32, #tpu.memory_space<vmem>>, vector<20x288xf32>
    tpu.vector_store %arg13[%c0_4, %c0_5], %3 {strides = array<i32>} : memref<20x288xf32, #tpu.memory_space<vmem>>, vector<20x288xf32>,
    %c0_6 = arith.constant 0 : index
    %c0_7 = arith.constant 0 : index
    %c0_8 = arith.constant 0 : index
    %5 = vector.load %arg3[%c0_6, %c0_7, %c0_8] : memref<2x1x128xf32, #tpu.memory_space<vmem>>, vector<1x1x128xf32>
    %6 = vector.shape_cast %5 : vector<1x1x128xf32> to vector<1x128xf32>
    %7 = vector.broadcast %6 : vector<1x128xf32> to vector<20x128xf32>
    %8 = arith.mulf %2, %7 : vector<20x128xf32>
    %c0_9 = arith.constant 0 : index
    %c0_10 = arith.constant 0 : index
    %c0_11 = arith.constant 0 : index
    %9 = vector.load %arg4[%c0_9, %c0_10, %c0_11] : memref<2x1x128xf32, #tpu.memory_space<vmem>>, vector<1x1x128xf32>
    %10 = vector.shape_cast %9 : vector<1x1x128xf32> to vector<1x128xf32>
    %11 = vector.broadcast %10 : vector<1x128xf32> to vector<20x128xf32>
    %12 = arith.addf %8, %11 : vector<20x128xf32>
    %cst_12 = arith.constant 0.000000e+00 : f32
    %13 = vector.broadcast %cst_12 : f32 to vector<20x128xf32>
    %14 = arith.maximumf %12, %13 : vector<20x128xf32>
    %15 = arith.truncf %14 : vector<20x128xf32> to vector<20x128xbf16>
    %c0_13 = arith.constant 0 : index
    %c0_14 = arith.constant 0 : index
    %c0_15 = arith.constant 0 : index
    %16 = vector.load %arg5[%c0_13, %c0_14, %c0_15] : memref<2x128x32xbf16, #tpu.memory_space<vmem>>, vector<1x128x32xbf16>
    %17 = vector.shape_cast %16 : vector<1x128x32xbf16> to vector<128x32xbf16>
    %cst_16 = arith.constant dense<0.000000e+00> : vector<20x32xf32>
    %18 = tpu.matmul %15, %17, %cst_16 {dimension_numbers = #tpu.dot_dimension_numbers<[1], [0], [0], [1], [0, 0, 1, 1], [], []>} : vector<20x128xbf16>, vector<128x32xbf16>, vector<20x32xf32> -> vector<20x32xf32>
    %c0_17 = arith.constant 0 : index
    %c0_18 = arith.constant 0 : index
    %c0_19 = arith.constant 0 : index
    %19 = vector.load %arg6[%c0_17, %c0_18, %c0_19] : memref<2x1x32xf32, #tpu.memory_space<vmem>>, vector<1x1x32xf32>
    %20 = vector.shape_cast %19 : vector<1x1x32xf32> to vector<1x32xf32>
    %21 = vector.broadcast %20 : vector<1x32xf32> to vector<20x32xf32>
    %22 = arith.mulf %18, %21 : vector<20x32xf32>
    %c0_20 = arith.constant 0 : index
    %c0_21 = arith.constant 0 : index
    %c0_22 = arith.constant 0 : index
    %23 = vector.load %arg7[%c0_20, %c0_21, %c0_22] : memref<2x1x32xf32, #tpu.memory_space<vmem>>, vector<1x1x32xf32>
    %24 = vector.shape_cast %23 : vector<1x1x32xf32> to vector<1x32xf32>
    %25 = vector.broadcast %24 : vector<1x32xf32> to vector<20x32xf32>
    %26 = arith.addf %22, %25 : vector<20x32xf32>
    %cst_23 = arith.constant 0.000000e+00 : f32
    %27 = vector.broadcast %cst_23 : f32 to vector<20x32xf32>
    %28 = arith.maximumf %26, %27 : vector<20x32xf32>
    %29 = vector.broadcast %0 : vector<20x1xf32> to vector<20x32xf32>
    %30 = arith.mulf %28, %29 : vector<20x32xf32>
    %31 = vector.extract_strided_slice %30 {offsets = [0, 0], sizes = [14, 32], strides = [1, 1]} : vector<20x32xf32> to vector<14x32xf32>
    %c6 = arith.constant 6 : index
    %c0_24 = arith.constant 0 : index
    %32 = vector.load %arg13[%c6, %c0_24] : memref<20x288xf32, #tpu.memory_space<vmem>>, vector<14x32xf32>
    tpu.vector_store %arg13[%c6, %c0_24], %31 {strides = array<i32>} : memref<20x288xf32, #tpu.memory_space<vmem>>, vector<14x32xf32>,
    %33 = vector.extract_strided_slice %30 {offsets = [0, 0], sizes = [15, 32], strides = [1, 1]} : vector<20x32xf32> to vector<15x32xf32>
    %c5 = arith.constant 5 : index
    %c32 = arith.constant 32 : index
    %34 = vector.load %arg13[%c5, %c32] : memref<20x288xf32, #tpu.memory_space<vmem>>, vector<15x32xf32>
    tpu.vector_store %arg13[%c5, %c32], %33 {strides = array<i32>} : memref<20x288xf32, #tpu.memory_space<vmem>>, vector<15x32xf32>,
    %35 = vector.extract_strided_slice %30 {offsets = [0, 0], sizes = [16, 32], strides = [1, 1]} : vector<20x32xf32> to vector<16x32xf32>
    %c4 = arith.constant 4 : index
    %c64 = arith.constant 64 : index
    %36 = vector.load %arg13[%c4, %c64] : memref<20x288xf32, #tpu.memory_space<vmem>>, vector<16x32xf32>
    tpu.vector_store %arg13[%c4, %c64], %35 {strides = array<i32>} : memref<20x288xf32, #tpu.memory_space<vmem>>, vector<16x32xf32>,
    %37 = vector.extract_strided_slice %30 {offsets = [0, 0], sizes = [19, 32], strides = [1, 1]} : vector<20x32xf32> to vector<19x32xf32>
    %c1 = arith.constant 1 : index
    %c96 = arith.constant 96 : index
    %38 = vector.load %arg13[%c1, %c96] : memref<20x288xf32, #tpu.memory_space<vmem>>, vector<19x32xf32>
    tpu.vector_store %arg13[%c1, %c96], %37 {strides = array<i32>} : memref<20x288xf32, #tpu.memory_space<vmem>>, vector<19x32xf32>,
    %c0_25 = arith.constant 0 : index
    %c128 = arith.constant 128 : index
    %39 = vector.load %arg13[%c0_25, %c128] : memref<20x288xf32, #tpu.memory_space<vmem>>, vector<20x32xf32>
    tpu.vector_store %arg13[%c0_25, %c128], %30 {strides = array<i32>} : memref<20x288xf32, #tpu.memory_space<vmem>>, vector<20x32xf32>,
    %40 = vector.extract_strided_slice %30 {offsets = [1, 0], sizes = [19, 32], strides = [1, 1]} : vector<20x32xf32> to vector<19x32xf32>
    %c0_26 = arith.constant 0 : index
    %c160 = arith.constant 160 : index
    %41 = vector.load %arg13[%c0_26, %c160] : memref<20x288xf32, #tpu.memory_space<vmem>>, vector<19x32xf32>
    tpu.vector_store %arg13[%c0_26, %c160], %40 {strides = array<i32>} : memref<20x288xf32, #tpu.memory_space<vmem>>, vector<19x32xf32>,
    %42 = vector.extract_strided_slice %30 {offsets = [4, 0], sizes = [16, 32], strides = [1, 1]} : vector<20x32xf32> to vector<16x32xf32>
    %c0_27 = arith.constant 0 : index
    %c192 = arith.constant 192 : index
    %43 = vector.load %arg13[%c0_27, %c192] : memref<20x288xf32, #tpu.memory_space<vmem>>, vector<16x32xf32>
    tpu.vector_store %arg13[%c0_27, %c192], %42 {strides = array<i32>} : memref<20x288xf32, #tpu.memory_space<vmem>>, vector<16x32xf32>,
    %44 = vector.extract_strided_slice %30 {offsets = [5, 0], sizes = [15, 32], strides = [1, 1]} : vector<20x32xf32> to vector<15x32xf32>
    %c0_28 = arith.constant 0 : index
    %c224 = arith.constant 224 : index
    %45 = vector.load %arg13[%c0_28, %c224] : memref<20x288xf32, #tpu.memory_space<vmem>>, vector<15x32xf32>
    tpu.vector_store %arg13[%c0_28, %c224], %44 {strides = array<i32>} : memref<20x288xf32, #tpu.memory_space<vmem>>, vector<15x32xf32>,
    %46 = vector.extract_strided_slice %30 {offsets = [6, 0], sizes = [14, 32], strides = [1, 1]} : vector<20x32xf32> to vector<14x32xf32>
    %c0_29 = arith.constant 0 : index
    %c256 = arith.constant 256 : index
    %47 = vector.load %arg13[%c0_29, %c256] : memref<20x288xf32, #tpu.memory_space<vmem>>, vector<14x32xf32>
    tpu.vector_store %arg13[%c0_29, %c256], %46 {strides = array<i32>} : memref<20x288xf32, #tpu.memory_space<vmem>>, vector<14x32xf32>,
    %c0_30 = arith.constant 0 : index
    %c0_31 = arith.constant 0 : index
    %48 = vector.load %arg13[%c0_30, %c0_31] : memref<20x288xf32, #tpu.memory_space<vmem>>, vector<20x288xf32>
    %49 = arith.truncf %48 : vector<20x288xf32> to vector<20x288xbf16>
    %c0_32 = arith.constant 0 : index
    %c0_33 = arith.constant 0 : index
    %c0_34 = arith.constant 0 : index
    %50 = vector.load %arg8[%c0_32, %c0_33, %c0_34] : memref<2x288x128xbf16, #tpu.memory_space<vmem>>, vector<1x288x128xbf16>
    %51 = vector.shape_cast %50 : vector<1x288x128xbf16> to vector<288x128xbf16>
    %cst_35 = arith.constant dense<0.000000e+00> : vector<20x128xf32>
    %52 = tpu.matmul %49, %51, %cst_35 {dimension_numbers = #tpu.dot_dimension_numbers<[1], [0], [0], [1], [0, 0, 1, 1], [], []>} : vector<20x288xbf16>, vector<288x128xbf16>, vector<20x128xf32> -> vector<20x128xf32>
    %53 = arith.addf %2, %52 : vector<20x128xf32>
    %c1_36 = arith.constant 1 : index
    %c0_37 = arith.constant 0 : index
    %c0_38 = arith.constant 0 : index
    %54 = vector.load %arg3[%c1_36, %c0_37, %c0_38] : memref<2x1x128xf32, #tpu.memory_space<vmem>>, vector<1x1x128xf32>
    %55 = vector.shape_cast %54 : vector<1x1x128xf32> to vector<1x128xf32>
    %56 = vector.broadcast %55 : vector<1x128xf32> to vector<20x128xf32>
    %57 = arith.mulf %53, %56 : vector<20x128xf32>
    %c1_39 = arith.constant 1 : index
    %c0_40 = arith.constant 0 : index
    %c0_41 = arith.constant 0 : index
    %58 = vector.load %arg4[%c1_39, %c0_40, %c0_41] : memref<2x1x128xf32, #tpu.memory_space<vmem>>, vector<1x1x128xf32>
    %59 = vector.shape_cast %58 : vector<1x1x128xf32> to vector<1x128xf32>
    %60 = vector.broadcast %59 : vector<1x128xf32> to vector<20x128xf32>
    %61 = arith.addf %57, %60 : vector<20x128xf32>
    %cst_42 = arith.constant 0.000000e+00 : f32
    %62 = vector.broadcast %cst_42 : f32 to vector<20x128xf32>
    %63 = arith.maximumf %61, %62 : vector<20x128xf32>
    %64 = arith.truncf %63 : vector<20x128xf32> to vector<20x128xbf16>
    %c1_43 = arith.constant 1 : index
    %c0_44 = arith.constant 0 : index
    %c0_45 = arith.constant 0 : index
    %65 = vector.load %arg5[%c1_43, %c0_44, %c0_45] : memref<2x128x32xbf16, #tpu.memory_space<vmem>>, vector<1x128x32xbf16>
    %66 = vector.shape_cast %65 : vector<1x128x32xbf16> to vector<128x32xbf16>
    %cst_46 = arith.constant dense<0.000000e+00> : vector<20x32xf32>
    %67 = tpu.matmul %64, %66, %cst_46 {dimension_numbers = #tpu.dot_dimension_numbers<[1], [0], [0], [1], [0, 0, 1, 1], [], []>} : vector<20x128xbf16>, vector<128x32xbf16>, vector<20x32xf32> -> vector<20x32xf32>
    %c1_47 = arith.constant 1 : index
    %c0_48 = arith.constant 0 : index
    %c0_49 = arith.constant 0 : index
    %68 = vector.load %arg6[%c1_47, %c0_48, %c0_49] : memref<2x1x32xf32, #tpu.memory_space<vmem>>, vector<1x1x32xf32>
    %69 = vector.shape_cast %68 : vector<1x1x32xf32> to vector<1x32xf32>
    %70 = vector.broadcast %69 : vector<1x32xf32> to vector<20x32xf32>
    %71 = arith.mulf %67, %70 : vector<20x32xf32>
    %c1_50 = arith.constant 1 : index
    %c0_51 = arith.constant 0 : index
    %c0_52 = arith.constant 0 : index
    %72 = vector.load %arg7[%c1_50, %c0_51, %c0_52] : memref<2x1x32xf32, #tpu.memory_space<vmem>>, vector<1x1x32xf32>
    %73 = vector.shape_cast %72 : vector<1x1x32xf32> to vector<1x32xf32>
    %74 = vector.broadcast %73 : vector<1x32xf32> to vector<20x32xf32>
    %75 = arith.addf %71, %74 : vector<20x32xf32>
    %cst_53 = arith.constant 0.000000e+00 : f32
    %76 = vector.broadcast %cst_53 : f32 to vector<20x32xf32>
    %77 = arith.maximumf %75, %76 : vector<20x32xf32>
    %78 = vector.broadcast %0 : vector<20x1xf32> to vector<20x32xf32>
    %79 = arith.mulf %77, %78 : vector<20x32xf32>
    %80 = vector.extract_strided_slice %79 {offsets = [0, 0], sizes = [14, 32], strides = [1, 1]} : vector<20x32xf32> to vector<14x32xf32>
    %c6_54 = arith.constant 6 : index
    %c0_55 = arith.constant 0 : index
    %81 = vector.load %arg13[%c6_54, %c0_55] : memref<20x288xf32, #tpu.memory_space<vmem>>, vector<14x32xf32>
    tpu.vector_store %arg13[%c6_54, %c0_55], %80 {strides = array<i32>} : memref<20x288xf32, #tpu.memory_space<vmem>>, vector<14x32xf32>,
    %82 = vector.extract_strided_slice %79 {offsets = [0, 0], sizes = [15, 32], strides = [1, 1]} : vector<20x32xf32> to vector<15x32xf32>
    %c5_56 = arith.constant 5 : index
    %c32_57 = arith.constant 32 : index
    %83 = vector.load %arg13[%c5_56, %c32_57] : memref<20x288xf32, #tpu.memory_space<vmem>>, vector<15x32xf32>
    tpu.vector_store %arg13[%c5_56, %c32_57], %82 {strides = array<i32>} : memref<20x288xf32, #tpu.memory_space<vmem>>, vector<15x32xf32>,
    %84 = vector.extract_strided_slice %79 {offsets = [0, 0], sizes = [16, 32], strides = [1, 1]} : vector<20x32xf32> to vector<16x32xf32>
    %c4_58 = arith.constant 4 : index
    %c64_59 = arith.constant 64 : index
    %85 = vector.load %arg13[%c4_58, %c64_59] : memref<20x288xf32, #tpu.memory_space<vmem>>, vector<16x32xf32>
    tpu.vector_store %arg13[%c4_58, %c64_59], %84 {strides = array<i32>} : memref<20x288xf32, #tpu.memory_space<vmem>>, vector<16x32xf32>,
    %86 = vector.extract_strided_slice %79 {offsets = [0, 0], sizes = [19, 32], strides = [1, 1]} : vector<20x32xf32> to vector<19x32xf32>
    %c1_60 = arith.constant 1 : index
    %c96_61 = arith.constant 96 : index
    %87 = vector.load %arg13[%c1_60, %c96_61] : memref<20x288xf32, #tpu.memory_space<vmem>>, vector<19x32xf32>
    tpu.vector_store %arg13[%c1_60, %c96_61], %86 {strides = array<i32>} : memref<20x288xf32, #tpu.memory_space<vmem>>, vector<19x32xf32>,
    %c0_62 = arith.constant 0 : index
    %c128_63 = arith.constant 128 : index
    %88 = vector.load %arg13[%c0_62, %c128_63] : memref<20x288xf32, #tpu.memory_space<vmem>>, vector<20x32xf32>
    tpu.vector_store %arg13[%c0_62, %c128_63], %79 {strides = array<i32>} : memref<20x288xf32, #tpu.memory_space<vmem>>, vector<20x32xf32>,
    %89 = vector.extract_strided_slice %79 {offsets = [1, 0], sizes = [19, 32], strides = [1, 1]} : vector<20x32xf32> to vector<19x32xf32>
    %c0_64 = arith.constant 0 : index
    %c160_65 = arith.constant 160 : index
    %90 = vector.load %arg13[%c0_64, %c160_65] : memref<20x288xf32, #tpu.memory_space<vmem>>, vector<19x32xf32>
    tpu.vector_store %arg13[%c0_64, %c160_65], %89 {strides = array<i32>} : memref<20x288xf32, #tpu.memory_space<vmem>>, vector<19x32xf32>,
    %91 = vector.extract_strided_slice %79 {offsets = [4, 0], sizes = [16, 32], strides = [1, 1]} : vector<20x32xf32> to vector<16x32xf32>
    %c0_66 = arith.constant 0 : index
    %c192_67 = arith.constant 192 : index
    %92 = vector.load %arg13[%c0_66, %c192_67] : memref<20x288xf32, #tpu.memory_space<vmem>>, vector<16x32xf32>
    tpu.vector_store %arg13[%c0_66, %c192_67], %91 {strides = array<i32>} : memref<20x288xf32, #tpu.memory_space<vmem>>, vector<16x32xf32>,
    %93 = vector.extract_strided_slice %79 {offsets = [5, 0], sizes = [15, 32], strides = [1, 1]} : vector<20x32xf32> to vector<15x32xf32>
    %c0_68 = arith.constant 0 : index
    %c224_69 = arith.constant 224 : index
    %94 = vector.load %arg13[%c0_68, %c224_69] : memref<20x288xf32, #tpu.memory_space<vmem>>, vector<15x32xf32>
    tpu.vector_store %arg13[%c0_68, %c224_69], %93 {strides = array<i32>} : memref<20x288xf32, #tpu.memory_space<vmem>>, vector<15x32xf32>,
    %95 = vector.extract_strided_slice %79 {offsets = [6, 0], sizes = [14, 32], strides = [1, 1]} : vector<20x32xf32> to vector<14x32xf32>
    %c0_70 = arith.constant 0 : index
    %c256_71 = arith.constant 256 : index
    %96 = vector.load %arg13[%c0_70, %c256_71] : memref<20x288xf32, #tpu.memory_space<vmem>>, vector<14x32xf32>
    tpu.vector_store %arg13[%c0_70, %c256_71], %95 {strides = array<i32>} : memref<20x288xf32, #tpu.memory_space<vmem>>, vector<14x32xf32>,
    %c0_72 = arith.constant 0 : index
    %c0_73 = arith.constant 0 : index
    %97 = vector.load %arg13[%c0_72, %c0_73] : memref<20x288xf32, #tpu.memory_space<vmem>>, vector<20x288xf32>
    %98 = arith.truncf %97 : vector<20x288xf32> to vector<20x288xbf16>
    %c1_74 = arith.constant 1 : index
    %c0_75 = arith.constant 0 : index
    %c0_76 = arith.constant 0 : index
    %99 = vector.load %arg8[%c1_74, %c0_75, %c0_76] : memref<2x288x128xbf16, #tpu.memory_space<vmem>>, vector<1x288x128xbf16>
    %100 = vector.shape_cast %99 : vector<1x288x128xbf16> to vector<288x128xbf16>
    %cst_77 = arith.constant dense<0.000000e+00> : vector<20x128xf32>
    %101 = tpu.matmul %98, %100, %cst_77 {dimension_numbers = #tpu.dot_dimension_numbers<[1], [0], [0], [1], [0, 0, 1, 1], [], []>} : vector<20x288xbf16>, vector<288x128xbf16>, vector<20x128xf32> -> vector<20x128xf32>
    %102 = arith.addf %53, %101 : vector<20x128xf32>
    %c0_78 = arith.constant 0 : index
    %c0_79 = arith.constant 0 : index
    %103 = vector.load %arg9[%c0_78, %c0_79] : memref<1x128xf32, #tpu.memory_space<vmem>>, vector<1x128xf32>
    %104 = vector.broadcast %103 : vector<1x128xf32> to vector<20x128xf32>
    %105 = arith.mulf %102, %104 : vector<20x128xf32>
    %c0_80 = arith.constant 0 : index
    %c0_81 = arith.constant 0 : index
    %106 = vector.load %arg10[%c0_80, %c0_81] : memref<1x128xf32, #tpu.memory_space<vmem>>, vector<1x128xf32>
    %107 = vector.broadcast %106 : vector<1x128xf32> to vector<20x128xf32>
    %108 = arith.addf %105, %107 : vector<20x128xf32>
    %cst_82 = arith.constant 0.000000e+00 : f32
    %109 = vector.broadcast %cst_82 : f32 to vector<20x128xf32>
    %110 = arith.maximumf %108, %109 : vector<20x128xf32>
    %111 = arith.truncf %110 : vector<20x128xf32> to vector<20x128xbf16>
    %c0_83 = arith.constant 0 : index
    %c0_84 = arith.constant 0 : index
    %112 = vector.load %arg11[%c0_83, %c0_84] : memref<128x128xbf16, #tpu.memory_space<vmem>>, vector<128x128xbf16>
    %cst_85 = arith.constant dense<0.000000e+00> : vector<20x128xf32>
    %113 = tpu.matmul %111, %112, %cst_85 {dimension_numbers = #tpu.dot_dimension_numbers<[1], [0], [0], [1], [0, 0, 1, 1], [], []>} : vector<20x128xbf16>, vector<128x128xbf16>, vector<20x128xf32> -> vector<20x128xf32>
    %c0_86 = arith.constant 0 : index
    %c0_87 = arith.constant 0 : index
    %c0_88 = arith.constant 0 : index
    %114 = vector.load %arg12[%c0_86, %c0_87, %c0_88] : memref<1x20x128xf32, #tpu.memory_space<vmem>>, vector<1x20x128xf32>
    %115 = vector.shape_cast %114 : vector<1x20x128xf32> to vector<20x128xf32>
    %116 = vector.shape_cast %113 : vector<20x128xf32> to vector<1x20x128xf32>
    tpu.vector_store %arg12[%c0_86, %c0_87, %c0_88], %116 {strides = array<i32>} : memref<1x20x128xf32, #tpu.memory_space<vmem>>, vector<1x20x128xf32>,
    return
  }
  func.func @transform_0(%arg0: i32) -> (i32, i32, i32) {
    %c0_i32 = arith.constant 0 : i32
    %c0_i32_0 = arith.constant 0 : i32
    %c0_i32_1 = arith.constant 0 : i32
    return %arg0, %c0_i32, %c0_i32_0 : i32, i32, i32
  }
  func.func @transform_1(%arg0: i32) -> (i32, i32) {
    %c0_i32 = arith.constant 0 : i32
    %c0_i32_0 = arith.constant 0 : i32
    %c0_i32_1 = arith.constant 0 : i32
    return %c0_i32, %c0_i32_0 : i32, i32
  }
  func.func @transform_2(%arg0: i32) -> (i32, i32, i32) {
    %c0_i32 = arith.constant 0 : i32
    %c0_i32_0 = arith.constant 0 : i32
    %c0_i32_1 = arith.constant 0 : i32
    %c0_i32_2 = arith.constant 0 : i32
    return %c0_i32, %c0_i32_0, %c0_i32_1 : i32, i32, i32
  }
  func.func @transform_3(%arg0: i32) -> (i32, i32, i32) {
    %c0_i32 = arith.constant 0 : i32
    %c0_i32_0 = arith.constant 0 : i32
    %c0_i32_1 = arith.constant 0 : i32
    %c0_i32_2 = arith.constant 0 : i32
    return %c0_i32, %c0_i32_0, %c0_i32_1 : i32, i32, i32
  }
  func.func @transform_4(%arg0: i32) -> (i32, i32, i32) {
    %c0_i32 = arith.constant 0 : i32
    %c0_i32_0 = arith.constant 0 : i32
    %c0_i32_1 = arith.constant 0 : i32
    %c0_i32_2 = arith.constant 0 : i32
    return %c0_i32, %c0_i32_0, %c0_i32_1 : i32, i32, i32
  }
  func.func @transform_5(%arg0: i32) -> (i32, i32, i32) {
    %c0_i32 = arith.constant 0 : i32
    %c0_i32_0 = arith.constant 0 : i32
    %c0_i32_1 = arith.constant 0 : i32
    %c0_i32_2 = arith.constant 0 : i32
    return %c0_i32, %c0_i32_0, %c0_i32_1 : i32, i32, i32
  }
  func.func @transform_6(%arg0: i32) -> (i32, i32, i32) {
    %c0_i32 = arith.constant 0 : i32
    %c0_i32_0 = arith.constant 0 : i32
    %c0_i32_1 = arith.constant 0 : i32
    %c0_i32_2 = arith.constant 0 : i32
    return %c0_i32, %c0_i32_0, %c0_i32_1 : i32, i32, i32
  }
  func.func @transform_7(%arg0: i32) -> (i32, i32, i32) {
    %c0_i32 = arith.constant 0 : i32
    %c0_i32_0 = arith.constant 0 : i32
    %c0_i32_1 = arith.constant 0 : i32
    %c0_i32_2 = arith.constant 0 : i32
    return %c0_i32, %c0_i32_0, %c0_i32_1 : i32, i32, i32
  }
  func.func @transform_8(%arg0: i32) -> (i32, i32) {
    %c0_i32 = arith.constant 0 : i32
    %c0_i32_0 = arith.constant 0 : i32
    %c0_i32_1 = arith.constant 0 : i32
    return %c0_i32, %c0_i32_0 : i32, i32
  }
  func.func @transform_9(%arg0: i32) -> (i32, i32) {
    %c0_i32 = arith.constant 0 : i32
    %c0_i32_0 = arith.constant 0 : i32
    %c0_i32_1 = arith.constant 0 : i32
    return %c0_i32, %c0_i32_0 : i32, i32
  }
  func.func @transform_10(%arg0: i32) -> (i32, i32) {
    %c0_i32 = arith.constant 0 : i32
    %c0_i32_0 = arith.constant 0 : i32
    %c0_i32_1 = arith.constant 0 : i32
    return %c0_i32, %c0_i32_0 : i32, i32
  }
  func.func @transform_11(%arg0: i32) -> (i32, i32, i32) {
    %c0_i32 = arith.constant 0 : i32
    %c0_i32_0 = arith.constant 0 : i32
    %c0_i32_1 = arith.constant 0 : i32
    return %arg0, %c0_i32, %c0_i32_0 : i32, i32, i32
  }
}

module attributes {stable_mosaic.version = 11 : i64} {
  func.func @kernel(%arg0: i32, %arg1: memref<1x6x128xf32, #tpu.memory_space<vmem>>, %arg2: memref<6x1xf32, #tpu.memory_space<vmem>>, %arg3: memref<2x1x128xf32, #tpu.memory_space<vmem>>, %arg4: memref<2x1x128xf32, #tpu.memory_space<vmem>>, %arg5: memref<2x128x32xbf16, #tpu.memory_space<vmem>>, %arg6: memref<2x1x32xf32, #tpu.memory_space<vmem>>, %arg7: memref<2x1x32xf32, #tpu.memory_space<vmem>>, %arg8: memref<2x288x128xbf16, #tpu.memory_space<vmem>>, %arg9: memref<1x128xf32, #tpu.memory_space<vmem>>, %arg10: memref<1x128xf32, #tpu.memory_space<vmem>>, %arg11: memref<128x128xbf16, #tpu.memory_space<vmem>>, %arg12: memref<1x6x128xf32, #tpu.memory_space<vmem>>, %arg13: memref<6x288xf32, #tpu.memory_space<vmem>>) attributes {dimension_semantics = [#tpu.dimension_semantics<parallel>], iteration_bounds = array<i64: 2>, scalar_prefetch = 0 : i64, scratch_operands = 1 : i64, tpu.core_type = #tpu.core_type<tc>, window_params = [{transform_indices = @transform_0, window_bounds = array<i64: 1, 6, 128>}, {pipeline_mode = #tpu.pipeline_mode<synchronous>, transform_indices = @transform_1, window_bounds = array<i64: 6, 1>}, {pipeline_mode = #tpu.pipeline_mode<synchronous>, transform_indices = @transform_2, window_bounds = array<i64: 2, 1, 128>}, {pipeline_mode = #tpu.pipeline_mode<synchronous>, transform_indices = @transform_3, window_bounds = array<i64: 2, 1, 128>}, {pipeline_mode = #tpu.pipeline_mode<synchronous>, transform_indices = @transform_4, window_bounds = array<i64: 2, 128, 32>}, {pipeline_mode = #tpu.pipeline_mode<synchronous>, transform_indices = @transform_5, window_bounds = array<i64: 2, 1, 32>}, {pipeline_mode = #tpu.pipeline_mode<synchronous>, transform_indices = @transform_6, window_bounds = array<i64: 2, 1, 32>}, {pipeline_mode = #tpu.pipeline_mode<synchronous>, transform_indices = @transform_7, window_bounds = array<i64: 2, 288, 128>}, {pipeline_mode = #tpu.pipeline_mode<synchronous>, transform_indices = @transform_8, window_bounds = array<i64: 1, 128>}, {pipeline_mode = #tpu.pipeline_mode<synchronous>, transform_indices = @transform_9, window_bounds = array<i64: 1, 128>}, {pipeline_mode = #tpu.pipeline_mode<synchronous>, transform_indices = @transform_10, window_bounds = array<i64: 128, 128>}, {transform_indices = @transform_11, window_bounds = array<i64: 1, 6, 128>}]} {
    %c0 = arith.constant 0 : index
    %c0_0 = arith.constant 0 : index
    %0 = vector.load %arg2[%c0, %c0_0] : memref<6x1xf32, #tpu.memory_space<vmem>>, vector<6x1xf32>
    %c0_1 = arith.constant 0 : index
    %c0_2 = arith.constant 0 : index
    %c0_3 = arith.constant 0 : index
    %1 = vector.load %arg1[%c0_1, %c0_2, %c0_3] : memref<1x6x128xf32, #tpu.memory_space<vmem>>, vector<1x6x128xf32>
    %2 = vector.shape_cast %1 : vector<1x6x128xf32> to vector<6x128xf32>
    %cst = arith.constant 0.000000e+00 : f32
    %3 = vector.broadcast %cst : f32 to vector<6x288xf32>
    %c0_4 = arith.constant 0 : index
    %c0_5 = arith.constant 0 : index
    %4 = vector.load %arg13[%c0_4, %c0_5] : memref<6x288xf32, #tpu.memory_space<vmem>>, vector<6x288xf32>
    tpu.vector_store %arg13[%c0_4, %c0_5], %3 {strides = array<i32>} : memref<6x288xf32, #tpu.memory_space<vmem>>, vector<6x288xf32>,
    %c0_6 = arith.constant 0 : index
    %c0_7 = arith.constant 0 : index
    %c0_8 = arith.constant 0 : index
    %5 = vector.load %arg3[%c0_6, %c0_7, %c0_8] : memref<2x1x128xf32, #tpu.memory_space<vmem>>, vector<1x1x128xf32>
    %6 = vector.shape_cast %5 : vector<1x1x128xf32> to vector<1x128xf32>
    %7 = vector.broadcast %6 : vector<1x128xf32> to vector<6x128xf32>
    %8 = arith.mulf %2, %7 : vector<6x128xf32>
    %c0_9 = arith.constant 0 : index
    %c0_10 = arith.constant 0 : index
    %c0_11 = arith.constant 0 : index
    %9 = vector.load %arg4[%c0_9, %c0_10, %c0_11] : memref<2x1x128xf32, #tpu.memory_space<vmem>>, vector<1x1x128xf32>
    %10 = vector.shape_cast %9 : vector<1x1x128xf32> to vector<1x128xf32>
    %11 = vector.broadcast %10 : vector<1x128xf32> to vector<6x128xf32>
    %12 = arith.addf %8, %11 : vector<6x128xf32>
    %cst_12 = arith.constant 0.000000e+00 : f32
    %13 = vector.broadcast %cst_12 : f32 to vector<6x128xf32>
    %14 = arith.maximumf %12, %13 : vector<6x128xf32>
    %15 = arith.truncf %14 : vector<6x128xf32> to vector<6x128xbf16>
    %c0_13 = arith.constant 0 : index
    %c0_14 = arith.constant 0 : index
    %c0_15 = arith.constant 0 : index
    %16 = vector.load %arg5[%c0_13, %c0_14, %c0_15] : memref<2x128x32xbf16, #tpu.memory_space<vmem>>, vector<1x128x32xbf16>
    %17 = vector.shape_cast %16 : vector<1x128x32xbf16> to vector<128x32xbf16>
    %cst_16 = arith.constant dense<0.000000e+00> : vector<6x32xf32>
    %18 = tpu.matmul %15, %17, %cst_16 {dimension_numbers = #tpu.dot_dimension_numbers<[1], [0], [0], [1], [0, 0, 1, 1], [], []>} : vector<6x128xbf16>, vector<128x32xbf16>, vector<6x32xf32> -> vector<6x32xf32>
    %c0_17 = arith.constant 0 : index
    %c0_18 = arith.constant 0 : index
    %c0_19 = arith.constant 0 : index
    %19 = vector.load %arg6[%c0_17, %c0_18, %c0_19] : memref<2x1x32xf32, #tpu.memory_space<vmem>>, vector<1x1x32xf32>
    %20 = vector.shape_cast %19 : vector<1x1x32xf32> to vector<1x32xf32>
    %21 = vector.broadcast %20 : vector<1x32xf32> to vector<6x32xf32>
    %22 = arith.mulf %18, %21 : vector<6x32xf32>
    %c0_20 = arith.constant 0 : index
    %c0_21 = arith.constant 0 : index
    %c0_22 = arith.constant 0 : index
    %23 = vector.load %arg7[%c0_20, %c0_21, %c0_22] : memref<2x1x32xf32, #tpu.memory_space<vmem>>, vector<1x1x32xf32>
    %24 = vector.shape_cast %23 : vector<1x1x32xf32> to vector<1x32xf32>
    %25 = vector.broadcast %24 : vector<1x32xf32> to vector<6x32xf32>
    %26 = arith.addf %22, %25 : vector<6x32xf32>
    %cst_23 = arith.constant 0.000000e+00 : f32
    %27 = vector.broadcast %cst_23 : f32 to vector<6x32xf32>
    %28 = arith.maximumf %26, %27 : vector<6x32xf32>
    %29 = vector.broadcast %0 : vector<6x1xf32> to vector<6x32xf32>
    %30 = arith.mulf %28, %29 : vector<6x32xf32>
    %31 = vector.extract_strided_slice %30 {offsets = [0, 0], sizes = [2, 32], strides = [1, 1]} : vector<6x32xf32> to vector<2x32xf32>
    %c4 = arith.constant 4 : index
    %c0_24 = arith.constant 0 : index
    %32 = vector.load %arg13[%c4, %c0_24] : memref<6x288xf32, #tpu.memory_space<vmem>>, vector<2x32xf32>
    tpu.vector_store %arg13[%c4, %c0_24], %31 {strides = array<i32>} : memref<6x288xf32, #tpu.memory_space<vmem>>, vector<2x32xf32>,
    %33 = vector.extract_strided_slice %30 {offsets = [0, 0], sizes = [3, 32], strides = [1, 1]} : vector<6x32xf32> to vector<3x32xf32>
    %c3 = arith.constant 3 : index
    %c32 = arith.constant 32 : index
    %34 = vector.load %arg13[%c3, %c32] : memref<6x288xf32, #tpu.memory_space<vmem>>, vector<3x32xf32>
    tpu.vector_store %arg13[%c3, %c32], %33 {strides = array<i32>} : memref<6x288xf32, #tpu.memory_space<vmem>>, vector<3x32xf32>,
    %35 = vector.extract_strided_slice %30 {offsets = [0, 0], sizes = [4, 32], strides = [1, 1]} : vector<6x32xf32> to vector<4x32xf32>
    %c2 = arith.constant 2 : index
    %c64 = arith.constant 64 : index
    %36 = vector.load %arg13[%c2, %c64] : memref<6x288xf32, #tpu.memory_space<vmem>>, vector<4x32xf32>
    tpu.vector_store %arg13[%c2, %c64], %35 {strides = array<i32>} : memref<6x288xf32, #tpu.memory_space<vmem>>, vector<4x32xf32>,
    %37 = vector.extract_strided_slice %30 {offsets = [0, 0], sizes = [5, 32], strides = [1, 1]} : vector<6x32xf32> to vector<5x32xf32>
    %c1 = arith.constant 1 : index
    %c96 = arith.constant 96 : index
    %38 = vector.load %arg13[%c1, %c96] : memref<6x288xf32, #tpu.memory_space<vmem>>, vector<5x32xf32>
    tpu.vector_store %arg13[%c1, %c96], %37 {strides = array<i32>} : memref<6x288xf32, #tpu.memory_space<vmem>>, vector<5x32xf32>,
    %c0_25 = arith.constant 0 : index
    %c128 = arith.constant 128 : index
    %39 = vector.load %arg13[%c0_25, %c128] : memref<6x288xf32, #tpu.memory_space<vmem>>, vector<6x32xf32>
    tpu.vector_store %arg13[%c0_25, %c128], %30 {strides = array<i32>} : memref<6x288xf32, #tpu.memory_space<vmem>>, vector<6x32xf32>,
    %40 = vector.extract_strided_slice %30 {offsets = [1, 0], sizes = [5, 32], strides = [1, 1]} : vector<6x32xf32> to vector<5x32xf32>
    %c0_26 = arith.constant 0 : index
    %c160 = arith.constant 160 : index
    %41 = vector.load %arg13[%c0_26, %c160] : memref<6x288xf32, #tpu.memory_space<vmem>>, vector<5x32xf32>
    tpu.vector_store %arg13[%c0_26, %c160], %40 {strides = array<i32>} : memref<6x288xf32, #tpu.memory_space<vmem>>, vector<5x32xf32>,
    %42 = vector.extract_strided_slice %30 {offsets = [2, 0], sizes = [4, 32], strides = [1, 1]} : vector<6x32xf32> to vector<4x32xf32>
    %c0_27 = arith.constant 0 : index
    %c192 = arith.constant 192 : index
    %43 = vector.load %arg13[%c0_27, %c192] : memref<6x288xf32, #tpu.memory_space<vmem>>, vector<4x32xf32>
    tpu.vector_store %arg13[%c0_27, %c192], %42 {strides = array<i32>} : memref<6x288xf32, #tpu.memory_space<vmem>>, vector<4x32xf32>,
    %44 = vector.extract_strided_slice %30 {offsets = [3, 0], sizes = [3, 32], strides = [1, 1]} : vector<6x32xf32> to vector<3x32xf32>
    %c0_28 = arith.constant 0 : index
    %c224 = arith.constant 224 : index
    %45 = vector.load %arg13[%c0_28, %c224] : memref<6x288xf32, #tpu.memory_space<vmem>>, vector<3x32xf32>
    tpu.vector_store %arg13[%c0_28, %c224], %44 {strides = array<i32>} : memref<6x288xf32, #tpu.memory_space<vmem>>, vector<3x32xf32>,
    %46 = vector.extract_strided_slice %30 {offsets = [4, 0], sizes = [2, 32], strides = [1, 1]} : vector<6x32xf32> to vector<2x32xf32>
    %c0_29 = arith.constant 0 : index
    %c256 = arith.constant 256 : index
    %47 = vector.load %arg13[%c0_29, %c256] : memref<6x288xf32, #tpu.memory_space<vmem>>, vector<2x32xf32>
    tpu.vector_store %arg13[%c0_29, %c256], %46 {strides = array<i32>} : memref<6x288xf32, #tpu.memory_space<vmem>>, vector<2x32xf32>,
    %c0_30 = arith.constant 0 : index
    %c0_31 = arith.constant 0 : index
    %48 = vector.load %arg13[%c0_30, %c0_31] : memref<6x288xf32, #tpu.memory_space<vmem>>, vector<6x288xf32>
    %49 = arith.truncf %48 : vector<6x288xf32> to vector<6x288xbf16>
    %c0_32 = arith.constant 0 : index
    %c0_33 = arith.constant 0 : index
    %c0_34 = arith.constant 0 : index
    %50 = vector.load %arg8[%c0_32, %c0_33, %c0_34] : memref<2x288x128xbf16, #tpu.memory_space<vmem>>, vector<1x288x128xbf16>
    %51 = vector.shape_cast %50 : vector<1x288x128xbf16> to vector<288x128xbf16>
    %cst_35 = arith.constant dense<0.000000e+00> : vector<6x128xf32>
    %52 = tpu.matmul %49, %51, %cst_35 {dimension_numbers = #tpu.dot_dimension_numbers<[1], [0], [0], [1], [0, 0, 1, 1], [], []>} : vector<6x288xbf16>, vector<288x128xbf16>, vector<6x128xf32> -> vector<6x128xf32>
    %53 = arith.addf %2, %52 : vector<6x128xf32>
    %c1_36 = arith.constant 1 : index
    %c0_37 = arith.constant 0 : index
    %c0_38 = arith.constant 0 : index
    %54 = vector.load %arg3[%c1_36, %c0_37, %c0_38] : memref<2x1x128xf32, #tpu.memory_space<vmem>>, vector<1x1x128xf32>
    %55 = vector.shape_cast %54 : vector<1x1x128xf32> to vector<1x128xf32>
    %56 = vector.broadcast %55 : vector<1x128xf32> to vector<6x128xf32>
    %57 = arith.mulf %53, %56 : vector<6x128xf32>
    %c1_39 = arith.constant 1 : index
    %c0_40 = arith.constant 0 : index
    %c0_41 = arith.constant 0 : index
    %58 = vector.load %arg4[%c1_39, %c0_40, %c0_41] : memref<2x1x128xf32, #tpu.memory_space<vmem>>, vector<1x1x128xf32>
    %59 = vector.shape_cast %58 : vector<1x1x128xf32> to vector<1x128xf32>
    %60 = vector.broadcast %59 : vector<1x128xf32> to vector<6x128xf32>
    %61 = arith.addf %57, %60 : vector<6x128xf32>
    %cst_42 = arith.constant 0.000000e+00 : f32
    %62 = vector.broadcast %cst_42 : f32 to vector<6x128xf32>
    %63 = arith.maximumf %61, %62 : vector<6x128xf32>
    %64 = arith.truncf %63 : vector<6x128xf32> to vector<6x128xbf16>
    %c1_43 = arith.constant 1 : index
    %c0_44 = arith.constant 0 : index
    %c0_45 = arith.constant 0 : index
    %65 = vector.load %arg5[%c1_43, %c0_44, %c0_45] : memref<2x128x32xbf16, #tpu.memory_space<vmem>>, vector<1x128x32xbf16>
    %66 = vector.shape_cast %65 : vector<1x128x32xbf16> to vector<128x32xbf16>
    %cst_46 = arith.constant dense<0.000000e+00> : vector<6x32xf32>
    %67 = tpu.matmul %64, %66, %cst_46 {dimension_numbers = #tpu.dot_dimension_numbers<[1], [0], [0], [1], [0, 0, 1, 1], [], []>} : vector<6x128xbf16>, vector<128x32xbf16>, vector<6x32xf32> -> vector<6x32xf32>
    %c1_47 = arith.constant 1 : index
    %c0_48 = arith.constant 0 : index
    %c0_49 = arith.constant 0 : index
    %68 = vector.load %arg6[%c1_47, %c0_48, %c0_49] : memref<2x1x32xf32, #tpu.memory_space<vmem>>, vector<1x1x32xf32>
    %69 = vector.shape_cast %68 : vector<1x1x32xf32> to vector<1x32xf32>
    %70 = vector.broadcast %69 : vector<1x32xf32> to vector<6x32xf32>
    %71 = arith.mulf %67, %70 : vector<6x32xf32>
    %c1_50 = arith.constant 1 : index
    %c0_51 = arith.constant 0 : index
    %c0_52 = arith.constant 0 : index
    %72 = vector.load %arg7[%c1_50, %c0_51, %c0_52] : memref<2x1x32xf32, #tpu.memory_space<vmem>>, vector<1x1x32xf32>
    %73 = vector.shape_cast %72 : vector<1x1x32xf32> to vector<1x32xf32>
    %74 = vector.broadcast %73 : vector<1x32xf32> to vector<6x32xf32>
    %75 = arith.addf %71, %74 : vector<6x32xf32>
    %cst_53 = arith.constant 0.000000e+00 : f32
    %76 = vector.broadcast %cst_53 : f32 to vector<6x32xf32>
    %77 = arith.maximumf %75, %76 : vector<6x32xf32>
    %78 = vector.broadcast %0 : vector<6x1xf32> to vector<6x32xf32>
    %79 = arith.mulf %77, %78 : vector<6x32xf32>
    %80 = vector.extract_strided_slice %79 {offsets = [0, 0], sizes = [2, 32], strides = [1, 1]} : vector<6x32xf32> to vector<2x32xf32>
    %c4_54 = arith.constant 4 : index
    %c0_55 = arith.constant 0 : index
    %81 = vector.load %arg13[%c4_54, %c0_55] : memref<6x288xf32, #tpu.memory_space<vmem>>, vector<2x32xf32>
    tpu.vector_store %arg13[%c4_54, %c0_55], %80 {strides = array<i32>} : memref<6x288xf32, #tpu.memory_space<vmem>>, vector<2x32xf32>,
    %82 = vector.extract_strided_slice %79 {offsets = [0, 0], sizes = [3, 32], strides = [1, 1]} : vector<6x32xf32> to vector<3x32xf32>
    %c3_56 = arith.constant 3 : index
    %c32_57 = arith.constant 32 : index
    %83 = vector.load %arg13[%c3_56, %c32_57] : memref<6x288xf32, #tpu.memory_space<vmem>>, vector<3x32xf32>
    tpu.vector_store %arg13[%c3_56, %c32_57], %82 {strides = array<i32>} : memref<6x288xf32, #tpu.memory_space<vmem>>, vector<3x32xf32>,
    %84 = vector.extract_strided_slice %79 {offsets = [0, 0], sizes = [4, 32], strides = [1, 1]} : vector<6x32xf32> to vector<4x32xf32>
    %c2_58 = arith.constant 2 : index
    %c64_59 = arith.constant 64 : index
    %85 = vector.load %arg13[%c2_58, %c64_59] : memref<6x288xf32, #tpu.memory_space<vmem>>, vector<4x32xf32>
    tpu.vector_store %arg13[%c2_58, %c64_59], %84 {strides = array<i32>} : memref<6x288xf32, #tpu.memory_space<vmem>>, vector<4x32xf32>,
    %86 = vector.extract_strided_slice %79 {offsets = [0, 0], sizes = [5, 32], strides = [1, 1]} : vector<6x32xf32> to vector<5x32xf32>
    %c1_60 = arith.constant 1 : index
    %c96_61 = arith.constant 96 : index
    %87 = vector.load %arg13[%c1_60, %c96_61] : memref<6x288xf32, #tpu.memory_space<vmem>>, vector<5x32xf32>
    tpu.vector_store %arg13[%c1_60, %c96_61], %86 {strides = array<i32>} : memref<6x288xf32, #tpu.memory_space<vmem>>, vector<5x32xf32>,
    %c0_62 = arith.constant 0 : index
    %c128_63 = arith.constant 128 : index
    %88 = vector.load %arg13[%c0_62, %c128_63] : memref<6x288xf32, #tpu.memory_space<vmem>>, vector<6x32xf32>
    tpu.vector_store %arg13[%c0_62, %c128_63], %79 {strides = array<i32>} : memref<6x288xf32, #tpu.memory_space<vmem>>, vector<6x32xf32>,
    %89 = vector.extract_strided_slice %79 {offsets = [1, 0], sizes = [5, 32], strides = [1, 1]} : vector<6x32xf32> to vector<5x32xf32>
    %c0_64 = arith.constant 0 : index
    %c160_65 = arith.constant 160 : index
    %90 = vector.load %arg13[%c0_64, %c160_65] : memref<6x288xf32, #tpu.memory_space<vmem>>, vector<5x32xf32>
    tpu.vector_store %arg13[%c0_64, %c160_65], %89 {strides = array<i32>} : memref<6x288xf32, #tpu.memory_space<vmem>>, vector<5x32xf32>,
    %91 = vector.extract_strided_slice %79 {offsets = [2, 0], sizes = [4, 32], strides = [1, 1]} : vector<6x32xf32> to vector<4x32xf32>
    %c0_66 = arith.constant 0 : index
    %c192_67 = arith.constant 192 : index
    %92 = vector.load %arg13[%c0_66, %c192_67] : memref<6x288xf32, #tpu.memory_space<vmem>>, vector<4x32xf32>
    tpu.vector_store %arg13[%c0_66, %c192_67], %91 {strides = array<i32>} : memref<6x288xf32, #tpu.memory_space<vmem>>, vector<4x32xf32>,
    %93 = vector.extract_strided_slice %79 {offsets = [3, 0], sizes = [3, 32], strides = [1, 1]} : vector<6x32xf32> to vector<3x32xf32>
    %c0_68 = arith.constant 0 : index
    %c224_69 = arith.constant 224 : index
    %94 = vector.load %arg13[%c0_68, %c224_69] : memref<6x288xf32, #tpu.memory_space<vmem>>, vector<3x32xf32>
    tpu.vector_store %arg13[%c0_68, %c224_69], %93 {strides = array<i32>} : memref<6x288xf32, #tpu.memory_space<vmem>>, vector<3x32xf32>,
    %95 = vector.extract_strided_slice %79 {offsets = [4, 0], sizes = [2, 32], strides = [1, 1]} : vector<6x32xf32> to vector<2x32xf32>
    %c0_70 = arith.constant 0 : index
    %c256_71 = arith.constant 256 : index
    %96 = vector.load %arg13[%c0_70, %c256_71] : memref<6x288xf32, #tpu.memory_space<vmem>>, vector<2x32xf32>
    tpu.vector_store %arg13[%c0_70, %c256_71], %95 {strides = array<i32>} : memref<6x288xf32, #tpu.memory_space<vmem>>, vector<2x32xf32>,
    %c0_72 = arith.constant 0 : index
    %c0_73 = arith.constant 0 : index
    %97 = vector.load %arg13[%c0_72, %c0_73] : memref<6x288xf32, #tpu.memory_space<vmem>>, vector<6x288xf32>
    %98 = arith.truncf %97 : vector<6x288xf32> to vector<6x288xbf16>
    %c1_74 = arith.constant 1 : index
    %c0_75 = arith.constant 0 : index
    %c0_76 = arith.constant 0 : index
    %99 = vector.load %arg8[%c1_74, %c0_75, %c0_76] : memref<2x288x128xbf16, #tpu.memory_space<vmem>>, vector<1x288x128xbf16>
    %100 = vector.shape_cast %99 : vector<1x288x128xbf16> to vector<288x128xbf16>
    %cst_77 = arith.constant dense<0.000000e+00> : vector<6x128xf32>
    %101 = tpu.matmul %98, %100, %cst_77 {dimension_numbers = #tpu.dot_dimension_numbers<[1], [0], [0], [1], [0, 0, 1, 1], [], []>} : vector<6x288xbf16>, vector<288x128xbf16>, vector<6x128xf32> -> vector<6x128xf32>
    %102 = arith.addf %53, %101 : vector<6x128xf32>
    %c0_78 = arith.constant 0 : index
    %c0_79 = arith.constant 0 : index
    %103 = vector.load %arg9[%c0_78, %c0_79] : memref<1x128xf32, #tpu.memory_space<vmem>>, vector<1x128xf32>
    %104 = vector.broadcast %103 : vector<1x128xf32> to vector<6x128xf32>
    %105 = arith.mulf %102, %104 : vector<6x128xf32>
    %c0_80 = arith.constant 0 : index
    %c0_81 = arith.constant 0 : index
    %106 = vector.load %arg10[%c0_80, %c0_81] : memref<1x128xf32, #tpu.memory_space<vmem>>, vector<1x128xf32>
    %107 = vector.broadcast %106 : vector<1x128xf32> to vector<6x128xf32>
    %108 = arith.addf %105, %107 : vector<6x128xf32>
    %cst_82 = arith.constant 0.000000e+00 : f32
    %109 = vector.broadcast %cst_82 : f32 to vector<6x128xf32>
    %110 = arith.maximumf %108, %109 : vector<6x128xf32>
    %111 = arith.truncf %110 : vector<6x128xf32> to vector<6x128xbf16>
    %c0_83 = arith.constant 0 : index
    %c0_84 = arith.constant 0 : index
    %112 = vector.load %arg11[%c0_83, %c0_84] : memref<128x128xbf16, #tpu.memory_space<vmem>>, vector<128x128xbf16>
    %cst_85 = arith.constant dense<0.000000e+00> : vector<6x128xf32>
    %113 = tpu.matmul %111, %112, %cst_85 {dimension_numbers = #tpu.dot_dimension_numbers<[1], [0], [0], [1], [0, 0, 1, 1], [], []>} : vector<6x128xbf16>, vector<128x128xbf16>, vector<6x128xf32> -> vector<6x128xf32>
    %c0_86 = arith.constant 0 : index
    %c0_87 = arith.constant 0 : index
    %c0_88 = arith.constant 0 : index
    %114 = vector.load %arg12[%c0_86, %c0_87, %c0_88] : memref<1x6x128xf32, #tpu.memory_space<vmem>>, vector<1x6x128xf32>
    %115 = vector.shape_cast %114 : vector<1x6x128xf32> to vector<6x128xf32>
    %116 = vector.shape_cast %113 : vector<6x128xf32> to vector<1x6x128xf32>
    tpu.vector_store %arg12[%c0_86, %c0_87, %c0_88], %116 {strides = array<i32>} : memref<1x6x128xf32, #tpu.memory_space<vmem>>, vector<1x6x128xf32>,
    return
  }
  func.func @transform_0(%arg0: i32) -> (i32, i32, i32) {
    %c0_i32 = arith.constant 0 : i32
    %c0_i32_0 = arith.constant 0 : i32
    %c0_i32_1 = arith.constant 0 : i32
    return %arg0, %c0_i32, %c0_i32_0 : i32, i32, i32
  }
  func.func @transform_1(%arg0: i32) -> (i32, i32) {
    %c0_i32 = arith.constant 0 : i32
    %c0_i32_0 = arith.constant 0 : i32
    %c0_i32_1 = arith.constant 0 : i32
    return %c0_i32, %c0_i32_0 : i32, i32
  }
  func.func @transform_2(%arg0: i32) -> (i32, i32, i32) {
    %c0_i32 = arith.constant 0 : i32
    %c0_i32_0 = arith.constant 0 : i32
    %c0_i32_1 = arith.constant 0 : i32
    %c0_i32_2 = arith.constant 0 : i32
    return %c0_i32, %c0_i32_0, %c0_i32_1 : i32, i32, i32
  }
  func.func @transform_3(%arg0: i32) -> (i32, i32, i32) {
    %c0_i32 = arith.constant 0 : i32
    %c0_i32_0 = arith.constant 0 : i32
    %c0_i32_1 = arith.constant 0 : i32
    %c0_i32_2 = arith.constant 0 : i32
    return %c0_i32, %c0_i32_0, %c0_i32_1 : i32, i32, i32
  }
  func.func @transform_4(%arg0: i32) -> (i32, i32, i32) {
    %c0_i32 = arith.constant 0 : i32
    %c0_i32_0 = arith.constant 0 : i32
    %c0_i32_1 = arith.constant 0 : i32
    %c0_i32_2 = arith.constant 0 : i32
    return %c0_i32, %c0_i32_0, %c0_i32_1 : i32, i32, i32
  }
  func.func @transform_5(%arg0: i32) -> (i32, i32, i32) {
    %c0_i32 = arith.constant 0 : i32
    %c0_i32_0 = arith.constant 0 : i32
    %c0_i32_1 = arith.constant 0 : i32
    %c0_i32_2 = arith.constant 0 : i32
    return %c0_i32, %c0_i32_0, %c0_i32_1 : i32, i32, i32
  }
  func.func @transform_6(%arg0: i32) -> (i32, i32, i32) {
    %c0_i32 = arith.constant 0 : i32
    %c0_i32_0 = arith.constant 0 : i32
    %c0_i32_1 = arith.constant 0 : i32
    %c0_i32_2 = arith.constant 0 : i32
    return %c0_i32, %c0_i32_0, %c0_i32_1 : i32, i32, i32
  }
  func.func @transform_7(%arg0: i32) -> (i32, i32, i32) {
    %c0_i32 = arith.constant 0 : i32
    %c0_i32_0 = arith.constant 0 : i32
    %c0_i32_1 = arith.constant 0 : i32
    %c0_i32_2 = arith.constant 0 : i32
    return %c0_i32, %c0_i32_0, %c0_i32_1 : i32, i32, i32
  }
  func.func @transform_8(%arg0: i32) -> (i32, i32) {
    %c0_i32 = arith.constant 0 : i32
    %c0_i32_0 = arith.constant 0 : i32
    %c0_i32_1 = arith.constant 0 : i32
    return %c0_i32, %c0_i32_0 : i32, i32
  }
  func.func @transform_9(%arg0: i32) -> (i32, i32) {
    %c0_i32 = arith.constant 0 : i32
    %c0_i32_0 = arith.constant 0 : i32
    %c0_i32_1 = arith.constant 0 : i32
    return %c0_i32, %c0_i32_0 : i32, i32
  }
  func.func @transform_10(%arg0: i32) -> (i32, i32) {
    %c0_i32 = arith.constant 0 : i32
    %c0_i32_0 = arith.constant 0 : i32
    %c0_i32_1 = arith.constant 0 : i32
    return %c0_i32, %c0_i32_0 : i32, i32
  }
  func.func @transform_11(%arg0: i32) -> (i32, i32, i32) {
    %c0_i32 = arith.constant 0 : i32
    %c0_i32_0 = arith.constant 0 : i32
    %c0_i32_1 = arith.constant 0 : i32
    return %arg0, %c0_i32, %c0_i32_0 : i32, i32, i32
  }
}

module attributes {stable_mosaic.version = 11 : i64} {
  func.func @kernel(%arg0: i32, %arg1: memref<1x2x128xf32, #tpu.memory_space<vmem>>, %arg2: memref<2x1xf32, #tpu.memory_space<vmem>>, %arg3: memref<2x1x128xf32, #tpu.memory_space<vmem>>, %arg4: memref<2x1x128xf32, #tpu.memory_space<vmem>>, %arg5: memref<2x128x32xbf16, #tpu.memory_space<vmem>>, %arg6: memref<2x1x32xf32, #tpu.memory_space<vmem>>, %arg7: memref<2x1x32xf32, #tpu.memory_space<vmem>>, %arg8: memref<2x288x128xbf16, #tpu.memory_space<vmem>>, %arg9: memref<1x128xf32, #tpu.memory_space<vmem>>, %arg10: memref<1x128xf32, #tpu.memory_space<vmem>>, %arg11: memref<128x128xbf16, #tpu.memory_space<vmem>>, %arg12: memref<1x128xf32, #tpu.memory_space<vmem>>, %arg13: memref<1x1x128xf32, #tpu.memory_space<vmem>>, %arg14: memref<2x288xf32, #tpu.memory_space<vmem>>) attributes {dimension_semantics = [#tpu.dimension_semantics<parallel>], iteration_bounds = array<i64: 2>, scalar_prefetch = 0 : i64, scratch_operands = 1 : i64, tpu.core_type = #tpu.core_type<tc>, window_params = [{transform_indices = @transform_0, window_bounds = array<i64: 1, 2, 128>}, {pipeline_mode = #tpu.pipeline_mode<synchronous>, transform_indices = @transform_1, window_bounds = array<i64: 2, 1>}, {pipeline_mode = #tpu.pipeline_mode<synchronous>, transform_indices = @transform_2, window_bounds = array<i64: 2, 1, 128>}, {pipeline_mode = #tpu.pipeline_mode<synchronous>, transform_indices = @transform_3, window_bounds = array<i64: 2, 1, 128>}, {pipeline_mode = #tpu.pipeline_mode<synchronous>, transform_indices = @transform_4, window_bounds = array<i64: 2, 128, 32>}, {pipeline_mode = #tpu.pipeline_mode<synchronous>, transform_indices = @transform_5, window_bounds = array<i64: 2, 1, 32>}, {pipeline_mode = #tpu.pipeline_mode<synchronous>, transform_indices = @transform_6, window_bounds = array<i64: 2, 1, 32>}, {pipeline_mode = #tpu.pipeline_mode<synchronous>, transform_indices = @transform_7, window_bounds = array<i64: 2, 288, 128>}, {pipeline_mode = #tpu.pipeline_mode<synchronous>, transform_indices = @transform_8, window_bounds = array<i64: 1, 128>}, {pipeline_mode = #tpu.pipeline_mode<synchronous>, transform_indices = @transform_9, window_bounds = array<i64: 1, 128>}, {pipeline_mode = #tpu.pipeline_mode<synchronous>, transform_indices = @transform_10, window_bounds = array<i64: 128, 128>}, {pipeline_mode = #tpu.pipeline_mode<synchronous>, transform_indices = @transform_11, window_bounds = array<i64: 1, 128>}, {transform_indices = @transform_12, window_bounds = array<i64: 1, 1, 128>}]} {
    %c0 = arith.constant 0 : index
    %c0_0 = arith.constant 0 : index
    %0 = vector.load %arg2[%c0, %c0_0] : memref<2x1xf32, #tpu.memory_space<vmem>>, vector<2x1xf32>
    %c0_1 = arith.constant 0 : index
    %c0_2 = arith.constant 0 : index
    %c0_3 = arith.constant 0 : index
    %1 = vector.load %arg1[%c0_1, %c0_2, %c0_3] : memref<1x2x128xf32, #tpu.memory_space<vmem>>, vector<1x2x128xf32>
    %2 = vector.shape_cast %1 : vector<1x2x128xf32> to vector<2x128xf32>
    %cst = arith.constant 0.000000e+00 : f32
    %3 = vector.broadcast %cst : f32 to vector<2x288xf32>
    %c0_4 = arith.constant 0 : index
    %c0_5 = arith.constant 0 : index
    %4 = vector.load %arg14[%c0_4, %c0_5] : memref<2x288xf32, #tpu.memory_space<vmem>>, vector<2x288xf32>
    tpu.vector_store %arg14[%c0_4, %c0_5], %3 {strides = array<i32>} : memref<2x288xf32, #tpu.memory_space<vmem>>, vector<2x288xf32>,
    %c0_6 = arith.constant 0 : index
    %c0_7 = arith.constant 0 : index
    %c0_8 = arith.constant 0 : index
    %5 = vector.load %arg3[%c0_6, %c0_7, %c0_8] : memref<2x1x128xf32, #tpu.memory_space<vmem>>, vector<1x1x128xf32>
    %6 = vector.shape_cast %5 : vector<1x1x128xf32> to vector<1x128xf32>
    %7 = vector.broadcast %6 : vector<1x128xf32> to vector<2x128xf32>
    %8 = arith.mulf %2, %7 : vector<2x128xf32>
    %c0_9 = arith.constant 0 : index
    %c0_10 = arith.constant 0 : index
    %c0_11 = arith.constant 0 : index
    %9 = vector.load %arg4[%c0_9, %c0_10, %c0_11] : memref<2x1x128xf32, #tpu.memory_space<vmem>>, vector<1x1x128xf32>
    %10 = vector.shape_cast %9 : vector<1x1x128xf32> to vector<1x128xf32>
    %11 = vector.broadcast %10 : vector<1x128xf32> to vector<2x128xf32>
    %12 = arith.addf %8, %11 : vector<2x128xf32>
    %cst_12 = arith.constant 0.000000e+00 : f32
    %13 = vector.broadcast %cst_12 : f32 to vector<2x128xf32>
    %14 = arith.maximumf %12, %13 : vector<2x128xf32>
    %15 = arith.truncf %14 : vector<2x128xf32> to vector<2x128xbf16>
    %c0_13 = arith.constant 0 : index
    %c0_14 = arith.constant 0 : index
    %c0_15 = arith.constant 0 : index
    %16 = vector.load %arg5[%c0_13, %c0_14, %c0_15] : memref<2x128x32xbf16, #tpu.memory_space<vmem>>, vector<1x128x32xbf16>
    %17 = vector.shape_cast %16 : vector<1x128x32xbf16> to vector<128x32xbf16>
    %cst_16 = arith.constant dense<0.000000e+00> : vector<2x32xf32>
    %18 = tpu.matmul %15, %17, %cst_16 {dimension_numbers = #tpu.dot_dimension_numbers<[1], [0], [0], [1], [0, 0, 1, 1], [], []>} : vector<2x128xbf16>, vector<128x32xbf16>, vector<2x32xf32> -> vector<2x32xf32>
    %c0_17 = arith.constant 0 : index
    %c0_18 = arith.constant 0 : index
    %c0_19 = arith.constant 0 : index
    %19 = vector.load %arg6[%c0_17, %c0_18, %c0_19] : memref<2x1x32xf32, #tpu.memory_space<vmem>>, vector<1x1x32xf32>
    %20 = vector.shape_cast %19 : vector<1x1x32xf32> to vector<1x32xf32>
    %21 = vector.broadcast %20 : vector<1x32xf32> to vector<2x32xf32>
    %22 = arith.mulf %18, %21 : vector<2x32xf32>
    %c0_20 = arith.constant 0 : index
    %c0_21 = arith.constant 0 : index
    %c0_22 = arith.constant 0 : index
    %23 = vector.load %arg7[%c0_20, %c0_21, %c0_22] : memref<2x1x32xf32, #tpu.memory_space<vmem>>, vector<1x1x32xf32>
    %24 = vector.shape_cast %23 : vector<1x1x32xf32> to vector<1x32xf32>
    %25 = vector.broadcast %24 : vector<1x32xf32> to vector<2x32xf32>
    %26 = arith.addf %22, %25 : vector<2x32xf32>
    %cst_23 = arith.constant 0.000000e+00 : f32
    %27 = vector.broadcast %cst_23 : f32 to vector<2x32xf32>
    %28 = arith.maximumf %26, %27 : vector<2x32xf32>
    %29 = vector.broadcast %0 : vector<2x1xf32> to vector<2x32xf32>
    %30 = arith.mulf %28, %29 : vector<2x32xf32>
    %31 = vector.extract_strided_slice %30 {offsets = [0, 0], sizes = [1, 32], strides = [1, 1]} : vector<2x32xf32> to vector<1x32xf32>
    %c1 = arith.constant 1 : index
    %c64 = arith.constant 64 : index
    %32 = vector.load %arg14[%c1, %c64] : memref<2x288xf32, #tpu.memory_space<vmem>>, vector<1x32xf32>
    tpu.vector_store %arg14[%c1, %c64], %31 {strides = array<i32>} : memref<2x288xf32, #tpu.memory_space<vmem>>, vector<1x32xf32>,
    %33 = vector.extract_strided_slice %30 {offsets = [0, 0], sizes = [1, 32], strides = [1, 1]} : vector<2x32xf32> to vector<1x32xf32>
    %c1_24 = arith.constant 1 : index
    %c96 = arith.constant 96 : index
    %34 = vector.load %arg14[%c1_24, %c96] : memref<2x288xf32, #tpu.memory_space<vmem>>, vector<1x32xf32>
    tpu.vector_store %arg14[%c1_24, %c96], %33 {strides = array<i32>} : memref<2x288xf32, #tpu.memory_space<vmem>>, vector<1x32xf32>,
    %c0_25 = arith.constant 0 : index
    %c128 = arith.constant 128 : index
    %35 = vector.load %arg14[%c0_25, %c128] : memref<2x288xf32, #tpu.memory_space<vmem>>, vector<2x32xf32>
    tpu.vector_store %arg14[%c0_25, %c128], %30 {strides = array<i32>} : memref<2x288xf32, #tpu.memory_space<vmem>>, vector<2x32xf32>,
    %36 = vector.extract_strided_slice %30 {offsets = [1, 0], sizes = [1, 32], strides = [1, 1]} : vector<2x32xf32> to vector<1x32xf32>
    %c0_26 = arith.constant 0 : index
    %c160 = arith.constant 160 : index
    %37 = vector.load %arg14[%c0_26, %c160] : memref<2x288xf32, #tpu.memory_space<vmem>>, vector<1x32xf32>
    tpu.vector_store %arg14[%c0_26, %c160], %36 {strides = array<i32>} : memref<2x288xf32, #tpu.memory_space<vmem>>, vector<1x32xf32>,
    %38 = vector.extract_strided_slice %30 {offsets = [1, 0], sizes = [1, 32], strides = [1, 1]} : vector<2x32xf32> to vector<1x32xf32>
    %c0_27 = arith.constant 0 : index
    %c192 = arith.constant 192 : index
    %39 = vector.load %arg14[%c0_27, %c192] : memref<2x288xf32, #tpu.memory_space<vmem>>, vector<1x32xf32>
    tpu.vector_store %arg14[%c0_27, %c192], %38 {strides = array<i32>} : memref<2x288xf32, #tpu.memory_space<vmem>>, vector<1x32xf32>,
    %c0_28 = arith.constant 0 : index
    %c0_29 = arith.constant 0 : index
    %40 = vector.load %arg14[%c0_28, %c0_29] : memref<2x288xf32, #tpu.memory_space<vmem>>, vector<2x288xf32>
    %41 = arith.truncf %40 : vector<2x288xf32> to vector<2x288xbf16>
    %c0_30 = arith.constant 0 : index
    %c0_31 = arith.constant 0 : index
    %c0_32 = arith.constant 0 : index
    %42 = vector.load %arg8[%c0_30, %c0_31, %c0_32] : memref<2x288x128xbf16, #tpu.memory_space<vmem>>, vector<1x288x128xbf16>
    %43 = vector.shape_cast %42 : vector<1x288x128xbf16> to vector<288x128xbf16>
    %cst_33 = arith.constant dense<0.000000e+00> : vector<2x128xf32>
    %44 = tpu.matmul %41, %43, %cst_33 {dimension_numbers = #tpu.dot_dimension_numbers<[1], [0], [0], [1], [0, 0, 1, 1], [], []>} : vector<2x288xbf16>, vector<288x128xbf16>, vector<2x128xf32> -> vector<2x128xf32>
    %45 = arith.addf %2, %44 : vector<2x128xf32>
    %c1_34 = arith.constant 1 : index
    %c0_35 = arith.constant 0 : index
    %c0_36 = arith.constant 0 : index
    %46 = vector.load %arg3[%c1_34, %c0_35, %c0_36] : memref<2x1x128xf32, #tpu.memory_space<vmem>>, vector<1x1x128xf32>
    %47 = vector.shape_cast %46 : vector<1x1x128xf32> to vector<1x128xf32>
    %48 = vector.broadcast %47 : vector<1x128xf32> to vector<2x128xf32>
    %49 = arith.mulf %45, %48 : vector<2x128xf32>
    %c1_37 = arith.constant 1 : index
    %c0_38 = arith.constant 0 : index
    %c0_39 = arith.constant 0 : index
    %50 = vector.load %arg4[%c1_37, %c0_38, %c0_39] : memref<2x1x128xf32, #tpu.memory_space<vmem>>, vector<1x1x128xf32>
    %51 = vector.shape_cast %50 : vector<1x1x128xf32> to vector<1x128xf32>
    %52 = vector.broadcast %51 : vector<1x128xf32> to vector<2x128xf32>
    %53 = arith.addf %49, %52 : vector<2x128xf32>
    %cst_40 = arith.constant 0.000000e+00 : f32
    %54 = vector.broadcast %cst_40 : f32 to vector<2x128xf32>
    %55 = arith.maximumf %53, %54 : vector<2x128xf32>
    %56 = arith.truncf %55 : vector<2x128xf32> to vector<2x128xbf16>
    %c1_41 = arith.constant 1 : index
    %c0_42 = arith.constant 0 : index
    %c0_43 = arith.constant 0 : index
    %57 = vector.load %arg5[%c1_41, %c0_42, %c0_43] : memref<2x128x32xbf16, #tpu.memory_space<vmem>>, vector<1x128x32xbf16>
    %58 = vector.shape_cast %57 : vector<1x128x32xbf16> to vector<128x32xbf16>
    %cst_44 = arith.constant dense<0.000000e+00> : vector<2x32xf32>
    %59 = tpu.matmul %56, %58, %cst_44 {dimension_numbers = #tpu.dot_dimension_numbers<[1], [0], [0], [1], [0, 0, 1, 1], [], []>} : vector<2x128xbf16>, vector<128x32xbf16>, vector<2x32xf32> -> vector<2x32xf32>
    %c1_45 = arith.constant 1 : index
    %c0_46 = arith.constant 0 : index
    %c0_47 = arith.constant 0 : index
    %60 = vector.load %arg6[%c1_45, %c0_46, %c0_47] : memref<2x1x32xf32, #tpu.memory_space<vmem>>, vector<1x1x32xf32>
    %61 = vector.shape_cast %60 : vector<1x1x32xf32> to vector<1x32xf32>
    %62 = vector.broadcast %61 : vector<1x32xf32> to vector<2x32xf32>
    %63 = arith.mulf %59, %62 : vector<2x32xf32>
    %c1_48 = arith.constant 1 : index
    %c0_49 = arith.constant 0 : index
    %c0_50 = arith.constant 0 : index
    %64 = vector.load %arg7[%c1_48, %c0_49, %c0_50] : memref<2x1x32xf32, #tpu.memory_space<vmem>>, vector<1x1x32xf32>
    %65 = vector.shape_cast %64 : vector<1x1x32xf32> to vector<1x32xf32>
    %66 = vector.broadcast %65 : vector<1x32xf32> to vector<2x32xf32>
    %67 = arith.addf %63, %66 : vector<2x32xf32>
    %cst_51 = arith.constant 0.000000e+00 : f32
    %68 = vector.broadcast %cst_51 : f32 to vector<2x32xf32>
    %69 = arith.maximumf %67, %68 : vector<2x32xf32>
    %70 = vector.broadcast %0 : vector<2x1xf32> to vector<2x32xf32>
    %71 = arith.mulf %69, %70 : vector<2x32xf32>
    %72 = vector.extract_strided_slice %71 {offsets = [0, 0], sizes = [1, 32], strides = [1, 1]} : vector<2x32xf32> to vector<1x32xf32>
    %c1_52 = arith.constant 1 : index
    %c64_53 = arith.constant 64 : index
    %73 = vector.load %arg14[%c1_52, %c64_53] : memref<2x288xf32, #tpu.memory_space<vmem>>, vector<1x32xf32>
    tpu.vector_store %arg14[%c1_52, %c64_53], %72 {strides = array<i32>} : memref<2x288xf32, #tpu.memory_space<vmem>>, vector<1x32xf32>,
    %74 = vector.extract_strided_slice %71 {offsets = [0, 0], sizes = [1, 32], strides = [1, 1]} : vector<2x32xf32> to vector<1x32xf32>
    %c1_54 = arith.constant 1 : index
    %c96_55 = arith.constant 96 : index
    %75 = vector.load %arg14[%c1_54, %c96_55] : memref<2x288xf32, #tpu.memory_space<vmem>>, vector<1x32xf32>
    tpu.vector_store %arg14[%c1_54, %c96_55], %74 {strides = array<i32>} : memref<2x288xf32, #tpu.memory_space<vmem>>, vector<1x32xf32>,
    %c0_56 = arith.constant 0 : index
    %c128_57 = arith.constant 128 : index
    %76 = vector.load %arg14[%c0_56, %c128_57] : memref<2x288xf32, #tpu.memory_space<vmem>>, vector<2x32xf32>
    tpu.vector_store %arg14[%c0_56, %c128_57], %71 {strides = array<i32>} : memref<2x288xf32, #tpu.memory_space<vmem>>, vector<2x32xf32>,
    %77 = vector.extract_strided_slice %71 {offsets = [1, 0], sizes = [1, 32], strides = [1, 1]} : vector<2x32xf32> to vector<1x32xf32>
    %c0_58 = arith.constant 0 : index
    %c160_59 = arith.constant 160 : index
    %78 = vector.load %arg14[%c0_58, %c160_59] : memref<2x288xf32, #tpu.memory_space<vmem>>, vector<1x32xf32>
    tpu.vector_store %arg14[%c0_58, %c160_59], %77 {strides = array<i32>} : memref<2x288xf32, #tpu.memory_space<vmem>>, vector<1x32xf32>,
    %79 = vector.extract_strided_slice %71 {offsets = [1, 0], sizes = [1, 32], strides = [1, 1]} : vector<2x32xf32> to vector<1x32xf32>
    %c0_60 = arith.constant 0 : index
    %c192_61 = arith.constant 192 : index
    %80 = vector.load %arg14[%c0_60, %c192_61] : memref<2x288xf32, #tpu.memory_space<vmem>>, vector<1x32xf32>
    tpu.vector_store %arg14[%c0_60, %c192_61], %79 {strides = array<i32>} : memref<2x288xf32, #tpu.memory_space<vmem>>, vector<1x32xf32>,
    %c0_62 = arith.constant 0 : index
    %c0_63 = arith.constant 0 : index
    %81 = vector.load %arg14[%c0_62, %c0_63] : memref<2x288xf32, #tpu.memory_space<vmem>>, vector<2x288xf32>
    %82 = arith.truncf %81 : vector<2x288xf32> to vector<2x288xbf16>
    %c1_64 = arith.constant 1 : index
    %c0_65 = arith.constant 0 : index
    %c0_66 = arith.constant 0 : index
    %83 = vector.load %arg8[%c1_64, %c0_65, %c0_66] : memref<2x288x128xbf16, #tpu.memory_space<vmem>>, vector<1x288x128xbf16>
    %84 = vector.shape_cast %83 : vector<1x288x128xbf16> to vector<288x128xbf16>
    %cst_67 = arith.constant dense<0.000000e+00> : vector<2x128xf32>
    %85 = tpu.matmul %82, %84, %cst_67 {dimension_numbers = #tpu.dot_dimension_numbers<[1], [0], [0], [1], [0, 0, 1, 1], [], []>} : vector<2x288xbf16>, vector<288x128xbf16>, vector<2x128xf32> -> vector<2x128xf32>
    %86 = arith.addf %45, %85 : vector<2x128xf32>
    %c0_68 = arith.constant 0 : index
    %c0_69 = arith.constant 0 : index
    %87 = vector.load %arg9[%c0_68, %c0_69] : memref<1x128xf32, #tpu.memory_space<vmem>>, vector<1x128xf32>
    %88 = vector.broadcast %87 : vector<1x128xf32> to vector<2x128xf32>
    %89 = arith.mulf %86, %88 : vector<2x128xf32>
    %c0_70 = arith.constant 0 : index
    %c0_71 = arith.constant 0 : index
    %90 = vector.load %arg10[%c0_70, %c0_71] : memref<1x128xf32, #tpu.memory_space<vmem>>, vector<1x128xf32>
    %91 = vector.broadcast %90 : vector<1x128xf32> to vector<2x128xf32>
    %92 = arith.addf %89, %91 : vector<2x128xf32>
    %cst_72 = arith.constant 0.000000e+00 : f32
    %93 = vector.broadcast %cst_72 : f32 to vector<2x128xf32>
    %94 = arith.maximumf %92, %93 : vector<2x128xf32>
    %95 = vector.broadcast %0 : vector<2x1xf32> to vector<2x128xf32>
    %96 = arith.mulf %94, %95 : vector<2x128xf32>
    %cst_73 = arith.constant dense<0.000000e+00> : vector<128xf32>
    %97 = vector.multi_reduction <add>, %96, %cst_73 [0] : vector<2x128xf32> to vector<128xf32>
    %98 = vector.shape_cast %97 : vector<128xf32> to vector<1x128xf32>
    %cst_74 = arith.constant 1.000000e+00 : f32
    %99 = vector.broadcast %cst_74 : f32 to vector<1x128xf32>
    %100 = arith.mulf %98, %99 : vector<1x128xf32>
    %101 = arith.truncf %100 : vector<1x128xf32> to vector<1x128xbf16>
    %c0_75 = arith.constant 0 : index
    %c0_76 = arith.constant 0 : index
    %102 = vector.load %arg11[%c0_75, %c0_76] : memref<128x128xbf16, #tpu.memory_space<vmem>>, vector<128x128xbf16>
    %cst_77 = arith.constant dense<0.000000e+00> : vector<1x128xf32>
    %103 = tpu.matmul %101, %102, %cst_77 {dimension_numbers = #tpu.dot_dimension_numbers<[1], [0], [0], [1], [0, 0, 1, 1], [], []>} : vector<1x128xbf16>, vector<128x128xbf16>, vector<1x128xf32> -> vector<1x128xf32>
    %c0_78 = arith.constant 0 : index
    %c0_79 = arith.constant 0 : index
    %104 = vector.load %arg12[%c0_78, %c0_79] : memref<1x128xf32, #tpu.memory_space<vmem>>, vector<1x128xf32>
    %105 = arith.addf %103, %104 : vector<1x128xf32>
    %c0_80 = arith.constant 0 : index
    %c0_81 = arith.constant 0 : index
    %c0_82 = arith.constant 0 : index
    %106 = vector.load %arg13[%c0_80, %c0_81, %c0_82] : memref<1x1x128xf32, #tpu.memory_space<vmem>>, vector<1x1x128xf32>
    %107 = vector.shape_cast %106 : vector<1x1x128xf32> to vector<1x128xf32>
    %108 = vector.shape_cast %105 : vector<1x128xf32> to vector<1x1x128xf32>
    tpu.vector_store %arg13[%c0_80, %c0_81, %c0_82], %108 {strides = array<i32>} : memref<1x1x128xf32, #tpu.memory_space<vmem>>, vector<1x1x128xf32>,
    return
  }
  func.func @transform_0(%arg0: i32) -> (i32, i32, i32) {
    %c0_i32 = arith.constant 0 : i32
    %c0_i32_0 = arith.constant 0 : i32
    %c0_i32_1 = arith.constant 0 : i32
    return %arg0, %c0_i32, %c0_i32_0 : i32, i32, i32
  }
  func.func @transform_1(%arg0: i32) -> (i32, i32) {
    %c0_i32 = arith.constant 0 : i32
    %c0_i32_0 = arith.constant 0 : i32
    %c0_i32_1 = arith.constant 0 : i32
    return %c0_i32, %c0_i32_0 : i32, i32
  }
  func.func @transform_2(%arg0: i32) -> (i32, i32, i32) {
    %c0_i32 = arith.constant 0 : i32
    %c0_i32_0 = arith.constant 0 : i32
    %c0_i32_1 = arith.constant 0 : i32
    %c0_i32_2 = arith.constant 0 : i32
    return %c0_i32, %c0_i32_0, %c0_i32_1 : i32, i32, i32
  }
  func.func @transform_3(%arg0: i32) -> (i32, i32, i32) {
    %c0_i32 = arith.constant 0 : i32
    %c0_i32_0 = arith.constant 0 : i32
    %c0_i32_1 = arith.constant 0 : i32
    %c0_i32_2 = arith.constant 0 : i32
    return %c0_i32, %c0_i32_0, %c0_i32_1 : i32, i32, i32
  }
  func.func @transform_4(%arg0: i32) -> (i32, i32, i32) {
    %c0_i32 = arith.constant 0 : i32
    %c0_i32_0 = arith.constant 0 : i32
    %c0_i32_1 = arith.constant 0 : i32
    %c0_i32_2 = arith.constant 0 : i32
    return %c0_i32, %c0_i32_0, %c0_i32_1 : i32, i32, i32
  }
  func.func @transform_5(%arg0: i32) -> (i32, i32, i32) {
    %c0_i32 = arith.constant 0 : i32
    %c0_i32_0 = arith.constant 0 : i32
    %c0_i32_1 = arith.constant 0 : i32
    %c0_i32_2 = arith.constant 0 : i32
    return %c0_i32, %c0_i32_0, %c0_i32_1 : i32, i32, i32
  }
  func.func @transform_6(%arg0: i32) -> (i32, i32, i32) {
    %c0_i32 = arith.constant 0 : i32
    %c0_i32_0 = arith.constant 0 : i32
    %c0_i32_1 = arith.constant 0 : i32
    %c0_i32_2 = arith.constant 0 : i32
    return %c0_i32, %c0_i32_0, %c0_i32_1 : i32, i32, i32
  }
  func.func @transform_7(%arg0: i32) -> (i32, i32, i32) {
    %c0_i32 = arith.constant 0 : i32
    %c0_i32_0 = arith.constant 0 : i32
    %c0_i32_1 = arith.constant 0 : i32
    %c0_i32_2 = arith.constant 0 : i32
    return %c0_i32, %c0_i32_0, %c0_i32_1 : i32, i32, i32
  }
  func.func @transform_8(%arg0: i32) -> (i32, i32) {
    %c0_i32 = arith.constant 0 : i32
    %c0_i32_0 = arith.constant 0 : i32
    %c0_i32_1 = arith.constant 0 : i32
    return %c0_i32, %c0_i32_0 : i32, i32
  }
  func.func @transform_9(%arg0: i32) -> (i32, i32) {
    %c0_i32 = arith.constant 0 : i32
    %c0_i32_0 = arith.constant 0 : i32
    %c0_i32_1 = arith.constant 0 : i32
    return %c0_i32, %c0_i32_0 : i32, i32
  }
  func.func @transform_10(%arg0: i32) -> (i32, i32) {
    %c0_i32 = arith.constant 0 : i32
    %c0_i32_0 = arith.constant 0 : i32
    %c0_i32_1 = arith.constant 0 : i32
    return %c0_i32, %c0_i32_0 : i32, i32
  }
  func.func @transform_11(%arg0: i32) -> (i32, i32) {
    %c0_i32 = arith.constant 0 : i32
    %c0_i32_0 = arith.constant 0 : i32
    %c0_i32_1 = arith.constant 0 : i32
    return %c0_i32, %c0_i32_0 : i32, i32
  }
  func.func @transform_12(%arg0: i32) -> (i32, i32, i32) {
    %c0_i32 = arith.constant 0 : i32
    %c0_i32_0 = arith.constant 0 : i32
    %c0_i32_1 = arith.constant 0 : i32
    return %arg0, %c0_i32, %c0_i32_0 : i32, i32, i32
  }
}

</mosaic_0001>

<llo_original>
// kernel: densenet_forward.5
$region0: #{densenet_forward.5}
  #allocation0 [shape = 'u32[]', space=smem, size = 0x4, offset = 0x4, fixed_abs, tag = 'smem constant byte address 0x4 - core index']
  #allocation1 [shape = 'u32[144,128]{1,0:T(1,128)}', space=vmem, size = 0x12000, scoped, tag = 'internal scratch']
  %s0 = inlined_call_operand.vmem [shape: f32[512,147], index: 0, kind: input, shape index: {}]
  %s1 = inlined_call_operand.vmem [shape: bf16[147,128], index: 1, kind: input, shape index: {}]
  %s2 = inlined_call_operand.vmem [shape: f32[1,128], index: 2, kind: input, shape index: {}]
  %s3 = inlined_call_operand.vmem [shape: f32[1,128], index: 3, kind: input, shape index: {}]
  %s4 = inlined_call_operand.vmem [shape: f32[512,128], index: 4, kind: output, shape index: {}]
  %s5 = sld [smem:[#allocation0]]
  $region49: #{densenet_forward.5} parent=0
    _
  %s7 = ssub.s32 1, %s5
  %s8 = scalar_select 0, %s7, %s5
  loop: start=0, step=1, limit=4
  $region2: #{densenet_forward.5} parent=0 // loop_pre_header
    _
  $region3: #{densenet_forward.5} parent=0 // loop_header
    %s10 = sphi 0, %s14
    %p11 = scmp.ge.s32.totalorder %s10, 4
    %s20 = sphi 0, %s22
    %s23 = sphi 0, %s20
    %s24 = sphi 0, %s23
    %s40 = sphi 0, %s24
    %s44 = sphi 0, %s44
    %s46 = sphi 0, %s44
    %s47 = sphi 0, %s46
    %s61 = sphi 0, %s47
    %s65 = sphi 0, %s65
    %s67 = sphi 0, %s65
    %s68 = sphi 0, %s67
    %s82 = sphi 0, %s68
    %s86 = sphi 0, %s86
    %s88 = sphi 0, %s86
    %s89 = sphi 0, %s88
    %s103 = sphi 0, %s89
    %s109 = sphi 0, %s111
    %s112 = sphi 0, %s109
    %s113 = sphi 0, %s112
    %s129 = sphi 0, %s113
  $region4: #{densenet_forward.5} parent=0 // loop_header_branch
    %13 = sbr.rel (%p11) target = $region8
  $region5: #{densenet_forward.5} parent=0 // loop_body
    %s15 = ssub.s32 %s10, 1
    %s16 = ssub.s32 %s10, 2
    %s17 = sadd.s32 %s10, 1
    %s18 = ssub.s32 %s10, %s17
    %p19 = scmp.eq.s32.totalorder %s18, 0
    %s21 = sadd.s32 %s20, 1
    %s22 = scalar_select %p19, %s20, %s21
    %p25 = pneg %p19
    %p26 = scmp.eq.s32.totalorder %s10, 1
    %p27 = por %p25, %p26
    %p28 = scmp.ne.s32.totalorder %s20, %s23
    %p29 = scmp.eq.s32.totalorder %s10, 0
    %p30 = por %p28, %p29
    %p31 = scmp.ne.s32.totalorder %s20, %s23
    %p32 = scmp.eq.s32.totalorder %s15, 1
    %p33 = por %p31, %p32
    %p34 = scmp.ne.s32.totalorder %s23, %s24
    %p35 = scmp.eq.s32.totalorder %s15, 0
    %p36 = por %p34, %p35
    %p37 = scmp.ne.s32.totalorder %s23, %s24
    %p38 = scmp.eq.s32.totalorder %s16, 1
    %p39 = por %p37, %p38
    %p41 = scmp.ne.s32.totalorder %s24, %s40
    %p42 = scmp.eq.s32.totalorder %s16, 0
    %p43 = por %p41, %p42
    %s45 = sadd.s32 %s44, 1
    %p48 = scmp.eq.s32.totalorder %s10, 1
    %p49 = scmp.ne.s32.totalorder %s44, %s46
    %p50 = scmp.eq.s32.totalorder %s10, 0
    %p51 = por %p49, %p50
    %p52 = scmp.ne.s32.totalorder %s44, %s46
    %p53 = scmp.eq.s32.totalorder %s15, 1
    %p54 = por %p52, %p53
    %p55 = scmp.ne.s32.totalorder %s46, %s47
    %p56 = scmp.eq.s32.totalorder %s15, 0
    %p57 = por %p55, %p56
    %p58 = scmp.ne.s32.totalorder %s46, %s47
    %p59 = scmp.eq.s32.totalorder %s16, 1
    %p60 = por %p58, %p59
    %p62 = scmp.ne.s32.totalorder %s47, %s61
    %p63 = scmp.eq.s32.totalorder %s16, 0
    %p64 = por %p62, %p63
    %s66 = sadd.s32 %s65, 1
    %p69 = scmp.eq.s32.totalorder %s10, 1
    %p70 = scmp.ne.s32.totalorder %s65, %s67
    %p71 = scmp.eq.s32.totalorder %s10, 0
    %p72 = por %p70, %p71
    %p73 = scmp.ne.s32.totalorder %s65, %s67
    %p74 = scmp.eq.s32.totalorder %s15, 1
    %p75 = por %p73, %p74
    %p76 = scmp.ne.s32.totalorder %s67, %s68
    %p77 = scmp.eq.s32.totalorder %s15, 0
    %p78 = por %p76, %p77
    %p79 = scmp.ne.s32.totalorder %s67, %s68
    %p80 = scmp.eq.s32.totalorder %s16, 1
    %p81 = por %p79, %p80
    %p83 = scmp.ne.s32.totalorder %s68, %s82
    %p84 = scmp.eq.s32.totalorder %s16, 0
    %p85 = por %p83, %p84
    %s87 = sadd.s32 %s86, 1
    %p90 = scmp.eq.s32.totalorder %s10, 1
    %p91 = scmp.ne.s32.totalorder %s86, %s88
    %p92 = scmp.eq.s32.totalorder %s10, 0
    %p93 = por %p91, %p92
    %p94 = scmp.ne.s32.totalorder %s86, %s88
    %p95 = scmp.eq.s32.totalorder %s15, 1
    %p96 = por %p94, %p95
    %p97 = scmp.ne.s32.totalorder %s88, %s89
    %p98 = scmp.eq.s32.totalorder %s15, 0
    %p99 = por %p97, %p98
    %p100 = scmp.ne.s32.totalorder %s88, %s89
    %p101 = scmp.eq.s32.totalorder %s16, 1
    %p102 = por %p100, %p101
    %p104 = scmp.ne.s32.totalorder %s89, %s103
    %p105 = scmp.eq.s32.totalorder %s16, 0
    %p106 = por %p104, %p105
    %s107 = ssub.s32 %s10, %s17
    %p108 = scmp.eq.s32.totalorder %s107, 0
    %s110 = sadd.s32 %s109, 1
    %s111 = scalar_select %p108, %s109, %s110
    %p114 = pneg %p108
    %p115 = scmp.eq.s32.totalorder %s10, 1
    %p116 = por %p114, %p115
    %p117 = scmp.ne.s32.totalorder %s109, %s112
    %p118 = scmp.eq.s32.totalorder %s10, 0
    %p119 = por %p117, %p118
    %p120 = scmp.ne.s32.totalorder %s109, %s112
    %p121 = scmp.eq.s32.totalorder %s15, 1
    %p122 = por %p120, %p121
    %p123 = scmp.ne.s32.totalorder %s112, %s113
    %p124 = scmp.eq.s32.totalorder %s15, 0
    %p125 = por %p123, %p124
    %p126 = scmp.ne.s32.totalorder %s112, %s113
    %p127 = scmp.eq.s32.totalorder %s16, 1
    %p128 = por %p126, %p127
    %p130 = scmp.ne.s32.totalorder %s113, %s129
    %p131 = scmp.eq.s32.totalorder %s16, 0
    %p132 = por %p130, %p131
    %p133 = scmp.le.s32.totalorder 1, %s10
    %p134 = scmp.lt.s32.totalorder %s10, 3
    %p135 = pnand %p133, %p134
    %p136 = pneg %p135
    // Predicated region
    $region9: #{densenet_forward.5} parent=5 // pred_check
      _
    $region10: #{densenet_forward.5} parent=5 // pred_check_branch
      %138 = sbr.rel (%p135) target = $region12
    $region11: #{densenet_forward.5} parent=5 // pred_region
      %s139 = ssub.s32 %s10, 1
      // Predicated region
      $region13: #{densenet_forward.5} parent=11 // pred_check
        %p140 = pneg %p57
      $region14: #{densenet_forward.5} parent=11 // pred_check_branch
        %142 = sbr.rel (%p140) target = $region16
      $region15: #{densenet_forward.5} parent=11 // pred_region
        _
      $region16: #{densenet_forward.5} parent=11 // pred_fallthru
        _
      // Predicated region
      $region17: #{densenet_forward.5} parent=11 // pred_check
        %p143 = pneg %p78
      $region18: #{densenet_forward.5} parent=11 // pred_check_branch
        %145 = sbr.rel (%p143) target = $region20
      $region19: #{densenet_forward.5} parent=11 // pred_region
        _
      $region20: #{densenet_forward.5} parent=11 // pred_fallthru
        _
      // Predicated region
      $region21: #{densenet_forward.5} parent=11 // pred_check
        %p146 = pneg %p99
      $region22: #{densenet_forward.5} parent=11 // pred_check_branch
        %148 = sbr.rel (%p146) target = $region24
      $region23: #{densenet_forward.5} parent=11 // pred_region
        _
      $region24: #{densenet_forward.5} parent=11 // pred_fallthru
        _
    $region12: #{densenet_forward.5} parent=5 // pred_fallthru
      _
    %p149 = scmp.lt.s32.totalorder %s10, 2
    // Predicated region
    $region25: #{densenet_forward.5} parent=5 // pred_check
      %p150 = pneg %p149
    $region26: #{densenet_forward.5} parent=5 // pred_check_branch
      %152 = sbr.rel (%p150) target = $region28
    $region27: #{densenet_forward.5} parent=5 // pred_region
      // Predicated region
      $region29: #{densenet_forward.5} parent=27 // pred_check
        %p153 = pneg %p30
      $region30: #{densenet_forward.5} parent=27 // pred_check_branch
        %155 = sbr.rel (%p153) target = $region32
      $region31: #{densenet_forward.5} parent=27 // pred_region
        %s156 = smul.u32 32, %s10
        %p157 = scmp.lt.s32.totalorder %s156, 63
        %s158 = scalar_select %p157, %s156, 63
        %s159 = smul.addr %s158, 2
        %s160 = smul.addr %s159, 8
        %s161 = scalar_lea.vmem %s0, %s160
        %s162 = smul.u32 32, %s10
      $region32: #{densenet_forward.5} parent=27 // pred_fallthru
        _
    $region28: #{densenet_forward.5} parent=5 // pred_fallthru
      _
    %p163 = scmp.le.s32.totalorder 1, %s10
    %p164 = scmp.lt.s32.totalorder %s10, 3
    %p165 = pnand %p163, %p164
    %p166 = pneg %p165
    // Predicated region
    $region33: #{densenet_forward.5} parent=5 // pred_check
      _
    $region34: #{densenet_forward.5} parent=5 // pred_check_branch
      %168 = sbr.rel (%p165) target = $region36
    $region35: #{densenet_forward.5} parent=5 // pred_region
      %s169 = ssub.s32 %s10, 1
      %s170 = smul.u32 32, %s15
      %p171 = scmp.lt.s32.totalorder %s170, 63
      %s172 = scalar_select %p171, %s170, 63
      %s173 = smul.addr %s172, 2
      %s174 = smul.addr %s173, 8
      %s175 = scalar_lea.vmem %s0, %s174
      %p176 = pneg %p36
      %p177 = pneg %p33
      %p178 = pneg %p57
      %p179 = pneg %p54
      %p180 = pneg %p78
      %p181 = pneg %p75
      %p182 = pneg %p99
      %p183 = pneg %p96
      %p184 = pneg %p125
      %p185 = pneg %p122
      %s186 = smul.u32 32, %s15
      %p187 = scmp.lt.s32.totalorder %s186, 63
      %s188 = scalar_select %p187, %s186, 63
      %s189 = smul.addr %s188, 8
      %s190 = scalar_lea.vmem %s4, %s189
      %s191 = smul.u32 32, %s15
      %p192 = scmp.lt.s32.totalorder %s191, 63
      %s193 = scalar_select %p192, %s191, 63
      %s194 = smul.addr %s193, 2
      %s195 = smul.addr %s194, 8
      %s196 = scalar_lea.vmem %s0, %s195
      %s197 = smul.u32 32, %s15
      %s198 = smul.u32 32, %s15
      %p199 = scmp.lt.s32.totalorder %s198, 63
      %s200 = scalar_select %p199, %s198, 63
      %s201 = smul.addr %s200, 8
      %s202 = scalar_lea.vmem %s4, %s201
      %s203 = smul.u32 32, %s15
      %v205 = vld [vmem:[%s196] sm:$0xff]
      %v206 = vld [vmem:[%s196 + $0x8] sm:$0xff]
      %v207 = vld [vmem:[%s196 + $0x10] sm:$0xff]
      %v208 = vld [vmem:[%s196 + $0x18] sm:$0xff]
      %v209 = vld [vmem:[%s196 + $0x20] sm:$0xff]
      %v210 = vld [vmem:[%s196 + $0x28] sm:$0xff]
      %v211 = vld [vmem:[%s196 + $0x30] sm:$0xff]
      %v212 = vld [vmem:[%s196 + $0x38] sm:$0xff]
      %v213 = vld [vmem:[%s196 + $0x40] sm:$0xff]
      %v214 = vld [vmem:[%s196 + $0x48] sm:$0xff]
      %v215 = vld [vmem:[%s196 + $0x50] sm:$0xff]
      %v216 = vld [vmem:[%s196 + $0x58] sm:$0xff]
      %v217 = vld [vmem:[%s196 + $0x60] sm:$0xff]
      %v218 = vld [vmem:[%s196 + $0x68] sm:$0xff]
      %v219 = vld [vmem:[%s196 + $0x70] sm:$0xff]
      %v220 = vld [vmem:[%s196 + $0x78] sm:$0xff]
      %v221 = vld [vmem:[%s196 + $0x80] sm:$0xff]
      %v222 = vld [vmem:[%s196 + $0x88] sm:$0xff]
      %v223 = vld [vmem:[%s196 + $0x90] sm:$0xff]
      %v224 = vld [vmem:[%s196 + $0x98] sm:$0xff]
      %v225 = vld [vmem:[%s196 + $0xa0] sm:$0xff]
      %v226 = vld [vmem:[%s196 + $0xa8] sm:$0xff]
      %v227 = vld [vmem:[%s196 + $0xb0] sm:$0xff]
      %v228 = vld [vmem:[%s196 + $0xb8] sm:$0xff]
      %v229 = vld [vmem:[%s196 + $0xc0] sm:$0xff]
      %v230 = vld [vmem:[%s196 + $0xc8] sm:$0xff]
      %v231 = vld [vmem:[%s196 + $0xd0] sm:$0xff]
      %v232 = vld [vmem:[%s196 + $0xd8] sm:$0xff]
      %v233 = vld [vmem:[%s196 + $0xe0] sm:$0xff]
      %v234 = vld [vmem:[%s196 + $0xe8] sm:$0xff]
      %v235 = vld [vmem:[%s196 + $0xf0] sm:$0xff]
      %v236 = vld [vmem:[%s196 + $0xf8] sm:$0xff]
      %v237 = vld [vmem:[%s196 + $0x100] sm:$0xff]
      %v238 = vld [vmem:[%s196 + $0x108] sm:$0xff]
      %v239 = vld [vmem:[%s196 + $0x110] sm:$0xff]
      %v240 = vld [vmem:[%s196 + $0x118] sm:$0xff]
      %v241 = vld [vmem:[%s196 + $0x120] sm:$0xff]
      %v242 = vld [vmem:[%s196 + $0x128] sm:$0xff]
      %v243 = vld [vmem:[%s196 + $0x130] sm:$0xff]
      %v244 = vld [vmem:[%s196 + $0x138] sm:$0xff]
      %v245 = vld [vmem:[%s196 + $0x140] sm:$0xff]
      %v246 = vld [vmem:[%s196 + $0x148] sm:$0xff]
      %v247 = vld [vmem:[%s196 + $0x150] sm:$0xff]
      %v248 = vld [vmem:[%s196 + $0x158] sm:$0xff]
      %v249 = vld [vmem:[%s196 + $0x160] sm:$0xff]
      %v250 = vld [vmem:[%s196 + $0x168] sm:$0xff]
      %v251 = vld [vmem:[%s196 + $0x170] sm:$0xff]
      %v252 = vld [vmem:[%s196 + $0x178] sm:$0xff]
      %v253 = vld [vmem:[%s196 + $0x180] sm:$0xff]
      %v254 = vld [vmem:[%s196 + $0x188] sm:$0xff]
      %v255 = vld [vmem:[%s196 + $0x190] sm:$0xff]
      %v256 = vld [vmem:[%s196 + $0x198] sm:$0xff]
      %v257 = vld [vmem:[%s196 + $0x1a0] sm:$0xff]
      %v258 = vld [vmem:[%s196 + $0x1a8] sm:$0xff]
      %v259 = vld [vmem:[%s196 + $0x1b0] sm:$0xff]
      %v260 = vld [vmem:[%s196 + $0x1b8] sm:$0xff]
      %v261 = vld [vmem:[%s196 + $0x1c0] sm:$0xff]
      %v262 = vld [vmem:[%s196 + $0x1c8] sm:$0xff]
      %v263 = vld [vmem:[%s196 + $0x1d0] sm:$0xff]
      %v264 = vld [vmem:[%s196 + $0x1d8] sm:$0xff]
      %v265 = vld [vmem:[%s196 + $0x1e0] sm:$0xff]
      %v266 = vld [vmem:[%s196 + $0x1e8] sm:$0xff]
      %v267 = vld [vmem:[%s196 + $0x1f0] sm:$0xff]
      %v268 = vld [vmem:[%s196 + $0x1f8] sm:$0xff]
      %v269 = vpack.c.bf16 %v207, %v205
      %v270 = vpack.c.bf16 %v208, %v206
      %v271 = vpack.c.bf16 %v211, %v209
      %v272 = vpack.c.bf16 %v212, %v210
      %v273 = vpack.c.bf16 %v215, %v213
      %v274 = vpack.c.bf16 %v216, %v214
      %v275 = vpack.c.bf16 %v219, %v217
      %v276 = vpack.c.bf16 %v220, %v218
      %v277 = vpack.c.bf16 %v223, %v221
      %v278 = vpack.c.bf16 %v224, %v222
      %v279 = vpack.c.bf16 %v227, %v225
      %v280 = vpack.c.bf16 %v228, %v226
      %v281 = vpack.c.bf16 %v231, %v229
      %v282 = vpack.c.bf16 %v232, %v230
      %v283 = vpack.c.bf16 %v235, %v233
      %v284 = vpack.c.bf16 %v236, %v234
      %v285 = vpack.c.bf16 %v239, %v237
      %v286 = vpack.c.bf16 %v240, %v238
      %v287 = vpack.c.bf16 %v243, %v241
      %v288 = vpack.c.bf16 %v244, %v242
      %v289 = vpack.c.bf16 %v247, %v245
      %v290 = vpack.c.bf16 %v248, %v246
      %v291 = vpack.c.bf16 %v251, %v249
      %v292 = vpack.c.bf16 %v252, %v250
      %v293 = vpack.c.bf16 %v255, %v253
      %v294 = vpack.c.bf16 %v256, %v254
      %v295 = vpack.c.bf16 %v259, %v257
      %v296 = vpack.c.bf16 %v260, %v258
      %v297 = vpack.c.bf16 %v263, %v261
      %v298 = vpack.c.bf16 %v264, %v262
      %v299 = vpack.c.bf16 %v267, %v265
      %v300 = vpack.c.bf16 %v268, %v266
      %v301 = vld [vmem:[%s1] sm:$0xf]
      %v302 = vld [vmem:[%s1 + $0x4] sm:$0xf]
      %v303 = vld [vmem:[%s1 + $0x8] sm:$0xf]
      %v304 = vld [vmem:[%s1 + $0xc] sm:$0xf]
      %v305 = vld [vmem:[%s1 + $0x10] sm:$0xf]
      %v306 = vld [vmem:[%s1 + $0x14] sm:$0xf]
      %v307 = vld [vmem:[%s1 + $0x18] sm:$0xf]
      %v308 = vld [vmem:[%s1 + $0x1c] sm:$0xf]
      %v309 = vld [vmem:[%s1 + $0x20] sm:$0xf]
      %v310 = vld [vmem:[%s1 + $0x24] sm:$0xf]
      %v311 = vld [vmem:[%s1 + $0x28] sm:$0xf]
      %v312 = vld [vmem:[%s1 + $0x2c] sm:$0xf]
      %v313 = vld [vmem:[%s1 + $0x30] sm:$0xf]
      %v314 = vld [vmem:[%s1 + $0x34] sm:$0xf]
      %v315 = vld [vmem:[%s1 + $0x38] sm:$0xf]
      %v316 = vld [vmem:[%s1 + $0x3c] sm:$0xf]
      %v317 = vld [vmem:[%s1 + $0x40] sm:$0xf]
      %v318 = vld [vmem:[%s1 + $0x44] sm:$0xf]
      %v319 = vld [vmem:[%s1 + $0x48] sm:$0x3]
      %v339 = vunpack.c.l.b16 %v301
      %v340 = vunpack.c.l.b16 %v302
      %v341 = vunpack.c.l.b16 %v303
      %v342 = vunpack.c.l.b16 %v304
      %v343 = vunpack.c.l.b16 %v305
      %v344 = vunpack.c.l.b16 %v306
      %v345 = vunpack.c.l.b16 %v307
      %v346 = vunpack.c.l.b16 %v308
      %v347 = vunpack.c.l.b16 %v309
      %v348 = vunpack.c.l.b16 %v310
      %v349 = vunpack.c.l.b16 %v311
      %v350 = vunpack.c.l.b16 %v312
      %v351 = vunpack.c.l.b16 %v313
      %v352 = vunpack.c.l.b16 %v314
      %v353 = vunpack.c.l.b16 %v315
      %v354 = vunpack.c.l.b16 %v316
      %v355 = vunpack.c.l.b16 %v317
      %v356 = vunpack.c.l.b16 %v318
      %v357 = vunpack.c.l.b16 %v319
      %v358 = vpack.c.b16 %v340, %v339
      %v359 = vpack.c.b16 %v342, %v341
      %v360 = vpack.c.b16 %v344, %v343
      %v361 = vpack.c.b16 %v346, %v345
      %v362 = vpack.c.b16 %v348, %v347
      %v363 = vpack.c.b16 %v350, %v349
      %v364 = vpack.c.b16 %v352, %v351
      %v365 = vpack.c.b16 %v354, %v353
      %v366 = vpack.c.b16 %v356, %v355
      %v367 = vpack.c.b16 %v357, %v357
      %vm377 = vcmask 154624
      %v379 = vsel %vm377, %v270, 0
      %v382 = vsel %vm377, %v272, 0
      %v385 = vsel %vm377, %v274, 0
      %v388 = vsel %vm377, %v276, 0
      %v391 = vsel %vm377, %v278, 0
      %v394 = vsel %vm377, %v280, 0
      %v397 = vsel %vm377, %v282, 0
      %v400 = vsel %vm377, %v284, 0
      %v403 = vsel %vm377, %v286, 0
      %v406 = vsel %vm377, %v288, 0
      %v409 = vsel %vm377, %v290, 0
      %v412 = vsel %vm377, %v292, 0
      %v415 = vsel %vm377, %v294, 0
      %v418 = vsel %vm377, %v296, 0
      %v421 = vsel %vm377, %v298, 0
      %v424 = vsel %vm377, %v300, 0
      %vm426 = vcmask 1040384
      %vm427 = vcmask 1041408
      %v428 = vsel %vm426, 4294967295, 65535
      %v429 = vsel %vm427, %v428, 0
      %v431 = vand.u32 %v367, %v429
      %433 = vmatprep.subr.bf16.mxu0 0
      %434 = vmatpush1.bf16.msra.mxu0 %v365
      %435 = vmatprep.subr.bf16.mxu0 0
      %436 = vmatpush1.bf16.msra.mxu0 %v364
      %437 = vmatprep.subr.bf16.mxu0 0
      %438 = vmatpush1.bf16.msra.mxu0 %v363
      %439 = vmatprep.subr.bf16.mxu0 0
      %440 = vmatpush1.bf16.msra.mxu0 %v362
      %441 = vmatprep.subr.bf16.mxu0 0
      %442 = vmatpush1.bf16.msra.mxu0 %v361
      %443 = vmatprep.subr.bf16.mxu0 0
      %444 = vmatpush1.bf16.msra.mxu0 %v360
      %445 = vmatprep.subr.bf16.mxu0 0
      %446 = vmatpush1.bf16.msra.mxu0 %v359
      %447 = vmatprep.subr.bf16.mxu0 0
      %448 = vmatpush1.bf16.msra.mxu0 %v358
      %449 = vmatprep.subr.bf16.mxu0 0
      %450 = vmatpush2.bf16.msra.mxu0 0
      %451 = vmatprep.subr.bf16.mxu0 0
      %452 = vmatpush2.bf16.msra.mxu0 0
      %453 = vmatprep.subr.bf16.mxu0 0
      %454 = vmatpush2.bf16.msra.mxu0 0
      %455 = vmatprep.subr.bf16.mxu0 0
      %456 = vmatpush2.bf16.msra.mxu0 0
      %457 = vmatprep.subr.bf16.mxu0 0
      %458 = vmatpush2.bf16.msra.mxu0 0
      %459 = vmatprep.subr.bf16.mxu0 0
      %460 = vmatpush2.bf16.msra.mxu0 0
      %461 = vmatprep.subr.bf16.mxu0 0
      %462 = vmatpush2.bf16.msra.mxu0 %v431
      %463 = vmatprep.subr.bf16.mxu0 0
      %464 = vmatpush2.bf16.msra.mxu0 %v366
      %465 = vmatprep.mubr.bf16.mxu0 %v379
      %466 = vmatmul.mubr.bf16.gmra.mxu0 %v269
      %v467 = vpop.f32.mrf.mxu0
      %v468 = vadd.f32 0.0, %v467
      %v469 = vpop.f32.mrf.mxu0
      %v470 = vpop.f32.mrf.mxu0
      %v471 = vadd.f32 0.0, %v470
      %v472 = vpop.f32.mrf.mxu0
      %473 = vmatprep.mubr.bf16.mxu0 %v382
      %474 = vmatmul.mubr.bf16.gmra.mxu0 %v271
      %v475 = vpop.f32.mrf.mxu0
      %v476 = vadd.f32 0.0, %v475
      %v477 = vpop.f32.mrf.mxu0
      %v478 = vpop.f32.mrf.mxu0
      %v479 = vadd.f32 0.0, %v478
      %v480 = vpop.f32.mrf.mxu0
      %481 = vmatprep.mubr.bf16.mxu0 %v385
      %482 = vmatmul.mubr.bf16.gmra.mxu0 %v273
      %v483 = vpop.f32.mrf.mxu0
      %v484 = vadd.f32 0.0, %v483
      %v485 = vpop.f32.mrf.mxu0
      %v486 = vpop.f32.mrf.mxu0
      %v487 = vadd.f32 0.0, %v486
      %v488 = vpop.f32.mrf.mxu0
      %489 = vmatprep.mubr.bf16.mxu0 %v388
      %490 = vmatmul.mubr.bf16.gmra.mxu0 %v275
      %v491 = vpop.f32.mrf.mxu0
      %v492 = vadd.f32 0.0, %v491
      %v493 = vpop.f32.mrf.mxu0
      %v494 = vpop.f32.mrf.mxu0
      %v495 = vadd.f32 0.0, %v494
      %v496 = vpop.f32.mrf.mxu0
      %497 = vmatprep.mubr.bf16.mxu0 %v391
      %498 = vmatmul.mubr.bf16.gmra.mxu0 %v277
      %v499 = vpop.f32.mrf.mxu0
      %v500 = vadd.f32 0.0, %v499
      %v501 = vpop.f32.mrf.mxu0
      %v502 = vpop.f32.mrf.mxu0
      %v503 = vadd.f32 0.0, %v502
      %v504 = vpop.f32.mrf.mxu0
      %505 = vmatprep.mubr.bf16.mxu0 %v394
      %506 = vmatmul.mubr.bf16.gmra.mxu0 %v279
      %v507 = vpop.f32.mrf.mxu0
      %v508 = vadd.f32 0.0, %v507
      %v509 = vpop.f32.mrf.mxu0
      %v510 = vpop.f32.mrf.mxu0
      %v511 = vadd.f32 0.0, %v510
      %v512 = vpop.f32.mrf.mxu0
      %513 = vmatprep.mubr.bf16.mxu0 %v397
      %514 = vmatmul.mubr.bf16.gmra.mxu0 %v281
      %v515 = vpop.f32.mrf.mxu0
      %v516 = vadd.f32 0.0, %v515
      %v517 = vpop.f32.mrf.mxu0
      %v518 = vpop.f32.mrf.mxu0
      %v519 = vadd.f32 0.0, %v518
      %v520 = vpop.f32.mrf.mxu0
      %521 = vmatprep.mubr.bf16.mxu0 %v400
      %522 = vmatmul.mubr.bf16.gmra.mxu0 %v283
      %v523 = vpop.f32.mrf.mxu0
      %v524 = vadd.f32 0.0, %v523
      %v525 = vpop.f32.mrf.mxu0
      %v526 = vpop.f32.mrf.mxu0
      %v527 = vadd.f32 0.0, %v526
      %v528 = vpop.f32.mrf.mxu0
      %529 = vmatprep.mubr.bf16.mxu0 %v403
      %530 = vmatmul.mubr.bf16.gmra.mxu0 %v285
      %v531 = vpop.f32.mrf.mxu0
      %v532 = vadd.f32 0.0, %v531
      %v533 = vpop.f32.mrf.mxu0
      %v534 = vpop.f32.mrf.mxu0
      %v535 = vadd.f32 0.0, %v534
      %v536 = vpop.f32.mrf.mxu0
      %537 = vmatprep.mubr.bf16.mxu0 %v406
      %538 = vmatmul.mubr.bf16.gmra.mxu0 %v287
      %v539 = vpop.f32.mrf.mxu0
      %v540 = vadd.f32 0.0, %v539
      %v541 = vpop.f32.mrf.mxu0
      %v542 = vpop.f32.mrf.mxu0
      %v543 = vadd.f32 0.0, %v542
      %v544 = vpop.f32.mrf.mxu0
      %545 = vmatprep.mubr.bf16.mxu0 %v409
      %546 = vmatmul.mubr.bf16.gmra.mxu0 %v289
      %v547 = vpop.f32.mrf.mxu0
      %v548 = vadd.f32 0.0, %v547
      %v549 = vpop.f32.mrf.mxu0
      %v550 = vpop.f32.mrf.mxu0
      %v551 = vadd.f32 0.0, %v550
      %v552 = vpop.f32.mrf.mxu0
      %553 = vmatprep.mubr.bf16.mxu0 %v412
      %554 = vmatmul.mubr.bf16.gmra.mxu0 %v291
      %v555 = vpop.f32.mrf.mxu0
      %v556 = vadd.f32 0.0, %v555
      %v557 = vpop.f32.mrf.mxu0
      %v558 = vpop.f32.mrf.mxu0
      %v559 = vadd.f32 0.0, %v558
      %v560 = vpop.f32.mrf.mxu0
      %561 = vmatprep.mubr.bf16.mxu0 %v415
      %562 = vmatmul.mubr.bf16.gmra.mxu0 %v293
      %v563 = vpop.f32.mrf.mxu0
      %v564 = vadd.f32 0.0, %v563
      %v565 = vpop.f32.mrf.mxu0
      %v566 = vpop.f32.mrf.mxu0
      %v567 = vadd.f32 0.0, %v566
      %v568 = vpop.f32.mrf.mxu0
      %569 = vmatprep.mubr.bf16.mxu0 %v418
      %570 = vmatmul.mubr.bf16.gmra.mxu0 %v295
      %v571 = vpop.f32.mrf.mxu0
      %v572 = vadd.f32 0.0, %v571
      %v573 = vpop.f32.mrf.mxu0
      %v574 = vpop.f32.mrf.mxu0
      %v575 = vadd.f32 0.0, %v574
      %v576 = vpop.f32.mrf.mxu0
      %577 = vmatprep.mubr.bf16.mxu0 %v421
      %578 = vmatmul.mubr.bf16.gmra.mxu0 %v297
      %v579 = vpop.f32.mrf.mxu0
      %v580 = vadd.f32 0.0, %v579
      %v581 = vpop.f32.mrf.mxu0
      %v582 = vpop.f32.mrf.mxu0
      %v583 = vadd.f32 0.0, %v582
      %v584 = vpop.f32.mrf.mxu0
      %585 = vmatprep.mubr.bf16.mxu0 %v424
      %586 = vmatmul.mubr.bf16.gmra.mxu0 %v299
      %v587 = vpop.f32.mrf.mxu0
      %v588 = vadd.f32 0.0, %v587
      %v589 = vpop.f32.mrf.mxu0
      %v590 = vpop.f32.mrf.mxu0
      %v591 = vadd.f32 0.0, %v590
      %v592 = vpop.f32.mrf.mxu0
      %593 = vdwg.mxu0
      %v594 = vld [vmem:[%s2] sm:$0x1]
      %v596 = vlaneseq
      %v597 = vshrl.u32 %v596, 7
      %v598 = vsub.s32 0, %v597
      %v599 = vrot.slane %v594, %v598
      %v601 = vmul.f32 %v468, %v599
      %v602 = vmul.f32 %v471, %v599
      %v603 = vmul.f32 %v476, %v599
      %v604 = vmul.f32 %v479, %v599
      %v605 = vmul.f32 %v484, %v599
      %v606 = vmul.f32 %v487, %v599
      %v607 = vmul.f32 %v492, %v599
      %v608 = vmul.f32 %v495, %v599
      %v609 = vmul.f32 %v500, %v599
      %v610 = vmul.f32 %v503, %v599
      %v611 = vmul.f32 %v508, %v599
      %v612 = vmul.f32 %v511, %v599
      %v613 = vmul.f32 %v516, %v599
      %v614 = vmul.f32 %v519, %v599
      %v615 = vmul.f32 %v524, %v599
      %v616 = vmul.f32 %v527, %v599
      %v617 = vmul.f32 %v532, %v599
      %v618 = vmul.f32 %v535, %v599
      %v619 = vmul.f32 %v540, %v599
      %v620 = vmul.f32 %v543, %v599
      %v621 = vmul.f32 %v548, %v599
      %v622 = vmul.f32 %v551, %v599
      %v623 = vmul.f32 %v556, %v599
      %v624 = vmul.f32 %v559, %v599
      %v625 = vmul.f32 %v564, %v599
      %v626 = vmul.f32 %v567, %v599
      %v627 = vmul.f32 %v572, %v599
      %v628 = vmul.f32 %v575, %v599
      %v629 = vmul.f32 %v580, %v599
      %v630 = vmul.f32 %v583, %v599
      %v631 = vmul.f32 %v588, %v599
      %v632 = vmul.f32 %v591, %v599
      %v633 = vld [vmem:[%s3] sm:$0x1]
      %v635 = vlaneseq
      %v636 = vshrl.u32 %v635, 7
      %v637 = vsub.s32 0, %v636
      %v638 = vrot.slane %v633, %v637
      %v640 = vadd.f32 %v601, %v638
      %v641 = vadd.f32 %v602, %v638
      %v642 = vadd.f32 %v603, %v638
      %v643 = vadd.f32 %v604, %v638
      %v644 = vadd.f32 %v605, %v638
      %v645 = vadd.f32 %v606, %v638
      %v646 = vadd.f32 %v607, %v638
      %v647 = vadd.f32 %v608, %v638
      %v648 = vadd.f32 %v609, %v638
      %v649 = vadd.f32 %v610, %v638
      %v650 = vadd.f32 %v611, %v638
      %v651 = vadd.f32 %v612, %v638
      %v652 = vadd.f32 %v613, %v638
      %v653 = vadd.f32 %v614, %v638
      %v654 = vadd.f32 %v615, %v638
      %v655 = vadd.f32 %v616, %v638
      %v656 = vadd.f32 %v617, %v638
      %v657 = vadd.f32 %v618, %v638
      %v658 = vadd.f32 %v619, %v638
      %v659 = vadd.f32 %v620, %v638
      %v660 = vadd.f32 %v621, %v638
      %v661 = vadd.f32 %v622, %v638
      %v662 = vadd.f32 %v623, %v638
      %v663 = vadd.f32 %v624, %v638
      %v664 = vadd.f32 %v625, %v638
      %v665 = vadd.f32 %v626, %v638
      %v666 = vadd.f32 %v627, %v638
      %v667 = vadd.f32 %v628, %v638
      %v668 = vadd.f32 %v629, %v638
      %v669 = vadd.f32 %v630, %v638
      %v670 = vadd.f32 %v631, %v638
      %v671 = vadd.f32 %v632, %v638
      %v672 = vmax.f32 %v640, 0.0
      %v673 = vmax.f32 %v641, 0.0
      %v674 = vmax.f32 %v642, 0.0
      %v675 = vmax.f32 %v643, 0.0
      %v676 = vmax.f32 %v644, 0.0
      %v677 = vmax.f32 %v645, 0.0
      %v678 = vmax.f32 %v646, 0.0
      %v679 = vmax.f32 %v647, 0.0
      %v680 = vmax.f32 %v648, 0.0
      %v681 = vmax.f32 %v649, 0.0
      %v682 = vmax.f32 %v650, 0.0
      %v683 = vmax.f32 %v651, 0.0
      %v684 = vmax.f32 %v652, 0.0
      %v685 = vmax.f32 %v653, 0.0
      %v686 = vmax.f32 %v654, 0.0
      %v687 = vmax.f32 %v655, 0.0
      %v688 = vmax.f32 %v656, 0.0
      %v689 = vmax.f32 %v657, 0.0
      %v690 = vmax.f32 %v658, 0.0
      %v691 = vmax.f32 %v659, 0.0
      %v692 = vmax.f32 %v660, 0.0
      %v693 = vmax.f32 %v661, 0.0
      %v694 = vmax.f32 %v662, 0.0
      %v695 = vmax.f32 %v663, 0.0
      %v696 = vmax.f32 %v664, 0.0
      %v697 = vmax.f32 %v665, 0.0
      %v698 = vmax.f32 %v666, 0.0
      %v699 = vmax.f32 %v667, 0.0
      %v700 = vmax.f32 %v668, 0.0
      %v701 = vmax.f32 %v669, 0.0
      %v702 = vmax.f32 %v670, 0.0
      %v703 = vmax.f32 %v671, 0.0
      %704 = vst [vmem:[%s202] sm:$0xff] %v672
      %705 = vst [vmem:[%s202 + $0x8] sm:$0xff] %v673
      %706 = vst [vmem:[%s202 + $0x10] sm:$0xff] %v674
      %707 = vst [vmem:[%s202 + $0x18] sm:$0xff] %v675
      %708 = vst [vmem:[%s202 + $0x20] sm:$0xff] %v676
      %709 = vst [vmem:[%s202 + $0x28] sm:$0xff] %v677
      %710 = vst [vmem:[%s202 + $0x30] sm:$0xff] %v678
      %711 = vst [vmem:[%s202 + $0x38] sm:$0xff] %v679
      %712 = vst [vmem:[%s202 + $0x40] sm:$0xff] %v680
      %713 = vst [vmem:[%s202 + $0x48] sm:$0xff] %v681
      %714 = vst [vmem:[%s202 + $0x50] sm:$0xff] %v682
      %715 = vst [vmem:[%s202 + $0x58] sm:$0xff] %v683
      %716 = vst [vmem:[%s202 + $0x60] sm:$0xff] %v684
      %717 = vst [vmem:[%s202 + $0x68] sm:$0xff] %v685
      %718 = vst [vmem:[%s202 + $0x70] sm:$0xff] %v686
      %719 = vst [vmem:[%s202 + $0x78] sm:$0xff] %v687
      %720 = vst [vmem:[%s202 + $0x80] sm:$0xff] %v688
      %721 = vst [vmem:[%s202 + $0x88] sm:$0xff] %v689
      %722 = vst [vmem:[%s202 + $0x90] sm:$0xff] %v690
      %723 = vst [vmem:[%s202 + $0x98] sm:$0xff] %v691
      %724 = vst [vmem:[%s202 + $0xa0] sm:$0xff] %v692
      %725 = vst [vmem:[%s202 + $0xa8] sm:$0xff] %v693
      %726 = vst [vmem:[%s202 + $0xb0] sm:$0xff] %v694
      %727 = vst [vmem:[%s202 + $0xb8] sm:$0xff] %v695
      %728 = vst [vmem:[%s202 + $0xc0] sm:$0xff] %v696
      %729 = vst [vmem:[%s202 + $0xc8] sm:$0xff] %v697
      %730 = vst [vmem:[%s202 + $0xd0] sm:$0xff] %v698
      %731 = vst [vmem:[%s202 + $0xd8] sm:$0xff] %v699
      %732 = vst [vmem:[%s202 + $0xe0] sm:$0xff] %v700
      %733 = vst [vmem:[%s202 + $0xe8] sm:$0xff] %v701
      %734 = vst [vmem:[%s202 + $0xf0] sm:$0xff] %v702
      %735 = vst [vmem:[%s202 + $0xf8] sm:$0xff] %v703
      %s736 = smul.u32 32, %s15
      %p737 = scmp.lt.s32.totalorder %s736, 63
      %s738 = scalar_select %p737, %s736, 63
      %s739 = smul.addr %s738, 8
      %s740 = scalar_lea.vmem %s4, %s739
      // Predicated region
      $region37: #{densenet_forward.5} parent=35 // pred_check
        %p741 = pneg %p122
      $region38: #{densenet_forward.5} parent=35 // pred_check_branch
        %743 = sbr.rel (%p741) target = $region40
      $region39: #{densenet_forward.5} parent=35 // pred_region
        %s744 = smul.u32 32, %s15
      $region40: #{densenet_forward.5} parent=35 // pred_fallthru
        _
    $region36: #{densenet_forward.5} parent=5 // pred_fallthru
      _
    %p745 = scmp.le.s32.totalorder 2, %s10
    // Predicated region
    $region41: #{densenet_forward.5} parent=5 // pred_check
      %p746 = pneg %p745
    $region42: #{densenet_forward.5} parent=5 // pred_check_branch
      %748 = sbr.rel (%p746) target = $region44
    $region43: #{densenet_forward.5} parent=5 // pred_region
      %s749 = ssub.s32 %s10, 2
      // Predicated region
      $region45: #{densenet_forward.5} parent=43 // pred_check
        %p750 = pneg %p128
      $region46: #{densenet_forward.5} parent=43 // pred_check_branch
        %752 = sbr.rel (%p750) target = $region48
      $region47: #{densenet_forward.5} parent=43 // pred_region
        %s753 = smul.u32 32, %s16
        %p754 = scmp.lt.s32.totalorder %s753, 63
        %s755 = scalar_select %p754, %s753, 63
        %s756 = smul.addr %s755, 8
        %s757 = scalar_lea.vmem %s4, %s756
      $region48: #{densenet_forward.5} parent=43 // pred_fallthru
        _
    $region44: #{densenet_forward.5} parent=5 // pred_fallthru
      _
  $region6: #{densenet_forward.5} parent=0 // loop_footer
    %s14 = sadd.s32 1, %s10
  $region7: #{densenet_forward.5} parent=0 // loop_footer_branch
    %9 = sbr.rel target = $region3
  $region8: #{densenet_forward.5} parent=0 // loop_exit
    _

// kernel: densenet_forward.7
$region0: #{densenet_forward.7}
  #allocation0 [shape = 'u32[]', space=smem, size = 0x4, offset = 0x4, fixed_abs, tag = 'smem constant byte address 0x4 - core index']
  #allocation1 [shape = 'u32[144,128]{1,0:T(1,128)}', space=vmem, size = 0x12000, scoped, tag = 'internal scratch']
  #allocation2 [shape = 'f32[20,288]{1,0:T(8,128)}', space=vmem, size = 0x9000, scoped, tag = 'scratch operand']
  %s0 = inlined_call_operand.vmem [shape: f32[2,20,128], index: 0, kind: input, shape index: {}]
  %s1 = inlined_call_operand.vmem [shape: f32[20,1], index: 1, kind: input, shape index: {}]
  %s2 = inlined_call_operand.vmem [shape: f32[2,1,128], index: 2, kind: input, shape index: {}]
  %s3 = inlined_call_operand.vmem [shape: f32[2,1,128], index: 3, kind: input, shape index: {}]
  %s4 = inlined_call_operand.vmem [shape: bf16[2,128,32], index: 4, kind: input, shape index: {}]
  %s5 = inlined_call_operand.vmem [shape: f32[2,1,32], index: 5, kind: input, shape index: {}]
  %s6 = inlined_call_operand.vmem [shape: f32[2,1,32], index: 6, kind: input, shape index: {}]
  %s7 = inlined_call_operand.vmem [shape: bf16[2,288,128], index: 7, kind: input, shape index: {}]
  %s8 = inlined_call_operand.vmem [shape: f32[1,128], index: 8, kind: input, shape index: {}]
  %s9 = inlined_call_operand.vmem [shape: f32[1,128], index: 9, kind: input, shape index: {}]
  %s10 = inlined_call_operand.vmem [shape: bf16[128,128], index: 10, kind: input, shape index: {}]
  %s11 = inlined_call_operand.vmem [shape: f32[2,20,128], index: 11, kind: output, shape index: {}]
  %s12 = sld [smem:[#allocation0]]
  $region77: #{densenet_forward.7} parent=0
    _
  %s14 = ssub.s32 1, %s12
  %s15 = scalar_select 0, %s14, %s12
  loop: start=0, step=1, limit=4
  $region2: #{densenet_forward.7} parent=0 // loop_pre_header
    _
  $region3: #{densenet_forward.7} parent=0 // loop_header
    %s17 = sphi 0, %s21
    %p18 = scmp.ge.s32.totalorder %s17, 4
    %s27 = sphi 0, %s29
    %s30 = sphi 0, %s27
    %s31 = sphi 0, %s30
    %s47 = sphi 0, %s31
    %s51 = sphi 0, %s51
    %s53 = sphi 0, %s51
    %s54 = sphi 0, %s53
    %s68 = sphi 0, %s54
    %s72 = sphi 0, %s72
    %s74 = sphi 0, %s72
    %s75 = sphi 0, %s74
    %s89 = sphi 0, %s75
    %s93 = sphi 0, %s93
    %s95 = sphi 0, %s93
    %s96 = sphi 0, %s95
    %s110 = sphi 0, %s96
    %s114 = sphi 0, %s114
    %s116 = sphi 0, %s114
    %s117 = sphi 0, %s116
    %s131 = sphi 0, %s117
    %s135 = sphi 0, %s135
    %s137 = sphi 0, %s135
    %s138 = sphi 0, %s137
    %s152 = sphi 0, %s138
    %s156 = sphi 0, %s156
    %s158 = sphi 0, %s156
    %s159 = sphi 0, %s158
    %s173 = sphi 0, %s159
    %s177 = sphi 0, %s177
    %s179 = sphi 0, %s177
    %s180 = sphi 0, %s179
    %s194 = sphi 0, %s180
    %s198 = sphi 0, %s198
    %s200 = sphi 0, %s198
    %s201 = sphi 0, %s200
    %s215 = sphi 0, %s201
    %s219 = sphi 0, %s219
    %s221 = sphi 0, %s219
    %s222 = sphi 0, %s221
    %s236 = sphi 0, %s222
    %s240 = sphi 0, %s240
    %s242 = sphi 0, %s240
    %s243 = sphi 0, %s242
    %s257 = sphi 0, %s243
    %s263 = sphi 0, %s265
    %s266 = sphi 0, %s263
    %s267 = sphi 0, %s266
    %s283 = sphi 0, %s267
  $region4: #{densenet_forward.7} parent=0 // loop_header_branch
    %20 = sbr.rel (%p18) target = $region8
  $region5: #{densenet_forward.7} parent=0 // loop_body
    %s22 = ssub.s32 %s17, 1
    %s23 = ssub.s32 %s17, 2
    %s24 = sadd.s32 %s17, 1
    %s25 = ssub.s32 %s17, %s24
    %p26 = scmp.eq.s32.totalorder %s25, 0
    %s28 = sadd.s32 %s27, 1
    %s29 = scalar_select %p26, %s27, %s28
    %p32 = pneg %p26
    %p33 = scmp.eq.s32.totalorder %s17, 1
    %p34 = por %p32, %p33
    %p35 = scmp.ne.s32.totalorder %s27, %s30
    %p36 = scmp.eq.s32.totalorder %s17, 0
    %p37 = por %p35, %p36
    %p38 = scmp.ne.s32.totalorder %s27, %s30
    %p39 = scmp.eq.s32.totalorder %s22, 1
    %p40 = por %p38, %p39
    %p41 = scmp.ne.s32.totalorder %s30, %s31
    %p42 = scmp.eq.s32.totalorder %s22, 0
    %p43 = por %p41, %p42
    %p44 = scmp.ne.s32.totalorder %s30, %s31
    %p45 = scmp.eq.s32.totalorder %s23, 1
    %p46 = por %p44, %p45
    %p48 = scmp.ne.s32.totalorder %s31, %s47
    %p49 = scmp.eq.s32.totalorder %s23, 0
    %p50 = por %p48, %p49
    %s52 = sadd.s32 %s51, 1
    %p55 = scmp.eq.s32.totalorder %s17, 1
    %p56 = scmp.ne.s32.totalorder %s51, %s53
    %p57 = scmp.eq.s32.totalorder %s17, 0
    %p58 = por %p56, %p57
    %p59 = scmp.ne.s32.totalorder %s51, %s53
    %p60 = scmp.eq.s32.totalorder %s22, 1
    %p61 = por %p59, %p60
    %p62 = scmp.ne.s32.totalorder %s53, %s54
    %p63 = scmp.eq.s32.totalorder %s22, 0
    %p64 = por %p62, %p63
    %p65 = scmp.ne.s32.totalorder %s53, %s54
    %p66 = scmp.eq.s32.totalorder %s23, 1
    %p67 = por %p65, %p66
    %p69 = scmp.ne.s32.totalorder %s54, %s68
    %p70 = scmp.eq.s32.totalorder %s23, 0
    %p71 = por %p69, %p70
    %s73 = sadd.s32 %s72, 1
    %p76 = scmp.eq.s32.totalorder %s17, 1
    %p77 = scmp.ne.s32.totalorder %s72, %s74
    %p78 = scmp.eq.s32.totalorder %s17, 0
    %p79 = por %p77, %p78
    %p80 = scmp.ne.s32.totalorder %s72, %s74
    %p81 = scmp.eq.s32.totalorder %s22, 1
    %p82 = por %p80, %p81
    %p83 = scmp.ne.s32.totalorder %s74, %s75
    %p84 = scmp.eq.s32.totalorder %s22, 0
    %p85 = por %p83, %p84
    %p86 = scmp.ne.s32.totalorder %s74, %s75
    %p87 = scmp.eq.s32.totalorder %s23, 1
    %p88 = por %p86, %p87
    %p90 = scmp.ne.s32.totalorder %s75, %s89
    %p91 = scmp.eq.s32.totalorder %s23, 0
    %p92 = por %p90, %p91
    %s94 = sadd.s32 %s93, 1
    %p97 = scmp.eq.s32.totalorder %s17, 1
    %p98 = scmp.ne.s32.totalorder %s93, %s95
    %p99 = scmp.eq.s32.totalorder %s17, 0
    %p100 = por %p98, %p99
    %p101 = scmp.ne.s32.totalorder %s93, %s95
    %p102 = scmp.eq.s32.totalorder %s22, 1
    %p103 = por %p101, %p102
    %p104 = scmp.ne.s32.totalorder %s95, %s96
    %p105 = scmp.eq.s32.totalorder %s22, 0
    %p106 = por %p104, %p105
    %p107 = scmp.ne.s32.totalorder %s95, %s96
    %p108 = scmp.eq.s32.totalorder %s23, 1
    %p109 = por %p107, %p108
    %p111 = scmp.ne.s32.totalorder %s96, %s110
    %p112 = scmp.eq.s32.totalorder %s23, 0
    %p113 = por %p111, %p112
    %s115 = sadd.s32 %s114, 1
    %p118 = scmp.eq.s32.totalorder %s17, 1
    %p119 = scmp.ne.s32.totalorder %s114, %s116
    %p120 = scmp.eq.s32.totalorder %s17, 0
    %p121 = por %p119, %p120
    %p122 = scmp.ne.s32.totalorder %s114, %s116
    %p123 = scmp.eq.s32.totalorder %s22, 1
    %p124 = por %p122, %p123
    %p125 = scmp.ne.s32.totalorder %s116, %s117
    %p126 = scmp.eq.s32.totalorder %s22, 0
    %p127 = por %p125, %p126
    %p128 = scmp.ne.s32.totalorder %s116, %s117
    %p129 = scmp.eq.s32.totalorder %s23, 1
    %p130 = por %p128, %p129
    %p132 = scmp.ne.s32.totalorder %s117, %s131
    %p133 = scmp.eq.s32.totalorder %s23, 0
    %p134 = por %p132, %p133
    %s136 = sadd.s32 %s135, 1
    %p139 = scmp.eq.s32.totalorder %s17, 1
    %p140 = scmp.ne.s32.totalorder %s135, %s137
    %p141 = scmp.eq.s32.totalorder %s17, 0
    %p142 = por %p140, %p141
    %p143 = scmp.ne.s32.totalorder %s135, %s137
    %p144 = scmp.eq.s32.totalorder %s22, 1
    %p145 = por %p143, %p144
    %p146 = scmp.ne.s32.totalorder %s137, %s138
    %p147 = scmp.eq.s32.totalorder %s22, 0
    %p148 = por %p146, %p147
    %p149 = scmp.ne.s32.totalorder %s137, %s138
    %p150 = scmp.eq.s32.totalorder %s23, 1
    %p151 = por %p149, %p150
    %p153 = scmp.ne.s32.totalorder %s138, %s152
    %p154 = scmp.eq.s32.totalorder %s23, 0
    %p155 = por %p153, %p154
    %s157 = sadd.s32 %s156, 1
    %p160 = scmp.eq.s32.totalorder %s17, 1
    %p161 = scmp.ne.s32.totalorder %s156, %s158
    %p162 = scmp.eq.s32.totalorder %s17, 0
    %p163 = por %p161, %p162
    %p164 = scmp.ne.s32.totalorder %s156, %s158
    %p165 = scmp.eq.s32.totalorder %s22, 1
    %p166 = por %p164, %p165
    %p167 = scmp.ne.s32.totalorder %s158, %s159
    %p168 = scmp.eq.s32.totalorder %s22, 0
    %p169 = por %p167, %p168
    %p170 = scmp.ne.s32.totalorder %s158, %s159
    %p171 = scmp.eq.s32.totalorder %s23, 1
    %p172 = por %p170, %p171
    %p174 = scmp.ne.s32.totalorder %s159, %s173
    %p175 = scmp.eq.s32.totalorder %s23, 0
    %p176 = por %p174, %p175
    %s178 = sadd.s32 %s177, 1
    %p181 = scmp.eq.s32.totalorder %s17, 1
    %p182 = scmp.ne.s32.totalorder %s177, %s179
    %p183 = scmp.eq.s32.totalorder %s17, 0
    %p184 = por %p182, %p183
    %p185 = scmp.ne.s32.totalorder %s177, %s179
    %p186 = scmp.eq.s32.totalorder %s22, 1
    %p187 = por %p185, %p186
    %p188 = scmp.ne.s32.totalorder %s179, %s180
    %p189 = scmp.eq.s32.totalorder %s22, 0
    %p190 = por %p188, %p189
    %p191 = scmp.ne.s32.totalorder %s179, %s180
    %p192 = scmp.eq.s32.totalorder %s23, 1
    %p193 = por %p191, %p192
    %p195 = scmp.ne.s32.totalorder %s180, %s194
    %p196 = scmp.eq.s32.totalorder %s23, 0
    %p197 = por %p195, %p196
    %s199 = sadd.s32 %s198, 1
    %p202 = scmp.eq.s32.totalorder %s17, 1
    %p203 = scmp.ne.s32.totalorder %s198, %s200
    %p204 = scmp.eq.s32.totalorder %s17, 0
    %p205 = por %p203, %p204
    %p206 = scmp.ne.s32.totalorder %s198, %s200
    %p207 = scmp.eq.s32.totalorder %s22, 1
    %p208 = por %p206, %p207
    %p209 = scmp.ne.s32.totalorder %s200, %s201
    %p210 = scmp.eq.s32.totalorder %s22, 0
    %p211 = por %p209, %p210
    %p212 = scmp.ne.s32.totalorder %s200, %s201
    %p213 = scmp.eq.s32.totalorder %s23, 1
    %p214 = por %p212, %p213
    %p216 = scmp.ne.s32.totalorder %s201, %s215
    %p217 = scmp.eq.s32.totalorder %s23, 0
    %p218 = por %p216, %p217
    %s220 = sadd.s32 %s219, 1
    %p223 = scmp.eq.s32.totalorder %s17, 1
    %p224 = scmp.ne.s32.totalorder %s219, %s221
    %p225 = scmp.eq.s32.totalorder %s17, 0
    %p226 = por %p224, %p225
    %p227 = scmp.ne.s32.totalorder %s219, %s221
    %p228 = scmp.eq.s32.totalorder %s22, 1
    %p229 = por %p227, %p228
    %p230 = scmp.ne.s32.totalorder %s221, %s222
    %p231 = scmp.eq.s32.totalorder %s22, 0
    %p232 = por %p230, %p231
    %p233 = scmp.ne.s32.totalorder %s221, %s222
    %p234 = scmp.eq.s32.totalorder %s23, 1
    %p235 = por %p233, %p234
    %p237 = scmp.ne.s32.totalorder %s222, %s236
    %p238 = scmp.eq.s32.totalorder %s23, 0
    %p239 = por %p237, %p238
    %s241 = sadd.s32 %s240, 1
    %p244 = scmp.eq.s32.totalorder %s17, 1
    %p245 = scmp.ne.s32.totalorder %s240, %s242
    %p246 = scmp.eq.s32.totalorder %s17, 0
    %p247 = por %p245, %p246
    %p248 = scmp.ne.s32.totalorder %s240, %s242
    %p249 = scmp.eq.s32.totalorder %s22, 1
    %p250 = por %p248, %p249
    %p251 = scmp.ne.s32.totalorder %s242, %s243
    %p252 = scmp.eq.s32.totalorder %s22, 0
    %p253 = por %p251, %p252
    %p254 = scmp.ne.s32.totalorder %s242, %s243
    %p255 = scmp.eq.s32.totalorder %s23, 1
    %p256 = por %p254, %p255
    %p258 = scmp.ne.s32.totalorder %s243, %s257
    %p259 = scmp.eq.s32.totalorder %s23, 0
    %p260 = por %p258, %p259
    %s261 = ssub.s32 %s17, %s24
    %p262 = scmp.eq.s32.totalorder %s261, 0
    %s264 = sadd.s32 %s263, 1
    %s265 = scalar_select %p262, %s263, %s264
    %p268 = pneg %p262
    %p269 = scmp.eq.s32.totalorder %s17, 1
    %p270 = por %p268, %p269
    %p271 = scmp.ne.s32.totalorder %s263, %s266
    %p272 = scmp.eq.s32.totalorder %s17, 0
    %p273 = por %p271, %p272
    %p274 = scmp.ne.s32.totalorder %s263, %s266
    %p275 = scmp.eq.s32.totalorder %s22, 1
    %p276 = por %p274, %p275
    %p277 = scmp.ne.s32.totalorder %s266, %s267
    %p278 = scmp.eq.s32.totalorder %s22, 0
    %p279 = por %p277, %p278
    %p280 = scmp.ne.s32.totalorder %s266, %s267
    %p281 = scmp.eq.s32.totalorder %s23, 1
    %p282 = por %p280, %p281
    %p284 = scmp.ne.s32.totalorder %s267, %s283
    %p285 = scmp.eq.s32.totalorder %s23, 0
    %p286 = por %p284, %p285
    %p287 = scmp.le.s32.totalorder 1, %s17
    %p288 = scmp.lt.s32.totalorder %s17, 3
    %p289 = pnand %p287, %p288
    %p290 = pneg %p289
    // Predicated region
    $region9: #{densenet_forward.7} parent=5 // pred_check
      _
    $region10: #{densenet_forward.7} parent=5 // pred_check_branch
      %292 = sbr.rel (%p289) target = $region12
    $region11: #{densenet_forward.7} parent=5 // pred_region
      %s293 = ssub.s32 %s17, 1
      // Predicated region
      $region13: #{densenet_forward.7} parent=11 // pred_check
        %p294 = pneg %p64
      $region14: #{densenet_forward.7} parent=11 // pred_check_branch
        %296 = sbr.rel (%p294) target = $region16
      $region15: #{densenet_forward.7} parent=11 // pred_region
        _
      $region16: #{densenet_forward.7} parent=11 // pred_fallthru
        _
      // Predicated region
      $region17: #{densenet_forward.7} parent=11 // pred_check
        %p297 = pneg %p85
      $region18: #{densenet_forward.7} parent=11 // pred_check_branch
        %299 = sbr.rel (%p297) target = $region20
      $region19: #{densenet_forward.7} parent=11 // pred_region
        _
      $region20: #{densenet_forward.7} parent=11 // pred_fallthru
        _
      // Predicated region
      $region21: #{densenet_forward.7} parent=11 // pred_check
        %p300 = pneg %p106
      $region22: #{densenet_forward.7} parent=11 // pred_check_branch
        %302 = sbr.rel (%p300) target = $region24
      $region23: #{densenet_forward.7} parent=11 // pred_region
        _
      $region24: #{densenet_forward.7} parent=11 // pred_fallthru
        _
      // Predicated region
      $region25: #{densenet_forward.7} parent=11 // pred_check
        %p303 = pneg %p127
      $region26: #{densenet_forward.7} parent=11 // pred_check_branch
        %305 = sbr.rel (%p303) target = $region28
      $region27: #{densenet_forward.7} parent=11 // pred_region
        _
      $region28: #{densenet_forward.7} parent=11 // pred_fallthru
        _
      // Predicated region
      $region29: #{densenet_forward.7} parent=11 // pred_check
        %p306 = pneg %p148
      $region30: #{densenet_forward.7} parent=11 // pred_check_branch
        %308 = sbr.rel (%p306) target = $region32
      $region31: #{densenet_forward.7} parent=11 // pred_region
        _
      $region32: #{densenet_forward.7} parent=11 // pred_fallthru
        _
      // Predicated region
      $region33: #{densenet_forward.7} parent=11 // pred_check
        %p309 = pneg %p169
      $region34: #{densenet_forward.7} parent=11 // pred_check_branch
        %311 = sbr.rel (%p309) target = $region36
      $region35: #{densenet_forward.7} parent=11 // pred_region
        _
      $region36: #{densenet_forward.7} parent=11 // pred_fallthru
        _
      // Predicated region
      $region37: #{densenet_forward.7} parent=11 // pred_check
        %p312 = pneg %p190
      $region38: #{densenet_forward.7} parent=11 // pred_check_branch
        %314 = sbr.rel (%p312) target = $region40
      $region39: #{densenet_forward.7} parent=11 // pred_region
        _
      $region40: #{densenet_forward.7} parent=11 // pred_fallthru
        _
      // Predicated region
      $region41: #{densenet_forward.7} parent=11 // pred_check
        %p315 = pneg %p211
      $region42: #{densenet_forward.7} parent=11 // pred_check_branch
        %317 = sbr.rel (%p315) target = $region44
      $region43: #{densenet_forward.7} parent=11 // pred_region
        _
      $region44: #{densenet_forward.7} parent=11 // pred_fallthru
        _
      // Predicated region
      $region45: #{densenet_forward.7} parent=11 // pred_check
        %p318 = pneg %p232
      $region46: #{densenet_forward.7} parent=11 // pred_check_branch
        %320 = sbr.rel (%p318) target = $region48
      $region47: #{densenet_forward.7} parent=11 // pred_region
        _
      $region48: #{densenet_forward.7} parent=11 // pred_fallthru
        _
      // Predicated region
      $region49: #{densenet_forward.7} parent=11 // pred_check
        %p321 = pneg %p253
      $region50: #{densenet_forward.7} parent=11 // pred_check_branch
        %323 = sbr.rel (%p321) target = $region52
      $region51: #{densenet_forward.7} parent=11 // pred_region
        _
      $region52: #{densenet_forward.7} parent=11 // pred_fallthru
        _
    $region12: #{densenet_forward.7} parent=5 // pred_fallthru
      _
    %p324 = scmp.lt.s32.totalorder %s17, 2
    // Predicated region
    $region53: #{densenet_forward.7} parent=5 // pred_check
      %p325 = pneg %p324
    $region54: #{densenet_forward.7} parent=5 // pred_check_branch
      %327 = sbr.rel (%p325) target = $region56
    $region55: #{densenet_forward.7} parent=5 // pred_region
      // Predicated region
      $region57: #{densenet_forward.7} parent=55 // pred_check
        %p328 = pneg %p37
      $region58: #{densenet_forward.7} parent=55 // pred_check_branch
        %330 = sbr.rel (%p328) target = $region60
      $region59: #{densenet_forward.7} parent=55 // pred_region
        %p331 = scmp.lt.s32.totalorder %s17, 1
        %s332 = scalar_select %p331, %s17, 1
        %s333 = smul.addr %s332, 3
        %s334 = smul.addr %s333, 8
        %s335 = scalar_lea.vmem %s0, %s334
      $region60: #{densenet_forward.7} parent=55 // pred_fallthru
        _
    $region56: #{densenet_forward.7} parent=5 // pred_fallthru
      _
    %p336 = scmp.le.s32.totalorder 1, %s17
    %p337 = scmp.lt.s32.totalorder %s17, 3
    %p338 = pnand %p336, %p337
    %p339 = pneg %p338
    // Predicated region
    $region61: #{densenet_forward.7} parent=5 // pred_check
      _
    $region62: #{densenet_forward.7} parent=5 // pred_check_branch
      %341 = sbr.rel (%p338) target = $region64
    $region63: #{densenet_forward.7} parent=5 // pred_region
      %s342 = ssub.s32 %s17, 1
      %p343 = scmp.lt.s32.totalorder %s22, 1
      %s344 = scalar_select %p343, %s22, 1
      %s345 = smul.addr %s344, 3
      %s346 = smul.addr %s345, 8
      %s347 = scalar_lea.vmem %s0, %s346
      %p348 = pneg %p43
      %p349 = pneg %p40
      %p350 = pneg %p64
      %p351 = pneg %p61
      %p352 = pneg %p85
      %p353 = pneg %p82
      %p354 = pneg %p106
      %p355 = pneg %p103
      %p356 = pneg %p127
      %p357 = pneg %p124
      %p358 = pneg %p148
      %p359 = pneg %p145
      %p360 = pneg %p169
      %p361 = pneg %p166
      %p362 = pneg %p190
      %p363 = pneg %p187
      %p364 = pneg %p211
      %p365 = pneg %p208
      %p366 = pneg %p232
      %p367 = pneg %p229
      %p368 = pneg %p253
      %p369 = pneg %p250
      %p370 = pneg %p279
      %p371 = pneg %p276
      %p372 = scmp.lt.s32.totalorder %s22, 1
      %s373 = scalar_select %p372, %s22, 1
      %s374 = smul.addr %s373, 3
      %s375 = smul.addr %s374, 8
      %s376 = scalar_lea.vmem %s11, %s375
      %p377 = scmp.lt.s32.totalorder %s22, 1
      %s378 = scalar_select %p377, %s22, 1
      %s379 = smul.addr %s378, 3
      %s380 = smul.addr %s379, 8
      %s381 = scalar_lea.vmem %s0, %s380
      %p382 = scmp.lt.s32.totalorder %s22, 1
      %s383 = scalar_select %p382, %s22, 1
      %s384 = smul.addr %s383, 3
      %s385 = smul.addr %s384, 8
      %s386 = scalar_lea.vmem %s11, %s385
      %v388 = vld [vmem:[%s1] sm:$0xff]
      %v389 = vld [vmem:[%s1 + $0x8] sm:$0xff]
      %v390 = vld [vmem:[%s1 + $0x10] sm:$0xf]
      %v391 = vld [vmem:[%s381] sm:$0xff]
      %v392 = vld [vmem:[%s381 + $0x8] sm:$0xff]
      %v393 = vld [vmem:[%s381 + $0x10] sm:$0xf]
      %394 = vst [vmem:[#allocation2] sm:$0xff] 0.0
      %395 = vst [vmem:[#allocation2 + $0x8] sm:$0xff] 0.0
      %vm396 = vcmask 261120
      %397 = vst.msk [vmem:[#allocation2 + $0x10] sm:$0xff] %vm396, 0.0
      %398 = vst [vmem:[#allocation2 + $0x18] sm:$0xff] 0.0
      %399 = vst [vmem:[#allocation2 + $0x20] sm:$0xff] 0.0
      %400 = vst.msk [vmem:[#allocation2 + $0x28] sm:$0xff] %vm396, 0.0
      %401 = vst [vmem:[#allocation2 + $0x30] sm:$0xf] 0.0
      %402 = vst [vmem:[#allocation2 + $0x38] sm:$0xf] 0.0
      %vm403 = vcmask 257024
      %404 = vst.msk [vmem:[#allocation2 + $0x40] sm:$0xf] %vm403, 0.0
      %v405 = vld [vmem:[%s2] sm:$0x1]
      %v407 = vlaneseq
      %v408 = vshrl.u32 %v407, 7
      %v409 = vsub.s32 0, %v408
      %v410 = vrot.slane %v405, %v409
      %v412 = vmul.f32 %v391, %v410
      %v413 = vmul.f32 %v392, %v410
      %v414 = vmul.f32 %v393, %v410
      %v415 = vld [vmem:[%s3] sm:$0x1]
      %v417 = vlaneseq
      %v418 = vshrl.u32 %v417, 7
      %v419 = vsub.s32 0, %v418
      %v420 = vrot.slane %v415, %v419
      %v422 = vadd.f32 %v412, %v420
      %v423 = vadd.f32 %v413, %v420
      %v424 = vadd.f32 %v414, %v420
      %v425 = vmax.f32 %v422, 0.0
      %v426 = vmax.f32 %v423, 0.0
      %v427 = vmax.f32 %v424, 0.0
      %v428 = vpack.c.bf16 %v426, %v425
      %v429 = vpack.c.bf16 %v427, %v427
      %v430 = vld [vmem:[%s4] sm:$0xf]
      %v431 = vld [vmem:[%s4 + $0x4] sm:$0xf]
      %v432 = vld [vmem:[%s4 + $0x8] sm:$0xf]
      %v433 = vld [vmem:[%s4 + $0xc] sm:$0xf]
      %v434 = vld [vmem:[%s4 + $0x10] sm:$0xf]
      %v435 = vld [vmem:[%s4 + $0x14] sm:$0xf]
      %v436 = vld [vmem:[%s4 + $0x18] sm:$0xf]
      %v437 = vld [vmem:[%s4 + $0x1c] sm:$0xf]
      %v438 = vld [vmem:[%s4 + $0x20] sm:$0xf]
      %v439 = vld [vmem:[%s4 + $0x24] sm:$0xf]
      %v440 = vld [vmem:[%s4 + $0x28] sm:$0xf]
      %v441 = vld [vmem:[%s4 + $0x2c] sm:$0xf]
      %v442 = vld [vmem:[%s4 + $0x30] sm:$0xf]
      %v443 = vld [vmem:[%s4 + $0x34] sm:$0xf]
      %v444 = vld [vmem:[%s4 + $0x38] sm:$0xf]
      %v445 = vld [vmem:[%s4 + $0x3c] sm:$0xf]
      %v462 = vunpack.c.l.b16 %v430
      %v463 = vunpack.c.l.b16 %v431
      %v464 = vunpack.c.l.b16 %v432
      %v465 = vunpack.c.l.b16 %v433
      %v466 = vunpack.c.l.b16 %v434
      %v467 = vunpack.c.l.b16 %v435
      %v468 = vunpack.c.l.b16 %v436
      %v469 = vunpack.c.l.b16 %v437
      %v470 = vunpack.c.l.b16 %v438
      %v471 = vunpack.c.l.b16 %v439
      %v472 = vunpack.c.l.b16 %v440
      %v473 = vunpack.c.l.b16 %v441
      %v474 = vunpack.c.l.b16 %v442
      %v475 = vunpack.c.l.b16 %v443
      %v476 = vunpack.c.l.b16 %v444
      %v477 = vunpack.c.l.b16 %v445
      %v478 = vpack.c.b16 %v463, %v462
      %v479 = vpack.c.b16 %v465, %v464
      %v480 = vpack.c.b16 %v467, %v466
      %v481 = vpack.c.b16 %v469, %v468
      %v482 = vpack.c.b16 %v471, %v470
      %v483 = vpack.c.b16 %v473, %v472
      %v484 = vpack.c.b16 %v475, %v474
      %v485 = vpack.c.b16 %v477, %v476
      %494 = vmatprep.subr.bf16.mxu0 0
      %495 = vmatpush1.bf16.msra.mxu0 %v485
      %496 = vmatprep.subr.bf16.mxu0 0
      %497 = vmatpush1.bf16.msra.mxu0 %v484
      %498 = vmatprep.subr.bf16.mxu0 0
      %499 = vmatpush1.bf16.msra.mxu0 %v483
      %500 = vmatprep.subr.bf16.mxu0 0
      %501 = vmatpush1.bf16.msra.mxu0 %v482
      %502 = vmatprep.subr.bf16.mxu0 0
      %503 = vmatpush1.bf16.msra.mxu0 %v481
      %504 = vmatprep.subr.bf16.mxu0 0
      %505 = vmatpush1.bf16.msra.mxu0 %v480
      %506 = vmatprep.subr.bf16.mxu0 0
      %507 = vmatpush1.bf16.msra.mxu0 %v479
      %508 = vmatprep.subr.bf16.mxu0 0
      %509 = vmatpush1.bf16.msra.mxu0 %v478
      %510 = vmatprep.subr.bf16.mxu0 0
      %511 = vmatpush2.bf16.msra.mxu0 0
      %512 = vmatprep.subr.bf16.mxu0 0
      %513 = vmatpush2.bf16.msra.mxu0 0
      %514 = vmatprep.subr.bf16.mxu0 0
      %515 = vmatpush2.bf16.msra.mxu0 0
      %516 = vmatprep.subr.bf16.mxu0 0
      %517 = vmatpush2.bf16.msra.mxu0 0
      %518 = vmatprep.subr.bf16.mxu0 0
      %519 = vmatpush2.bf16.msra.mxu0 0
      %520 = vmatprep.subr.bf16.mxu0 0
      %521 = vmatpush2.bf16.msra.mxu0 0
      %522 = vmatprep.subr.bf16.mxu0 0
      %523 = vmatpush2.bf16.msra.mxu0 0
      %524 = vmatprep.subr.bf16.mxu0 0
      %525 = vmatpush2.bf16.msra.mxu0 0
      %526 = vmatprep.mubr.bf16.mxu0 0
      %527 = vmatmul.mubr.bf16.gmra.mxu0 %v428
      %v528 = vpop.f32.mrf.mxu0
      %v529 = vadd.f32 0.0, %v528
      %v530 = vpop.f32.mrf.mxu0
      %v531 = vpop.f32.mrf.mxu0
      %v532 = vadd.f32 0.0, %v531
      %v533 = vpop.f32.mrf.mxu0
      %534 = vmatprep.mubr.bf16.mxu0 0
      %535 = vmatmul.mubr.bf16.gmra.mxu0 %v429
      %v536 = vpop.f32.mrf.mxu0
      %v537 = vadd.f32 0.0, %v536
      %v538 = vpop.f32.mrf.mxu0
      %v539 = vpop.f32.mrf.mxu0
      %v540 = vpop.f32.mrf.mxu0
      %541 = vdwg.mxu0
      %v542 = vld [vmem:[%s5] sm:$0x1]
      %v544 = vlaneseq
      %v545 = vshrl.u32 %v544, 7
      %v546 = vsub.s32 0, %v545
      %v547 = vrot.slane %v542, %v546
      %v549 = vmul.f32 %v529, %v547
      %v550 = vmul.f32 %v532, %v547
      %v551 = vmul.f32 %v537, %v547
      %v552 = vld [vmem:[%s6] sm:$0x1]
      %v554 = vlaneseq
      %v555 = vshrl.u32 %v554, 7
      %v556 = vsub.s32 0, %v555
      %v557 = vrot.slane %v552, %v556
      %v559 = vadd.f32 %v549, %v557
      %v560 = vadd.f32 %v550, %v557
      %v561 = vadd.f32 %v551, %v557
      %v562 = vmax.f32 %v559, 0.0
      %v563 = vmax.f32 %v560, 0.0
      %v564 = vmax.f32 %v561, 0.0
      %566 = vset.pattern.permute.xlu0 0
      %567 = vperm.xlu0 %566, %v388
      %v568 = vpop.permute.xlu0 %567
      %571 = vset.pattern.permute.xlu0 0
      %572 = vperm.xlu0 %571, %v389
      %v573 = vpop.permute.xlu0 %572
      %576 = vset.pattern.permute.xlu0 0
      %577 = vperm.xlu0 %576, %v390
      %v578 = vpop.permute.xlu0 %577
      %v580 = vmul.f32 %v562, %v568
      %v581 = vmul.f32 %v563, %v573
      %v582 = vmul.f32 %v564, %v578
      %vm585 = vcmask 1045504
      %v586 = vrot.slane %v580, 2
      %v587 = vrot.slane %v581, 2
      %v588 = vsel %vm585, %v586, %v587
      %vm592 = vcmask 261126
      %593 = vst.msk [vmem:[#allocation2] sm:$0xc0] %vm592, %v586
      %594 = vst.msk [vmem:[#allocation2 + $0x18] sm:$0xff] %vm396, %v588
      %595 = vst.msk [vmem:[#allocation2 + $0x30] sm:$0xf] %vm403, %v587
      %vm596 = vcmask 1044480
      %v597 = vrot.slane %v580, 3
      %v598 = vrot.slane %v581, 3
      %v599 = vsel %vm596, %v597, %v598
      %600 = vrot.lane.b32.xlu0 %v597, 32
      %v601 = vpop.permute.xlu0 %600
      %602 = vrot.lane.b32.xlu0 %v599, 32
      %v603 = vpop.permute.xlu0 %602
      %604 = vrot.lane.b32.xlu0 %v598, 32
      %v605 = vpop.permute.xlu0 %604
      %vm609 = vcmask 523525
      %610 = vst.msk [vmem:[#allocation2] sm:$0xe0] %vm609, %v601
      %vm611 = vcmask 523520
      %612 = vst.msk [vmem:[#allocation2 + $0x18] sm:$0xff] %vm611, %v603
      %vm613 = vcmask 519424
      %614 = vst.msk [vmem:[#allocation2 + $0x30] sm:$0xf] %vm613, %v605
      %vm615 = vcmask 1043456
      %v616 = vrot.slane %v580, 4
      %v617 = vrot.slane %v581, 4
      %v618 = vsel %vm615, %v616, %v617
      %619 = vrot.lane.b32.xlu0 %v616, 64
      %v620 = vpop.permute.xlu0 %619
      %621 = vrot.lane.b32.xlu0 %v618, 64
      %v622 = vpop.permute.xlu0 %621
      %623 = vrot.lane.b32.xlu0 %v617, 64
      %v624 = vpop.permute.xlu0 %623
      %vm628 = vcmask 785924
      %629 = vst.msk [vmem:[#allocation2] sm:$0xf0] %vm628, %v620
      %vm630 = vcmask 785920
      %631 = vst.msk [vmem:[#allocation2 + $0x18] sm:$0xff] %vm630, %v622
      %vm632 = vcmask 781824
      %633 = vst.msk [vmem:[#allocation2 + $0x30] sm:$0xf] %vm632, %v624
      %vm635 = vcmask 1040384
      %v636 = vrot.slane %v580, 7
      %v637 = vrot.slane %v581, 7
      %v638 = vsel %vm635, %v636, %v637
      %v639 = vrot.slane %v582, 7
      %v640 = vsel %vm635, %v637, %v639
      %641 = vrot.lane.b32.xlu0 %v636, 96
      %v642 = vpop.permute.xlu0 %641
      %643 = vrot.lane.b32.xlu0 %v638, 96
      %v644 = vpop.permute.xlu0 %643
      %645 = vrot.lane.b32.xlu0 %v640, 96
      %v646 = vpop.permute.xlu0 %645
      %vm650 = vcmask 1048321
      %651 = vst.msk [vmem:[#allocation2] sm:$0xfe] %vm650, %v642
      %vm652 = vcmask 1048320
      %653 = vst.msk [vmem:[#allocation2 + $0x18] sm:$0xff] %vm652, %v644
      %vm654 = vcmask 1044224
      %655 = vst.msk [vmem:[#allocation2 + $0x30] sm:$0xf] %vm654, %v646
      %656 = vst.msk [vmem:[#allocation2 + $0x8] sm:$0xff] %vm396, %v580
      %657 = vst.msk [vmem:[#allocation2 + $0x20] sm:$0xff] %vm396, %v581
      %658 = vst.msk [vmem:[#allocation2 + $0x38] sm:$0xf] %vm403, %v582
      %vm659 = vcmask 1046528
      %v660 = vrot.slane %v580, 1
      %v661 = vrot.slane %v581, 1
      %v662 = vsel %vm659, %v660, %v661
      %v663 = vrot.slane %v582, 1
      %v664 = vsel %vm659, %v661, %v663
      %665 = vrot.lane.b32.xlu0 %v662, 32
      %v666 = vpop.permute.xlu0 %665
      %667 = vrot.lane.b32.xlu0 %v664, 32
      %v668 = vpop.permute.xlu0 %667
      %669 = vrot.lane.b32.xlu0 %v663, 32
      %v670 = vpop.permute.xlu0 %669
      %674 = vst.msk [vmem:[#allocation2 + $0x8] sm:$0xff] %vm611, %v666
      %675 = vst.msk [vmem:[#allocation2 + $0x20] sm:$0xff] %vm611, %v668
      %vm676 = vcmask 518400
      %677 = vst.msk [vmem:[#allocation2 + $0x38] sm:$0x7] %vm676, %v670
      %v678 = vrot.slane %v582, 4
      %v679 = vsel %vm615, %v617, %v678
      %680 = vrot.lane.b32.xlu0 %v679, 64
      %v681 = vpop.permute.xlu0 %680
      %683 = vst.msk [vmem:[#allocation2 + $0x8] sm:$0xff] %vm630, %v622
      %684 = vst.msk [vmem:[#allocation2 + $0x20] sm:$0xff] %vm630, %v681
      %vm685 = vcmask 1042432
      %v686 = vrot.slane %v580, 5
      %v687 = vrot.slane %v581, 5
      %v688 = vsel %vm685, %v686, %v687
      %v689 = vrot.slane %v582, 5
      %v690 = vsel %vm685, %v687, %v689
      %691 = vrot.lane.b32.xlu0 %v688, 96
      %v692 = vpop.permute.xlu0 %691
      %693 = vrot.lane.b32.xlu0 %v690, 96
      %v694 = vpop.permute.xlu0 %693
      %697 = vst.msk [vmem:[#allocation2 + $0x8] sm:$0xff] %vm652, %v692
      %vm698 = vcmask 1047296
      %699 = vst.msk [vmem:[#allocation2 + $0x20] sm:$0x7f] %vm698, %v694
      %vm700 = vcmask 1041408
      %v701 = vrot.slane %v580, 6
      %v702 = vrot.slane %v581, 6
      %v703 = vsel %vm700, %v701, %v702
      %v704 = vrot.slane %v582, 6
      %v705 = vsel %vm700, %v702, %v704
      %708 = vst.msk [vmem:[#allocation2 + $0x10] sm:$0xff] %vm396, %v703
      %vm709 = vcmask 259072
      %710 = vst.msk [vmem:[#allocation2 + $0x28] sm:$0x3f] %vm709, %v705
      %v711 = vld [vmem:[#allocation2] sm:$0xff]
      %v712 = vld [vmem:[#allocation2 + $0x8] sm:$0xff]
      %v713 = vld [vmem:[#allocation2 + $0x10] sm:$0xff]
      %v714 = vld [vmem:[#allocation2 + $0x18] sm:$0xff]
      %v715 = vld [vmem:[#allocation2 + $0x20] sm:$0xff]
      %v716 = vld [vmem:[#allocation2 + $0x28] sm:$0xff]
      %v717 = vld [vmem:[#allocation2 + $0x30] sm:$0xf]
      %v718 = vld [vmem:[#allocation2 + $0x38] sm:$0xf]
      %v719 = vld [vmem:[#allocation2 + $0x40] sm:$0xf]
      %v720 = vpack.c.bf16 %v714, %v711
      %v721 = vpack.c.bf16 %v715, %v712
      %v722 = vpack.c.bf16 %v716, %v713
      %v723 = vpack.c.bf16 %v717, %v717
      %v724 = vpack.c.bf16 %v718, %v718
      %v725 = vpack.c.bf16 %v719, %v719
      %v726 = vld [vmem:[%s7] sm:$0xf]
      %v727 = vld [vmem:[%s7 + $0x4] sm:$0xf]
      %v728 = vld [vmem:[%s7 + $0x8] sm:$0xf]
      %v729 = vld [vmem:[%s7 + $0xc] sm:$0xf]
      %v730 = vld [vmem:[%s7 + $0x10] sm:$0xf]
      %v731 = vld [vmem:[%s7 + $0x14] sm:$0xf]
      %v732 = vld [vmem:[%s7 + $0x18] sm:$0xf]
      %v733 = vld [vmem:[%s7 + $0x1c] sm:$0xf]
      %v734 = vld [vmem:[%s7 + $0x20] sm:$0xf]
      %v735 = vld [vmem:[%s7 + $0x24] sm:$0xf]
      %v736 = vld [vmem:[%s7 + $0x28] sm:$0xf]
      %v737 = vld [vmem:[%s7 + $0x2c] sm:$0xf]
      %v738 = vld [vmem:[%s7 + $0x30] sm:$0xf]
      %v739 = vld [vmem:[%s7 + $0x34] sm:$0xf]
      %v740 = vld [vmem:[%s7 + $0x38] sm:$0xf]
      %v741 = vld [vmem:[%s7 + $0x3c] sm:$0xf]
      %v742 = vld [vmem:[%s7 + $0x40] sm:$0xf]
      %v743 = vld [vmem:[%s7 + $0x44] sm:$0xf]
      %v744 = vld [vmem:[%s7 + $0x48] sm:$0xf]
      %v745 = vld [vmem:[%s7 + $0x4c] sm:$0xf]
      %v746 = vld [vmem:[%s7 + $0x50] sm:$0xf]
      %v747 = vld [vmem:[%s7 + $0x54] sm:$0xf]
      %v748 = vld [vmem:[%s7 + $0x58] sm:$0xf]
      %v749 = vld [vmem:[%s7 + $0x5c] sm:$0xf]
      %v750 = vld [vmem:[%s7 + $0x60] sm:$0xf]
      %v751 = vld [vmem:[%s7 + $0x64] sm:$0xf]
      %v752 = vld [vmem:[%s7 + $0x68] sm:$0xf]
      %v753 = vld [vmem:[%s7 + $0x6c] sm:$0xf]
      %v754 = vld [vmem:[%s7 + $0x70] sm:$0xf]
      %v755 = vld [vmem:[%s7 + $0x74] sm:$0xf]
      %v756 = vld [vmem:[%s7 + $0x78] sm:$0xf]
      %v757 = vld [vmem:[%s7 + $0x7c] sm:$0xf]
      %v758 = vld [vmem:[%s7 + $0x80] sm:$0xf]
      %v759 = vld [vmem:[%s7 + $0x84] sm:$0xf]
      %v760 = vld [vmem:[%s7 + $0x88] sm:$0xf]
      %v761 = vld [vmem:[%s7 + $0x8c] sm:$0xf]
      %v798 = vunpack.c.l.b16 %v726
      %v799 = vunpack.c.l.b16 %v727
      %v800 = vunpack.c.l.b16 %v728
      %v801 = vunpack.c.l.b16 %v729
      %v802 = vunpack.c.l.b16 %v730
      %v803 = vunpack.c.l.b16 %v731
      %v804 = vunpack.c.l.b16 %v732
      %v805 = vunpack.c.l.b16 %v733
      %v806 = vunpack.c.l.b16 %v734
      %v807 = vunpack.c.l.b16 %v735
      %v808 = vunpack.c.l.b16 %v736
      %v809 = vunpack.c.l.b16 %v737
      %v810 = vunpack.c.l.b16 %v738
      %v811 = vunpack.c.l.b16 %v739
      %v812 = vunpack.c.l.b16 %v740
      %v813 = vunpack.c.l.b16 %v741
      %v814 = vunpack.c.l.b16 %v742
      %v815 = vunpack.c.l.b16 %v743
      %v816 = vunpack.c.l.b16 %v744
      %v817 = vunpack.c.l.b16 %v745
      %v818 = vunpack.c.l.b16 %v746
      %v819 = vunpack.c.l.b16 %v747
      %v820 = vunpack.c.l.b16 %v748
      %v821 = vunpack.c.l.b16 %v749
      %v822 = vunpack.c.l.b16 %v750
      %v823 = vunpack.c.l.b16 %v751
      %v824 = vunpack.c.l.b16 %v752
      %v825 = vunpack.c.l.b16 %v753
      %v826 = vunpack.c.l.b16 %v754
      %v827 = vunpack.c.l.b16 %v755
      %v828 = vunpack.c.l.b16 %v756
      %v829 = vunpack.c.l.b16 %v757
      %v830 = vunpack.c.l.b16 %v758
      %v831 = vunpack.c.l.b16 %v759
      %v832 = vunpack.c.l.b16 %v760
      %v833 = vunpack.c.l.b16 %v761
      %v834 = vpack.c.b16 %v799, %v798
      %v835 = vpack.c.b16 %v801, %v800
      %v836 = vpack.c.b16 %v803, %v802
      %v837 = vpack.c.b16 %v805, %v804
      %v838 = vpack.c.b16 %v807, %v806
      %v839 = vpack.c.b16 %v809, %v808
      %v840 = vpack.c.b16 %v811, %v810
      %v841 = vpack.c.b16 %v813, %v812
      %v842 = vpack.c.b16 %v815, %v814
      %v843 = vpack.c.b16 %v817, %v816
      %v844 = vpack.c.b16 %v819, %v818
      %v845 = vpack.c.b16 %v821, %v820
      %v846 = vpack.c.b16 %v823, %v822
      %v847 = vpack.c.b16 %v825, %v824
      %v848 = vpack.c.b16 %v827, %v826
      %v849 = vpack.c.b16 %v829, %v828
      %v850 = vpack.c.b16 %v831, %v830
      %v851 = vpack.c.b16 %v833, %v832
      %v871 = vsel %vm396, %v722, 0
      %v874 = vsel %vm396, %v725, 0
      %876 = vmatprep.subr.bf16.mxu0 0
      %877 = vmatpush1.bf16.msra.mxu0 %v841
      %878 = vmatprep.subr.bf16.mxu0 0
      %879 = vmatpush1.bf16.msra.mxu0 %v840
      %880 = vmatprep.subr.bf16.mxu0 0
      %881 = vmatpush1.bf16.msra.mxu0 %v839
      %882 = vmatprep.subr.bf16.mxu0 0
      %883 = vmatpush1.bf16.msra.mxu0 %v838
      %884 = vmatprep.subr.bf16.mxu0 0
      %885 = vmatpush1.bf16.msra.mxu0 %v837
      %886 = vmatprep.subr.bf16.mxu0 0
      %887 = vmatpush1.bf16.msra.mxu0 %v836
      %888 = vmatprep.subr.bf16.mxu0 0
      %889 = vmatpush1.bf16.msra.mxu0 %v835
      %890 = vmatprep.subr.bf16.mxu0 0
      %891 = vmatpush1.bf16.msra.mxu0 %v834
      %892 = vmatprep.subr.bf16.mxu0 0
      %893 = vmatpush2.bf16.msra.mxu0 %v849
      %894 = vmatprep.subr.bf16.mxu0 0
      %895 = vmatpush2.bf16.msra.mxu0 %v848
      %896 = vmatprep.subr.bf16.mxu0 0
      %897 = vmatpush2.bf16.msra.mxu0 %v847
      %898 = vmatprep.subr.bf16.mxu0 0
      %899 = vmatpush2.bf16.msra.mxu0 %v846
      %900 = vmatprep.subr.bf16.mxu0 0
      %901 = vmatpush2.bf16.msra.mxu0 %v845
      %902 = vmatprep.subr.bf16.mxu0 0
      %903 = vmatpush2.bf16.msra.mxu0 %v844
      %904 = vmatprep.subr.bf16.mxu0 0
      %905 = vmatpush2.bf16.msra.mxu0 %v843
      %906 = vmatprep.subr.bf16.mxu0 0
      %907 = vmatpush2.bf16.msra.mxu0 %v842
      %908 = vmatprep.mubr.bf16.mxu0 %v721
      %909 = vmatmul.mubr.bf16.gmra.mxu0 %v720
      %v910 = vpop.f32.mrf.mxu0
      %v911 = vadd.f32 0.0, %v910
      %v912 = vpop.f32.mrf.mxu0
      %v913 = vpop.f32.mrf.mxu0
      %v914 = vadd.f32 0.0, %v913
      %v915 = vpop.f32.mrf.mxu0
      %916 = vmatprep.mubr.bf16.mxu0 %v724
      %917 = vmatmul.mubr.bf16.gmra.mxu0 %v723
      %v918 = vpop.f32.mrf.mxu0
      %v919 = vadd.f32 0.0, %v918
      %v920 = vpop.f32.mrf.mxu0
      %v921 = vpop.f32.mrf.mxu0
      %v922 = vpop.f32.mrf.mxu0
      %923 = vdwg.mxu0
      %924 = vmatprep.subr.bf16.mxu0 0
      %925 = vmatpush1.bf16.msra.mxu0 0
      %926 = vmatprep.subr.bf16.mxu0 0
      %927 = vmatpush1.bf16.msra.mxu0 0
      %928 = vmatprep.subr.bf16.mxu0 0
      %929 = vmatpush1.bf16.msra.mxu0 0
      %930 = vmatprep.subr.bf16.mxu0 0
      %931 = vmatpush1.bf16.msra.mxu0 0
      %932 = vmatprep.subr.bf16.mxu0 0
      %933 = vmatpush1.bf16.msra.mxu0 0
      %934 = vmatprep.subr.bf16.mxu0 0
      %935 = vmatpush1.bf16.msra.mxu0 0
      %936 = vmatprep.subr.bf16.mxu0 0
      %937 = vmatpush1.bf16.msra.mxu0 %v851
      %938 = vmatprep.subr.bf16.mxu0 0
      %939 = vmatpush1.bf16.msra.mxu0 %v850
      %940 = vmatprep.subr.bf16.mxu0 0
      %941 = vmatpush2.bf16.msra.mxu0 0
      %942 = vmatprep.subr.bf16.mxu0 0
      %943 = vmatpush2.bf16.msra.mxu0 0
      %944 = vmatprep.subr.bf16.mxu0 0
      %945 = vmatpush2.bf16.msra.mxu0 0
      %946 = vmatprep.subr.bf16.mxu0 0
      %947 = vmatpush2.bf16.msra.mxu0 0
      %948 = vmatprep.subr.bf16.mxu0 0
      %949 = vmatpush2.bf16.msra.mxu0 0
      %950 = vmatprep.subr.bf16.mxu0 0
      %951 = vmatpush2.bf16.msra.mxu0 0
      %952 = vmatprep.subr.bf16.mxu0 0
      %953 = vmatpush2.bf16.msra.mxu0 0
      %954 = vmatprep.subr.bf16.mxu0 0
      %955 = vmatpush2.bf16.msra.mxu0 0
      %956 = vmatprep.mubr.bf16.mxu0 0
      %957 = vmatmul.mubr.bf16.gmra.mxu0 %v871
      %v958 = vpop.f32.mrf.mxu0
      %v959 = vadd.f32 %v911, %v958
      %v960 = vpop.f32.mrf.mxu0
      %v961 = vpop.f32.mrf.mxu0
      %v962 = vadd.f32 %v914, %v961
      %v963 = vpop.f32.mrf.mxu0
      %964 = vmatprep.mubr.bf16.mxu0 0
      %965 = vmatmul.mubr.bf16.gmra.mxu0 %v874
      %v966 = vpop.f32.mrf.mxu0
      %v967 = vadd.f32 %v919, %v966
      %v968 = vpop.f32.mrf.mxu0
      %v969 = vpop.f32.mrf.mxu0
      %v970 = vpop.f32.mrf.mxu0
      %971 = vdwg.mxu0
      %v972 = vadd.f32 %v391, %v959
      %v973 = vadd.f32 %v392, %v962
      %v974 = vadd.f32 %v393, %v967
      %s975 = scalar_lea.vmem %s2, 1
      %v976 = vld [vmem:[%s975] sm:$0x1]
      %v978 = vlaneseq
      %v979 = vshrl.u32 %v978, 7
      %v980 = vsub.s32 0, %v979
      %v981 = vrot.slane %v976, %v980
      %v983 = vmul.f32 %v972, %v981
      %v984 = vmul.f32 %v973, %v981
      %v985 = vmul.f32 %v974, %v981
      %s986 = scalar_lea.vmem %s3, 1
      %v987 = vld [vmem:[%s986] sm:$0x1]
      %v989 = vlaneseq
      %v990 = vshrl.u32 %v989, 7
      %v991 = vsub.s32 0, %v990
      %v992 = vrot.slane %v987, %v991
      %v994 = vadd.f32 %v983, %v992
      %v995 = vadd.f32 %v984, %v992
      %v996 = vadd.f32 %v985, %v992
      %v997 = vmax.f32 %v994, 0.0
      %v998 = vmax.f32 %v995, 0.0
      %v999 = vmax.f32 %v996, 0.0
      %v1000 = vpack.c.bf16 %v998, %v997
      %v1001 = vpack.c.bf16 %v999, %v999
      %s1002 = scalar_lea.vmem %s4, 64
      %v1003 = vld [vmem:[%s1002] sm:$0xf]
      %v1004 = vld [vmem:[%s1002 + $0x4] sm:$0xf]
      %v1005 = vld [vmem:[%s1002 + $0x8] sm:$0xf]
      %v1006 = vld [vmem:[%s1002 + $0xc] sm:$0xf]
      %v1007 = vld [vmem:[%s1002 + $0x10] sm:$0xf]
      %v1008 = vld [vmem:[%s1002 + $0x14] sm:$0xf]
      %v1009 = vld [vmem:[%s1002 + $0x18] sm:$0xf]
      %v1010 = vld [vmem:[%s1002 + $0x1c] sm:$0xf]
      %v1011 = vld [vmem:[%s1002 + $0x20] sm:$0xf]
      %v1012 = vld [vmem:[%s1002 + $0x24] sm:$0xf]
      %v1013 = vld [vmem:[%s1002 + $0x28] sm:$0xf]
      %v1014 = vld [vmem:[%s1002 + $0x2c] sm:$0xf]
      %v1015 = vld [vmem:[%s1002 + $0x30] sm:$0xf]
      %v1016 = vld [vmem:[%s1002 + $0x34] sm:$0xf]
      %v1017 = vld [vmem:[%s1002 + $0x38] sm:$0xf]
      %v1018 = vld [vmem:[%s1002 + $0x3c] sm:$0xf]
      %v1035 = vunpack.c.l.b16 %v1003
      %v1036 = vunpack.c.l.b16 %v1004
      %v1037 = vunpack.c.l.b16 %v1005
      %v1038 = vunpack.c.l.b16 %v1006
      %v1039 = vunpack.c.l.b16 %v1007
      %v1040 = vunpack.c.l.b16 %v1008
      %v1041 = vunpack.c.l.b16 %v1009
      %v1042 = vunpack.c.l.b16 %v1010
      %v1043 = vunpack.c.l.b16 %v1011
      %v1044 = vunpack.c.l.b16 %v1012
      %v1045 = vunpack.c.l.b16 %v1013
      %v1046 = vunpack.c.l.b16 %v1014
      %v1047 = vunpack.c.l.b16 %v1015
      %v1048 = vunpack.c.l.b16 %v1016
      %v1049 = vunpack.c.l.b16 %v1017
      %v1050 = vunpack.c.l.b16 %v1018
      %v1051 = vpack.c.b16 %v1036, %v1035
      %v1052 = vpack.c.b16 %v1038, %v1037
      %v1053 = vpack.c.b16 %v1040, %v1039
      %v1054 = vpack.c.b16 %v1042, %v1041
      %v1055 = vpack.c.b16 %v1044, %v1043
      %v1056 = vpack.c.b16 %v1046, %v1045
      %v1057 = vpack.c.b16 %v1048, %v1047
      %v1058 = vpack.c.b16 %v1050, %v1049
      %1067 = vmatprep.subr.bf16.mxu0 0
      %1068 = vmatpush1.bf16.msra.mxu0 %v1058
      %1069 = vmatprep.subr.bf16.mxu0 0
      %1070 = vmatpush1.bf16.msra.mxu0 %v1057
      %1071 = vmatprep.subr.bf16.mxu0 0
      %1072 = vmatpush1.bf16.msra.mxu0 %v1056
      %1073 = vmatprep.subr.bf16.mxu0 0
      %1074 = vmatpush1.bf16.msra.mxu0 %v1055
      %1075 = vmatprep.subr.bf16.mxu0 0
      %1076 = vmatpush1.bf16.msra.mxu0 %v1054
      %1077 = vmatprep.subr.bf16.mxu0 0
      %1078 = vmatpush1.bf16.msra.mxu0 %v1053
      %1079 = vmatprep.subr.bf16.mxu0 0
      %1080 = vmatpush1.bf16.msra.mxu0 %v1052
      %1081 = vmatprep.subr.bf16.mxu0 0
      %1082 = vmatpush1.bf16.msra.mxu0 %v1051
      %1083 = vmatprep.subr.bf16.mxu0 0
      %1084 = vmatpush2.bf16.msra.mxu0 0
      %1085 = vmatprep.subr.bf16.mxu0 0
      %1086 = vmatpush2.bf16.msra.mxu0 0
      %1087 = vmatprep.subr.bf16.mxu0 0
      %1088 = vmatpush2.bf16.msra.mxu0 0
      %1089 = vmatprep.subr.bf16.mxu0 0
      %1090 = vmatpush2.bf16.msra.mxu0 0
      %1091 = vmatprep.subr.bf16.mxu0 0
      %1092 = vmatpush2.bf16.msra.mxu0 0
      %1093 = vmatprep.subr.bf16.mxu0 0
      %1094 = vmatpush2.bf16.msra.mxu0 0
      %1095 = vmatprep.subr.bf16.mxu0 0
      %1096 = vmatpush2.bf16.msra.mxu0 0
      %1097 = vmatprep.subr.bf16.mxu0 0
      %1098 = vmatpush2.bf16.msra.mxu0 0
      %1099 = vmatprep.mubr.bf16.mxu0 0
      %1100 = vmatmul.mubr.bf16.gmra.mxu0 %v1000
      %v1101 = vpop.f32.mrf.mxu0
      %v1102 = vadd.f32 0.0, %v1101
      %v1103 = vpop.f32.mrf.mxu0
      %v1104 = vpop.f32.mrf.mxu0
      %v1105 = vadd.f32 0.0, %v1104
      %v1106 = vpop.f32.mrf.mxu0
      %1107 = vmatprep.mubr.bf16.mxu0 0
      %1108 = vmatmul.mubr.bf16.gmra.mxu0 %v1001
      %v1109 = vpop.f32.mrf.mxu0
      %v1110 = vadd.f32 0.0, %v1109
      %v1111 = vpop.f32.mrf.mxu0
      %v1112 = vpop.f32.mrf.mxu0
      %v1113 = vpop.f32.mrf.mxu0
      %1114 = vdwg.mxu0
      %s1115 = scalar_lea.vmem %s5, 1
      %v1116 = vld [vmem:[%s1115] sm:$0x1]
      %v1118 = vlaneseq
      %v1119 = vshrl.u32 %v1118, 7
      %v1120 = vsub.s32 0, %v1119
      %v1121 = vrot.slane %v1116, %v1120
      %v1123 = vmul.f32 %v1102, %v1121
      %v1124 = vmul.f32 %v1105, %v1121
      %v1125 = vmul.f32 %v1110, %v1121
      %s1126 = scalar_lea.vmem %s6, 1
      %v1127 = vld [vmem:[%s1126] sm:$0x1]
      %v1129 = vlaneseq
      %v1130 = vshrl.u32 %v1129, 7
      %v1131 = vsub.s32 0, %v1130
      %v1132 = vrot.slane %v1127, %v1131
      %v1134 = vadd.f32 %v1123, %v1132
      %v1135 = vadd.f32 %v1124, %v1132
      %v1136 = vadd.f32 %v1125, %v1132
      %v1137 = vmax.f32 %v1134, 0.0
      %v1138 = vmax.f32 %v1135, 0.0
      %v1139 = vmax.f32 %v1136, 0.0
      %v1140 = vmul.f32 %v1137, %v568
      %v1141 = vmul.f32 %v1138, %v573
      %v1142 = vmul.f32 %v1139, %v578
      %v1145 = vrot.slane %v1140, 2
      %v1146 = vrot.slane %v1141, 2
      %v1147 = vsel %vm585, %v1145, %v1146
      %1151 = vst.msk [vmem:[#allocation2] sm:$0xc0] %vm592, %v1145
      %1152 = vst.msk [vmem:[#allocation2 + $0x18] sm:$0xff] %vm396, %v1147
      %1153 = vst.msk [vmem:[#allocation2 + $0x30] sm:$0xf] %vm403, %v1146
      %v1154 = vrot.slane %v1140, 3
      %v1155 = vrot.slane %v1141, 3
      %v1156 = vsel %vm596, %v1154, %v1155
      %1157 = vrot.lane.b32.xlu0 %v1154, 32
      %v1158 = vpop.permute.xlu0 %1157
      %1159 = vrot.lane.b32.xlu0 %v1156, 32
      %v1160 = vpop.permute.xlu0 %1159
      %1161 = vrot.lane.b32.xlu0 %v1155, 32
      %v1162 = vpop.permute.xlu0 %1161
      %1166 = vst.msk [vmem:[#allocation2] sm:$0xe0] %vm609, %v1158
      %1167 = vst.msk [vmem:[#allocation2 + $0x18] sm:$0xff] %vm611, %v1160
      %1168 = vst.msk [vmem:[#allocation2 + $0x30] sm:$0xf] %vm613, %v1162
      %v1169 = vrot.slane %v1140, 4
      %v1170 = vrot.slane %v1141, 4
      %v1171 = vsel %vm615, %v1169, %v1170
      %1172 = vrot.lane.b32.xlu0 %v1169, 64
      %v1173 = vpop.permute.xlu0 %1172
      %1174 = vrot.lane.b32.xlu0 %v1171, 64
      %v1175 = vpop.permute.xlu0 %1174
      %1176 = vrot.lane.b32.xlu0 %v1170, 64
      %v1177 = vpop.permute.xlu0 %1176
      %1181 = vst.msk [vmem:[#allocation2] sm:$0xf0] %vm628, %v1173
      %1182 = vst.msk [vmem:[#allocation2 + $0x18] sm:$0xff] %vm630, %v1175
      %1183 = vst.msk [vmem:[#allocation2 + $0x30] sm:$0xf] %vm632, %v1177
      %v1185 = vrot.slane %v1140, 7
      %v1186 = vrot.slane %v1141, 7
      %v1187 = vsel %vm635, %v1185, %v1186
      %v1188 = vrot.slane %v1142, 7
      %v1189 = vsel %vm635, %v1186, %v1188
      %1190 = vrot.lane.b32.xlu0 %v1185, 96
      %v1191 = vpop.permute.xlu0 %1190
      %1192 = vrot.lane.b32.xlu0 %v1187, 96
      %v1193 = vpop.permute.xlu0 %1192
      %1194 = vrot.lane.b32.xlu0 %v1189, 96
      %v1195 = vpop.permute.xlu0 %1194
      %1199 = vst.msk [vmem:[#allocation2] sm:$0xfe] %vm650, %v1191
      %1200 = vst.msk [vmem:[#allocation2 + $0x18] sm:$0xff] %vm652, %v1193
      %1201 = vst.msk [vmem:[#allocation2 + $0x30] sm:$0xf] %vm654, %v1195
      %1202 = vst.msk [vmem:[#allocation2 + $0x8] sm:$0xff] %vm396, %v1140
      %1203 = vst.msk [vmem:[#allocation2 + $0x20] sm:$0xff] %vm396, %v1141
      %1204 = vst.msk [vmem:[#allocation2 + $0x38] sm:$0xf] %vm403, %v1142
      %v1205 = vrot.slane %v1140, 1
      %v1206 = vrot.slane %v1141, 1
      %v1207 = vsel %vm659, %v1205, %v1206
      %v1208 = vrot.slane %v1142, 1
      %v1209 = vsel %vm659, %v1206, %v1208
      %1210 = vrot.lane.b32.xlu0 %v1207, 32
      %v1211 = vpop.permute.xlu0 %1210
      %1212 = vrot.lane.b32.xlu0 %v1209, 32
      %v1213 = vpop.permute.xlu0 %1212
      %1214 = vrot.lane.b32.xlu0 %v1208, 32
      %v1215 = vpop.permute.xlu0 %1214
      %1219 = vst.msk [vmem:[#allocation2 + $0x8] sm:$0xff] %vm611, %v1211
      %1220 = vst.msk [vmem:[#allocation2 + $0x20] sm:$0xff] %vm611, %v1213
      %1221 = vst.msk [vmem:[#allocation2 + $0x38] sm:$0x7] %vm676, %v1215
      %v1222 = vrot.slane %v1142, 4
      %v1223 = vsel %vm615, %v1170, %v1222
      %1224 = vrot.lane.b32.xlu0 %v1223, 64
      %v1225 = vpop.permute.xlu0 %1224
      %1227 = vst.msk [vmem:[#allocation2 + $0x8] sm:$0xff] %vm630, %v1175
      %1228 = vst.msk [vmem:[#allocation2 + $0x20] sm:$0xff] %vm630, %v1225
      %v1229 = vrot.slane %v1140, 5
      %v1230 = vrot.slane %v1141, 5
      %v1231 = vsel %vm685, %v1229, %v1230
      %v1232 = vrot.slane %v1142, 5
      %v1233 = vsel %vm685, %v1230, %v1232
      %1234 = vrot.lane.b32.xlu0 %v1231, 96
      %v1235 = vpop.permute.xlu0 %1234
      %1236 = vrot.lane.b32.xlu0 %v1233, 96
      %v1237 = vpop.permute.xlu0 %1236
      %1240 = vst.msk [vmem:[#allocation2 + $0x8] sm:$0xff] %vm652, %v1235
      %1241 = vst.msk [vmem:[#allocation2 + $0x20] sm:$0x7f] %vm698, %v1237
      %v1242 = vrot.slane %v1140, 6
      %v1243 = vrot.slane %v1141, 6
      %v1244 = vsel %vm700, %v1242, %v1243
      %v1245 = vrot.slane %v1142, 6
      %v1246 = vsel %vm700, %v1243, %v1245
      %1249 = vst.msk [vmem:[#allocation2 + $0x10] sm:$0xff] %vm396, %v1244
      %1250 = vst.msk [vmem:[#allocation2 + $0x28] sm:$0x3f] %vm709, %v1246
      %v1251 = vld [vmem:[#allocation2] sm:$0xff]
      %v1252 = vld [vmem:[#allocation2 + $0x8] sm:$0xff]
      %v1253 = vld [vmem:[#allocation2 + $0x10] sm:$0xff]
      %v1254 = vld [vmem:[#allocation2 + $0x18] sm:$0xff]
      %v1255 = vld [vmem:[#allocation2 + $0x20] sm:$0xff]
      %v1256 = vld [vmem:[#allocation2 + $0x28] sm:$0xff]
      %v1257 = vld [vmem:[#allocation2 + $0x30] sm:$0xf]
      %v1258 = vld [vmem:[#allocation2 + $0x38] sm:$0xf]
      %v1259 = vld [vmem:[#allocation2 + $0x40] sm:$0xf]
      %v1260 = vpack.c.bf16 %v1254, %v1251
      %v1261 = vpack.c.bf16 %v1255, %v1252
      %v1262 = vpack.c.bf16 %v1256, %v1253
      %v1263 = vpack.c.bf16 %v1257, %v1257
      %v1264 = vpack.c.bf16 %v1258, %v1258
      %v1265 = vpack.c.bf16 %v1259, %v1259
      %s1266 = scalar_lea.vmem %s7, 144
      %v1267 = vld [vmem:[%s1266] sm:$0xf]
      %v1268 = vld [vmem:[%s1266 + $0x4] sm:$0xf]
      %v1269 = vld [vmem:[%s1266 + $0x8] sm:$0xf]
      %v1270 = vld [vmem:[%s1266 + $0xc] sm:$0xf]
      %v1271 = vld [vmem:[%s1266 + $0x10] sm:$0xf]
      %v1272 = vld [vmem:[%s1266 + $0x14] sm:$0xf]
      %v1273 = vld [vmem:[%s1266 + $0x18] sm:$0xf]
      %v1274 = vld [vmem:[%s1266 + $0x1c] sm:$0xf]
      %v1275 = vld [vmem:[%s1266 + $0x20] sm:$0xf]
      %v1276 = vld [vmem:[%s1266 + $0x24] sm:$0xf]
      %v1277 = vld [vmem:[%s1266 + $0x28] sm:$0xf]
      %v1278 = vld [vmem:[%s1266 + $0x2c] sm:$0xf]
      %v1279 = vld [vmem:[%s1266 + $0x30] sm:$0xf]
      %v1280 = vld [vmem:[%s1266 + $0x34] sm:$0xf]
      %v1281 = vld [vmem:[%s1266 + $0x38] sm:$0xf]
      %v1282 = vld [vmem:[%s1266 + $0x3c] sm:$0xf]
      %v1283 = vld [vmem:[%s1266 + $0x40] sm:$0xf]
      %v1284 = vld [vmem:[%s1266 + $0x44] sm:$0xf]
      %v1285 = vld [vmem:[%s1266 + $0x48] sm:$0xf]
      %v1286 = vld [vmem:[%s1266 + $0x4c] sm:$0xf]
      %v1287 = vld [vmem:[%s1266 + $0x50] sm:$0xf]
      %v1288 = vld [vmem:[%s1266 + $0x54] sm:$0xf]
      %v1289 = vld [vmem:[%s1266 + $0x58] sm:$0xf]
      %v1290 = vld [vmem:[%s1266 + $0x5c] sm:$0xf]
      %v1291 = vld [vmem:[%s1266 + $0x60] sm:$0xf]
      %v1292 = vld [vmem:[%s1266 + $0x64] sm:$0xf]
      %v1293 = vld [vmem:[%s1266 + $0x68] sm:$0xf]
      %v1294 = vld [vmem:[%s1266 + $0x6c] sm:$0xf]
      %v1295 = vld [vmem:[%s1266 + $0x70] sm:$0xf]
      %v1296 = vld [vmem:[%s1266 + $0x74] sm:$0xf]
      %v1297 = vld [vmem:[%s1266 + $0x78] sm:$0xf]
      %v1298 = vld [vmem:[%s1266 + $0x7c] sm:$0xf]
      %v1299 = vld [vmem:[%s1266 + $0x80] sm:$0xf]
      %v1300 = vld [vmem:[%s1266 + $0x84] sm:$0xf]
      %v1301 = vld [vmem:[%s1266 + $0x88] sm:$0xf]
      %v1302 = vld [vmem:[%s1266 + $0x8c] sm:$0xf]
      %v1339 = vunpack.c.l.b16 %v1267
      %v1340 = vunpack.c.l.b16 %v1268
      %v1341 = vunpack.c.l.b16 %v1269
      %v1342 = vunpack.c.l.b16 %v1270
      %v1343 = vunpack.c.l.b16 %v1271
      %v1344 = vunpack.c.l.b16 %v1272
      %v1345 = vunpack.c.l.b16 %v1273
      %v1346 = vunpack.c.l.b16 %v1274
      %v1347 = vunpack.c.l.b16 %v1275
      %v1348 = vunpack.c.l.b16 %v1276
      %v1349 = vunpack.c.l.b16 %v1277
      %v1350 = vunpack.c.l.b16 %v1278
      %v1351 = vunpack.c.l.b16 %v1279
      %v1352 = vunpack.c.l.b16 %v1280
      %v1353 = vunpack.c.l.b16 %v1281
      %v1354 = vunpack.c.l.b16 %v1282
      %v1355 = vunpack.c.l.b16 %v1283
      %v1356 = vunpack.c.l.b16 %v1284
      %v1357 = vunpack.c.l.b16 %v1285
      %v1358 = vunpack.c.l.b16 %v1286
      %v1359 = vunpack.c.l.b16 %v1287
      %v1360 = vunpack.c.l.b16 %v1288
      %v1361 = vunpack.c.l.b16 %v1289
      %v1362 = vunpack.c.l.b16 %v1290
      %v1363 = vunpack.c.l.b16 %v1291
      %v1364 = vunpack.c.l.b16 %v1292
      %v1365 = vunpack.c.l.b16 %v1293
      %v1366 = vunpack.c.l.b16 %v1294
      %v1367 = vunpack.c.l.b16 %v1295
      %v1368 = vunpack.c.l.b16 %v1296
      %v1369 = vunpack.c.l.b16 %v1297
      %v1370 = vunpack.c.l.b16 %v1298
      %v1371 = vunpack.c.l.b16 %v1299
      %v1372 = vunpack.c.l.b16 %v1300
      %v1373 = vunpack.c.l.b16 %v1301
      %v1374 = vunpack.c.l.b16 %v1302
      %v1375 = vpack.c.b16 %v1340, %v1339
      %v1376 = vpack.c.b16 %v1342, %v1341
      %v1377 = vpack.c.b16 %v1344, %v1343
      %v1378 = vpack.c.b16 %v1346, %v1345
      %v1379 = vpack.c.b16 %v1348, %v1347
      %v1380 = vpack.c.b16 %v1350, %v1349
      %v1381 = vpack.c.b16 %v1352, %v1351
      %v1382 = vpack.c.b16 %v1354, %v1353
      %v1383 = vpack.c.b16 %v1356, %v1355
      %v1384 = vpack.c.b16 %v1358, %v1357
      %v1385 = vpack.c.b16 %v1360, %v1359
      %v1386 = vpack.c.b16 %v1362, %v1361
      %v1387 = vpack.c.b16 %v1364, %v1363
      %v1388 = vpack.c.b16 %v1366, %v1365
      %v1389 = vpack.c.b16 %v1368, %v1367
      %v1390 = vpack.c.b16 %v1370, %v1369
      %v1391 = vpack.c.b16 %v1372, %v1371
      %v1392 = vpack.c.b16 %v1374, %v1373
      %v1412 = vsel %vm396, %v1262, 0
      %v1415 = vsel %vm396, %v1265, 0
      %1417 = vmatprep.subr.bf16.mxu0 0
      %1418 = vmatpush1.bf16.msra.mxu0 %v1382
      %1419 = vmatprep.subr.bf16.mxu0 0
      %1420 = vmatpush1.bf16.msra.mxu0 %v1381
      %1421 = vmatprep.subr.bf16.mxu0 0
      %1422 = vmatpush1.bf16.msra.mxu0 %v1380
      %1423 = vmatprep.subr.bf16.mxu0 0
      %1424 = vmatpush1.bf16.msra.mxu0 %v1379
      %1425 = vmatprep.subr.bf16.mxu0 0
      %1426 = vmatpush1.bf16.msra.mxu0 %v1378
      %1427 = vmatprep.subr.bf16.mxu0 0
      %1428 = vmatpush1.bf16.msra.mxu0 %v1377
      %1429 = vmatprep.subr.bf16.mxu0 0
      %1430 = vmatpush1.bf16.msra.mxu0 %v1376
      %1431 = vmatprep.subr.bf16.mxu0 0
      %1432 = vmatpush1.bf16.msra.mxu0 %v1375
      %1433 = vmatprep.subr.bf16.mxu0 0
      %1434 = vmatpush2.bf16.msra.mxu0 %v1390
      %1435 = vmatprep.subr.bf16.mxu0 0
      %1436 = vmatpush2.bf16.msra.mxu0 %v1389
      %1437 = vmatprep.subr.bf16.mxu0 0
      %1438 = vmatpush2.bf16.msra.mxu0 %v1388
      %1439 = vmatprep.subr.bf16.mxu0 0
      %1440 = vmatpush2.bf16.msra.mxu0 %v1387
      %1441 = vmatprep.subr.bf16.mxu0 0
      %1442 = vmatpush2.bf16.msra.mxu0 %v1386
      %1443 = vmatprep.subr.bf16.mxu0 0
      %1444 = vmatpush2.bf16.msra.mxu0 %v1385
      %1445 = vmatprep.subr.bf16.mxu0 0
      %1446 = vmatpush2.bf16.msra.mxu0 %v1384
      %1447 = vmatprep.subr.bf16.mxu0 0
      %1448 = vmatpush2.bf16.msra.mxu0 %v1383
      %1449 = vmatprep.mubr.bf16.mxu0 %v1261
      %1450 = vmatmul.mubr.bf16.gmra.mxu0 %v1260
      %v1451 = vpop.f32.mrf.mxu0
      %v1452 = vadd.f32 0.0, %v1451
      %v1453 = vpop.f32.mrf.mxu0
      %v1454 = vpop.f32.mrf.mxu0
      %v1455 = vadd.f32 0.0, %v1454
      %v1456 = vpop.f32.mrf.mxu0
      %1457 = vmatprep.mubr.bf16.mxu0 %v1264
      %1458 = vmatmul.mubr.bf16.gmra.mxu0 %v1263
      %v1459 = vpop.f32.mrf.mxu0
      %v1460 = vadd.f32 0.0, %v1459
      %v1461 = vpop.f32.mrf.mxu0
      %v1462 = vpop.f32.mrf.mxu0
      %v1463 = vpop.f32.mrf.mxu0
      %1464 = vdwg.mxu0
      %1465 = vmatprep.subr.bf16.mxu0 0
      %1466 = vmatpush1.bf16.msra.mxu0 0
      %1467 = vmatprep.subr.bf16.mxu0 0
      %1468 = vmatpush1.bf16.msra.mxu0 0
      %1469 = vmatprep.subr.bf16.mxu0 0
      %1470 = vmatpush1.bf16.msra.mxu0 0
      %1471 = vmatprep.subr.bf16.mxu0 0
      %1472 = vmatpush1.bf16.msra.mxu0 0
      %1473 = vmatprep.subr.bf16.mxu0 0
      %1474 = vmatpush1.bf16.msra.mxu0 0
      %1475 = vmatprep.subr.bf16.mxu0 0
      %1476 = vmatpush1.bf16.msra.mxu0 0
      %1477 = vmatprep.subr.bf16.mxu0 0
      %1478 = vmatpush1.bf16.msra.mxu0 %v1392
      %1479 = vmatprep.subr.bf16.mxu0 0
      %1480 = vmatpush1.bf16.msra.mxu0 %v1391
      %1481 = vmatprep.subr.bf16.mxu0 0
      %1482 = vmatpush2.bf16.msra.mxu0 0
      %1483 = vmatprep.subr.bf16.mxu0 0
      %1484 = vmatpush2.bf16.msra.mxu0 0
      %1485 = vmatprep.subr.bf16.mxu0 0
      %1486 = vmatpush2.bf16.msra.mxu0 0
      %1487 = vmatprep.subr.bf16.mxu0 0
      %1488 = vmatpush2.bf16.msra.mxu0 0
      %1489 = vmatprep.subr.bf16.mxu0 0
      %1490 = vmatpush2.bf16.msra.mxu0 0
      %1491 = vmatprep.subr.bf16.mxu0 0
      %1492 = vmatpush2.bf16.msra.mxu0 0
      %1493 = vmatprep.subr.bf16.mxu0 0
      %1494 = vmatpush2.bf16.msra.mxu0 0
      %1495 = vmatprep.subr.bf16.mxu0 0
      %1496 = vmatpush2.bf16.msra.mxu0 0
      %1497 = vmatprep.mubr.bf16.mxu0 0
      %1498 = vmatmul.mubr.bf16.gmra.mxu0 %v1412
      %v1499 = vpop.f32.mrf.mxu0
      %v1500 = vadd.f32 %v1452, %v1499
      %v1501 = vpop.f32.mrf.mxu0
      %v1502 = vpop.f32.mrf.mxu0
      %v1503 = vadd.f32 %v1455, %v1502
      %v1504 = vpop.f32.mrf.mxu0
      %1505 = vmatprep.mubr.bf16.mxu0 0
      %1506 = vmatmul.mubr.bf16.gmra.mxu0 %v1415
      %v1507 = vpop.f32.mrf.mxu0
      %v1508 = vadd.f32 %v1460, %v1507
      %v1509 = vpop.f32.mrf.mxu0
      %v1510 = vpop.f32.mrf.mxu0
      %v1511 = vpop.f32.mrf.mxu0
      %1512 = vdwg.mxu0
      %v1513 = vadd.f32 %v972, %v1500
      %v1514 = vadd.f32 %v973, %v1503
      %v1515 = vadd.f32 %v974, %v1508
      %v1516 = vld [vmem:[%s8] sm:$0x1]
      %v1518 = vlaneseq
      %v1519 = vshrl.u32 %v1518, 7
      %v1520 = vsub.s32 0, %v1519
      %v1521 = vrot.slane %v1516, %v1520
      %v1523 = vmul.f32 %v1513, %v1521
      %v1524 = vmul.f32 %v1514, %v1521
      %v1525 = vmul.f32 %v1515, %v1521
      %v1526 = vld [vmem:[%s9] sm:$0x1]
      %v1528 = vlaneseq
      %v1529 = vshrl.u32 %v1528, 7
      %v1530 = vsub.s32 0, %v1529
      %v1531 = vrot.slane %v1526, %v1530
      %v1533 = vadd.f32 %v1523, %v1531
      %v1534 = vadd.f32 %v1524, %v1531
      %v1535 = vadd.f32 %v1525, %v1531
      %v1536 = vmax.f32 %v1533, 0.0
      %v1537 = vmax.f32 %v1534, 0.0
      %v1538 = vmax.f32 %v1535, 0.0
      %v1539 = vpack.c.bf16 %v1537, %v1536
      %v1540 = vpack.c.bf16 %v1538, %v1538
      %v1541 = vld [vmem:[%s10] sm:$0xf]
      %v1542 = vld [vmem:[%s10 + $0x4] sm:$0xf]
      %v1543 = vld [vmem:[%s10 + $0x8] sm:$0xf]
      %v1544 = vld [vmem:[%s10 + $0xc] sm:$0xf]
      %v1545 = vld [vmem:[%s10 + $0x10] sm:$0xf]
      %v1546 = vld [vmem:[%s10 + $0x14] sm:$0xf]
      %v1547 = vld [vmem:[%s10 + $0x18] sm:$0xf]
      %v1548 = vld [vmem:[%s10 + $0x1c] sm:$0xf]
      %v1549 = vld [vmem:[%s10 + $0x20] sm:$0xf]
      %v1550 = vld [vmem:[%s10 + $0x24] sm:$0xf]
      %v1551 = vld [vmem:[%s10 + $0x28] sm:$0xf]
      %v1552 = vld [vmem:[%s10 + $0x2c] sm:$0xf]
      %v1553 = vld [vmem:[%s10 + $0x30] sm:$0xf]
      %v1554 = vld [vmem:[%s10 + $0x34] sm:$0xf]
      %v1555 = vld [vmem:[%s10 + $0x38] sm:$0xf]
      %v1556 = vld [vmem:[%s10 + $0x3c] sm:$0xf]
      %v1573 = vunpack.c.l.b16 %v1541
      %v1574 = vunpack.c.l.b16 %v1542
      %v1575 = vunpack.c.l.b16 %v1543
      %v1576 = vunpack.c.l.b16 %v1544
      %v1577 = vunpack.c.l.b16 %v1545
      %v1578 = vunpack.c.l.b16 %v1546
      %v1579 = vunpack.c.l.b16 %v1547
      %v1580 = vunpack.c.l.b16 %v1548
      %v1581 = vunpack.c.l.b16 %v1549
      %v1582 = vunpack.c.l.b16 %v1550
      %v1583 = vunpack.c.l.b16 %v1551
      %v1584 = vunpack.c.l.b16 %v1552
      %v1585 = vunpack.c.l.b16 %v1553
      %v1586 = vunpack.c.l.b16 %v1554
      %v1587 = vunpack.c.l.b16 %v1555
      %v1588 = vunpack.c.l.b16 %v1556
      %v1589 = vpack.c.b16 %v1574, %v1573
      %v1590 = vpack.c.b16 %v1576, %v1575
      %v1591 = vpack.c.b16 %v1578, %v1577
      %v1592 = vpack.c.b16 %v1580, %v1579
      %v1593 = vpack.c.b16 %v1582, %v1581
      %v1594 = vpack.c.b16 %v1584, %v1583
      %v1595 = vpack.c.b16 %v1586, %v1585
      %v1596 = vpack.c.b16 %v1588, %v1587
      %1605 = vmatprep.subr.bf16.mxu0 0
      %1606 = vmatpush1.bf16.msra.mxu0 %v1596
      %1607 = vmatprep.subr.bf16.mxu0 0
      %1608 = vmatpush1.bf16.msra.mxu0 %v1595
      %1609 = vmatprep.subr.bf16.mxu0 0
      %1610 = vmatpush1.bf16.msra.mxu0 %v1594
      %1611 = vmatprep.subr.bf16.mxu0 0
      %1612 = vmatpush1.bf16.msra.mxu0 %v1593
      %1613 = vmatprep.subr.bf16.mxu0 0
      %1614 = vmatpush1.bf16.msra.mxu0 %v1592
      %1615 = vmatprep.subr.bf16.mxu0 0
      %1616 = vmatpush1.bf16.msra.mxu0 %v1591
      %1617 = vmatprep.subr.bf16.mxu0 0
      %1618 = vmatpush1.bf16.msra.mxu0 %v1590
      %1619 = vmatprep.subr.bf16.mxu0 0
      %1620 = vmatpush1.bf16.msra.mxu0 %v1589
      %1621 = vmatprep.subr.bf16.mxu0 0
      %1622 = vmatpush2.bf16.msra.mxu0 0
      %1623 = vmatprep.subr.bf16.mxu0 0
      %1624 = vmatpush2.bf16.msra.mxu0 0
      %1625 = vmatprep.subr.bf16.mxu0 0
      %1626 = vmatpush2.bf16.msra.mxu0 0
      %1627 = vmatprep.subr.bf16.mxu0 0
      %1628 = vmatpush2.bf16.msra.mxu0 0
      %1629 = vmatprep.subr.bf16.mxu0 0
      %1630 = vmatpush2.bf16.msra.mxu0 0
      %1631 = vmatprep.subr.bf16.mxu0 0
      %1632 = vmatpush2.bf16.msra.mxu0 0
      %1633 = vmatprep.subr.bf16.mxu0 0
      %1634 = vmatpush2.bf16.msra.mxu0 0
      %1635 = vmatprep.subr.bf16.mxu0 0
      %1636 = vmatpush2.bf16.msra.mxu0 0
      %1637 = vmatprep.mubr.bf16.mxu0 0
      %1638 = vmatmul.mubr.bf16.gmra.mxu0 %v1539
      %v1639 = vpop.f32.mrf.mxu0
      %v1640 = vadd.f32 0.0, %v1639
      %v1641 = vpop.f32.mrf.mxu0
      %v1642 = vpop.f32.mrf.mxu0
      %v1643 = vadd.f32 0.0, %v1642
      %v1644 = vpop.f32.mrf.mxu0
      %1645 = vmatprep.mubr.bf16.mxu0 0
      %1646 = vmatmul.mubr.bf16.gmra.mxu0 %v1540
      %v1647 = vpop.f32.mrf.mxu0
      %v1648 = vadd.f32 0.0, %v1647
      %v1649 = vpop.f32.mrf.mxu0
      %v1650 = vpop.f32.mrf.mxu0
      %v1651 = vpop.f32.mrf.mxu0
      %1652 = vdwg.mxu0
      %1653 = vst [vmem:[%s386] sm:$0xff] %v1640
      %1654 = vst [vmem:[%s386 + $0x8] sm:$0xff] %v1643
      %1655 = vst [vmem:[%s386 + $0x10] sm:$0xf] %v1648
      %p1656 = scmp.lt.s32.totalorder %s22, 1
      %s1657 = scalar_select %p1656, %s22, 1
      %s1658 = smul.addr %s1657, 3
      %s1659 = smul.addr %s1658, 8
      %s1660 = scalar_lea.vmem %s11, %s1659
      // Predicated region
      $region65: #{densenet_forward.7} parent=63 // pred_check
        %p1661 = pneg %p276
      $region66: #{densenet_forward.7} parent=63 // pred_check_branch
        %1663 = sbr.rel (%p1661) target = $region68
      $region67: #{densenet_forward.7} parent=63 // pred_region
        _
      $region68: #{densenet_forward.7} parent=63 // pred_fallthru
        _
    $region64: #{densenet_forward.7} parent=5 // pred_fallthru
      _
    %p1664 = scmp.le.s32.totalorder 2, %s17
    // Predicated region
    $region69: #{densenet_forward.7} parent=5 // pred_check
      %p1665 = pneg %p1664
    $region70: #{densenet_forward.7} parent=5 // pred_check_branch
      %1667 = sbr.rel (%p1665) target = $region72
    $region71: #{densenet_forward.7} parent=5 // pred_region
      %s1668 = ssub.s32 %s17, 2
      // Predicated region
      $region73: #{densenet_forward.7} parent=71 // pred_check
        %p1669 = pneg %p282
      $region74: #{densenet_forward.7} parent=71 // pred_check_branch
        %1671 = sbr.rel (%p1669) target = $region76
      $region75: #{densenet_forward.7} parent=71 // pred_region
        %p1672 = scmp.lt.s32.totalorder %s23, 1
        %s1673 = scalar_select %p1672, %s23, 1
        %s1674 = smul.addr %s1673, 3
        %s1675 = smul.addr %s1674, 8
        %s1676 = scalar_lea.vmem %s11, %s1675
      $region76: #{densenet_forward.7} parent=71 // pred_fallthru
        _
    $region72: #{densenet_forward.7} parent=5 // pred_fallthru
      _
  $region6: #{densenet_forward.7} parent=0 // loop_footer
    %s21 = sadd.s32 1, %s17
  $region7: #{densenet_forward.7} parent=0 // loop_footer_branch
    %16 = sbr.rel target = $region3
  $region8: #{densenet_forward.7} parent=0 // loop_exit
    _

// kernel: densenet_forward.6
$region0: #{densenet_forward.6}
  #allocation0 [shape = 'u32[]', space=smem, size = 0x4, offset = 0x4, fixed_abs, tag = 'smem constant byte address 0x4 - core index']
  #allocation1 [shape = 'u32[144,128]{1,0:T(1,128)}', space=vmem, size = 0x12000, scoped, tag = 'internal scratch']
  #allocation2 [shape = 'f32[72,288]{1,0:T(8,128)}', space=vmem, size = 0x1b000, scoped, tag = 'scratch operand']
  %s0 = inlined_call_operand.vmem [shape: f32[2,72,128], index: 0, kind: input, shape index: {}]
  %s1 = inlined_call_operand.vmem [shape: f32[72,1], index: 1, kind: input, shape index: {}]
  %s2 = inlined_call_operand.vmem [shape: f32[2,1,128], index: 2, kind: input, shape index: {}]
  %s3 = inlined_call_operand.vmem [shape: f32[2,1,128], index: 3, kind: input, shape index: {}]
  %s4 = inlined_call_operand.vmem [shape: bf16[2,128,32], index: 4, kind: input, shape index: {}]
  %s5 = inlined_call_operand.vmem [shape: f32[2,1,32], index: 5, kind: input, shape index: {}]
  %s6 = inlined_call_operand.vmem [shape: f32[2,1,32], index: 6, kind: input, shape index: {}]
  %s7 = inlined_call_operand.vmem [shape: bf16[2,288,128], index: 7, kind: input, shape index: {}]
  %s8 = inlined_call_operand.vmem [shape: f32[1,128], index: 8, kind: input, shape index: {}]
  %s9 = inlined_call_operand.vmem [shape: f32[1,128], index: 9, kind: input, shape index: {}]
  %s10 = inlined_call_operand.vmem [shape: bf16[128,128], index: 10, kind: input, shape index: {}]
  %s11 = inlined_call_operand.vmem [shape: f32[2,72,128], index: 11, kind: output, shape index: {}]
  %s12 = sld [smem:[#allocation0]]
  $region77: #{densenet_forward.6} parent=0
    _
  %s14 = ssub.s32 1, %s12
  %s15 = scalar_select 0, %s14, %s12
  loop: start=0, step=1, limit=4
  $region2: #{densenet_forward.6} parent=0 // loop_pre_header
    _
  $region3: #{densenet_forward.6} parent=0 // loop_header
    %s17 = sphi 0, %s21
    %p18 = scmp.ge.s32.totalorder %s17, 4
    %s27 = sphi 0, %s29
    %s30 = sphi 0, %s27
    %s31 = sphi 0, %s30
    %s47 = sphi 0, %s31
    %s51 = sphi 0, %s51
    %s53 = sphi 0, %s51
    %s54 = sphi 0, %s53
    %s68 = sphi 0, %s54
    %s72 = sphi 0, %s72
    %s74 = sphi 0, %s72
    %s75 = sphi 0, %s74
    %s89 = sphi 0, %s75
    %s93 = sphi 0, %s93
    %s95 = sphi 0, %s93
    %s96 = sphi 0, %s95
    %s110 = sphi 0, %s96
    %s114 = sphi 0, %s114
    %s116 = sphi 0, %s114
    %s117 = sphi 0, %s116
    %s131 = sphi 0, %s117
    %s135 = sphi 0, %s135
    %s137 = sphi 0, %s135
    %s138 = sphi 0, %s137
    %s152 = sphi 0, %s138
    %s156 = sphi 0, %s156
    %s158 = sphi 0, %s156
    %s159 = sphi 0, %s158
    %s173 = sphi 0, %s159
    %s177 = sphi 0, %s177
    %s179 = sphi 0, %s177
    %s180 = sphi 0, %s179
    %s194 = sphi 0, %s180
    %s198 = sphi 0, %s198
    %s200 = sphi 0, %s198
    %s201 = sphi 0, %s200
    %s215 = sphi 0, %s201
    %s219 = sphi 0, %s219
    %s221 = sphi 0, %s219
    %s222 = sphi 0, %s221
    %s236 = sphi 0, %s222
    %s240 = sphi 0, %s240
    %s242 = sphi 0, %s240
    %s243 = sphi 0, %s242
    %s257 = sphi 0, %s243
    %s263 = sphi 0, %s265
    %s266 = sphi 0, %s263
    %s267 = sphi 0, %s266
    %s283 = sphi 0, %s267
  $region4: #{densenet_forward.6} parent=0 // loop_header_branch
    %20 = sbr.rel (%p18) target = $region8
  $region5: #{densenet_forward.6} parent=0 // loop_body
    %s22 = ssub.s32 %s17, 1
    %s23 = ssub.s32 %s17, 2
    %s24 = sadd.s32 %s17, 1
    %s25 = ssub.s32 %s17, %s24
    %p26 = scmp.eq.s32.totalorder %s25, 0
    %s28 = sadd.s32 %s27, 1
    %s29 = scalar_select %p26, %s27, %s28
    %p32 = pneg %p26
    %p33 = scmp.eq.s32.totalorder %s17, 1
    %p34 = por %p32, %p33
    %p35 = scmp.ne.s32.totalorder %s27, %s30
    %p36 = scmp.eq.s32.totalorder %s17, 0
    %p37 = por %p35, %p36
    %p38 = scmp.ne.s32.totalorder %s27, %s30
    %p39 = scmp.eq.s32.totalorder %s22, 1
    %p40 = por %p38, %p39
    %p41 = scmp.ne.s32.totalorder %s30, %s31
    %p42 = scmp.eq.s32.totalorder %s22, 0
    %p43 = por %p41, %p42
    %p44 = scmp.ne.s32.totalorder %s30, %s31
    %p45 = scmp.eq.s32.totalorder %s23, 1
    %p46 = por %p44, %p45
    %p48 = scmp.ne.s32.totalorder %s31, %s47
    %p49 = scmp.eq.s32.totalorder %s23, 0
    %p50 = por %p48, %p49
    %s52 = sadd.s32 %s51, 1
    %p55 = scmp.eq.s32.totalorder %s17, 1
    %p56 = scmp.ne.s32.totalorder %s51, %s53
    %p57 = scmp.eq.s32.totalorder %s17, 0
    %p58 = por %p56, %p57
    %p59 = scmp.ne.s32.totalorder %s51, %s53
    %p60 = scmp.eq.s32.totalorder %s22, 1
    %p61 = por %p59, %p60
    %p62 = scmp.ne.s32.totalorder %s53, %s54
    %p63 = scmp.eq.s32.totalorder %s22, 0
    %p64 = por %p62, %p63
    %p65 = scmp.ne.s32.totalorder %s53, %s54
    %p66 = scmp.eq.s32.totalorder %s23, 1
    %p67 = por %p65, %p66
    %p69 = scmp.ne.s32.totalorder %s54, %s68
    %p70 = scmp.eq.s32.totalorder %s23, 0
    %p71 = por %p69, %p70
    %s73 = sadd.s32 %s72, 1
    %p76 = scmp.eq.s32.totalorder %s17, 1
    %p77 = scmp.ne.s32.totalorder %s72, %s74
    %p78 = scmp.eq.s32.totalorder %s17, 0
    %p79 = por %p77, %p78
    %p80 = scmp.ne.s32.totalorder %s72, %s74
    %p81 = scmp.eq.s32.totalorder %s22, 1
    %p82 = por %p80, %p81
    %p83 = scmp.ne.s32.totalorder %s74, %s75
    %p84 = scmp.eq.s32.totalorder %s22, 0
    %p85 = por %p83, %p84
    %p86 = scmp.ne.s32.totalorder %s74, %s75
    %p87 = scmp.eq.s32.totalorder %s23, 1
    %p88 = por %p86, %p87
    %p90 = scmp.ne.s32.totalorder %s75, %s89
    %p91 = scmp.eq.s32.totalorder %s23, 0
    %p92 = por %p90, %p91
    %s94 = sadd.s32 %s93, 1
    %p97 = scmp.eq.s32.totalorder %s17, 1
    %p98 = scmp.ne.s32.totalorder %s93, %s95
    %p99 = scmp.eq.s32.totalorder %s17, 0
    %p100 = por %p98, %p99
    %p101 = scmp.ne.s32.totalorder %s93, %s95
    %p102 = scmp.eq.s32.totalorder %s22, 1
    %p103 = por %p101, %p102
    %p104 = scmp.ne.s32.totalorder %s95, %s96
    %p105 = scmp.eq.s32.totalorder %s22, 0
    %p106 = por %p104, %p105
    %p107 = scmp.ne.s32.totalorder %s95, %s96
    %p108 = scmp.eq.s32.totalorder %s23, 1
    %p109 = por %p107, %p108
    %p111 = scmp.ne.s32.totalorder %s96, %s110
    %p112 = scmp.eq.s32.totalorder %s23, 0
    %p113 = por %p111, %p112
    %s115 = sadd.s32 %s114, 1
    %p118 = scmp.eq.s32.totalorder %s17, 1
    %p119 = scmp.ne.s32.totalorder %s114, %s116
    %p120 = scmp.eq.s32.totalorder %s17, 0
    %p121 = por %p119, %p120
    %p122 = scmp.ne.s32.totalorder %s114, %s116
    %p123 = scmp.eq.s32.totalorder %s22, 1
    %p124 = por %p122, %p123
    %p125 = scmp.ne.s32.totalorder %s116, %s117
    %p126 = scmp.eq.s32.totalorder %s22, 0
    %p127 = por %p125, %p126
    %p128 = scmp.ne.s32.totalorder %s116, %s117
    %p129 = scmp.eq.s32.totalorder %s23, 1
    %p130 = por %p128, %p129
    %p132 = scmp.ne.s32.totalorder %s117, %s131
    %p133 = scmp.eq.s32.totalorder %s23, 0
    %p134 = por %p132, %p133
    %s136 = sadd.s32 %s135, 1
    %p139 = scmp.eq.s32.totalorder %s17, 1
    %p140 = scmp.ne.s32.totalorder %s135, %s137
    %p141 = scmp.eq.s32.totalorder %s17, 0
    %p142 = por %p140, %p141
    %p143 = scmp.ne.s32.totalorder %s135, %s137
    %p144 = scmp.eq.s32.totalorder %s22, 1
    %p145 = por %p143, %p144
    %p146 = scmp.ne.s32.totalorder %s137, %s138
    %p147 = scmp.eq.s32.totalorder %s22, 0
    %p148 = por %p146, %p147
    %p149 = scmp.ne.s32.totalorder %s137, %s138
    %p150 = scmp.eq.s32.totalorder %s23, 1
    %p151 = por %p149, %p150
    %p153 = scmp.ne.s32.totalorder %s138, %s152
    %p154 = scmp.eq.s32.totalorder %s23, 0
    %p155 = por %p153, %p154
    %s157 = sadd.s32 %s156, 1
    %p160 = scmp.eq.s32.totalorder %s17, 1
    %p161 = scmp.ne.s32.totalorder %s156, %s158
    %p162 = scmp.eq.s32.totalorder %s17, 0
    %p163 = por %p161, %p162
    %p164 = scmp.ne.s32.totalorder %s156, %s158
    %p165 = scmp.eq.s32.totalorder %s22, 1
    %p166 = por %p164, %p165
    %p167 = scmp.ne.s32.totalorder %s158, %s159
    %p168 = scmp.eq.s32.totalorder %s22, 0
    %p169 = por %p167, %p168
    %p170 = scmp.ne.s32.totalorder %s158, %s159
    %p171 = scmp.eq.s32.totalorder %s23, 1
    %p172 = por %p170, %p171
    %p174 = scmp.ne.s32.totalorder %s159, %s173
    %p175 = scmp.eq.s32.totalorder %s23, 0
    %p176 = por %p174, %p175
    %s178 = sadd.s32 %s177, 1
    %p181 = scmp.eq.s32.totalorder %s17, 1
    %p182 = scmp.ne.s32.totalorder %s177, %s179
    %p183 = scmp.eq.s32.totalorder %s17, 0
    %p184 = por %p182, %p183
    %p185 = scmp.ne.s32.totalorder %s177, %s179
    %p186 = scmp.eq.s32.totalorder %s22, 1
    %p187 = por %p185, %p186
    %p188 = scmp.ne.s32.totalorder %s179, %s180
    %p189 = scmp.eq.s32.totalorder %s22, 0
    %p190 = por %p188, %p189
    %p191 = scmp.ne.s32.totalorder %s179, %s180
    %p192 = scmp.eq.s32.totalorder %s23, 1
    %p193 = por %p191, %p192
    %p195 = scmp.ne.s32.totalorder %s180, %s194
    %p196 = scmp.eq.s32.totalorder %s23, 0
    %p197 = por %p195, %p196
    %s199 = sadd.s32 %s198, 1
    %p202 = scmp.eq.s32.totalorder %s17, 1
    %p203 = scmp.ne.s32.totalorder %s198, %s200
    %p204 = scmp.eq.s32.totalorder %s17, 0
    %p205 = por %p203, %p204
    %p206 = scmp.ne.s32.totalorder %s198, %s200
    %p207 = scmp.eq.s32.totalorder %s22, 1
    %p208 = por %p206, %p207
    %p209 = scmp.ne.s32.totalorder %s200, %s201
    %p210 = scmp.eq.s32.totalorder %s22, 0
    %p211 = por %p209, %p210
    %p212 = scmp.ne.s32.totalorder %s200, %s201
    %p213 = scmp.eq.s32.totalorder %s23, 1
    %p214 = por %p212, %p213
    %p216 = scmp.ne.s32.totalorder %s201, %s215
    %p217 = scmp.eq.s32.totalorder %s23, 0
    %p218 = por %p216, %p217
    %s220 = sadd.s32 %s219, 1
    %p223 = scmp.eq.s32.totalorder %s17, 1
    %p224 = scmp.ne.s32.totalorder %s219, %s221
    %p225 = scmp.eq.s32.totalorder %s17, 0
    %p226 = por %p224, %p225
    %p227 = scmp.ne.s32.totalorder %s219, %s221
    %p228 = scmp.eq.s32.totalorder %s22, 1
    %p229 = por %p227, %p228
    %p230 = scmp.ne.s32.totalorder %s221, %s222
    %p231 = scmp.eq.s32.totalorder %s22, 0
    %p232 = por %p230, %p231
    %p233 = scmp.ne.s32.totalorder %s221, %s222
    %p234 = scmp.eq.s32.totalorder %s23, 1
    %p235 = por %p233, %p234
    %p237 = scmp.ne.s32.totalorder %s222, %s236
    %p238 = scmp.eq.s32.totalorder %s23, 0
    %p239 = por %p237, %p238
    %s241 = sadd.s32 %s240, 1
    %p244 = scmp.eq.s32.totalorder %s17, 1
    %p245 = scmp.ne.s32.totalorder %s240, %s242
    %p246 = scmp.eq.s32.totalorder %s17, 0
    %p247 = por %p245, %p246
    %p248 = scmp.ne.s32.totalorder %s240, %s242
    %p249 = scmp.eq.s32.totalorder %s22, 1
    %p250 = por %p248, %p249
    %p251 = scmp.ne.s32.totalorder %s242, %s243
    %p252 = scmp.eq.s32.totalorder %s22, 0
    %p253 = por %p251, %p252
    %p254 = scmp.ne.s32.totalorder %s242, %s243
    %p255 = scmp.eq.s32.totalorder %s23, 1
    %p256 = por %p254, %p255
    %p258 = scmp.ne.s32.totalorder %s243, %s257
    %p259 = scmp.eq.s32.totalorder %s23, 0
    %p260 = por %p258, %p259
    %s261 = ssub.s32 %s17, %s24
    %p262 = scmp.eq.s32.totalorder %s261, 0
    %s264 = sadd.s32 %s263, 1
    %s265 = scalar_select %p262, %s263, %s264
    %p268 = pneg %p262
    %p269 = scmp.eq.s32.totalorder %s17, 1
    %p270 = por %p268, %p269
    %p271 = scmp.ne.s32.totalorder %s263, %s266
    %p272 = scmp.eq.s32.totalorder %s17, 0
    %p273 = por %p271, %p272
    %p274 = scmp.ne.s32.totalorder %s263, %s266
    %p275 = scmp.eq.s32.totalorder %s22, 1
    %p276 = por %p274, %p275
    %p277 = scmp.ne.s32.totalorder %s266, %s267
    %p278 = scmp.eq.s32.totalorder %s22, 0
    %p279 = por %p277, %p278
    %p280 = scmp.ne.s32.totalorder %s266, %s267
    %p281 = scmp.eq.s32.totalorder %s23, 1
    %p282 = por %p280, %p281
    %p284 = scmp.ne.s32.totalorder %s267, %s283
    %p285 = scmp.eq.s32.totalorder %s23, 0
    %p286 = por %p284, %p285
    %p287 = scmp.le.s32.totalorder 1, %s17
    %p288 = scmp.lt.s32.totalorder %s17, 3
    %p289 = pnand %p287, %p288
    %p290 = pneg %p289
    // Predicated region
    $region9: #{densenet_forward.6} parent=5 // pred_check
      _
    $region10: #{densenet_forward.6} parent=5 // pred_check_branch
      %292 = sbr.rel (%p289) target = $region12
    $region11: #{densenet_forward.6} parent=5 // pred_region
      %s293 = ssub.s32 %s17, 1
      // Predicated region
      $region13: #{densenet_forward.6} parent=11 // pred_check
        %p294 = pneg %p64
      $region14: #{densenet_forward.6} parent=11 // pred_check_branch
        %296 = sbr.rel (%p294) target = $region16
      $region15: #{densenet_forward.6} parent=11 // pred_region
        _
      $region16: #{densenet_forward.6} parent=11 // pred_fallthru
        _
      // Predicated region
      $region17: #{densenet_forward.6} parent=11 // pred_check
        %p297 = pneg %p85
      $region18: #{densenet_forward.6} parent=11 // pred_check_branch
        %299 = sbr.rel (%p297) target = $region20
      $region19: #{densenet_forward.6} parent=11 // pred_region
        _
      $region20: #{densenet_forward.6} parent=11 // pred_fallthru
        _
      // Predicated region
      $region21: #{densenet_forward.6} parent=11 // pred_check
        %p300 = pneg %p106
      $region22: #{densenet_forward.6} parent=11 // pred_check_branch
        %302 = sbr.rel (%p300) target = $region24
      $region23: #{densenet_forward.6} parent=11 // pred_region
        _
      $region24: #{densenet_forward.6} parent=11 // pred_fallthru
        _
      // Predicated region
      $region25: #{densenet_forward.6} parent=11 // pred_check
        %p303 = pneg %p127
      $region26: #{densenet_forward.6} parent=11 // pred_check_branch
        %305 = sbr.rel (%p303) target = $region28
      $region27: #{densenet_forward.6} parent=11 // pred_region
        _
      $region28: #{densenet_forward.6} parent=11 // pred_fallthru
        _
      // Predicated region
      $region29: #{densenet_forward.6} parent=11 // pred_check
        %p306 = pneg %p148
      $region30: #{densenet_forward.6} parent=11 // pred_check_branch
        %308 = sbr.rel (%p306) target = $region32
      $region31: #{densenet_forward.6} parent=11 // pred_region
        _
      $region32: #{densenet_forward.6} parent=11 // pred_fallthru
        _
      // Predicated region
      $region33: #{densenet_forward.6} parent=11 // pred_check
        %p309 = pneg %p169
      $region34: #{densenet_forward.6} parent=11 // pred_check_branch
        %311 = sbr.rel (%p309) target = $region36
      $region35: #{densenet_forward.6} parent=11 // pred_region
        _
      $region36: #{densenet_forward.6} parent=11 // pred_fallthru
        _
      // Predicated region
      $region37: #{densenet_forward.6} parent=11 // pred_check
        %p312 = pneg %p190
      $region38: #{densenet_forward.6} parent=11 // pred_check_branch
        %314 = sbr.rel (%p312) target = $region40
      $region39: #{densenet_forward.6} parent=11 // pred_region
        _
      $region40: #{densenet_forward.6} parent=11 // pred_fallthru
        _
      // Predicated region
      $region41: #{densenet_forward.6} parent=11 // pred_check
        %p315 = pneg %p211
      $region42: #{densenet_forward.6} parent=11 // pred_check_branch
        %317 = sbr.rel (%p315) target = $region44
      $region43: #{densenet_forward.6} parent=11 // pred_region
        _
      $region44: #{densenet_forward.6} parent=11 // pred_fallthru
        _
      // Predicated region
      $region45: #{densenet_forward.6} parent=11 // pred_check
        %p318 = pneg %p232
      $region46: #{densenet_forward.6} parent=11 // pred_check_branch
        %320 = sbr.rel (%p318) target = $region48
      $region47: #{densenet_forward.6} parent=11 // pred_region
        _
      $region48: #{densenet_forward.6} parent=11 // pred_fallthru
        _
      // Predicated region
      $region49: #{densenet_forward.6} parent=11 // pred_check
        %p321 = pneg %p253
      $region50: #{densenet_forward.6} parent=11 // pred_check_branch
        %323 = sbr.rel (%p321) target = $region52
      $region51: #{densenet_forward.6} parent=11 // pred_region
        _
      $region52: #{densenet_forward.6} parent=11 // pred_fallthru
        _
    $region12: #{densenet_forward.6} parent=5 // pred_fallthru
      _
    %p324 = scmp.lt.s32.totalorder %s17, 2
    // Predicated region
    $region53: #{densenet_forward.6} parent=5 // pred_check
      %p325 = pneg %p324
    $region54: #{densenet_forward.6} parent=5 // pred_check_branch
      %327 = sbr.rel (%p325) target = $region56
    $region55: #{densenet_forward.6} parent=5 // pred_region
      // Predicated region
      $region57: #{densenet_forward.6} parent=55 // pred_check
        %p328 = pneg %p37
      $region58: #{densenet_forward.6} parent=55 // pred_check_branch
        %330 = sbr.rel (%p328) target = $region60
      $region59: #{densenet_forward.6} parent=55 // pred_region
        %p331 = scmp.lt.s32.totalorder %s17, 1
        %s332 = scalar_select %p331, %s17, 1
        %s333 = smul.addr %s332, 9
        %s334 = smul.addr %s333, 8
        %s335 = scalar_lea.vmem %s0, %s334
      $region60: #{densenet_forward.6} parent=55 // pred_fallthru
        _
    $region56: #{densenet_forward.6} parent=5 // pred_fallthru
      _
    %p336 = scmp.le.s32.totalorder 1, %s17
    %p337 = scmp.lt.s32.totalorder %s17, 3
    %p338 = pnand %p336, %p337
    %p339 = pneg %p338
    // Predicated region
    $region61: #{densenet_forward.6} parent=5 // pred_check
      _
    $region62: #{densenet_forward.6} parent=5 // pred_check_branch
      %341 = sbr.rel (%p338) target = $region64
    $region63: #{densenet_forward.6} parent=5 // pred_region
      %s342 = ssub.s32 %s17, 1
      %p343 = scmp.lt.s32.totalorder %s22, 1
      %s344 = scalar_select %p343, %s22, 1
      %s345 = smul.addr %s344, 9
      %s346 = smul.addr %s345, 8
      %s347 = scalar_lea.vmem %s0, %s346
      %p348 = pneg %p43
      %p349 = pneg %p40
      %p350 = pneg %p64
      %p351 = pneg %p61
      %p352 = pneg %p85
      %p353 = pneg %p82
      %p354 = pneg %p106
      %p355 = pneg %p103
      %p356 = pneg %p127
      %p357 = pneg %p124
      %p358 = pneg %p148
      %p359 = pneg %p145
      %p360 = pneg %p169
      %p361 = pneg %p166
      %p362 = pneg %p190
      %p363 = pneg %p187
      %p364 = pneg %p211
      %p365 = pneg %p208
      %p366 = pneg %p232
      %p367 = pneg %p229
      %p368 = pneg %p253
      %p369 = pneg %p250
      %p370 = pneg %p279
      %p371 = pneg %p276
      %p372 = scmp.lt.s32.totalorder %s22, 1
      %s373 = scalar_select %p372, %s22, 1
      %s374 = smul.addr %s373, 9
      %s375 = smul.addr %s374, 8
      %s376 = scalar_lea.vmem %s11, %s375
      %p377 = scmp.lt.s32.totalorder %s22, 1
      %s378 = scalar_select %p377, %s22, 1
      %s379 = smul.addr %s378, 9
      %s380 = smul.addr %s379, 8
      %s381 = scalar_lea.vmem %s0, %s380
      %p382 = scmp.lt.s32.totalorder %s22, 1
      %s383 = scalar_select %p382, %s22, 1
      %s384 = smul.addr %s383, 9
      %s385 = smul.addr %s384, 8
      %s386 = scalar_lea.vmem %s11, %s385
      %v388 = vld [vmem:[%s1] sm:$0xff]
      %v389 = vld [vmem:[%s1 + $0x8] sm:$0xff]
      %v390 = vld [vmem:[%s1 + $0x10] sm:$0xff]
      %v391 = vld [vmem:[%s1 + $0x18] sm:$0xff]
      %v392 = vld [vmem:[%s1 + $0x20] sm:$0xff]
      %v393 = vld [vmem:[%s1 + $0x28] sm:$0xff]
      %v394 = vld [vmem:[%s1 + $0x30] sm:$0xff]
      %v395 = vld [vmem:[%s1 + $0x38] sm:$0xff]
      %v396 = vld [vmem:[%s1 + $0x40] sm:$0xff]
      %v397 = vld [vmem:[%s381] sm:$0xff]
      %v398 = vld [vmem:[%s381 + $0x8] sm:$0xff]
      %v399 = vld [vmem:[%s381 + $0x10] sm:$0xff]
      %v400 = vld [vmem:[%s381 + $0x18] sm:$0xff]
      %v401 = vld [vmem:[%s381 + $0x20] sm:$0xff]
      %v402 = vld [vmem:[%s381 + $0x28] sm:$0xff]
      %v403 = vld [vmem:[%s381 + $0x30] sm:$0xff]
      %v404 = vld [vmem:[%s381 + $0x38] sm:$0xff]
      %v405 = vld [vmem:[%s381 + $0x40] sm:$0xff]
      %406 = vst [vmem:[#allocation2] sm:$0xff] 0.0
      %407 = vst [vmem:[#allocation2 + $0x8] sm:$0xff] 0.0
      %vm408 = vcmask 261120
      %409 = vst.msk [vmem:[#allocation2 + $0x10] sm:$0xff] %vm408, 0.0
      %410 = vst [vmem:[#allocation2 + $0x18] sm:$0xff] 0.0
      %411 = vst [vmem:[#allocation2 + $0x20] sm:$0xff] 0.0
      %412 = vst.msk [vmem:[#allocation2 + $0x28] sm:$0xff] %vm408, 0.0
      %413 = vst [vmem:[#allocation2 + $0x30] sm:$0xff] 0.0
      %414 = vst [vmem:[#allocation2 + $0x38] sm:$0xff] 0.0
      %415 = vst.msk [vmem:[#allocation2 + $0x40] sm:$0xff] %vm408, 0.0
      %416 = vst [vmem:[#allocation2 + $0x48] sm:$0xff] 0.0
      %417 = vst [vmem:[#allocation2 + $0x50] sm:$0xff] 0.0
      %418 = vst.msk [vmem:[#allocation2 + $0x58] sm:$0xff] %vm408, 0.0
      %419 = vst [vmem:[#allocation2 + $0x60] sm:$0xff] 0.0
      %420 = vst [vmem:[#allocation2 + $0x68] sm:$0xff] 0.0
      %421 = vst.msk [vmem:[#allocation2 + $0x70] sm:$0xff] %vm408, 0.0
      %422 = vst [vmem:[#allocation2 + $0x78] sm:$0xff] 0.0
      %423 = vst [vmem:[#allocation2 + $0x80] sm:$0xff] 0.0
      %424 = vst.msk [vmem:[#allocation2 + $0x88] sm:$0xff] %vm408, 0.0
      %425 = vst [vmem:[#allocation2 + $0x90] sm:$0xff] 0.0
      %426 = vst [vmem:[#allocation2 + $0x98] sm:$0xff] 0.0
      %427 = vst.msk [vmem:[#allocation2 + $0xa0] sm:$0xff] %vm408, 0.0
      %428 = vst [vmem:[#allocation2 + $0xa8] sm:$0xff] 0.0
      %429 = vst [vmem:[#allocation2 + $0xb0] sm:$0xff] 0.0
      %430 = vst.msk [vmem:[#allocation2 + $0xb8] sm:$0xff] %vm408, 0.0
      %431 = vst [vmem:[#allocation2 + $0xc0] sm:$0xff] 0.0
      %432 = vst [vmem:[#allocation2 + $0xc8] sm:$0xff] 0.0
      %433 = vst.msk [vmem:[#allocation2 + $0xd0] sm:$0xff] %vm408, 0.0
      %v434 = vld [vmem:[%s2] sm:$0x1]
      %v436 = vlaneseq
      %v437 = vshrl.u32 %v436, 7
      %v438 = vsub.s32 0, %v437
      %v439 = vrot.slane %v434, %v438
      %v441 = vmul.f32 %v397, %v439
      %v442 = vmul.f32 %v398, %v439
      %v443 = vmul.f32 %v399, %v439
      %v444 = vmul.f32 %v400, %v439
      %v445 = vmul.f32 %v401, %v439
      %v446 = vmul.f32 %v402, %v439
      %v447 = vmul.f32 %v403, %v439
      %v448 = vmul.f32 %v404, %v439
      %v449 = vmul.f32 %v405, %v439
      %v450 = vld [vmem:[%s3] sm:$0x1]
      %v452 = vlaneseq
      %v453 = vshrl.u32 %v452, 7
      %v454 = vsub.s32 0, %v453
      %v455 = vrot.slane %v450, %v454
      %v457 = vadd.f32 %v441, %v455
      %v458 = vadd.f32 %v442, %v455
      %v459 = vadd.f32 %v443, %v455
      %v460 = vadd.f32 %v444, %v455
      %v461 = vadd.f32 %v445, %v455
      %v462 = vadd.f32 %v446, %v455
      %v463 = vadd.f32 %v447, %v455
      %v464 = vadd.f32 %v448, %v455
      %v465 = vadd.f32 %v449, %v455
      %v466 = vmax.f32 %v457, 0.0
      %v467 = vmax.f32 %v458, 0.0
      %v468 = vmax.f32 %v459, 0.0
      %v469 = vmax.f32 %v460, 0.0
      %v470 = vmax.f32 %v461, 0.0
      %v471 = vmax.f32 %v462, 0.0
      %v472 = vmax.f32 %v463, 0.0
      %v473 = vmax.f32 %v464, 0.0
      %v474 = vmax.f32 %v465, 0.0
      %v475 = vpack.c.bf16 %v467, %v466
      %v476 = vpack.c.bf16 %v469, %v468
      %v477 = vpack.c.bf16 %v471, %v470
      %v478 = vpack.c.bf16 %v473, %v472
      %v479 = vpack.c.bf16 %v474, %v474
      %v480 = vld [vmem:[%s4] sm:$0xf]
      %v481 = vld [vmem:[%s4 + $0x4] sm:$0xf]
      %v482 = vld [vmem:[%s4 + $0x8] sm:$0xf]
      %v483 = vld [vmem:[%s4 + $0xc] sm:$0xf]
      %v484 = vld [vmem:[%s4 + $0x10] sm:$0xf]
      %v485 = vld [vmem:[%s4 + $0x14] sm:$0xf]
      %v486 = vld [vmem:[%s4 + $0x18] sm:$0xf]
      %v487 = vld [vmem:[%s4 + $0x1c] sm:$0xf]
      %v488 = vld [vmem:[%s4 + $0x20] sm:$0xf]
      %v489 = vld [vmem:[%s4 + $0x24] sm:$0xf]
      %v490 = vld [vmem:[%s4 + $0x28] sm:$0xf]
      %v491 = vld [vmem:[%s4 + $0x2c] sm:$0xf]
      %v492 = vld [vmem:[%s4 + $0x30] sm:$0xf]
      %v493 = vld [vmem:[%s4 + $0x34] sm:$0xf]
      %v494 = vld [vmem:[%s4 + $0x38] sm:$0xf]
      %v495 = vld [vmem:[%s4 + $0x3c] sm:$0xf]
      %v512 = vunpack.c.l.b16 %v480
      %v513 = vunpack.c.l.b16 %v481
      %v514 = vunpack.c.l.b16 %v482
      %v515 = vunpack.c.l.b16 %v483
      %v516 = vunpack.c.l.b16 %v484
      %v517 = vunpack.c.l.b16 %v485
      %v518 = vunpack.c.l.b16 %v486
      %v519 = vunpack.c.l.b16 %v487
      %v520 = vunpack.c.l.b16 %v488
      %v521 = vunpack.c.l.b16 %v489
      %v522 = vunpack.c.l.b16 %v490
      %v523 = vunpack.c.l.b16 %v491
      %v524 = vunpack.c.l.b16 %v492
      %v525 = vunpack.c.l.b16 %v493
      %v526 = vunpack.c.l.b16 %v494
      %v527 = vunpack.c.l.b16 %v495
      %v528 = vpack.c.b16 %v513, %v512
      %v529 = vpack.c.b16 %v515, %v514
      %v530 = vpack.c.b16 %v517, %v516
      %v531 = vpack.c.b16 %v519, %v518
      %v532 = vpack.c.b16 %v521, %v520
      %v533 = vpack.c.b16 %v523, %v522
      %v534 = vpack.c.b16 %v525, %v524
      %v535 = vpack.c.b16 %v527, %v526
      %544 = vmatprep.subr.bf16.mxu0 0
      %545 = vmatpush1.bf16.msra.mxu0 %v535
      %546 = vmatprep.subr.bf16.mxu0 0
      %547 = vmatpush1.bf16.msra.mxu0 %v534
      %548 = vmatprep.subr.bf16.mxu0 0
      %549 = vmatpush1.bf16.msra.mxu0 %v533
      %550 = vmatprep.subr.bf16.mxu0 0
      %551 = vmatpush1.bf16.msra.mxu0 %v532
      %552 = vmatprep.subr.bf16.mxu0 0
      %553 = vmatpush1.bf16.msra.mxu0 %v531
      %554 = vmatprep.subr.bf16.mxu0 0
      %555 = vmatpush1.bf16.msra.mxu0 %v530
      %556 = vmatprep.subr.bf16.mxu0 0
      %557 = vmatpush1.bf16.msra.mxu0 %v529
      %558 = vmatprep.subr.bf16.mxu0 0
      %559 = vmatpush1.bf16.msra.mxu0 %v528
      %560 = vmatprep.subr.bf16.mxu0 0
      %561 = vmatpush2.bf16.msra.mxu0 0
      %562 = vmatprep.subr.bf16.mxu0 0
      %563 = vmatpush2.bf16.msra.mxu0 0
      %564 = vmatprep.subr.bf16.mxu0 0
      %565 = vmatpush2.bf16.msra.mxu0 0
      %566 = vmatprep.subr.bf16.mxu0 0
      %567 = vmatpush2.bf16.msra.mxu0 0
      %568 = vmatprep.subr.bf16.mxu0 0
      %569 = vmatpush2.bf16.msra.mxu0 0
      %570 = vmatprep.subr.bf16.mxu0 0
      %571 = vmatpush2.bf16.msra.mxu0 0
      %572 = vmatprep.subr.bf16.mxu0 0
      %573 = vmatpush2.bf16.msra.mxu0 0
      %574 = vmatprep.subr.bf16.mxu0 0
      %575 = vmatpush2.bf16.msra.mxu0 0
      %576 = vmatprep.mubr.bf16.mxu0 0
      %577 = vmatmul.mubr.bf16.gmra.mxu0 %v475
      %v578 = vpop.f32.mrf.mxu0
      %v579 = vadd.f32 0.0, %v578
      %v580 = vpop.f32.mrf.mxu0
      %v581 = vpop.f32.mrf.mxu0
      %v582 = vadd.f32 0.0, %v581
      %v583 = vpop.f32.mrf.mxu0
      %584 = vmatprep.mubr.bf16.mxu0 0
      %585 = vmatmul.mubr.bf16.gmra.mxu0 %v476
      %v586 = vpop.f32.mrf.mxu0
      %v587 = vadd.f32 0.0, %v586
      %v588 = vpop.f32.mrf.mxu0
      %v589 = vpop.f32.mrf.mxu0
      %v590 = vadd.f32 0.0, %v589
      %v591 = vpop.f32.mrf.mxu0
      %592 = vmatprep.mubr.bf16.mxu0 0
      %593 = vmatmul.mubr.bf16.gmra.mxu0 %v477
      %v594 = vpop.f32.mrf.mxu0
      %v595 = vadd.f32 0.0, %v594
      %v596 = vpop.f32.mrf.mxu0
      %v597 = vpop.f32.mrf.mxu0
      %v598 = vadd.f32 0.0, %v597
      %v599 = vpop.f32.mrf.mxu0
      %600 = vmatprep.mubr.bf16.mxu0 0
      %601 = vmatmul.mubr.bf16.gmra.mxu0 %v478
      %v602 = vpop.f32.mrf.mxu0
      %v603 = vadd.f32 0.0, %v602
      %v604 = vpop.f32.mrf.mxu0
      %v605 = vpop.f32.mrf.mxu0
      %v606 = vadd.f32 0.0, %v605
      %v607 = vpop.f32.mrf.mxu0
      %608 = vmatprep.mubr.bf16.mxu0 0
      %609 = vmatmul.mubr.bf16.gmra.mxu0 %v479
      %v610 = vpop.f32.mrf.mxu0
      %v611 = vadd.f32 0.0, %v610
      %v612 = vpop.f32.mrf.mxu0
      %v613 = vpop.f32.mrf.mxu0
      %v614 = vpop.f32.mrf.mxu0
      %615 = vdwg.mxu0
      %v616 = vld [vmem:[%s5] sm:$0x1]
      %v618 = vlaneseq
      %v619 = vshrl.u32 %v618, 7
      %v620 = vsub.s32 0, %v619
      %v621 = vrot.slane %v616, %v620
      %v623 = vmul.f32 %v579, %v621
      %v624 = vmul.f32 %v582, %v621
      %v625 = vmul.f32 %v587, %v621
      %v626 = vmul.f32 %v590, %v621
      %v627 = vmul.f32 %v595, %v621
      %v628 = vmul.f32 %v598, %v621
      %v629 = vmul.f32 %v603, %v621
      %v630 = vmul.f32 %v606, %v621
      %v631 = vmul.f32 %v611, %v621
      %v632 = vld [vmem:[%s6] sm:$0x1]
      %v634 = vlaneseq
      %v635 = vshrl.u32 %v634, 7
      %v636 = vsub.s32 0, %v635
      %v637 = vrot.slane %v632, %v636
      %v639 = vadd.f32 %v623, %v637
      %v640 = vadd.f32 %v624, %v637
      %v641 = vadd.f32 %v625, %v637
      %v642 = vadd.f32 %v626, %v637
      %v643 = vadd.f32 %v627, %v637
      %v644 = vadd.f32 %v628, %v637
      %v645 = vadd.f32 %v629, %v637
      %v646 = vadd.f32 %v630, %v637
      %v647 = vadd.f32 %v631, %v637
      %v648 = vmax.f32 %v639, 0.0
      %v649 = vmax.f32 %v640, 0.0
      %v650 = vmax.f32 %v641, 0.0
      %v651 = vmax.f32 %v642, 0.0
      %v652 = vmax.f32 %v643, 0.0
      %v653 = vmax.f32 %v644, 0.0
      %v654 = vmax.f32 %v645, 0.0
      %v655 = vmax.f32 %v646, 0.0
      %v656 = vmax.f32 %v647, 0.0
      %658 = vset.pattern.permute.xlu0 0
      %659 = vperm.xlu0 %658, %v388
      %v660 = vpop.permute.xlu0 %659
      %663 = vset.pattern.permute.xlu0 0
      %664 = vperm.xlu0 %663, %v389
      %v665 = vpop.permute.xlu0 %664
      %668 = vset.pattern.permute.xlu0 0
      %669 = vperm.xlu0 %668, %v390
      %v670 = vpop.permute.xlu0 %669
      %673 = vset.pattern.permute.xlu0 0
      %674 = vperm.xlu0 %673, %v391
      %v675 = vpop.permute.xlu0 %674
      %678 = vset.pattern.permute.xlu0 0
      %679 = vperm.xlu0 %678, %v392
      %v680 = vpop.permute.xlu0 %679
      %683 = vset.pattern.permute.xlu0 0
      %684 = vperm.xlu0 %683, %v393
      %v685 = vpop.permute.xlu0 %684
      %688 = vset.pattern.permute.xlu0 0
      %689 = vperm.xlu0 %688, %v394
      %v690 = vpop.permute.xlu0 %689
      %693 = vset.pattern.permute.xlu0 0
      %694 = vperm.xlu0 %693, %v395
      %v695 = vpop.permute.xlu0 %694
      %698 = vset.pattern.permute.xlu0 0
      %699 = vperm.xlu0 %698, %v396
      %v700 = vpop.permute.xlu0 %699
      %v702 = vmul.f32 %v648, %v660
      %v703 = vmul.f32 %v649, %v665
      %v704 = vmul.f32 %v650, %v670
      %v705 = vmul.f32 %v651, %v675
      %v706 = vmul.f32 %v652, %v680
      %v707 = vmul.f32 %v653, %v685
      %v708 = vmul.f32 %v654, %v690
      %v709 = vmul.f32 %v655, %v695
      %v710 = vmul.f32 %v656, %v700
      %vm719 = vcmask 1041408
      %v720 = vrot.slane %v702, 6
      %v721 = vrot.slane %v703, 6
      %v722 = vsel %vm719, %v720, %v721
      %v723 = vrot.slane %v704, 6
      %v724 = vsel %vm719, %v721, %v723
      %v725 = vrot.slane %v705, 6
      %v726 = vsel %vm719, %v723, %v725
      %v727 = vrot.slane %v706, 6
      %v728 = vsel %vm719, %v725, %v727
      %v729 = vrot.slane %v707, 6
      %v730 = vsel %vm719, %v727, %v729
      %v731 = vrot.slane %v708, 6
      %v732 = vsel %vm719, %v729, %v731
      %v733 = vrot.slane %v709, 6
      %v734 = vsel %vm719, %v731, %v733
      %vm743 = vcmask 261122
      %744 = vst.msk [vmem:[#allocation2 + $0x18] sm:$0xfc] %vm743, %v720
      %745 = vst.msk [vmem:[#allocation2 + $0x30] sm:$0xff] %vm408, %v722
      %746 = vst.msk [vmem:[#allocation2 + $0x48] sm:$0xff] %vm408, %v724
      %747 = vst.msk [vmem:[#allocation2 + $0x60] sm:$0xff] %vm408, %v726
      %748 = vst.msk [vmem:[#allocation2 + $0x78] sm:$0xff] %vm408, %v728
      %749 = vst.msk [vmem:[#allocation2 + $0x90] sm:$0xff] %vm408, %v730
      %750 = vst.msk [vmem:[#allocation2 + $0xa8] sm:$0xff] %vm408, %v732
      %751 = vst.msk [vmem:[#allocation2 + $0xc0] sm:$0xff] %vm408, %v734
      %vm752 = vcmask 1040384
      %v753 = vrot.slane %v702, 7
      %v754 = vrot.slane %v703, 7
      %v755 = vsel %vm752, %v753, %v754
      %v756 = vrot.slane %v704, 7
      %v757 = vsel %vm752, %v754, %v756
      %v758 = vrot.slane %v705, 7
      %v759 = vsel %vm752, %v756, %v758
      %v760 = vrot.slane %v706, 7
      %v761 = vsel %vm752, %v758, %v760
      %v762 = vrot.slane %v707, 7
      %v763 = vsel %vm752, %v760, %v762
      %v764 = vrot.slane %v708, 7
      %v765 = vsel %vm752, %v762, %v764
      %v766 = vrot.slane %v709, 7
      %v767 = vsel %vm752, %v764, %v766
      %768 = vrot.lane.b32.xlu0 %v753, 32
      %v769 = vpop.permute.xlu0 %768
      %770 = vrot.lane.b32.xlu0 %v755, 32
      %v771 = vpop.permute.xlu0 %770
      %772 = vrot.lane.b32.xlu0 %v757, 32
      %v773 = vpop.permute.xlu0 %772
      %774 = vrot.lane.b32.xlu0 %v759, 32
      %v775 = vpop.permute.xlu0 %774
      %776 = vrot.lane.b32.xlu0 %v761, 32
      %v777 = vpop.permute.xlu0 %776
      %778 = vrot.lane.b32.xlu0 %v763, 32
      %v779 = vpop.permute.xlu0 %778
      %780 = vrot.lane.b32.xlu0 %v765, 32
      %v781 = vpop.permute.xlu0 %780
      %782 = vrot.lane.b32.xlu0 %v767, 32
      %v783 = vpop.permute.xlu0 %782
      %vm792 = vcmask 523521
      %793 = vst.msk [vmem:[#allocation2 + $0x18] sm:$0xfe] %vm792, %v769
      %vm794 = vcmask 523520
      %795 = vst.msk [vmem:[#allocation2 + $0x30] sm:$0xff] %vm794, %v771
      %796 = vst.msk [vmem:[#allocation2 + $0x48] sm:$0xff] %vm794, %v773
      %797 = vst.msk [vmem:[#allocation2 + $0x60] sm:$0xff] %vm794, %v775
      %798 = vst.msk [vmem:[#allocation2 + $0x78] sm:$0xff] %vm794, %v777
      %799 = vst.msk [vmem:[#allocation2 + $0x90] sm:$0xff] %vm794, %v779
      %800 = vst.msk [vmem:[#allocation2 + $0xa8] sm:$0xff] %vm794, %v781
      %801 = vst.msk [vmem:[#allocation2 + $0xc0] sm:$0xff] %vm794, %v783
      %802 = vrot.lane.b32.xlu0 %v702, 64
      %v803 = vpop.permute.xlu0 %802
      %804 = vrot.lane.b32.xlu0 %v703, 64
      %v805 = vpop.permute.xlu0 %804
      %806 = vrot.lane.b32.xlu0 %v704, 64
      %v807 = vpop.permute.xlu0 %806
      %808 = vrot.lane.b32.xlu0 %v705, 64
      %v809 = vpop.permute.xlu0 %808
      %810 = vrot.lane.b32.xlu0 %v706, 64
      %v811 = vpop.permute.xlu0 %810
      %812 = vrot.lane.b32.xlu0 %v707, 64
      %v813 = vpop.permute.xlu0 %812
      %814 = vrot.lane.b32.xlu0 %v708, 64
      %v815 = vpop.permute.xlu0 %814
      %816 = vrot.lane.b32.xlu0 %v709, 64
      %v817 = vpop.permute.xlu0 %816
      %vm826 = vcmask 785920
      %827 = vst.msk [vmem:[#allocation2 + $0x18] sm:$0xff] %vm826, %v803
      %828 = vst.msk [vmem:[#allocation2 + $0x30] sm:$0xff] %vm826, %v805
      %829 = vst.msk [vmem:[#allocation2 + $0x48] sm:$0xff] %vm826, %v807
      %830 = vst.msk [vmem:[#allocation2 + $0x60] sm:$0xff] %vm826, %v809
      %831 = vst.msk [vmem:[#allocation2 + $0x78] sm:$0xff] %vm826, %v811
      %832 = vst.msk [vmem:[#allocation2 + $0x90] sm:$0xff] %vm826, %v813
      %833 = vst.msk [vmem:[#allocation2 + $0xa8] sm:$0xff] %vm826, %v815
      %834 = vst.msk [vmem:[#allocation2 + $0xc0] sm:$0xff] %vm826, %v817
      %v836 = vrot.slane %v710, 7
      %v837 = vsel %vm752, %v766, %v836
      %838 = vrot.lane.b32.xlu0 %v753, 96
      %v839 = vpop.permute.xlu0 %838
      %840 = vrot.lane.b32.xlu0 %v755, 96
      %v841 = vpop.permute.xlu0 %840
      %842 = vrot.lane.b32.xlu0 %v757, 96
      %v843 = vpop.permute.xlu0 %842
      %844 = vrot.lane.b32.xlu0 %v759, 96
      %v845 = vpop.permute.xlu0 %844
      %846 = vrot.lane.b32.xlu0 %v761, 96
      %v847 = vpop.permute.xlu0 %846
      %848 = vrot.lane.b32.xlu0 %v763, 96
      %v849 = vpop.permute.xlu0 %848
      %850 = vrot.lane.b32.xlu0 %v765, 96
      %v851 = vpop.permute.xlu0 %850
      %852 = vrot.lane.b32.xlu0 %v767, 96
      %v853 = vpop.permute.xlu0 %852
      %854 = vrot.lane.b32.xlu0 %v837, 96
      %v855 = vpop.permute.xlu0 %854
      %vm865 = vcmask 1048321
      %866 = vst.msk [vmem:[#allocation2] sm:$0xfe] %vm865, %v839
      %vm867 = vcmask 1048320
      %868 = vst.msk [vmem:[#allocation2 + $0x18] sm:$0xff] %vm867, %v841
      %869 = vst.msk [vmem:[#allocation2 + $0x30] sm:$0xff] %vm867, %v843
      %870 = vst.msk [vmem:[#allocation2 + $0x48] sm:$0xff] %vm867, %v845
      %871 = vst.msk [vmem:[#allocation2 + $0x60] sm:$0xff] %vm867, %v847
      %872 = vst.msk [vmem:[#allocation2 + $0x78] sm:$0xff] %vm867, %v849
      %873 = vst.msk [vmem:[#allocation2 + $0x90] sm:$0xff] %vm867, %v851
      %874 = vst.msk [vmem:[#allocation2 + $0xa8] sm:$0xff] %vm867, %v853
      %875 = vst.msk [vmem:[#allocation2 + $0xc0] sm:$0xff] %vm867, %v855
      %876 = vst.msk [vmem:[#allocation2 + $0x8] sm:$0xff] %vm408, %v702
      %877 = vst.msk [vmem:[#allocation2 + $0x20] sm:$0xff] %vm408, %v703
      %878 = vst.msk [vmem:[#allocation2 + $0x38] sm:$0xff] %vm408, %v704
      %879 = vst.msk [vmem:[#allocation2 + $0x50] sm:$0xff] %vm408, %v705
      %880 = vst.msk [vmem:[#allocation2 + $0x68] sm:$0xff] %vm408, %v706
      %881 = vst.msk [vmem:[#allocation2 + $0x80] sm:$0xff] %vm408, %v707
      %882 = vst.msk [vmem:[#allocation2 + $0x98] sm:$0xff] %vm408, %v708
      %883 = vst.msk [vmem:[#allocation2 + $0xb0] sm:$0xff] %vm408, %v709
      %884 = vst.msk [vmem:[#allocation2 + $0xc8] sm:$0xff] %vm408, %v710
      %vm885 = vcmask 1046528
      %v886 = vrot.slane %v702, 1
      %v887 = vrot.slane %v703, 1
      %v888 = vsel %vm885, %v886, %v887
      %v889 = vrot.slane %v704, 1
      %v890 = vsel %vm885, %v887, %v889
      %v891 = vrot.slane %v705, 1
      %v892 = vsel %vm885, %v889, %v891
      %v893 = vrot.slane %v706, 1
      %v894 = vsel %vm885, %v891, %v893
      %v895 = vrot.slane %v707, 1
      %v896 = vsel %vm885, %v893, %v895
      %v897 = vrot.slane %v708, 1
      %v898 = vsel %vm885, %v895, %v897
      %v899 = vrot.slane %v709, 1
      %v900 = vsel %vm885, %v897, %v899
      %v901 = vrot.slane %v710, 1
      %v902 = vsel %vm885, %v899, %v901
      %903 = vrot.lane.b32.xlu0 %v888, 32
      %v904 = vpop.permute.xlu0 %903
      %905 = vrot.lane.b32.xlu0 %v890, 32
      %v906 = vpop.permute.xlu0 %905
      %907 = vrot.lane.b32.xlu0 %v892, 32
      %v908 = vpop.permute.xlu0 %907
      %909 = vrot.lane.b32.xlu0 %v894, 32
      %v910 = vpop.permute.xlu0 %909
      %911 = vrot.lane.b32.xlu0 %v896, 32
      %v912 = vpop.permute.xlu0 %911
      %913 = vrot.lane.b32.xlu0 %v898, 32
      %v914 = vpop.permute.xlu0 %913
      %915 = vrot.lane.b32.xlu0 %v900, 32
      %v916 = vpop.permute.xlu0 %915
      %917 = vrot.lane.b32.xlu0 %v902, 32
      %v918 = vpop.permute.xlu0 %917
      %919 = vrot.lane.b32.xlu0 %v901, 32
      %v920 = vpop.permute.xlu0 %919
      %930 = vst.msk [vmem:[#allocation2 + $0x8] sm:$0xff] %vm794, %v904
      %931 = vst.msk [vmem:[#allocation2 + $0x20] sm:$0xff] %vm794, %v906
      %932 = vst.msk [vmem:[#allocation2 + $0x38] sm:$0xff] %vm794, %v908
      %933 = vst.msk [vmem:[#allocation2 + $0x50] sm:$0xff] %vm794, %v910
      %934 = vst.msk [vmem:[#allocation2 + $0x68] sm:$0xff] %vm794, %v912
      %935 = vst.msk [vmem:[#allocation2 + $0x80] sm:$0xff] %vm794, %v914
      %936 = vst.msk [vmem:[#allocation2 + $0x98] sm:$0xff] %vm794, %v916
      %937 = vst.msk [vmem:[#allocation2 + $0xb0] sm:$0xff] %vm794, %v918
      %vm938 = vcmask 522496
      %939 = vst.msk [vmem:[#allocation2 + $0xc8] sm:$0x7f] %vm938, %v920
      %940 = vrot.lane.b32.xlu0 %v710, 64
      %v941 = vpop.permute.xlu0 %940
      %943 = vst.msk [vmem:[#allocation2 + $0x8] sm:$0xff] %vm826, %v805
      %944 = vst.msk [vmem:[#allocation2 + $0x20] sm:$0xff] %vm826, %v807
      %945 = vst.msk [vmem:[#allocation2 + $0x38] sm:$0xff] %vm826, %v809
      %946 = vst.msk [vmem:[#allocation2 + $0x50] sm:$0xff] %vm826, %v811
      %947 = vst.msk [vmem:[#allocation2 + $0x68] sm:$0xff] %vm826, %v813
      %948 = vst.msk [vmem:[#allocation2 + $0x80] sm:$0xff] %vm826, %v815
      %949 = vst.msk [vmem:[#allocation2 + $0x98] sm:$0xff] %vm826, %v817
      %950 = vst.msk [vmem:[#allocation2 + $0xb0] sm:$0xff] %vm826, %v941
      %951 = vrot.lane.b32.xlu0 %v890, 96
      %v952 = vpop.permute.xlu0 %951
      %953 = vrot.lane.b32.xlu0 %v892, 96
      %v954 = vpop.permute.xlu0 %953
      %955 = vrot.lane.b32.xlu0 %v894, 96
      %v956 = vpop.permute.xlu0 %955
      %957 = vrot.lane.b32.xlu0 %v896, 96
      %v958 = vpop.permute.xlu0 %957
      %959 = vrot.lane.b32.xlu0 %v898, 96
      %v960 = vpop.permute.xlu0 %959
      %961 = vrot.lane.b32.xlu0 %v900, 96
      %v962 = vpop.permute.xlu0 %961
      %963 = vrot.lane.b32.xlu0 %v902, 96
      %v964 = vpop.permute.xlu0 %963
      %965 = vrot.lane.b32.xlu0 %v901, 96
      %v966 = vpop.permute.xlu0 %965
      %975 = vst.msk [vmem:[#allocation2 + $0x8] sm:$0xff] %vm867, %v952
      %976 = vst.msk [vmem:[#allocation2 + $0x20] sm:$0xff] %vm867, %v954
      %977 = vst.msk [vmem:[#allocation2 + $0x38] sm:$0xff] %vm867, %v956
      %978 = vst.msk [vmem:[#allocation2 + $0x50] sm:$0xff] %vm867, %v958
      %979 = vst.msk [vmem:[#allocation2 + $0x68] sm:$0xff] %vm867, %v960
      %980 = vst.msk [vmem:[#allocation2 + $0x80] sm:$0xff] %vm867, %v962
      %981 = vst.msk [vmem:[#allocation2 + $0x98] sm:$0xff] %vm867, %v964
      %vm982 = vcmask 1047296
      %983 = vst.msk [vmem:[#allocation2 + $0xb0] sm:$0x7f] %vm982, %v966
      %vm984 = vcmask 1045504
      %v985 = vrot.slane %v703, 2
      %v986 = vrot.slane %v704, 2
      %v987 = vsel %vm984, %v985, %v986
      %v988 = vrot.slane %v705, 2
      %v989 = vsel %vm984, %v986, %v988
      %v990 = vrot.slane %v706, 2
      %v991 = vsel %vm984, %v988, %v990
      %v992 = vrot.slane %v707, 2
      %v993 = vsel %vm984, %v990, %v992
      %v994 = vrot.slane %v708, 2
      %v995 = vsel %vm984, %v992, %v994
      %v996 = vrot.slane %v709, 2
      %v997 = vsel %vm984, %v994, %v996
      %v998 = vrot.slane %v710, 2
      %v999 = vsel %vm984, %v996, %v998
      %1008 = vst.msk [vmem:[#allocation2 + $0x10] sm:$0xff] %vm408, %v987
      %1009 = vst.msk [vmem:[#allocation2 + $0x28] sm:$0xff] %vm408, %v989
      %1010 = vst.msk [vmem:[#allocation2 + $0x40] sm:$0xff] %vm408, %v991
      %1011 = vst.msk [vmem:[#allocation2 + $0x58] sm:$0xff] %vm408, %v993
      %1012 = vst.msk [vmem:[#allocation2 + $0x70] sm:$0xff] %vm408, %v995
      %1013 = vst.msk [vmem:[#allocation2 + $0x88] sm:$0xff] %vm408, %v997
      %1014 = vst.msk [vmem:[#allocation2 + $0xa0] sm:$0xff] %vm408, %v999
      %vm1015 = vcmask 259072
      %1016 = vst.msk [vmem:[#allocation2 + $0xb8] sm:$0x3f] %vm1015, %v998
      %v1017 = vld [vmem:[#allocation2] sm:$0xff]
      %v1018 = vld [vmem:[#allocation2 + $0x8] sm:$0xff]
      %v1019 = vld [vmem:[#allocation2 + $0x10] sm:$0xff]
      %v1020 = vld [vmem:[#allocation2 + $0x18] sm:$0xff]
      %v1021 = vld [vmem:[#allocation2 + $0x20] sm:$0xff]
      %v1022 = vld [vmem:[#allocation2 + $0x28] sm:$0xff]
      %v1023 = vld [vmem:[#allocation2 + $0x30] sm:$0xff]
      %v1024 = vld [vmem:[#allocation2 + $0x38] sm:$0xff]
      %v1025 = vld [vmem:[#allocation2 + $0x40] sm:$0xff]
      %v1026 = vld [vmem:[#allocation2 + $0x48] sm:$0xff]
      %v1027 = vld [vmem:[#allocation2 + $0x50] sm:$0xff]
      %v1028 = vld [vmem:[#allocation2 + $0x58] sm:$0xff]
      %v1029 = vld [vmem:[#allocation2 + $0x60] sm:$0xff]
      %v1030 = vld [vmem:[#allocation2 + $0x68] sm:$0xff]
      %v1031 = vld [vmem:[#allocation2 + $0x70] sm:$0xff]
      %v1032 = vld [vmem:[#allocation2 + $0x78] sm:$0xff]
      %v1033 = vld [vmem:[#allocation2 + $0x80] sm:$0xff]
      %v1034 = vld [vmem:[#allocation2 + $0x88] sm:$0xff]
      %v1035 = vld [vmem:[#allocation2 + $0x90] sm:$0xff]
      %v1036 = vld [vmem:[#allocation2 + $0x98] sm:$0xff]
      %v1037 = vld [vmem:[#allocation2 + $0xa0] sm:$0xff]
      %v1038 = vld [vmem:[#allocation2 + $0xa8] sm:$0xff]
      %v1039 = vld [vmem:[#allocation2 + $0xb0] sm:$0xff]
      %v1040 = vld [vmem:[#allocation2 + $0xb8] sm:$0xff]
      %v1041 = vld [vmem:[#allocation2 + $0xc0] sm:$0xff]
      %v1042 = vld [vmem:[#allocation2 + $0xc8] sm:$0xff]
      %v1043 = vld [vmem:[#allocation2 + $0xd0] sm:$0xff]
      %v1044 = vpack.c.bf16 %v1020, %v1017
      %v1045 = vpack.c.bf16 %v1021, %v1018
      %v1046 = vpack.c.bf16 %v1022, %v1019
      %v1047 = vpack.c.bf16 %v1026, %v1023
      %v1048 = vpack.c.bf16 %v1027, %v1024
      %v1049 = vpack.c.bf16 %v1028, %v1025
      %v1050 = vpack.c.bf16 %v1032, %v1029
      %v1051 = vpack.c.bf16 %v1033, %v1030
      %v1052 = vpack.c.bf16 %v1034, %v1031
      %v1053 = vpack.c.bf16 %v1038, %v1035
      %v1054 = vpack.c.bf16 %v1039, %v1036
      %v1055 = vpack.c.bf16 %v1040, %v1037
      %v1056 = vpack.c.bf16 %v1041, %v1041
      %v1057 = vpack.c.bf16 %v1042, %v1042
      %v1058 = vpack.c.bf16 %v1043, %v1043
      %v1059 = vld [vmem:[%s7] sm:$0xf]
      %v1060 = vld [vmem:[%s7 + $0x4] sm:$0xf]
      %v1061 = vld [vmem:[%s7 + $0x8] sm:$0xf]
      %v1062 = vld [vmem:[%s7 + $0xc] sm:$0xf]
      %v1063 = vld [vmem:[%s7 + $0x10] sm:$0xf]
      %v1064 = vld [vmem:[%s7 + $0x14] sm:$0xf]
      %v1065 = vld [vmem:[%s7 + $0x18] sm:$0xf]
      %v1066 = vld [vmem:[%s7 + $0x1c] sm:$0xf]
      %v1067 = vld [vmem:[%s7 + $0x20] sm:$0xf]
      %v1068 = vld [vmem:[%s7 + $0x24] sm:$0xf]
      %v1069 = vld [vmem:[%s7 + $0x28] sm:$0xf]
      %v1070 = vld [vmem:[%s7 + $0x2c] sm:$0xf]
      %v1071 = vld [vmem:[%s7 + $0x30] sm:$0xf]
      %v1072 = vld [vmem:[%s7 + $0x34] sm:$0xf]
      %v1073 = vld [vmem:[%s7 + $0x38] sm:$0xf]
      %v1074 = vld [vmem:[%s7 + $0x3c] sm:$0xf]
      %v1075 = vld [vmem:[%s7 + $0x40] sm:$0xf]
      %v1076 = vld [vmem:[%s7 + $0x44] sm:$0xf]
      %v1077 = vld [vmem:[%s7 + $0x48] sm:$0xf]
      %v1078 = vld [vmem:[%s7 + $0x4c] sm:$0xf]
      %v1079 = vld [vmem:[%s7 + $0x50] sm:$0xf]
      %v1080 = vld [vmem:[%s7 + $0x54] sm:$0xf]
      %v1081 = vld [vmem:[%s7 + $0x58] sm:$0xf]
      %v1082 = vld [vmem:[%s7 + $0x5c] sm:$0xf]
      %v1083 = vld [vmem:[%s7 + $0x60] sm:$0xf]
      %v1084 = vld [vmem:[%s7 + $0x64] sm:$0xf]
      %v1085 = vld [vmem:[%s7 + $0x68] sm:$0xf]
      %v1086 = vld [vmem:[%s7 + $0x6c] sm:$0xf]
      %v1087 = vld [vmem:[%s7 + $0x70] sm:$0xf]
      %v1088 = vld [vmem:[%s7 + $0x74] sm:$0xf]
      %v1089 = vld [vmem:[%s7 + $0x78] sm:$0xf]
      %v1090 = vld [vmem:[%s7 + $0x7c] sm:$0xf]
      %v1091 = vld [vmem:[%s7 + $0x80] sm:$0xf]
      %v1092 = vld [vmem:[%s7 + $0x84] sm:$0xf]
      %v1093 = vld [vmem:[%s7 + $0x88] sm:$0xf]
      %v1094 = vld [vmem:[%s7 + $0x8c] sm:$0xf]
      %v1131 = vunpack.c.l.b16 %v1059
      %v1132 = vunpack.c.l.b16 %v1060
      %v1133 = vunpack.c.l.b16 %v1061
      %v1134 = vunpack.c.l.b16 %v1062
      %v1135 = vunpack.c.l.b16 %v1063
      %v1136 = vunpack.c.l.b16 %v1064
      %v1137 = vunpack.c.l.b16 %v1065
      %v1138 = vunpack.c.l.b16 %v1066
      %v1139 = vunpack.c.l.b16 %v1067
      %v1140 = vunpack.c.l.b16 %v1068
      %v1141 = vunpack.c.l.b16 %v1069
      %v1142 = vunpack.c.l.b16 %v1070
      %v1143 = vunpack.c.l.b16 %v1071
      %v1144 = vunpack.c.l.b16 %v1072
      %v1145 = vunpack.c.l.b16 %v1073
      %v1146 = vunpack.c.l.b16 %v1074
      %v1147 = vunpack.c.l.b16 %v1075
      %v1148 = vunpack.c.l.b16 %v1076
      %v1149 = vunpack.c.l.b16 %v1077
      %v1150 = vunpack.c.l.b16 %v1078
      %v1151 = vunpack.c.l.b16 %v1079
      %v1152 = vunpack.c.l.b16 %v1080
      %v1153 = vunpack.c.l.b16 %v1081
      %v1154 = vunpack.c.l.b16 %v1082
      %v1155 = vunpack.c.l.b16 %v1083
      %v1156 = vunpack.c.l.b16 %v1084
      %v1157 = vunpack.c.l.b16 %v1085
      %v1158 = vunpack.c.l.b16 %v1086
      %v1159 = vunpack.c.l.b16 %v1087
      %v1160 = vunpack.c.l.b16 %v1088
      %v1161 = vunpack.c.l.b16 %v1089
      %v1162 = vunpack.c.l.b16 %v1090
      %v1163 = vunpack.c.l.b16 %v1091
      %v1164 = vunpack.c.l.b16 %v1092
      %v1165 = vunpack.c.l.b16 %v1093
      %v1166 = vunpack.c.l.b16 %v1094
      %v1167 = vpack.c.b16 %v1132, %v1131
      %v1168 = vpack.c.b16 %v1134, %v1133
      %v1169 = vpack.c.b16 %v1136, %v1135
      %v1170 = vpack.c.b16 %v1138, %v1137
      %v1171 = vpack.c.b16 %v1140, %v1139
      %v1172 = vpack.c.b16 %v1142, %v1141
      %v1173 = vpack.c.b16 %v1144, %v1143
      %v1174 = vpack.c.b16 %v1146, %v1145
      %v1175 = vpack.c.b16 %v1148, %v1147
      %v1176 = vpack.c.b16 %v1150, %v1149
      %v1177 = vpack.c.b16 %v1152, %v1151
      %v1178 = vpack.c.b16 %v1154, %v1153
      %v1179 = vpack.c.b16 %v1156, %v1155
      %v1180 = vpack.c.b16 %v1158, %v1157
      %v1181 = vpack.c.b16 %v1160, %v1159
      %v1182 = vpack.c.b16 %v1162, %v1161
      %v1183 = vpack.c.b16 %v1164, %v1163
      %v1184 = vpack.c.b16 %v1166, %v1165
      %v1204 = vsel %vm408, %v1046, 0
      %v1207 = vsel %vm408, %v1049, 0
      %v1210 = vsel %vm408, %v1052, 0
      %v1213 = vsel %vm408, %v1055, 0
      %v1216 = vsel %vm408, %v1058, 0
      %1218 = vmatprep.subr.bf16.mxu0 0
      %1219 = vmatpush1.bf16.msra.mxu0 %v1174
      %1220 = vmatprep.subr.bf16.mxu0 0
      %1221 = vmatpush1.bf16.msra.mxu0 %v1173
      %1222 = vmatprep.subr.bf16.mxu0 0
      %1223 = vmatpush1.bf16.msra.mxu0 %v1172
      %1224 = vmatprep.subr.bf16.mxu0 0
      %1225 = vmatpush1.bf16.msra.mxu0 %v1171
      %1226 = vmatprep.subr.bf16.mxu0 0
      %1227 = vmatpush1.bf16.msra.mxu0 %v1170
      %1228 = vmatprep.subr.bf16.mxu0 0
      %1229 = vmatpush1.bf16.msra.mxu0 %v1169
      %1230 = vmatprep.subr.bf16.mxu0 0
      %1231 = vmatpush1.bf16.msra.mxu0 %v1168
      %1232 = vmatprep.subr.bf16.mxu0 0
      %1233 = vmatpush1.bf16.msra.mxu0 %v1167
      %1234 = vmatprep.subr.bf16.mxu0 0
      %1235 = vmatpush2.bf16.msra.mxu0 %v1182
      %1236 = vmatprep.subr.bf16.mxu0 0
      %1237 = vmatpush2.bf16.msra.mxu0 %v1181
      %1238 = vmatprep.subr.bf16.mxu0 0
      %1239 = vmatpush2.bf16.msra.mxu0 %v1180
      %1240 = vmatprep.subr.bf16.mxu0 0
      %1241 = vmatpush2.bf16.msra.mxu0 %v1179
      %1242 = vmatprep.subr.bf16.mxu0 0
      %1243 = vmatpush2.bf16.msra.mxu0 %v1178
      %1244 = vmatprep.subr.bf16.mxu0 0
      %1245 = vmatpush2.bf16.msra.mxu0 %v1177
      %1246 = vmatprep.subr.bf16.mxu0 0
      %1247 = vmatpush2.bf16.msra.mxu0 %v1176
      %1248 = vmatprep.subr.bf16.mxu0 0
      %1249 = vmatpush2.bf16.msra.mxu0 %v1175
      %1250 = vmatprep.mubr.bf16.mxu0 %v1045
      %1251 = vmatmul.mubr.bf16.gmra.mxu0 %v1044
      %v1252 = vpop.f32.mrf.mxu0
      %v1253 = vadd.f32 0.0, %v1252
      %v1254 = vpop.f32.mrf.mxu0
      %v1255 = vpop.f32.mrf.mxu0
      %v1256 = vadd.f32 0.0, %v1255
      %v1257 = vpop.f32.mrf.mxu0
      %1258 = vmatprep.mubr.bf16.mxu0 %v1048
      %1259 = vmatmul.mubr.bf16.gmra.mxu0 %v1047
      %v1260 = vpop.f32.mrf.mxu0
      %v1261 = vadd.f32 0.0, %v1260
      %v1262 = vpop.f32.mrf.mxu0
      %v1263 = vpop.f32.mrf.mxu0
      %v1264 = vadd.f32 0.0, %v1263
      %v1265 = vpop.f32.mrf.mxu0
      %1266 = vmatprep.mubr.bf16.mxu0 %v1051
      %1267 = vmatmul.mubr.bf16.gmra.mxu0 %v1050
      %v1268 = vpop.f32.mrf.mxu0
      %v1269 = vadd.f32 0.0, %v1268
      %v1270 = vpop.f32.mrf.mxu0
      %v1271 = vpop.f32.mrf.mxu0
      %v1272 = vadd.f32 0.0, %v1271
      %v1273 = vpop.f32.mrf.mxu0
      %1274 = vmatprep.mubr.bf16.mxu0 %v1054
      %1275 = vmatmul.mubr.bf16.gmra.mxu0 %v1053
      %v1276 = vpop.f32.mrf.mxu0
      %v1277 = vadd.f32 0.0, %v1276
      %v1278 = vpop.f32.mrf.mxu0
      %v1279 = vpop.f32.mrf.mxu0
      %v1280 = vadd.f32 0.0, %v1279
      %v1281 = vpop.f32.mrf.mxu0
      %1282 = vmatprep.mubr.bf16.mxu0 %v1057
      %1283 = vmatmul.mubr.bf16.gmra.mxu0 %v1056
      %v1284 = vpop.f32.mrf.mxu0
      %v1285 = vadd.f32 0.0, %v1284
      %v1286 = vpop.f32.mrf.mxu0
      %v1287 = vpop.f32.mrf.mxu0
      %v1288 = vpop.f32.mrf.mxu0
      %1289 = vdwg.mxu0
      %1290 = vmatprep.subr.bf16.mxu0 0
      %1291 = vmatpush1.bf16.msra.mxu0 0
      %1292 = vmatprep.subr.bf16.mxu0 0
      %1293 = vmatpush1.bf16.msra.mxu0 0
      %1294 = vmatprep.subr.bf16.mxu0 0
      %1295 = vmatpush1.bf16.msra.mxu0 0
      %1296 = vmatprep.subr.bf16.mxu0 0
      %1297 = vmatpush1.bf16.msra.mxu0 0
      %1298 = vmatprep.subr.bf16.mxu0 0
      %1299 = vmatpush1.bf16.msra.mxu0 0
      %1300 = vmatprep.subr.bf16.mxu0 0
      %1301 = vmatpush1.bf16.msra.mxu0 0
      %1302 = vmatprep.subr.bf16.mxu0 0
      %1303 = vmatpush1.bf16.msra.mxu0 %v1184
      %1304 = vmatprep.subr.bf16.mxu0 0
      %1305 = vmatpush1.bf16.msra.mxu0 %v1183
      %1306 = vmatprep.subr.bf16.mxu0 0
      %1307 = vmatpush2.bf16.msra.mxu0 0
      %1308 = vmatprep.subr.bf16.mxu0 0
      %1309 = vmatpush2.bf16.msra.mxu0 0
      %1310 = vmatprep.subr.bf16.mxu0 0
      %1311 = vmatpush2.bf16.msra.mxu0 0
      %1312 = vmatprep.subr.bf16.mxu0 0
      %1313 = vmatpush2.bf16.msra.mxu0 0
      %1314 = vmatprep.subr.bf16.mxu0 0
      %1315 = vmatpush2.bf16.msra.mxu0 0
      %1316 = vmatprep.subr.bf16.mxu0 0
      %1317 = vmatpush2.bf16.msra.mxu0 0
      %1318 = vmatprep.subr.bf16.mxu0 0
      %1319 = vmatpush2.bf16.msra.mxu0 0
      %1320 = vmatprep.subr.bf16.mxu0 0
      %1321 = vmatpush2.bf16.msra.mxu0 0
      %1322 = vmatprep.mubr.bf16.mxu0 0
      %1323 = vmatmul.mubr.bf16.gmra.mxu0 %v1204
      %v1324 = vpop.f32.mrf.mxu0
      %v1325 = vadd.f32 %v1253, %v1324
      %v1326 = vpop.f32.mrf.mxu0
      %v1327 = vpop.f32.mrf.mxu0
      %v1328 = vadd.f32 %v1256, %v1327
      %v1329 = vpop.f32.mrf.mxu0
      %1330 = vmatprep.mubr.bf16.mxu0 0
      %1331 = vmatmul.mubr.bf16.gmra.mxu0 %v1207
      %v1332 = vpop.f32.mrf.mxu0
      %v1333 = vadd.f32 %v1261, %v1332
      %v1334 = vpop.f32.mrf.mxu0
      %v1335 = vpop.f32.mrf.mxu0
      %v1336 = vadd.f32 %v1264, %v1335
      %v1337 = vpop.f32.mrf.mxu0
      %1338 = vmatprep.mubr.bf16.mxu0 0
      %1339 = vmatmul.mubr.bf16.gmra.mxu0 %v1210
      %v1340 = vpop.f32.mrf.mxu0
      %v1341 = vadd.f32 %v1269, %v1340
      %v1342 = vpop.f32.mrf.mxu0
      %v1343 = vpop.f32.mrf.mxu0
      %v1344 = vadd.f32 %v1272, %v1343
      %v1345 = vpop.f32.mrf.mxu0
      %1346 = vmatprep.mubr.bf16.mxu0 0
      %1347 = vmatmul.mubr.bf16.gmra.mxu0 %v1213
      %v1348 = vpop.f32.mrf.mxu0
      %v1349 = vadd.f32 %v1277, %v1348
      %v1350 = vpop.f32.mrf.mxu0
      %v1351 = vpop.f32.mrf.mxu0
      %v1352 = vadd.f32 %v1280, %v1351
      %v1353 = vpop.f32.mrf.mxu0
      %1354 = vmatprep.mubr.bf16.mxu0 0
      %1355 = vmatmul.mubr.bf16.gmra.mxu0 %v1216
      %v1356 = vpop.f32.mrf.mxu0
      %v1357 = vadd.f32 %v1285, %v1356
      %v1358 = vpop.f32.mrf.mxu0
      %v1359 = vpop.f32.mrf.mxu0
      %v1360 = vpop.f32.mrf.mxu0
      %1361 = vdwg.mxu0
      %v1362 = vadd.f32 %v397, %v1325
      %v1363 = vadd.f32 %v398, %v1328
      %v1364 = vadd.f32 %v399, %v1333
      %v1365 = vadd.f32 %v400, %v1336
      %v1366 = vadd.f32 %v401, %v1341
      %v1367 = vadd.f32 %v402, %v1344
      %v1368 = vadd.f32 %v403, %v1349
      %v1369 = vadd.f32 %v404, %v1352
      %v1370 = vadd.f32 %v405, %v1357
      %s1371 = scalar_lea.vmem %s2, 1
      %v1372 = vld [vmem:[%s1371] sm:$0x1]
      %v1374 = vlaneseq
      %v1375 = vshrl.u32 %v1374, 7
      %v1376 = vsub.s32 0, %v1375
      %v1377 = vrot.slane %v1372, %v1376
      %v1379 = vmul.f32 %v1362, %v1377
      %v1380 = vmul.f32 %v1363, %v1377
      %v1381 = vmul.f32 %v1364, %v1377
      %v1382 = vmul.f32 %v1365, %v1377
      %v1383 = vmul.f32 %v1366, %v1377
      %v1384 = vmul.f32 %v1367, %v1377
      %v1385 = vmul.f32 %v1368, %v1377
      %v1386 = vmul.f32 %v1369, %v1377
      %v1387 = vmul.f32 %v1370, %v1377
      %s1388 = scalar_lea.vmem %s3, 1
      %v1389 = vld [vmem:[%s1388] sm:$0x1]
      %v1391 = vlaneseq
      %v1392 = vshrl.u32 %v1391, 7
      %v1393 = vsub.s32 0, %v1392
      %v1394 = vrot.slane %v1389, %v1393
      %v1396 = vadd.f32 %v1379, %v1394
      %v1397 = vadd.f32 %v1380, %v1394
      %v1398 = vadd.f32 %v1381, %v1394
      %v1399 = vadd.f32 %v1382, %v1394
      %v1400 = vadd.f32 %v1383, %v1394
      %v1401 = vadd.f32 %v1384, %v1394
      %v1402 = vadd.f32 %v1385, %v1394
      %v1403 = vadd.f32 %v1386, %v1394
      %v1404 = vadd.f32 %v1387, %v1394
      %v1405 = vmax.f32 %v1396, 0.0
      %v1406 = vmax.f32 %v1397, 0.0
      %v1407 = vmax.f32 %v1398, 0.0
      %v1408 = vmax.f32 %v1399, 0.0
      %v1409 = vmax.f32 %v1400, 0.0
      %v1410 = vmax.f32 %v1401, 0.0
      %v1411 = vmax.f32 %v1402, 0.0
      %v1412 = vmax.f32 %v1403, 0.0
      %v1413 = vmax.f32 %v1404, 0.0
      %v1414 = vpack.c.bf16 %v1406, %v1405
      %v1415 = vpack.c.bf16 %v1408, %v1407
      %v1416 = vpack.c.bf16 %v1410, %v1409
      %v1417 = vpack.c.bf16 %v1412, %v1411
      %v1418 = vpack.c.bf16 %v1413, %v1413
      %s1419 = scalar_lea.vmem %s4, 64
      %v1420 = vld [vmem:[%s1419] sm:$0xf]
      %v1421 = vld [vmem:[%s1419 + $0x4] sm:$0xf]
      %v1422 = vld [vmem:[%s1419 + $0x8] sm:$0xf]
      %v1423 = vld [vmem:[%s1419 + $0xc] sm:$0xf]
      %v1424 = vld [vmem:[%s1419 + $0x10] sm:$0xf]
      %v1425 = vld [vmem:[%s1419 + $0x14] sm:$0xf]
      %v1426 = vld [vmem:[%s1419 + $0x18] sm:$0xf]
      %v1427 = vld [vmem:[%s1419 + $0x1c] sm:$0xf]
      %v1428 = vld [vmem:[%s1419 + $0x20] sm:$0xf]
      %v1429 = vld [vmem:[%s1419 + $0x24] sm:$0xf]
      %v1430 = vld [vmem:[%s1419 + $0x28] sm:$0xf]
      %v1431 = vld [vmem:[%s1419 + $0x2c] sm:$0xf]
      %v1432 = vld [vmem:[%s1419 + $0x30] sm:$0xf]
      %v1433 = vld [vmem:[%s1419 + $0x34] sm:$0xf]
      %v1434 = vld [vmem:[%s1419 + $0x38] sm:$0xf]
      %v1435 = vld [vmem:[%s1419 + $0x3c] sm:$0xf]
      %v1452 = vunpack.c.l.b16 %v1420
      %v1453 = vunpack.c.l.b16 %v1421
      %v1454 = vunpack.c.l.b16 %v1422
      %v1455 = vunpack.c.l.b16 %v1423
      %v1456 = vunpack.c.l.b16 %v1424
      %v1457 = vunpack.c.l.b16 %v1425
      %v1458 = vunpack.c.l.b16 %v1426
      %v1459 = vunpack.c.l.b16 %v1427
      %v1460 = vunpack.c.l.b16 %v1428
      %v1461 = vunpack.c.l.b16 %v1429
      %v1462 = vunpack.c.l.b16 %v1430
      %v1463 = vunpack.c.l.b16 %v1431
      %v1464 = vunpack.c.l.b16 %v1432
      %v1465 = vunpack.c.l.b16 %v1433
      %v1466 = vunpack.c.l.b16 %v1434
      %v1467 = vunpack.c.l.b16 %v1435
      %v1468 = vpack.c.b16 %v1453, %v1452
      %v1469 = vpack.c.b16 %v1455, %v1454
      %v1470 = vpack.c.b16 %v1457, %v1456
      %v1471 = vpack.c.b16 %v1459, %v1458
      %v1472 = vpack.c.b16 %v1461, %v1460
      %v1473 = vpack.c.b16 %v1463, %v1462
      %v1474 = vpack.c.b16 %v1465, %v1464
      %v1475 = vpack.c.b16 %v1467, %v1466
      %1484 = vmatprep.subr.bf16.mxu0 0
      %1485 = vmatpush1.bf16.msra.mxu0 %v1475
      %1486 = vmatprep.subr.bf16.mxu0 0
      %1487 = vmatpush1.bf16.msra.mxu0 %v1474
      %1488 = vmatprep.subr.bf16.mxu0 0
      %1489 = vmatpush1.bf16.msra.mxu0 %v1473
      %1490 = vmatprep.subr.bf16.mxu0 0
      %1491 = vmatpush1.bf16.msra.mxu0 %v1472
      %1492 = vmatprep.subr.bf16.mxu0 0
      %1493 = vmatpush1.bf16.msra.mxu0 %v1471
      %1494 = vmatprep.subr.bf16.mxu0 0
      %1495 = vmatpush1.bf16.msra.mxu0 %v1470
      %1496 = vmatprep.subr.bf16.mxu0 0
      %1497 = vmatpush1.bf16.msra.mxu0 %v1469
      %1498 = vmatprep.subr.bf16.mxu0 0
      %1499 = vmatpush1.bf16.msra.mxu0 %v1468
      %1500 = vmatprep.subr.bf16.mxu0 0
      %1501 = vmatpush2.bf16.msra.mxu0 0
      %1502 = vmatprep.subr.bf16.mxu0 0
      %1503 = vmatpush2.bf16.msra.mxu0 0
      %1504 = vmatprep.subr.bf16.mxu0 0
      %1505 = vmatpush2.bf16.msra.mxu0 0
      %1506 = vmatprep.subr.bf16.mxu0 0
      %1507 = vmatpush2.bf16.msra.mxu0 0
      %1508 = vmatprep.subr.bf16.mxu0 0
      %1509 = vmatpush2.bf16.msra.mxu0 0
      %1510 = vmatprep.subr.bf16.mxu0 0
      %1511 = vmatpush2.bf16.msra.mxu0 0
      %1512 = vmatprep.subr.bf16.mxu0 0
      %1513 = vmatpush2.bf16.msra.mxu0 0
      %1514 = vmatprep.subr.bf16.mxu0 0
      %1515 = vmatpush2.bf16.msra.mxu0 0
      %1516 = vmatprep.mubr.bf16.mxu0 0
      %1517 = vmatmul.mubr.bf16.gmra.mxu0 %v1414
      %v1518 = vpop.f32.mrf.mxu0
      %v1519 = vadd.f32 0.0, %v1518
      %v1520 = vpop.f32.mrf.mxu0
      %v1521 = vpop.f32.mrf.mxu0
      %v1522 = vadd.f32 0.0, %v1521
      %v1523 = vpop.f32.mrf.mxu0
      %1524 = vmatprep.mubr.bf16.mxu0 0
      %1525 = vmatmul.mubr.bf16.gmra.mxu0 %v1415
      %v1526 = vpop.f32.mrf.mxu0
      %v1527 = vadd.f32 0.0, %v1526
      %v1528 = vpop.f32.mrf.mxu0
      %v1529 = vpop.f32.mrf.mxu0
      %v1530 = vadd.f32 0.0, %v1529
      %v1531 = vpop.f32.mrf.mxu0
      %1532 = vmatprep.mubr.bf16.mxu0 0
      %1533 = vmatmul.mubr.bf16.gmra.mxu0 %v1416
      %v1534 = vpop.f32.mrf.mxu0
      %v1535 = vadd.f32 0.0, %v1534
      %v1536 = vpop.f32.mrf.mxu0
      %v1537 = vpop.f32.mrf.mxu0
      %v1538 = vadd.f32 0.0, %v1537
      %v1539 = vpop.f32.mrf.mxu0
      %1540 = vmatprep.mubr.bf16.mxu0 0
      %1541 = vmatmul.mubr.bf16.gmra.mxu0 %v1417
      %v1542 = vpop.f32.mrf.mxu0
      %v1543 = vadd.f32 0.0, %v1542
      %v1544 = vpop.f32.mrf.mxu0
      %v1545 = vpop.f32.mrf.mxu0
      %v1546 = vadd.f32 0.0, %v1545
      %v1547 = vpop.f32.mrf.mxu0
      %1548 = vmatprep.mubr.bf16.mxu0 0
      %1549 = vmatmul.mubr.bf16.gmra.mxu0 %v1418
      %v1550 = vpop.f32.mrf.mxu0
      %v1551 = vadd.f32 0.0, %v1550
      %v1552 = vpop.f32.mrf.mxu0
      %v1553 = vpop.f32.mrf.mxu0
      %v1554 = vpop.f32.mrf.mxu0
      %1555 = vdwg.mxu0
      %s1556 = scalar_lea.vmem %s5, 1
      %v1557 = vld [vmem:[%s1556] sm:$0x1]
      %v1559 = vlaneseq
      %v1560 = vshrl.u32 %v1559, 7
      %v1561 = vsub.s32 0, %v1560
      %v1562 = vrot.slane %v1557, %v1561
      %v1564 = vmul.f32 %v1519, %v1562
      %v1565 = vmul.f32 %v1522, %v1562
      %v1566 = vmul.f32 %v1527, %v1562
      %v1567 = vmul.f32 %v1530, %v1562
      %v1568 = vmul.f32 %v1535, %v1562
      %v1569 = vmul.f32 %v1538, %v1562
      %v1570 = vmul.f32 %v1543, %v1562
      %v1571 = vmul.f32 %v1546, %v1562
      %v1572 = vmul.f32 %v1551, %v1562
      %s1573 = scalar_lea.vmem %s6, 1
      %v1574 = vld [vmem:[%s1573] sm:$0x1]
      %v1576 = vlaneseq
      %v1577 = vshrl.u32 %v1576, 7
      %v1578 = vsub.s32 0, %v1577
      %v1579 = vrot.slane %v1574, %v1578
      %v1581 = vadd.f32 %v1564, %v1579
      %v1582 = vadd.f32 %v1565, %v1579
      %v1583 = vadd.f32 %v1566, %v1579
      %v1584 = vadd.f32 %v1567, %v1579
      %v1585 = vadd.f32 %v1568, %v1579
      %v1586 = vadd.f32 %v1569, %v1579
      %v1587 = vadd.f32 %v1570, %v1579
      %v1588 = vadd.f32 %v1571, %v1579
      %v1589 = vadd.f32 %v1572, %v1579
      %v1590 = vmax.f32 %v1581, 0.0
      %v1591 = vmax.f32 %v1582, 0.0
      %v1592 = vmax.f32 %v1583, 0.0
      %v1593 = vmax.f32 %v1584, 0.0
      %v1594 = vmax.f32 %v1585, 0.0
      %v1595 = vmax.f32 %v1586, 0.0
      %v1596 = vmax.f32 %v1587, 0.0
      %v1597 = vmax.f32 %v1588, 0.0
      %v1598 = vmax.f32 %v1589, 0.0
      %v1599 = vmul.f32 %v1590, %v660
      %v1600 = vmul.f32 %v1591, %v665
      %v1601 = vmul.f32 %v1592, %v670
      %v1602 = vmul.f32 %v1593, %v675
      %v1603 = vmul.f32 %v1594, %v680
      %v1604 = vmul.f32 %v1595, %v685
      %v1605 = vmul.f32 %v1596, %v690
      %v1606 = vmul.f32 %v1597, %v695
      %v1607 = vmul.f32 %v1598, %v700
      %v1616 = vrot.slane %v1599, 6
      %v1617 = vrot.slane %v1600, 6
      %v1618 = vsel %vm719, %v1616, %v1617
      %v1619 = vrot.slane %v1601, 6
      %v1620 = vsel %vm719, %v1617, %v1619
      %v1621 = vrot.slane %v1602, 6
      %v1622 = vsel %vm719, %v1619, %v1621
      %v1623 = vrot.slane %v1603, 6
      %v1624 = vsel %vm719, %v1621, %v1623
      %v1625 = vrot.slane %v1604, 6
      %v1626 = vsel %vm719, %v1623, %v1625
      %v1627 = vrot.slane %v1605, 6
      %v1628 = vsel %vm719, %v1625, %v1627
      %v1629 = vrot.slane %v1606, 6
      %v1630 = vsel %vm719, %v1627, %v1629
      %1639 = vst.msk [vmem:[#allocation2 + $0x18] sm:$0xfc] %vm743, %v1616
      %1640 = vst.msk [vmem:[#allocation2 + $0x30] sm:$0xff] %vm408, %v1618
      %1641 = vst.msk [vmem:[#allocation2 + $0x48] sm:$0xff] %vm408, %v1620
      %1642 = vst.msk [vmem:[#allocation2 + $0x60] sm:$0xff] %vm408, %v1622
      %1643 = vst.msk [vmem:[#allocation2 + $0x78] sm:$0xff] %vm408, %v1624
      %1644 = vst.msk [vmem:[#allocation2 + $0x90] sm:$0xff] %vm408, %v1626
      %1645 = vst.msk [vmem:[#allocation2 + $0xa8] sm:$0xff] %vm408, %v1628
      %1646 = vst.msk [vmem:[#allocation2 + $0xc0] sm:$0xff] %vm408, %v1630
      %v1647 = vrot.slane %v1599, 7
      %v1648 = vrot.slane %v1600, 7
      %v1649 = vsel %vm752, %v1647, %v1648
      %v1650 = vrot.slane %v1601, 7
      %v1651 = vsel %vm752, %v1648, %v1650
      %v1652 = vrot.slane %v1602, 7
      %v1653 = vsel %vm752, %v1650, %v1652
      %v1654 = vrot.slane %v1603, 7
      %v1655 = vsel %vm752, %v1652, %v1654
      %v1656 = vrot.slane %v1604, 7
      %v1657 = vsel %vm752, %v1654, %v1656
      %v1658 = vrot.slane %v1605, 7
      %v1659 = vsel %vm752, %v1656, %v1658
      %v1660 = vrot.slane %v1606, 7
      %v1661 = vsel %vm752, %v1658, %v1660
      %1662 = vrot.lane.b32.xlu0 %v1647, 32
      %v1663 = vpop.permute.xlu0 %1662
      %1664 = vrot.lane.b32.xlu0 %v1649, 32
      %v1665 = vpop.permute.xlu0 %1664
      %1666 = vrot.lane.b32.xlu0 %v1651, 32
      %v1667 = vpop.permute.xlu0 %1666
      %1668 = vrot.lane.b32.xlu0 %v1653, 32
      %v1669 = vpop.permute.xlu0 %1668
      %1670 = vrot.lane.b32.xlu0 %v1655, 32
      %v1671 = vpop.permute.xlu0 %1670
      %1672 = vrot.lane.b32.xlu0 %v1657, 32
      %v1673 = vpop.permute.xlu0 %1672
      %1674 = vrot.lane.b32.xlu0 %v1659, 32
      %v1675 = vpop.permute.xlu0 %1674
      %1676 = vrot.lane.b32.xlu0 %v1661, 32
      %v1677 = vpop.permute.xlu0 %1676
      %1686 = vst.msk [vmem:[#allocation2 + $0x18] sm:$0xfe] %vm792, %v1663
      %1687 = vst.msk [vmem:[#allocation2 + $0x30] sm:$0xff] %vm794, %v1665
      %1688 = vst.msk [vmem:[#allocation2 + $0x48] sm:$0xff] %vm794, %v1667
      %1689 = vst.msk [vmem:[#allocation2 + $0x60] sm:$0xff] %vm794, %v1669
      %1690 = vst.msk [vmem:[#allocation2 + $0x78] sm:$0xff] %vm794, %v1671
      %1691 = vst.msk [vmem:[#allocation2 + $0x90] sm:$0xff] %vm794, %v1673
      %1692 = vst.msk [vmem:[#allocation2 + $0xa8] sm:$0xff] %vm794, %v1675
      %1693 = vst.msk [vmem:[#allocation2 + $0xc0] sm:$0xff] %vm794, %v1677
      %1694 = vrot.lane.b32.xlu0 %v1599, 64
      %v1695 = vpop.permute.xlu0 %1694
      %1696 = vrot.lane.b32.xlu0 %v1600, 64
      %v1697 = vpop.permute.xlu0 %1696
      %1698 = vrot.lane.b32.xlu0 %v1601, 64
      %v1699 = vpop.permute.xlu0 %1698
      %1700 = vrot.lane.b32.xlu0 %v1602, 64
      %v1701 = vpop.permute.xlu0 %1700
      %1702 = vrot.lane.b32.xlu0 %v1603, 64
      %v1703 = vpop.permute.xlu0 %1702
      %1704 = vrot.lane.b32.xlu0 %v1604, 64
      %v1705 = vpop.permute.xlu0 %1704
      %1706 = vrot.lane.b32.xlu0 %v1605, 64
      %v1707 = vpop.permute.xlu0 %1706
      %1708 = vrot.lane.b32.xlu0 %v1606, 64
      %v1709 = vpop.permute.xlu0 %1708
      %1718 = vst.msk [vmem:[#allocation2 + $0x18] sm:$0xff] %vm826, %v1695
      %1719 = vst.msk [vmem:[#allocation2 + $0x30] sm:$0xff] %vm826, %v1697
      %1720 = vst.msk [vmem:[#allocation2 + $0x48] sm:$0xff] %vm826, %v1699
      %1721 = vst.msk [vmem:[#allocation2 + $0x60] sm:$0xff] %vm826, %v1701
      %1722 = vst.msk [vmem:[#allocation2 + $0x78] sm:$0xff] %vm826, %v1703
      %1723 = vst.msk [vmem:[#allocation2 + $0x90] sm:$0xff] %vm826, %v1705
      %1724 = vst.msk [vmem:[#allocation2 + $0xa8] sm:$0xff] %vm826, %v1707
      %1725 = vst.msk [vmem:[#allocation2 + $0xc0] sm:$0xff] %vm826, %v1709
      %v1727 = vrot.slane %v1607, 7
      %v1728 = vsel %vm752, %v1660, %v1727
      %1729 = vrot.lane.b32.xlu0 %v1647, 96
      %v1730 = vpop.permute.xlu0 %1729
      %1731 = vrot.lane.b32.xlu0 %v1649, 96
      %v1732 = vpop.permute.xlu0 %1731
      %1733 = vrot.lane.b32.xlu0 %v1651, 96
      %v1734 = vpop.permute.xlu0 %1733
      %1735 = vrot.lane.b32.xlu0 %v1653, 96
      %v1736 = vpop.permute.xlu0 %1735
      %1737 = vrot.lane.b32.xlu0 %v1655, 96
      %v1738 = vpop.permute.xlu0 %1737
      %1739 = vrot.lane.b32.xlu0 %v1657, 96
      %v1740 = vpop.permute.xlu0 %1739
      %1741 = vrot.lane.b32.xlu0 %v1659, 96
      %v1742 = vpop.permute.xlu0 %1741
      %1743 = vrot.lane.b32.xlu0 %v1661, 96
      %v1744 = vpop.permute.xlu0 %1743
      %1745 = vrot.lane.b32.xlu0 %v1728, 96
      %v1746 = vpop.permute.xlu0 %1745
      %1756 = vst.msk [vmem:[#allocation2] sm:$0xfe] %vm865, %v1730
      %1757 = vst.msk [vmem:[#allocation2 + $0x18] sm:$0xff] %vm867, %v1732
      %1758 = vst.msk [vmem:[#allocation2 + $0x30] sm:$0xff] %vm867, %v1734
      %1759 = vst.msk [vmem:[#allocation2 + $0x48] sm:$0xff] %vm867, %v1736
      %1760 = vst.msk [vmem:[#allocation2 + $0x60] sm:$0xff] %vm867, %v1738
      %1761 = vst.msk [vmem:[#allocation2 + $0x78] sm:$0xff] %vm867, %v1740
      %1762 = vst.msk [vmem:[#allocation2 + $0x90] sm:$0xff] %vm867, %v1742
      %1763 = vst.msk [vmem:[#allocation2 + $0xa8] sm:$0xff] %vm867, %v1744
      %1764 = vst.msk [vmem:[#allocation2 + $0xc0] sm:$0xff] %vm867, %v1746
      %1765 = vst.msk [vmem:[#allocation2 + $0x8] sm:$0xff] %vm408, %v1599
      %1766 = vst.msk [vmem:[#allocation2 + $0x20] sm:$0xff] %vm408, %v1600
      %1767 = vst.msk [vmem:[#allocation2 + $0x38] sm:$0xff] %vm408, %v1601
      %1768 = vst.msk [vmem:[#allocation2 + $0x50] sm:$0xff] %vm408, %v1602
      %1769 = vst.msk [vmem:[#allocation2 + $0x68] sm:$0xff] %vm408, %v1603
      %1770 = vst.msk [vmem:[#allocation2 + $0x80] sm:$0xff] %vm408, %v1604
      %1771 = vst.msk [vmem:[#allocation2 + $0x98] sm:$0xff] %vm408, %v1605
      %1772 = vst.msk [vmem:[#allocation2 + $0xb0] sm:$0xff] %vm408, %v1606
      %1773 = vst.msk [vmem:[#allocation2 + $0xc8] sm:$0xff] %vm408, %v1607
      %v1774 = vrot.slane %v1599, 1
      %v1775 = vrot.slane %v1600, 1
      %v1776 = vsel %vm885, %v1774, %v1775
      %v1777 = vrot.slane %v1601, 1
      %v1778 = vsel %vm885, %v1775, %v1777
      %v1779 = vrot.slane %v1602, 1
      %v1780 = vsel %vm885, %v1777, %v1779
      %v1781 = vrot.slane %v1603, 1
      %v1782 = vsel %vm885, %v1779, %v1781
      %v1783 = vrot.slane %v1604, 1
      %v1784 = vsel %vm885, %v1781, %v1783
      %v1785 = vrot.slane %v1605, 1
      %v1786 = vsel %vm885, %v1783, %v1785
      %v1787 = vrot.slane %v1606, 1
      %v1788 = vsel %vm885, %v1785, %v1787
      %v1789 = vrot.slane %v1607, 1
      %v1790 = vsel %vm885, %v1787, %v1789
      %1791 = vrot.lane.b32.xlu0 %v1776, 32
      %v1792 = vpop.permute.xlu0 %1791
      %1793 = vrot.lane.b32.xlu0 %v1778, 32
      %v1794 = vpop.permute.xlu0 %1793
      %1795 = vrot.lane.b32.xlu0 %v1780, 32
      %v1796 = vpop.permute.xlu0 %1795
      %1797 = vrot.lane.b32.xlu0 %v1782, 32
      %v1798 = vpop.permute.xlu0 %1797
      %1799 = vrot.lane.b32.xlu0 %v1784, 32
      %v1800 = vpop.permute.xlu0 %1799
      %1801 = vrot.lane.b32.xlu0 %v1786, 32
      %v1802 = vpop.permute.xlu0 %1801
      %1803 = vrot.lane.b32.xlu0 %v1788, 32
      %v1804 = vpop.permute.xlu0 %1803
      %1805 = vrot.lane.b32.xlu0 %v1790, 32
      %v1806 = vpop.permute.xlu0 %1805
      %1807 = vrot.lane.b32.xlu0 %v1789, 32
      %v1808 = vpop.permute.xlu0 %1807
      %1818 = vst.msk [vmem:[#allocation2 + $0x8] sm:$0xff] %vm794, %v1792
      %1819 = vst.msk [vmem:[#allocation2 + $0x20] sm:$0xff] %vm794, %v1794
      %1820 = vst.msk [vmem:[#allocation2 + $0x38] sm:$0xff] %vm794, %v1796
      %1821 = vst.msk [vmem:[#allocation2 + $0x50] sm:$0xff] %vm794, %v1798
      %1822 = vst.msk [vmem:[#allocation2 + $0x68] sm:$0xff] %vm794, %v1800
      %1823 = vst.msk [vmem:[#allocation2 + $0x80] sm:$0xff] %vm794, %v1802
      %1824 = vst.msk [vmem:[#allocation2 + $0x98] sm:$0xff] %vm794, %v1804
      %1825 = vst.msk [vmem:[#allocation2 + $0xb0] sm:$0xff] %vm794, %v1806
      %1826 = vst.msk [vmem:[#allocation2 + $0xc8] sm:$0x7f] %vm938, %v1808
      %1827 = vrot.lane.b32.xlu0 %v1607, 64
      %v1828 = vpop.permute.xlu0 %1827
      %1830 = vst.msk [vmem:[#allocation2 + $0x8] sm:$0xff] %vm826, %v1697
      %1831 = vst.msk [vmem:[#allocation2 + $0x20] sm:$0xff] %vm826, %v1699
      %1832 = vst.msk [vmem:[#allocation2 + $0x38] sm:$0xff] %vm826, %v1701
      %1833 = vst.msk [vmem:[#allocation2 + $0x50] sm:$0xff] %vm826, %v1703
      %1834 = vst.msk [vmem:[#allocation2 + $0x68] sm:$0xff] %vm826, %v1705
      %1835 = vst.msk [vmem:[#allocation2 + $0x80] sm:$0xff] %vm826, %v1707
      %1836 = vst.msk [vmem:[#allocation2 + $0x98] sm:$0xff] %vm826, %v1709
      %1837 = vst.msk [vmem:[#allocation2 + $0xb0] sm:$0xff] %vm826, %v1828
      %1838 = vrot.lane.b32.xlu0 %v1778, 96
      %v1839 = vpop.permute.xlu0 %1838
      %1840 = vrot.lane.b32.xlu0 %v1780, 96
      %v1841 = vpop.permute.xlu0 %1840
      %1842 = vrot.lane.b32.xlu0 %v1782, 96
      %v1843 = vpop.permute.xlu0 %1842
      %1844 = vrot.lane.b32.xlu0 %v1784, 96
      %v1845 = vpop.permute.xlu0 %1844
      %1846 = vrot.lane.b32.xlu0 %v1786, 96
      %v1847 = vpop.permute.xlu0 %1846
      %1848 = vrot.lane.b32.xlu0 %v1788, 96
      %v1849 = vpop.permute.xlu0 %1848
      %1850 = vrot.lane.b32.xlu0 %v1790, 96
      %v1851 = vpop.permute.xlu0 %1850
      %1852 = vrot.lane.b32.xlu0 %v1789, 96
      %v1853 = vpop.permute.xlu0 %1852
      %1862 = vst.msk [vmem:[#allocation2 + $0x8] sm:$0xff] %vm867, %v1839
      %1863 = vst.msk [vmem:[#allocation2 + $0x20] sm:$0xff] %vm867, %v1841
      %1864 = vst.msk [vmem:[#allocation2 + $0x38] sm:$0xff] %vm867, %v1843
      %1865 = vst.msk [vmem:[#allocation2 + $0x50] sm:$0xff] %vm867, %v1845
      %1866 = vst.msk [vmem:[#allocation2 + $0x68] sm:$0xff] %vm867, %v1847
      %1867 = vst.msk [vmem:[#allocation2 + $0x80] sm:$0xff] %vm867, %v1849
      %1868 = vst.msk [vmem:[#allocation2 + $0x98] sm:$0xff] %vm867, %v1851
      %1869 = vst.msk [vmem:[#allocation2 + $0xb0] sm:$0x7f] %vm982, %v1853
      %v1870 = vrot.slane %v1600, 2
      %v1871 = vrot.slane %v1601, 2
      %v1872 = vsel %vm984, %v1870, %v1871
      %v1873 = vrot.slane %v1602, 2
      %v1874 = vsel %vm984, %v1871, %v1873
      %v1875 = vrot.slane %v1603, 2
      %v1876 = vsel %vm984, %v1873, %v1875
      %v1877 = vrot.slane %v1604, 2
      %v1878 = vsel %vm984, %v1875, %v1877
      %v1879 = vrot.slane %v1605, 2
      %v1880 = vsel %vm984, %v1877, %v1879
      %v1881 = vrot.slane %v1606, 2
      %v1882 = vsel %vm984, %v1879, %v1881
      %v1883 = vrot.slane %v1607, 2
      %v1884 = vsel %vm984, %v1881, %v1883
      %1893 = vst.msk [vmem:[#allocation2 + $0x10] sm:$0xff] %vm408, %v1872
      %1894 = vst.msk [vmem:[#allocation2 + $0x28] sm:$0xff] %vm408, %v1874
      %1895 = vst.msk [vmem:[#allocation2 + $0x40] sm:$0xff] %vm408, %v1876
      %1896 = vst.msk [vmem:[#allocation2 + $0x58] sm:$0xff] %vm408, %v1878
      %1897 = vst.msk [vmem:[#allocation2 + $0x70] sm:$0xff] %vm408, %v1880
      %1898 = vst.msk [vmem:[#allocation2 + $0x88] sm:$0xff] %vm408, %v1882
      %1899 = vst.msk [vmem:[#allocation2 + $0xa0] sm:$0xff] %vm408, %v1884
      %1900 = vst.msk [vmem:[#allocation2 + $0xb8] sm:$0x3f] %vm1015, %v1883
      %v1901 = vld [vmem:[#allocation2] sm:$0xff]
      %v1902 = vld [vmem:[#allocation2 + $0x8] sm:$0xff]
      %v1903 = vld [vmem:[#allocation2 + $0x10] sm:$0xff]
      %v1904 = vld [vmem:[#allocation2 + $0x18] sm:$0xff]
      %v1905 = vld [vmem:[#allocation2 + $0x20] sm:$0xff]
      %v1906 = vld [vmem:[#allocation2 + $0x28] sm:$0xff]
      %v1907 = vld [vmem:[#allocation2 + $0x30] sm:$0xff]
      %v1908 = vld [vmem:[#allocation2 + $0x38] sm:$0xff]
      %v1909 = vld [vmem:[#allocation2 + $0x40] sm:$0xff]
      %v1910 = vld [vmem:[#allocation2 + $0x48] sm:$0xff]
      %v1911 = vld [vmem:[#allocation2 + $0x50] sm:$0xff]
      %v1912 = vld [vmem:[#allocation2 + $0x58] sm:$0xff]
      %v1913 = vld [vmem:[#allocation2 + $0x60] sm:$0xff]
      %v1914 = vld [vmem:[#allocation2 + $0x68] sm:$0xff]
      %v1915 = vld [vmem:[#allocation2 + $0x70] sm:$0xff]
      %v1916 = vld [vmem:[#allocation2 + $0x78] sm:$0xff]
      %v1917 = vld [vmem:[#allocation2 + $0x80] sm:$0xff]
      %v1918 = vld [vmem:[#allocation2 + $0x88] sm:$0xff]
      %v1919 = vld [vmem:[#allocation2 + $0x90] sm:$0xff]
      %v1920 = vld [vmem:[#allocation2 + $0x98] sm:$0xff]
      %v1921 = vld [vmem:[#allocation2 + $0xa0] sm:$0xff]
      %v1922 = vld [vmem:[#allocation2 + $0xa8] sm:$0xff]
      %v1923 = vld [vmem:[#allocation2 + $0xb0] sm:$0xff]
      %v1924 = vld [vmem:[#allocation2 + $0xb8] sm:$0xff]
      %v1925 = vld [vmem:[#allocation2 + $0xc0] sm:$0xff]
      %v1926 = vld [vmem:[#allocation2 + $0xc8] sm:$0xff]
      %v1927 = vld [vmem:[#allocation2 + $0xd0] sm:$0xff]
      %v1928 = vpack.c.bf16 %v1904, %v1901
      %v1929 = vpack.c.bf16 %v1905, %v1902
      %v1930 = vpack.c.bf16 %v1906, %v1903
      %v1931 = vpack.c.bf16 %v1910, %v1907
      %v1932 = vpack.c.bf16 %v1911, %v1908
      %v1933 = vpack.c.bf16 %v1912, %v1909
      %v1934 = vpack.c.bf16 %v1916, %v1913
      %v1935 = vpack.c.bf16 %v1917, %v1914
      %v1936 = vpack.c.bf16 %v1918, %v1915
      %v1937 = vpack.c.bf16 %v1922, %v1919
      %v1938 = vpack.c.bf16 %v1923, %v1920
      %v1939 = vpack.c.bf16 %v1924, %v1921
      %v1940 = vpack.c.bf16 %v1925, %v1925
      %v1941 = vpack.c.bf16 %v1926, %v1926
      %v1942 = vpack.c.bf16 %v1927, %v1927
      %s1943 = scalar_lea.vmem %s7, 144
      %v1944 = vld [vmem:[%s1943] sm:$0xf]
      %v1945 = vld [vmem:[%s1943 + $0x4] sm:$0xf]
      %v1946 = vld [vmem:[%s1943 + $0x8] sm:$0xf]
      %v1947 = vld [vmem:[%s1943 + $0xc] sm:$0xf]
      %v1948 = vld [vmem:[%s1943 + $0x10] sm:$0xf]
      %v1949 = vld [vmem:[%s1943 + $0x14] sm:$0xf]
      %v1950 = vld [vmem:[%s1943 + $0x18] sm:$0xf]
      %v1951 = vld [vmem:[%s1943 + $0x1c] sm:$0xf]
      %v1952 = vld [vmem:[%s1943 + $0x20] sm:$0xf]
      %v1953 = vld [vmem:[%s1943 + $0x24] sm:$0xf]
      %v1954 = vld [vmem:[%s1943 + $0x28] sm:$0xf]
      %v1955 = vld [vmem:[%s1943 + $0x2c] sm:$0xf]
      %v1956 = vld [vmem:[%s1943 + $0x30] sm:$0xf]
      %v1957 = vld [vmem:[%s1943 + $0x34] sm:$0xf]
      %v1958 = vld [vmem:[%s1943 + $0x38] sm:$0xf]
      %v1959 = vld [vmem:[%s1943 + $0x3c] sm:$0xf]
      %v1960 = vld [vmem:[%s1943 + $0x40] sm:$0xf]
      %v1961 = vld [vmem:[%s1943 + $0x44] sm:$0xf]
      %v1962 = vld [vmem:[%s1943 + $0x48] sm:$0xf]
      %v1963 = vld [vmem:[%s1943 + $0x4c] sm:$0xf]
      %v1964 = vld [vmem:[%s1943 + $0x50] sm:$0xf]
      %v1965 = vld [vmem:[%s1943 + $0x54] sm:$0xf]
      %v1966 = vld [vmem:[%s1943 + $0x58] sm:$0xf]
      %v1967 = vld [vmem:[%s1943 + $0x5c] sm:$0xf]
      %v1968 = vld [vmem:[%s1943 + $0x60] sm:$0xf]
      %v1969 = vld [vmem:[%s1943 + $0x64] sm:$0xf]
      %v1970 = vld [vmem:[%s1943 + $0x68] sm:$0xf]
      %v1971 = vld [vmem:[%s1943 + $0x6c] sm:$0xf]
      %v1972 = vld [vmem:[%s1943 + $0x70] sm:$0xf]
      %v1973 = vld [vmem:[%s1943 + $0x74] sm:$0xf]
      %v1974 = vld [vmem:[%s1943 + $0x78] sm:$0xf]
      %v1975 = vld [vmem:[%s1943 + $0x7c] sm:$0xf]
      %v1976 = vld [vmem:[%s1943 + $0x80] sm:$0xf]
      %v1977 = vld [vmem:[%s1943 + $0x84] sm:$0xf]
      %v1978 = vld [vmem:[%s1943 + $0x88] sm:$0xf]
      %v1979 = vld [vmem:[%s1943 + $0x8c] sm:$0xf]
      %v2016 = vunpack.c.l.b16 %v1944
      %v2017 = vunpack.c.l.b16 %v1945
      %v2018 = vunpack.c.l.b16 %v1946
      %v2019 = vunpack.c.l.b16 %v1947
      %v2020 = vunpack.c.l.b16 %v1948
      %v2021 = vunpack.c.l.b16 %v1949
      %v2022 = vunpack.c.l.b16 %v1950
      %v2023 = vunpack.c.l.b16 %v1951
      %v2024 = vunpack.c.l.b16 %v1952
      %v2025 = vunpack.c.l.b16 %v1953
      %v2026 = vunpack.c.l.b16 %v1954
      %v2027 = vunpack.c.l.b16 %v1955
      %v2028 = vunpack.c.l.b16 %v1956
      %v2029 = vunpack.c.l.b16 %v1957
      %v2030 = vunpack.c.l.b16 %v1958
      %v2031 = vunpack.c.l.b16 %v1959
      %v2032 = vunpack.c.l.b16 %v1960
      %v2033 = vunpack.c.l.b16 %v1961
      %v2034 = vunpack.c.l.b16 %v1962
      %v2035 = vunpack.c.l.b16 %v1963
      %v2036 = vunpack.c.l.b16 %v1964
      %v2037 = vunpack.c.l.b16 %v1965
      %v2038 = vunpack.c.l.b16 %v1966
      %v2039 = vunpack.c.l.b16 %v1967
      %v2040 = vunpack.c.l.b16 %v1968
      %v2041 = vunpack.c.l.b16 %v1969
      %v2042 = vunpack.c.l.b16 %v1970
      %v2043 = vunpack.c.l.b16 %v1971
      %v2044 = vunpack.c.l.b16 %v1972
      %v2045 = vunpack.c.l.b16 %v1973
      %v2046 = vunpack.c.l.b16 %v1974
      %v2047 = vunpack.c.l.b16 %v1975
      %v2048 = vunpack.c.l.b16 %v1976
      %v2049 = vunpack.c.l.b16 %v1977
      %v2050 = vunpack.c.l.b16 %v1978
      %v2051 = vunpack.c.l.b16 %v1979
      %v2052 = vpack.c.b16 %v2017, %v2016
      %v2053 = vpack.c.b16 %v2019, %v2018
      %v2054 = vpack.c.b16 %v2021, %v2020
      %v2055 = vpack.c.b16 %v2023, %v2022
      %v2056 = vpack.c.b16 %v2025, %v2024
      %v2057 = vpack.c.b16 %v2027, %v2026
      %v2058 = vpack.c.b16 %v2029, %v2028
      %v2059 = vpack.c.b16 %v2031, %v2030
      %v2060 = vpack.c.b16 %v2033, %v2032
      %v2061 = vpack.c.b16 %v2035, %v2034
      %v2062 = vpack.c.b16 %v2037, %v2036
      %v2063 = vpack.c.b16 %v2039, %v2038
      %v2064 = vpack.c.b16 %v2041, %v2040
      %v2065 = vpack.c.b16 %v2043, %v2042
      %v2066 = vpack.c.b16 %v2045, %v2044
      %v2067 = vpack.c.b16 %v2047, %v2046
      %v2068 = vpack.c.b16 %v2049, %v2048
      %v2069 = vpack.c.b16 %v2051, %v2050
      %v2089 = vsel %vm408, %v1930, 0
      %v2092 = vsel %vm408, %v1933, 0
      %v2095 = vsel %vm408, %v1936, 0
      %v2098 = vsel %vm408, %v1939, 0
      %v2101 = vsel %vm408, %v1942, 0
      %2103 = vmatprep.subr.bf16.mxu0 0
      %2104 = vmatpush1.bf16.msra.mxu0 %v2059
      %2105 = vmatprep.subr.bf16.mxu0 0
      %2106 = vmatpush1.bf16.msra.mxu0 %v2058
      %2107 = vmatprep.subr.bf16.mxu0 0
      %2108 = vmatpush1.bf16.msra.mxu0 %v2057
      %2109 = vmatprep.subr.bf16.mxu0 0
      %2110 = vmatpush1.bf16.msra.mxu0 %v2056
      %2111 = vmatprep.subr.bf16.mxu0 0
      %2112 = vmatpush1.bf16.msra.mxu0 %v2055
      %2113 = vmatprep.subr.bf16.mxu0 0
      %2114 = vmatpush1.bf16.msra.mxu0 %v2054
      %2115 = vmatprep.subr.bf16.mxu0 0
      %2116 = vmatpush1.bf16.msra.mxu0 %v2053
      %2117 = vmatprep.subr.bf16.mxu0 0
      %2118 = vmatpush1.bf16.msra.mxu0 %v2052
      %2119 = vmatprep.subr.bf16.mxu0 0
      %2120 = vmatpush2.bf16.msra.mxu0 %v2067
      %2121 = vmatprep.subr.bf16.mxu0 0
      %2122 = vmatpush2.bf16.msra.mxu0 %v2066
      %2123 = vmatprep.subr.bf16.mxu0 0
      %2124 = vmatpush2.bf16.msra.mxu0 %v2065
      %2125 = vmatprep.subr.bf16.mxu0 0
      %2126 = vmatpush2.bf16.msra.mxu0 %v2064
      %2127 = vmatprep.subr.bf16.mxu0 0
      %2128 = vmatpush2.bf16.msra.mxu0 %v2063
      %2129 = vmatprep.subr.bf16.mxu0 0
      %2130 = vmatpush2.bf16.msra.mxu0 %v2062
      %2131 = vmatprep.subr.bf16.mxu0 0
      %2132 = vmatpush2.bf16.msra.mxu0 %v2061
      %2133 = vmatprep.subr.bf16.mxu0 0
      %2134 = vmatpush2.bf16.msra.mxu0 %v2060
      %2135 = vmatprep.mubr.bf16.mxu0 %v1929
      %2136 = vmatmul.mubr.bf16.gmra.mxu0 %v1928
      %v2137 = vpop.f32.mrf.mxu0
      %v2138 = vadd.f32 0.0, %v2137
      %v2139 = vpop.f32.mrf.mxu0
      %v2140 = vpop.f32.mrf.mxu0
      %v2141 = vadd.f32 0.0, %v2140
      %v2142 = vpop.f32.mrf.mxu0
      %2143 = vmatprep.mubr.bf16.mxu0 %v1932
      %2144 = vmatmul.mubr.bf16.gmra.mxu0 %v1931
      %v2145 = vpop.f32.mrf.mxu0
      %v2146 = vadd.f32 0.0, %v2145
      %v2147 = vpop.f32.mrf.mxu0
      %v2148 = vpop.f32.mrf.mxu0
      %v2149 = vadd.f32 0.0, %v2148
      %v2150 = vpop.f32.mrf.mxu0
      %2151 = vmatprep.mubr.bf16.mxu0 %v1935
      %2152 = vmatmul.mubr.bf16.gmra.mxu0 %v1934
      %v2153 = vpop.f32.mrf.mxu0
      %v2154 = vadd.f32 0.0, %v2153
      %v2155 = vpop.f32.mrf.mxu0
      %v2156 = vpop.f32.mrf.mxu0
      %v2157 = vadd.f32 0.0, %v2156
      %v2158 = vpop.f32.mrf.mxu0
      %2159 = vmatprep.mubr.bf16.mxu0 %v1938
      %2160 = vmatmul.mubr.bf16.gmra.mxu0 %v1937
      %v2161 = vpop.f32.mrf.mxu0
      %v2162 = vadd.f32 0.0, %v2161
      %v2163 = vpop.f32.mrf.mxu0
      %v2164 = vpop.f32.mrf.mxu0
      %v2165 = vadd.f32 0.0, %v2164
      %v2166 = vpop.f32.mrf.mxu0
      %2167 = vmatprep.mubr.bf16.mxu0 %v1941
      %2168 = vmatmul.mubr.bf16.gmra.mxu0 %v1940
      %v2169 = vpop.f32.mrf.mxu0
      %v2170 = vadd.f32 0.0, %v2169
      %v2171 = vpop.f32.mrf.mxu0
      %v2172 = vpop.f32.mrf.mxu0
      %v2173 = vpop.f32.mrf.mxu0
      %2174 = vdwg.mxu0
      %2175 = vmatprep.subr.bf16.mxu0 0
      %2176 = vmatpush1.bf16.msra.mxu0 0
      %2177 = vmatprep.subr.bf16.mxu0 0
      %2178 = vmatpush1.bf16.msra.mxu0 0
      %2179 = vmatprep.subr.bf16.mxu0 0
      %2180 = vmatpush1.bf16.msra.mxu0 0
      %2181 = vmatprep.subr.bf16.mxu0 0
      %2182 = vmatpush1.bf16.msra.mxu0 0
      %2183 = vmatprep.subr.bf16.mxu0 0
      %2184 = vmatpush1.bf16.msra.mxu0 0
      %2185 = vmatprep.subr.bf16.mxu0 0
      %2186 = vmatpush1.bf16.msra.mxu0 0
      %2187 = vmatprep.subr.bf16.mxu0 0
      %2188 = vmatpush1.bf16.msra.mxu0 %v2069
      %2189 = vmatprep.subr.bf16.mxu0 0
      %2190 = vmatpush1.bf16.msra.mxu0 %v2068
      %2191 = vmatprep.subr.bf16.mxu0 0
      %2192 = vmatpush2.bf16.msra.mxu0 0
      %2193 = vmatprep.subr.bf16.mxu0 0
      %2194 = vmatpush2.bf16.msra.mxu0 0
      %2195 = vmatprep.subr.bf16.mxu0 0
      %2196 = vmatpush2.bf16.msra.mxu0 0
      %2197 = vmatprep.subr.bf16.mxu0 0
      %2198 = vmatpush2.bf16.msra.mxu0 0
      %2199 = vmatprep.subr.bf16.mxu0 0
      %2200 = vmatpush2.bf16.msra.mxu0 0
      %2201 = vmatprep.subr.bf16.mxu0 0
      %2202 = vmatpush2.bf16.msra.mxu0 0
      %2203 = vmatprep.subr.bf16.mxu0 0
      %2204 = vmatpush2.bf16.msra.mxu0 0
      %2205 = vmatprep.subr.bf16.mxu0 0
      %2206 = vmatpush2.bf16.msra.mxu0 0
      %2207 = vmatprep.mubr.bf16.mxu0 0
      %2208 = vmatmul.mubr.bf16.gmra.mxu0 %v2089
      %v2209 = vpop.f32.mrf.mxu0
      %v2210 = vadd.f32 %v2138, %v2209
      %v2211 = vpop.f32.mrf.mxu0
      %v2212 = vpop.f32.mrf.mxu0
      %v2213 = vadd.f32 %v2141, %v2212
      %v2214 = vpop.f32.mrf.mxu0
      %2215 = vmatprep.mubr.bf16.mxu0 0
      %2216 = vmatmul.mubr.bf16.gmra.mxu0 %v2092
      %v2217 = vpop.f32.mrf.mxu0
      %v2218 = vadd.f32 %v2146, %v2217
      %v2219 = vpop.f32.mrf.mxu0
      %v2220 = vpop.f32.mrf.mxu0
      %v2221 = vadd.f32 %v2149, %v2220
      %v2222 = vpop.f32.mrf.mxu0
      %2223 = vmatprep.mubr.bf16.mxu0 0
      %2224 = vmatmul.mubr.bf16.gmra.mxu0 %v2095
      %v2225 = vpop.f32.mrf.mxu0
      %v2226 = vadd.f32 %v2154, %v2225
      %v2227 = vpop.f32.mrf.mxu0
      %v2228 = vpop.f32.mrf.mxu0
      %v2229 = vadd.f32 %v2157, %v2228
      %v2230 = vpop.f32.mrf.mxu0
      %2231 = vmatprep.mubr.bf16.mxu0 0
      %2232 = vmatmul.mubr.bf16.gmra.mxu0 %v2098
      %v2233 = vpop.f32.mrf.mxu0
      %v2234 = vadd.f32 %v2162, %v2233
      %v2235 = vpop.f32.mrf.mxu0
      %v2236 = vpop.f32.mrf.mxu0
      %v2237 = vadd.f32 %v2165, %v2236
      %v2238 = vpop.f32.mrf.mxu0
      %2239 = vmatprep.mubr.bf16.mxu0 0
      %2240 = vmatmul.mubr.bf16.gmra.mxu0 %v2101
      %v2241 = vpop.f32.mrf.mxu0
      %v2242 = vadd.f32 %v2170, %v2241
      %v2243 = vpop.f32.mrf.mxu0
      %v2244 = vpop.f32.mrf.mxu0
      %v2245 = vpop.f32.mrf.mxu0
      %2246 = vdwg.mxu0
      %v2247 = vadd.f32 %v1362, %v2210
      %v2248 = vadd.f32 %v1363, %v2213
      %v2249 = vadd.f32 %v1364, %v2218
      %v2250 = vadd.f32 %v1365, %v2221
      %v2251 = vadd.f32 %v1366, %v2226
      %v2252 = vadd.f32 %v1367, %v2229
      %v2253 = vadd.f32 %v1368, %v2234
      %v2254 = vadd.f32 %v1369, %v2237
      %v2255 = vadd.f32 %v1370, %v2242
      %v2256 = vld [vmem:[%s8] sm:$0x1]
      %v2258 = vlaneseq
      %v2259 = vshrl.u32 %v2258, 7
      %v2260 = vsub.s32 0, %v2259
      %v2261 = vrot.slane %v2256, %v2260
      %v2263 = vmul.f32 %v2247, %v2261
      %v2264 = vmul.f32 %v2248, %v2261
      %v2265 = vmul.f32 %v2249, %v2261
      %v2266 = vmul.f32 %v2250, %v2261
      %v2267 = vmul.f32 %v2251, %v2261
      %v2268 = vmul.f32 %v2252, %v2261
      %v2269 = vmul.f32 %v2253, %v2261
      %v2270 = vmul.f32 %v2254, %v2261
      %v2271 = vmul.f32 %v2255, %v2261
      %v2272 = vld [vmem:[%s9] sm:$0x1]
      %v2274 = vlaneseq
      %v2275 = vshrl.u32 %v2274, 7
      %v2276 = vsub.s32 0, %v2275
      %v2277 = vrot.slane %v2272, %v2276
      %v2279 = vadd.f32 %v2263, %v2277
      %v2280 = vadd.f32 %v2264, %v2277
      %v2281 = vadd.f32 %v2265, %v2277
      %v2282 = vadd.f32 %v2266, %v2277
      %v2283 = vadd.f32 %v2267, %v2277
      %v2284 = vadd.f32 %v2268, %v2277
      %v2285 = vadd.f32 %v2269, %v2277
      %v2286 = vadd.f32 %v2270, %v2277
      %v2287 = vadd.f32 %v2271, %v2277
      %v2288 = vmax.f32 %v2279, 0.0
      %v2289 = vmax.f32 %v2280, 0.0
      %v2290 = vmax.f32 %v2281, 0.0
      %v2291 = vmax.f32 %v2282, 0.0
      %v2292 = vmax.f32 %v2283, 0.0
      %v2293 = vmax.f32 %v2284, 0.0
      %v2294 = vmax.f32 %v2285, 0.0
      %v2295 = vmax.f32 %v2286, 0.0
      %v2296 = vmax.f32 %v2287, 0.0
      %v2297 = vpack.c.bf16 %v2289, %v2288
      %v2298 = vpack.c.bf16 %v2291, %v2290
      %v2299 = vpack.c.bf16 %v2293, %v2292
      %v2300 = vpack.c.bf16 %v2295, %v2294
      %v2301 = vpack.c.bf16 %v2296, %v2296
      %v2302 = vld [vmem:[%s10] sm:$0xf]
      %v2303 = vld [vmem:[%s10 + $0x4] sm:$0xf]
      %v2304 = vld [vmem:[%s10 + $0x8] sm:$0xf]
      %v2305 = vld [vmem:[%s10 + $0xc] sm:$0xf]
      %v2306 = vld [vmem:[%s10 + $0x10] sm:$0xf]
      %v2307 = vld [vmem:[%s10 + $0x14] sm:$0xf]
      %v2308 = vld [vmem:[%s10 + $0x18] sm:$0xf]
      %v2309 = vld [vmem:[%s10 + $0x1c] sm:$0xf]
      %v2310 = vld [vmem:[%s10 + $0x20] sm:$0xf]
      %v2311 = vld [vmem:[%s10 + $0x24] sm:$0xf]
      %v2312 = vld [vmem:[%s10 + $0x28] sm:$0xf]
      %v2313 = vld [vmem:[%s10 + $0x2c] sm:$0xf]
      %v2314 = vld [vmem:[%s10 + $0x30] sm:$0xf]
      %v2315 = vld [vmem:[%s10 + $0x34] sm:$0xf]
      %v2316 = vld [vmem:[%s10 + $0x38] sm:$0xf]
      %v2317 = vld [vmem:[%s10 + $0x3c] sm:$0xf]
      %v2334 = vunpack.c.l.b16 %v2302
      %v2335 = vunpack.c.l.b16 %v2303
      %v2336 = vunpack.c.l.b16 %v2304
      %v2337 = vunpack.c.l.b16 %v2305
      %v2338 = vunpack.c.l.b16 %v2306
      %v2339 = vunpack.c.l.b16 %v2307
      %v2340 = vunpack.c.l.b16 %v2308
      %v2341 = vunpack.c.l.b16 %v2309
      %v2342 = vunpack.c.l.b16 %v2310
      %v2343 = vunpack.c.l.b16 %v2311
      %v2344 = vunpack.c.l.b16 %v2312
      %v2345 = vunpack.c.l.b16 %v2313
      %v2346 = vunpack.c.l.b16 %v2314
      %v2347 = vunpack.c.l.b16 %v2315
      %v2348 = vunpack.c.l.b16 %v2316
      %v2349 = vunpack.c.l.b16 %v2317
      %v2350 = vpack.c.b16 %v2335, %v2334
      %v2351 = vpack.c.b16 %v2337, %v2336
      %v2352 = vpack.c.b16 %v2339, %v2338
      %v2353 = vpack.c.b16 %v2341, %v2340
      %v2354 = vpack.c.b16 %v2343, %v2342
      %v2355 = vpack.c.b16 %v2345, %v2344
      %v2356 = vpack.c.b16 %v2347, %v2346
      %v2357 = vpack.c.b16 %v2349, %v2348
      %2366 = vmatprep.subr.bf16.mxu0 0
      %2367 = vmatpush1.bf16.msra.mxu0 %v2357
      %2368 = vmatprep.subr.bf16.mxu0 0
      %2369 = vmatpush1.bf16.msra.mxu0 %v2356
      %2370 = vmatprep.subr.bf16.mxu0 0
      %2371 = vmatpush1.bf16.msra.mxu0 %v2355
      %2372 = vmatprep.subr.bf16.mxu0 0
      %2373 = vmatpush1.bf16.msra.mxu0 %v2354
      %2374 = vmatprep.subr.bf16.mxu0 0
      %2375 = vmatpush1.bf16.msra.mxu0 %v2353
      %2376 = vmatprep.subr.bf16.mxu0 0
      %2377 = vmatpush1.bf16.msra.mxu0 %v2352
      %2378 = vmatprep.subr.bf16.mxu0 0
      %2379 = vmatpush1.bf16.msra.mxu0 %v2351
      %2380 = vmatprep.subr.bf16.mxu0 0
      %2381 = vmatpush1.bf16.msra.mxu0 %v2350
      %2382 = vmatprep.subr.bf16.mxu0 0
      %2383 = vmatpush2.bf16.msra.mxu0 0
      %2384 = vmatprep.subr.bf16.mxu0 0
      %2385 = vmatpush2.bf16.msra.mxu0 0
      %2386 = vmatprep.subr.bf16.mxu0 0
      %2387 = vmatpush2.bf16.msra.mxu0 0
      %2388 = vmatprep.subr.bf16.mxu0 0
      %2389 = vmatpush2.bf16.msra.mxu0 0
      %2390 = vmatprep.subr.bf16.mxu0 0
      %2391 = vmatpush2.bf16.msra.mxu0 0
      %2392 = vmatprep.subr.bf16.mxu0 0
      %2393 = vmatpush2.bf16.msra.mxu0 0
      %2394 = vmatprep.subr.bf16.mxu0 0
      %2395 = vmatpush2.bf16.msra.mxu0 0
      %2396 = vmatprep.subr.bf16.mxu0 0
      %2397 = vmatpush2.bf16.msra.mxu0 0
      %2398 = vmatprep.mubr.bf16.mxu0 0
      %2399 = vmatmul.mubr.bf16.gmra.mxu0 %v2297
      %v2400 = vpop.f32.mrf.mxu0
      %v2401 = vadd.f32 0.0, %v2400
      %v2402 = vpop.f32.mrf.mxu0
      %v2403 = vpop.f32.mrf.mxu0
      %v2404 = vadd.f32 0.0, %v2403
      %v2405 = vpop.f32.mrf.mxu0
      %2406 = vmatprep.mubr.bf16.mxu0 0
      %2407 = vmatmul.mubr.bf16.gmra.mxu0 %v2298
      %v2408 = vpop.f32.mrf.mxu0
      %v2409 = vadd.f32 0.0, %v2408
      %v2410 = vpop.f32.mrf.mxu0
      %v2411 = vpop.f32.mrf.mxu0
      %v2412 = vadd.f32 0.0, %v2411
      %v2413 = vpop.f32.mrf.mxu0
      %2414 = vmatprep.mubr.bf16.mxu0 0
      %2415 = vmatmul.mubr.bf16.gmra.mxu0 %v2299
      %v2416 = vpop.f32.mrf.mxu0
      %v2417 = vadd.f32 0.0, %v2416
      %v2418 = vpop.f32.mrf.mxu0
      %v2419 = vpop.f32.mrf.mxu0
      %v2420 = vadd.f32 0.0, %v2419
      %v2421 = vpop.f32.mrf.mxu0
      %2422 = vmatprep.mubr.bf16.mxu0 0
      %2423 = vmatmul.mubr.bf16.gmra.mxu0 %v2300
      %v2424 = vpop.f32.mrf.mxu0
      %v2425 = vadd.f32 0.0, %v2424
      %v2426 = vpop.f32.mrf.mxu0
      %v2427 = vpop.f32.mrf.mxu0
      %v2428 = vadd.f32 0.0, %v2427
      %v2429 = vpop.f32.mrf.mxu0
      %2430 = vmatprep.mubr.bf16.mxu0 0
      %2431 = vmatmul.mubr.bf16.gmra.mxu0 %v2301
      %v2432 = vpop.f32.mrf.mxu0
      %v2433 = vadd.f32 0.0, %v2432
      %v2434 = vpop.f32.mrf.mxu0
      %v2435 = vpop.f32.mrf.mxu0
      %v2436 = vpop.f32.mrf.mxu0
      %2437 = vdwg.mxu0
      %2438 = vst [vmem:[%s386] sm:$0xff] %v2401
      %2439 = vst [vmem:[%s386 + $0x8] sm:$0xff] %v2404
      %2440 = vst [vmem:[%s386 + $0x10] sm:$0xff] %v2409
      %2441 = vst [vmem:[%s386 + $0x18] sm:$0xff] %v2412
      %2442 = vst [vmem:[%s386 + $0x20] sm:$0xff] %v2417
      %2443 = vst [vmem:[%s386 + $0x28] sm:$0xff] %v2420
      %2444 = vst [vmem:[%s386 + $0x30] sm:$0xff] %v2425
      %2445 = vst [vmem:[%s386 + $0x38] sm:$0xff] %v2428
      %2446 = vst [vmem:[%s386 + $0x40] sm:$0xff] %v2433
      %p2447 = scmp.lt.s32.totalorder %s22, 1
      %s2448 = scalar_select %p2447, %s22, 1
      %s2449 = smul.addr %s2448, 9
      %s2450 = smul.addr %s2449, 8
      %s2451 = scalar_lea.vmem %s11, %s2450
      // Predicated region
      $region65: #{densenet_forward.6} parent=63 // pred_check
        %p2452 = pneg %p276
      $region66: #{densenet_forward.6} parent=63 // pred_check_branch
        %2454 = sbr.rel (%p2452) target = $region68
      $region67: #{densenet_forward.6} parent=63 // pred_region
        _
      $region68: #{densenet_forward.6} parent=63 // pred_fallthru
        _
    $region64: #{densenet_forward.6} parent=5 // pred_fallthru
      _
    %p2455 = scmp.le.s32.totalorder 2, %s17
    // Predicated region
    $region69: #{densenet_forward.6} parent=5 // pred_check
      %p2456 = pneg %p2455
    $region70: #{densenet_forward.6} parent=5 // pred_check_branch
      %2458 = sbr.rel (%p2456) target = $region72
    $region71: #{densenet_forward.6} parent=5 // pred_region
      %s2459 = ssub.s32 %s17, 2
      // Predicated region
      $region73: #{densenet_forward.6} parent=71 // pred_check
        %p2460 = pneg %p282
      $region74: #{densenet_forward.6} parent=71 // pred_check_branch
        %2462 = sbr.rel (%p2460) target = $region76
      $region75: #{densenet_forward.6} parent=71 // pred_region
        %p2463 = scmp.lt.s32.totalorder %s23, 1
        %s2464 = scalar_select %p2463, %s23, 1
        %s2465 = smul.addr %s2464, 9
        %s2466 = smul.addr %s2465, 8
        %s2467 = scalar_lea.vmem %s11, %s2466
      $region76: #{densenet_forward.6} parent=71 // pred_fallthru
        _
    $region72: #{densenet_forward.6} parent=5 // pred_fallthru
      _
  $region6: #{densenet_forward.6} parent=0 // loop_footer
    %s21 = sadd.s32 1, %s17
  $region7: #{densenet_forward.6} parent=0 // loop_footer_branch
    %16 = sbr.rel target = $region3
  $region8: #{densenet_forward.6} parent=0 // loop_exit
    _

// kernel: densenet_forward.8
$region0: #{densenet_forward.8}
  #allocation0 [shape = 'u32[]', space=smem, size = 0x4, offset = 0x4, fixed_abs, tag = 'smem constant byte address 0x4 - core index']
  #allocation1 [shape = 'u32[144,128]{1,0:T(1,128)}', space=vmem, size = 0x12000, scoped, tag = 'internal scratch']
  #allocation2 [shape = 'f32[6,288]{1,0:T(8,128)}', space=vmem, size = 0x3000, scoped, tag = 'scratch operand']
  %s0 = inlined_call_operand.vmem [shape: f32[2,6,128], index: 0, kind: input, shape index: {}]
  %s1 = inlined_call_operand.vmem [shape: f32[6,1], index: 1, kind: input, shape index: {}]
  %s2 = inlined_call_operand.vmem [shape: f32[2,1,128], index: 2, kind: input, shape index: {}]
  %s3 = inlined_call_operand.vmem [shape: f32[2,1,128], index: 3, kind: input, shape index: {}]
  %s4 = inlined_call_operand.vmem [shape: bf16[2,128,32], index: 4, kind: input, shape index: {}]
  %s5 = inlined_call_operand.vmem [shape: f32[2,1,32], index: 5, kind: input, shape index: {}]
  %s6 = inlined_call_operand.vmem [shape: f32[2,1,32], index: 6, kind: input, shape index: {}]
  %s7 = inlined_call_operand.vmem [shape: bf16[2,288,128], index: 7, kind: input, shape index: {}]
  %s8 = inlined_call_operand.vmem [shape: f32[1,128], index: 8, kind: input, shape index: {}]
  %s9 = inlined_call_operand.vmem [shape: f32[1,128], index: 9, kind: input, shape index: {}]
  %s10 = inlined_call_operand.vmem [shape: bf16[128,128], index: 10, kind: input, shape index: {}]
  %s11 = inlined_call_operand.vmem [shape: f32[2,6,128], index: 11, kind: output, shape index: {}]
  %s12 = sld [smem:[#allocation0]]
  $region77: #{densenet_forward.8} parent=0
    _
  %s14 = ssub.s32 1, %s12
  %s15 = scalar_select 0, %s14, %s12
  loop: start=0, step=1, limit=4
  $region2: #{densenet_forward.8} parent=0 // loop_pre_header
    _
  $region3: #{densenet_forward.8} parent=0 // loop_header
    %s17 = sphi 0, %s21
    %p18 = scmp.ge.s32.totalorder %s17, 4
    %s27 = sphi 0, %s29
    %s30 = sphi 0, %s27
    %s31 = sphi 0, %s30
    %s47 = sphi 0, %s31
    %s51 = sphi 0, %s51
    %s53 = sphi 0, %s51
    %s54 = sphi 0, %s53
    %s68 = sphi 0, %s54
    %s72 = sphi 0, %s72
    %s74 = sphi 0, %s72
    %s75 = sphi 0, %s74
    %s89 = sphi 0, %s75
    %s93 = sphi 0, %s93
    %s95 = sphi 0, %s93
    %s96 = sphi 0, %s95
    %s110 = sphi 0, %s96
    %s114 = sphi 0, %s114
    %s116 = sphi 0, %s114
    %s117 = sphi 0, %s116
    %s131 = sphi 0, %s117
    %s135 = sphi 0, %s135
    %s137 = sphi 0, %s135
    %s138 = sphi 0, %s137
    %s152 = sphi 0, %s138
    %s156 = sphi 0, %s156
    %s158 = sphi 0, %s156
    %s159 = sphi 0, %s158
    %s173 = sphi 0, %s159
    %s177 = sphi 0, %s177
    %s179 = sphi 0, %s177
    %s180 = sphi 0, %s179
    %s194 = sphi 0, %s180
    %s198 = sphi 0, %s198
    %s200 = sphi 0, %s198
    %s201 = sphi 0, %s200
    %s215 = sphi 0, %s201
    %s219 = sphi 0, %s219
    %s221 = sphi 0, %s219
    %s222 = sphi 0, %s221
    %s236 = sphi 0, %s222
    %s240 = sphi 0, %s240
    %s242 = sphi 0, %s240
    %s243 = sphi 0, %s242
    %s257 = sphi 0, %s243
    %s263 = sphi 0, %s265
    %s266 = sphi 0, %s263
    %s267 = sphi 0, %s266
    %s283 = sphi 0, %s267
  $region4: #{densenet_forward.8} parent=0 // loop_header_branch
    %20 = sbr.rel (%p18) target = $region8
  $region5: #{densenet_forward.8} parent=0 // loop_body
    %s22 = ssub.s32 %s17, 1
    %s23 = ssub.s32 %s17, 2
    %s24 = sadd.s32 %s17, 1
    %s25 = ssub.s32 %s17, %s24
    %p26 = scmp.eq.s32.totalorder %s25, 0
    %s28 = sadd.s32 %s27, 1
    %s29 = scalar_select %p26, %s27, %s28
    %p32 = pneg %p26
    %p33 = scmp.eq.s32.totalorder %s17, 1
    %p34 = por %p32, %p33
    %p35 = scmp.ne.s32.totalorder %s27, %s30
    %p36 = scmp.eq.s32.totalorder %s17, 0
    %p37 = por %p35, %p36
    %p38 = scmp.ne.s32.totalorder %s27, %s30
    %p39 = scmp.eq.s32.totalorder %s22, 1
    %p40 = por %p38, %p39
    %p41 = scmp.ne.s32.totalorder %s30, %s31
    %p42 = scmp.eq.s32.totalorder %s22, 0
    %p43 = por %p41, %p42
    %p44 = scmp.ne.s32.totalorder %s30, %s31
    %p45 = scmp.eq.s32.totalorder %s23, 1
    %p46 = por %p44, %p45
    %p48 = scmp.ne.s32.totalorder %s31, %s47
    %p49 = scmp.eq.s32.totalorder %s23, 0
    %p50 = por %p48, %p49
    %s52 = sadd.s32 %s51, 1
    %p55 = scmp.eq.s32.totalorder %s17, 1
    %p56 = scmp.ne.s32.totalorder %s51, %s53
    %p57 = scmp.eq.s32.totalorder %s17, 0
    %p58 = por %p56, %p57
    %p59 = scmp.ne.s32.totalorder %s51, %s53
    %p60 = scmp.eq.s32.totalorder %s22, 1
    %p61 = por %p59, %p60
    %p62 = scmp.ne.s32.totalorder %s53, %s54
    %p63 = scmp.eq.s32.totalorder %s22, 0
    %p64 = por %p62, %p63
    %p65 = scmp.ne.s32.totalorder %s53, %s54
    %p66 = scmp.eq.s32.totalorder %s23, 1
    %p67 = por %p65, %p66
    %p69 = scmp.ne.s32.totalorder %s54, %s68
    %p70 = scmp.eq.s32.totalorder %s23, 0
    %p71 = por %p69, %p70
    %s73 = sadd.s32 %s72, 1
    %p76 = scmp.eq.s32.totalorder %s17, 1
    %p77 = scmp.ne.s32.totalorder %s72, %s74
    %p78 = scmp.eq.s32.totalorder %s17, 0
    %p79 = por %p77, %p78
    %p80 = scmp.ne.s32.totalorder %s72, %s74
    %p81 = scmp.eq.s32.totalorder %s22, 1
    %p82 = por %p80, %p81
    %p83 = scmp.ne.s32.totalorder %s74, %s75
    %p84 = scmp.eq.s32.totalorder %s22, 0
    %p85 = por %p83, %p84
    %p86 = scmp.ne.s32.totalorder %s74, %s75
    %p87 = scmp.eq.s32.totalorder %s23, 1
    %p88 = por %p86, %p87
    %p90 = scmp.ne.s32.totalorder %s75, %s89
    %p91 = scmp.eq.s32.totalorder %s23, 0
    %p92 = por %p90, %p91
    %s94 = sadd.s32 %s93, 1
    %p97 = scmp.eq.s32.totalorder %s17, 1
    %p98 = scmp.ne.s32.totalorder %s93, %s95
    %p99 = scmp.eq.s32.totalorder %s17, 0
    %p100 = por %p98, %p99
    %p101 = scmp.ne.s32.totalorder %s93, %s95
    %p102 = scmp.eq.s32.totalorder %s22, 1
    %p103 = por %p101, %p102
    %p104 = scmp.ne.s32.totalorder %s95, %s96
    %p105 = scmp.eq.s32.totalorder %s22, 0
    %p106 = por %p104, %p105
    %p107 = scmp.ne.s32.totalorder %s95, %s96
    %p108 = scmp.eq.s32.totalorder %s23, 1
    %p109 = por %p107, %p108
    %p111 = scmp.ne.s32.totalorder %s96, %s110
    %p112 = scmp.eq.s32.totalorder %s23, 0
    %p113 = por %p111, %p112
    %s115 = sadd.s32 %s114, 1
    %p118 = scmp.eq.s32.totalorder %s17, 1
    %p119 = scmp.ne.s32.totalorder %s114, %s116
    %p120 = scmp.eq.s32.totalorder %s17, 0
    %p121 = por %p119, %p120
    %p122 = scmp.ne.s32.totalorder %s114, %s116
    %p123 = scmp.eq.s32.totalorder %s22, 1
    %p124 = por %p122, %p123
    %p125 = scmp.ne.s32.totalorder %s116, %s117
    %p126 = scmp.eq.s32.totalorder %s22, 0
    %p127 = por %p125, %p126
    %p128 = scmp.ne.s32.totalorder %s116, %s117
    %p129 = scmp.eq.s32.totalorder %s23, 1
    %p130 = por %p128, %p129
    %p132 = scmp.ne.s32.totalorder %s117, %s131
    %p133 = scmp.eq.s32.totalorder %s23, 0
    %p134 = por %p132, %p133
    %s136 = sadd.s32 %s135, 1
    %p139 = scmp.eq.s32.totalorder %s17, 1
    %p140 = scmp.ne.s32.totalorder %s135, %s137
    %p141 = scmp.eq.s32.totalorder %s17, 0
    %p142 = por %p140, %p141
    %p143 = scmp.ne.s32.totalorder %s135, %s137
    %p144 = scmp.eq.s32.totalorder %s22, 1
    %p145 = por %p143, %p144
    %p146 = scmp.ne.s32.totalorder %s137, %s138
    %p147 = scmp.eq.s32.totalorder %s22, 0
    %p148 = por %p146, %p147
    %p149 = scmp.ne.s32.totalorder %s137, %s138
    %p150 = scmp.eq.s32.totalorder %s23, 1
    %p151 = por %p149, %p150
    %p153 = scmp.ne.s32.totalorder %s138, %s152
    %p154 = scmp.eq.s32.totalorder %s23, 0
    %p155 = por %p153, %p154
    %s157 = sadd.s32 %s156, 1
    %p160 = scmp.eq.s32.totalorder %s17, 1
    %p161 = scmp.ne.s32.totalorder %s156, %s158
    %p162 = scmp.eq.s32.totalorder %s17, 0
    %p163 = por %p161, %p162
    %p164 = scmp.ne.s32.totalorder %s156, %s158
    %p165 = scmp.eq.s32.totalorder %s22, 1
    %p166 = por %p164, %p165
    %p167 = scmp.ne.s32.totalorder %s158, %s159
    %p168 = scmp.eq.s32.totalorder %s22, 0
    %p169 = por %p167, %p168
    %p170 = scmp.ne.s32.totalorder %s158, %s159
    %p171 = scmp.eq.s32.totalorder %s23, 1
    %p172 = por %p170, %p171
    %p174 = scmp.ne.s32.totalorder %s159, %s173
    %p175 = scmp.eq.s32.totalorder %s23, 0
    %p176 = por %p174, %p175
    %s178 = sadd.s32 %s177, 1
    %p181 = scmp.eq.s32.totalorder %s17, 1
    %p182 = scmp.ne.s32.totalorder %s177, %s179
    %p183 = scmp.eq.s32.totalorder %s17, 0
    %p184 = por %p182, %p183
    %p185 = scmp.ne.s32.totalorder %s177, %s179
    %p186 = scmp.eq.s32.totalorder %s22, 1
    %p187 = por %p185, %p186
    %p188 = scmp.ne.s32.totalorder %s179, %s180
    %p189 = scmp.eq.s32.totalorder %s22, 0
    %p190 = por %p188, %p189
    %p191 = scmp.ne.s32.totalorder %s179, %s180
    %p192 = scmp.eq.s32.totalorder %s23, 1
    %p193 = por %p191, %p192
    %p195 = scmp.ne.s32.totalorder %s180, %s194
    %p196 = scmp.eq.s32.totalorder %s23, 0
    %p197 = por %p195, %p196
    %s199 = sadd.s32 %s198, 1
    %p202 = scmp.eq.s32.totalorder %s17, 1
    %p203 = scmp.ne.s32.totalorder %s198, %s200
    %p204 = scmp.eq.s32.totalorder %s17, 0
    %p205 = por %p203, %p204
    %p206 = scmp.ne.s32.totalorder %s198, %s200
    %p207 = scmp.eq.s32.totalorder %s22, 1
    %p208 = por %p206, %p207
    %p209 = scmp.ne.s32.totalorder %s200, %s201
    %p210 = scmp.eq.s32.totalorder %s22, 0
    %p211 = por %p209, %p210
    %p212 = scmp.ne.s32.totalorder %s200, %s201
    %p213 = scmp.eq.s32.totalorder %s23, 1
    %p214 = por %p212, %p213
    %p216 = scmp.ne.s32.totalorder %s201, %s215
    %p217 = scmp.eq.s32.totalorder %s23, 0
    %p218 = por %p216, %p217
    %s220 = sadd.s32 %s219, 1
    %p223 = scmp.eq.s32.totalorder %s17, 1
    %p224 = scmp.ne.s32.totalorder %s219, %s221
    %p225 = scmp.eq.s32.totalorder %s17, 0
    %p226 = por %p224, %p225
    %p227 = scmp.ne.s32.totalorder %s219, %s221
    %p228 = scmp.eq.s32.totalorder %s22, 1
    %p229 = por %p227, %p228
    %p230 = scmp.ne.s32.totalorder %s221, %s222
    %p231 = scmp.eq.s32.totalorder %s22, 0
    %p232 = por %p230, %p231
    %p233 = scmp.ne.s32.totalorder %s221, %s222
    %p234 = scmp.eq.s32.totalorder %s23, 1
    %p235 = por %p233, %p234
    %p237 = scmp.ne.s32.totalorder %s222, %s236
    %p238 = scmp.eq.s32.totalorder %s23, 0
    %p239 = por %p237, %p238
    %s241 = sadd.s32 %s240, 1
    %p244 = scmp.eq.s32.totalorder %s17, 1
    %p245 = scmp.ne.s32.totalorder %s240, %s242
    %p246 = scmp.eq.s32.totalorder %s17, 0
    %p247 = por %p245, %p246
    %p248 = scmp.ne.s32.totalorder %s240, %s242
    %p249 = scmp.eq.s32.totalorder %s22, 1
    %p250 = por %p248, %p249
    %p251 = scmp.ne.s32.totalorder %s242, %s243
    %p252 = scmp.eq.s32.totalorder %s22, 0
    %p253 = por %p251, %p252
    %p254 = scmp.ne.s32.totalorder %s242, %s243
    %p255 = scmp.eq.s32.totalorder %s23, 1
    %p256 = por %p254, %p255
    %p258 = scmp.ne.s32.totalorder %s243, %s257
    %p259 = scmp.eq.s32.totalorder %s23, 0
    %p260 = por %p258, %p259
    %s261 = ssub.s32 %s17, %s24
    %p262 = scmp.eq.s32.totalorder %s261, 0
    %s264 = sadd.s32 %s263, 1
    %s265 = scalar_select %p262, %s263, %s264
    %p268 = pneg %p262
    %p269 = scmp.eq.s32.totalorder %s17, 1
    %p270 = por %p268, %p269
    %p271 = scmp.ne.s32.totalorder %s263, %s266
    %p272 = scmp.eq.s32.totalorder %s17, 0
    %p273 = por %p271, %p272
    %p274 = scmp.ne.s32.totalorder %s263, %s266
    %p275 = scmp.eq.s32.totalorder %s22, 1
    %p276 = por %p274, %p275
    %p277 = scmp.ne.s32.totalorder %s266, %s267
    %p278 = scmp.eq.s32.totalorder %s22, 0
    %p279 = por %p277, %p278
    %p280 = scmp.ne.s32.totalorder %s266, %s267
    %p281 = scmp.eq.s32.totalorder %s23, 1
    %p282 = por %p280, %p281
    %p284 = scmp.ne.s32.totalorder %s267, %s283
    %p285 = scmp.eq.s32.totalorder %s23, 0
    %p286 = por %p284, %p285
    %p287 = scmp.le.s32.totalorder 1, %s17
    %p288 = scmp.lt.s32.totalorder %s17, 3
    %p289 = pnand %p287, %p288
    %p290 = pneg %p289
    // Predicated region
    $region9: #{densenet_forward.8} parent=5 // pred_check
      _
    $region10: #{densenet_forward.8} parent=5 // pred_check_branch
      %292 = sbr.rel (%p289) target = $region12
    $region11: #{densenet_forward.8} parent=5 // pred_region
      %s293 = ssub.s32 %s17, 1
      // Predicated region
      $region13: #{densenet_forward.8} parent=11 // pred_check
        %p294 = pneg %p64
      $region14: #{densenet_forward.8} parent=11 // pred_check_branch
        %296 = sbr.rel (%p294) target = $region16
      $region15: #{densenet_forward.8} parent=11 // pred_region
        _
      $region16: #{densenet_forward.8} parent=11 // pred_fallthru
        _
      // Predicated region
      $region17: #{densenet_forward.8} parent=11 // pred_check
        %p297 = pneg %p85
      $region18: #{densenet_forward.8} parent=11 // pred_check_branch
        %299 = sbr.rel (%p297) target = $region20
      $region19: #{densenet_forward.8} parent=11 // pred_region
        _
      $region20: #{densenet_forward.8} parent=11 // pred_fallthru
        _
      // Predicated region
      $region21: #{densenet_forward.8} parent=11 // pred_check
        %p300 = pneg %p106
      $region22: #{densenet_forward.8} parent=11 // pred_check_branch
        %302 = sbr.rel (%p300) target = $region24
      $region23: #{densenet_forward.8} parent=11 // pred_region
        _
      $region24: #{densenet_forward.8} parent=11 // pred_fallthru
        _
      // Predicated region
      $region25: #{densenet_forward.8} parent=11 // pred_check
        %p303 = pneg %p127
      $region26: #{densenet_forward.8} parent=11 // pred_check_branch
        %305 = sbr.rel (%p303) target = $region28
      $region27: #{densenet_forward.8} parent=11 // pred_region
        _
      $region28: #{densenet_forward.8} parent=11 // pred_fallthru
        _
      // Predicated region
      $region29: #{densenet_forward.8} parent=11 // pred_check
        %p306 = pneg %p148
      $region30: #{densenet_forward.8} parent=11 // pred_check_branch
        %308 = sbr.rel (%p306) target = $region32
      $region31: #{densenet_forward.8} parent=11 // pred_region
        _
      $region32: #{densenet_forward.8} parent=11 // pred_fallthru
        _
      // Predicated region
      $region33: #{densenet_forward.8} parent=11 // pred_check
        %p309 = pneg %p169
      $region34: #{densenet_forward.8} parent=11 // pred_check_branch
        %311 = sbr.rel (%p309) target = $region36
      $region35: #{densenet_forward.8} parent=11 // pred_region
        _
      $region36: #{densenet_forward.8} parent=11 // pred_fallthru
        _
      // Predicated region
      $region37: #{densenet_forward.8} parent=11 // pred_check
        %p312 = pneg %p190
      $region38: #{densenet_forward.8} parent=11 // pred_check_branch
        %314 = sbr.rel (%p312) target = $region40
      $region39: #{densenet_forward.8} parent=11 // pred_region
        _
      $region40: #{densenet_forward.8} parent=11 // pred_fallthru
        _
      // Predicated region
      $region41: #{densenet_forward.8} parent=11 // pred_check
        %p315 = pneg %p211
      $region42: #{densenet_forward.8} parent=11 // pred_check_branch
        %317 = sbr.rel (%p315) target = $region44
      $region43: #{densenet_forward.8} parent=11 // pred_region
        _
      $region44: #{densenet_forward.8} parent=11 // pred_fallthru
        _
      // Predicated region
      $region45: #{densenet_forward.8} parent=11 // pred_check
        %p318 = pneg %p232
      $region46: #{densenet_forward.8} parent=11 // pred_check_branch
        %320 = sbr.rel (%p318) target = $region48
      $region47: #{densenet_forward.8} parent=11 // pred_region
        _
      $region48: #{densenet_forward.8} parent=11 // pred_fallthru
        _
      // Predicated region
      $region49: #{densenet_forward.8} parent=11 // pred_check
        %p321 = pneg %p253
      $region50: #{densenet_forward.8} parent=11 // pred_check_branch
        %323 = sbr.rel (%p321) target = $region52
      $region51: #{densenet_forward.8} parent=11 // pred_region
        _
      $region52: #{densenet_forward.8} parent=11 // pred_fallthru
        _
    $region12: #{densenet_forward.8} parent=5 // pred_fallthru
      _
    %p324 = scmp.lt.s32.totalorder %s17, 2
    // Predicated region
    $region53: #{densenet_forward.8} parent=5 // pred_check
      %p325 = pneg %p324
    $region54: #{densenet_forward.8} parent=5 // pred_check_branch
      %327 = sbr.rel (%p325) target = $region56
    $region55: #{densenet_forward.8} parent=5 // pred_region
      // Predicated region
      $region57: #{densenet_forward.8} parent=55 // pred_check
        %p328 = pneg %p37
      $region58: #{densenet_forward.8} parent=55 // pred_check_branch
        %330 = sbr.rel (%p328) target = $region60
      $region59: #{densenet_forward.8} parent=55 // pred_region
        %p331 = scmp.lt.s32.totalorder %s17, 1
        %s332 = scalar_select %p331, %s17, 1
        %s333 = smul.addr %s332, 8
        %s334 = scalar_lea.vmem %s0, %s333
      $region60: #{densenet_forward.8} parent=55 // pred_fallthru
        _
    $region56: #{densenet_forward.8} parent=5 // pred_fallthru
      _
    %p335 = scmp.le.s32.totalorder 1, %s17
    %p336 = scmp.lt.s32.totalorder %s17, 3
    %p337 = pnand %p335, %p336
    %p338 = pneg %p337
    // Predicated region
    $region61: #{densenet_forward.8} parent=5 // pred_check
      _
    $region62: #{densenet_forward.8} parent=5 // pred_check_branch
      %340 = sbr.rel (%p337) target = $region64
    $region63: #{densenet_forward.8} parent=5 // pred_region
      %s341 = ssub.s32 %s17, 1
      %p342 = scmp.lt.s32.totalorder %s22, 1
      %s343 = scalar_select %p342, %s22, 1
      %s344 = smul.addr %s343, 8
      %s345 = scalar_lea.vmem %s0, %s344
      %p346 = pneg %p43
      %p347 = pneg %p40
      %p348 = pneg %p64
      %p349 = pneg %p61
      %p350 = pneg %p85
      %p351 = pneg %p82
      %p352 = pneg %p106
      %p353 = pneg %p103
      %p354 = pneg %p127
      %p355 = pneg %p124
      %p356 = pneg %p148
      %p357 = pneg %p145
      %p358 = pneg %p169
      %p359 = pneg %p166
      %p360 = pneg %p190
      %p361 = pneg %p187
      %p362 = pneg %p211
      %p363 = pneg %p208
      %p364 = pneg %p232
      %p365 = pneg %p229
      %p366 = pneg %p253
      %p367 = pneg %p250
      %p368 = pneg %p279
      %p369 = pneg %p276
      %p370 = scmp.lt.s32.totalorder %s22, 1
      %s371 = scalar_select %p370, %s22, 1
      %s372 = smul.addr %s371, 8
      %s373 = scalar_lea.vmem %s11, %s372
      %p374 = scmp.lt.s32.totalorder %s22, 1
      %s375 = scalar_select %p374, %s22, 1
      %s376 = smul.addr %s375, 8
      %s377 = scalar_lea.vmem %s0, %s376
      %p378 = scmp.lt.s32.totalorder %s22, 1
      %s379 = scalar_select %p378, %s22, 1
      %s380 = smul.addr %s379, 8
      %s381 = scalar_lea.vmem %s11, %s380
      %v383 = vld [vmem:[%s1] sm:$0x3f]
      %v384 = vld [vmem:[%s377] sm:$0x3f]
      %385 = vst [vmem:[#allocation2] sm:$0x3f] 0.0
      %386 = vst [vmem:[#allocation2 + $0x8] sm:$0x3f] 0.0
      %vm387 = vcmask 259072
      %388 = vst.msk [vmem:[#allocation2 + $0x10] sm:$0x3f] %vm387, 0.0
      %v389 = vld [vmem:[%s2] sm:$0x1]
      %v391 = vlaneseq
      %v392 = vshrl.u32 %v391, 7
      %v393 = vsub.s32 0, %v392
      %v394 = vrot.slane %v389, %v393
      %v396 = vmul.f32 %v384, %v394
      %v397 = vld [vmem:[%s3] sm:$0x1]
      %v399 = vlaneseq
      %v400 = vshrl.u32 %v399, 7
      %v401 = vsub.s32 0, %v400
      %v402 = vrot.slane %v397, %v401
      %v404 = vadd.f32 %v396, %v402
      %v405 = vmax.f32 %v404, 0.0
      %v406 = vpack.c.bf16 %v405, %v405
      %v407 = vld [vmem:[%s4] sm:$0xf]
      %v408 = vld [vmem:[%s4 + $0x4] sm:$0xf]
      %v409 = vld [vmem:[%s4 + $0x8] sm:$0xf]
      %v410 = vld [vmem:[%s4 + $0xc] sm:$0xf]
      %v411 = vld [vmem:[%s4 + $0x10] sm:$0xf]
      %v412 = vld [vmem:[%s4 + $0x14] sm:$0xf]
      %v413 = vld [vmem:[%s4 + $0x18] sm:$0xf]
      %v414 = vld [vmem:[%s4 + $0x1c] sm:$0xf]
      %v415 = vld [vmem:[%s4 + $0x20] sm:$0xf]
      %v416 = vld [vmem:[%s4 + $0x24] sm:$0xf]
      %v417 = vld [vmem:[%s4 + $0x28] sm:$0xf]
      %v418 = vld [vmem:[%s4 + $0x2c] sm:$0xf]
      %v419 = vld [vmem:[%s4 + $0x30] sm:$0xf]
      %v420 = vld [vmem:[%s4 + $0x34] sm:$0xf]
      %v421 = vld [vmem:[%s4 + $0x38] sm:$0xf]
      %v422 = vld [vmem:[%s4 + $0x3c] sm:$0xf]
      %v439 = vunpack.c.l.b16 %v407
      %v440 = vunpack.c.l.b16 %v408
      %v441 = vunpack.c.l.b16 %v409
      %v442 = vunpack.c.l.b16 %v410
      %v443 = vunpack.c.l.b16 %v411
      %v444 = vunpack.c.l.b16 %v412
      %v445 = vunpack.c.l.b16 %v413
      %v446 = vunpack.c.l.b16 %v414
      %v447 = vunpack.c.l.b16 %v415
      %v448 = vunpack.c.l.b16 %v416
      %v449 = vunpack.c.l.b16 %v417
      %v450 = vunpack.c.l.b16 %v418
      %v451 = vunpack.c.l.b16 %v419
      %v452 = vunpack.c.l.b16 %v420
      %v453 = vunpack.c.l.b16 %v421
      %v454 = vunpack.c.l.b16 %v422
      %v455 = vpack.c.b16 %v440, %v439
      %v456 = vpack.c.b16 %v442, %v441
      %v457 = vpack.c.b16 %v444, %v443
      %v458 = vpack.c.b16 %v446, %v445
      %v459 = vpack.c.b16 %v448, %v447
      %v460 = vpack.c.b16 %v450, %v449
      %v461 = vpack.c.b16 %v452, %v451
      %v462 = vpack.c.b16 %v454, %v453
      %471 = vmatprep.subr.bf16.mxu0 0
      %472 = vmatpush1.bf16.msra.mxu0 %v462
      %473 = vmatprep.subr.bf16.mxu0 0
      %474 = vmatpush1.bf16.msra.mxu0 %v461
      %475 = vmatprep.subr.bf16.mxu0 0
      %476 = vmatpush1.bf16.msra.mxu0 %v460
      %477 = vmatprep.subr.bf16.mxu0 0
      %478 = vmatpush1.bf16.msra.mxu0 %v459
      %479 = vmatprep.subr.bf16.mxu0 0
      %480 = vmatpush1.bf16.msra.mxu0 %v458
      %481 = vmatprep.subr.bf16.mxu0 0
      %482 = vmatpush1.bf16.msra.mxu0 %v457
      %483 = vmatprep.subr.bf16.mxu0 0
      %484 = vmatpush1.bf16.msra.mxu0 %v456
      %485 = vmatprep.subr.bf16.mxu0 0
      %486 = vmatpush1.bf16.msra.mxu0 %v455
      %487 = vmatprep.subr.bf16.mxu0 0
      %488 = vmatpush2.bf16.msra.mxu0 0
      %489 = vmatprep.subr.bf16.mxu0 0
      %490 = vmatpush2.bf16.msra.mxu0 0
      %491 = vmatprep.subr.bf16.mxu0 0
      %492 = vmatpush2.bf16.msra.mxu0 0
      %493 = vmatprep.subr.bf16.mxu0 0
      %494 = vmatpush2.bf16.msra.mxu0 0
      %495 = vmatprep.subr.bf16.mxu0 0
      %496 = vmatpush2.bf16.msra.mxu0 0
      %497 = vmatprep.subr.bf16.mxu0 0
      %498 = vmatpush2.bf16.msra.mxu0 0
      %499 = vmatprep.subr.bf16.mxu0 0
      %500 = vmatpush2.bf16.msra.mxu0 0
      %501 = vmatprep.subr.bf16.mxu0 0
      %502 = vmatpush2.bf16.msra.mxu0 0
      %503 = vmatprep.mubr.bf16.mxu0 0
      %504 = vmatmul.mubr.bf16.gmra.mxu0 %v406
      %v505 = vpop.f32.mrf.mxu0
      %v506 = vadd.f32 0.0, %v505
      %v507 = vpop.f32.mrf.mxu0
      %v508 = vpop.f32.mrf.mxu0
      %v509 = vpop.f32.mrf.mxu0
      %510 = vdwg.mxu0
      %v511 = vld [vmem:[%s5] sm:$0x1]
      %v513 = vlaneseq
      %v514 = vshrl.u32 %v513, 7
      %v515 = vsub.s32 0, %v514
      %v516 = vrot.slane %v511, %v515
      %v518 = vmul.f32 %v506, %v516
      %v519 = vld [vmem:[%s6] sm:$0x1]
      %v521 = vlaneseq
      %v522 = vshrl.u32 %v521, 7
      %v523 = vsub.s32 0, %v522
      %v524 = vrot.slane %v519, %v523
      %v526 = vadd.f32 %v518, %v524
      %v527 = vmax.f32 %v526, 0.0
      %529 = vset.pattern.permute.xlu0 0
      %530 = vperm.xlu0 %529, %v383
      %v531 = vpop.permute.xlu0 %530
      %v533 = vmul.f32 %v527, %v531
      %v535 = vrot.slane %v533, 4
      %vm537 = vcmask 259076
      %538 = vst.msk [vmem:[#allocation2] sm:$0x30] %vm537, %v535
      %v539 = vrot.slane %v533, 5
      %540 = vrot.lane.b32.xlu0 %v539, 32
      %v541 = vpop.permute.xlu0 %540
      %vm543 = vcmask 521475
      %544 = vst.msk [vmem:[#allocation2] sm:$0x38] %vm543, %v541
      %v545 = vrot.slane %v533, 6
      %546 = vrot.lane.b32.xlu0 %v545, 64
      %v547 = vpop.permute.xlu0 %546
      %vm549 = vcmask 783874
      %550 = vst.msk [vmem:[#allocation2] sm:$0x3c] %vm549, %v547
      %v551 = vrot.slane %v533, 7
      %552 = vrot.lane.b32.xlu0 %v551, 96
      %v553 = vpop.permute.xlu0 %552
      %vm555 = vcmask 1046273
      %556 = vst.msk [vmem:[#allocation2] sm:$0x3e] %vm555, %v553
      %557 = vst.msk [vmem:[#allocation2 + $0x8] sm:$0x3f] %vm387, %v533
      %v558 = vrot.slane %v533, 1
      %559 = vrot.lane.b32.xlu0 %v558, 32
      %v560 = vpop.permute.xlu0 %559
      %vm562 = vcmask 520448
      %563 = vst.msk [vmem:[#allocation2 + $0x8] sm:$0x1f] %vm562, %v560
      %v564 = vrot.slane %v533, 2
      %565 = vrot.lane.b32.xlu0 %v564, 64
      %v566 = vpop.permute.xlu0 %565
      %vm568 = vcmask 781824
      %569 = vst.msk [vmem:[#allocation2 + $0x8] sm:$0xf] %vm568, %v566
      %v570 = vrot.slane %v533, 3
      %571 = vrot.lane.b32.xlu0 %v570, 96
      %v572 = vpop.permute.xlu0 %571
      %vm574 = vcmask 1043200
      %575 = vst.msk [vmem:[#allocation2 + $0x8] sm:$0x7] %vm574, %v572
      %vm576 = vcmask 254976
      %577 = vst.msk [vmem:[#allocation2 + $0x10] sm:$0x3] %vm576, %v535
      %v578 = vld [vmem:[#allocation2] sm:$0x3f]
      %v579 = vld [vmem:[#allocation2 + $0x8] sm:$0x3f]
      %v580 = vld [vmem:[#allocation2 + $0x10] sm:$0x3f]
      %v581 = vpack.c.bf16 %v578, %v578
      %v582 = vpack.c.bf16 %v579, %v579
      %v583 = vpack.c.bf16 %v580, %v580
      %v584 = vld [vmem:[%s7] sm:$0xf]
      %v585 = vld [vmem:[%s7 + $0x4] sm:$0xf]
      %v586 = vld [vmem:[%s7 + $0x8] sm:$0xf]
      %v587 = vld [vmem:[%s7 + $0xc] sm:$0xf]
      %v588 = vld [vmem:[%s7 + $0x10] sm:$0xf]
      %v589 = vld [vmem:[%s7 + $0x14] sm:$0xf]
      %v590 = vld [vmem:[%s7 + $0x18] sm:$0xf]
      %v591 = vld [vmem:[%s7 + $0x1c] sm:$0xf]
      %v592 = vld [vmem:[%s7 + $0x20] sm:$0xf]
      %v593 = vld [vmem:[%s7 + $0x24] sm:$0xf]
      %v594 = vld [vmem:[%s7 + $0x28] sm:$0xf]
      %v595 = vld [vmem:[%s7 + $0x2c] sm:$0xf]
      %v596 = vld [vmem:[%s7 + $0x30] sm:$0xf]
      %v597 = vld [vmem:[%s7 + $0x34] sm:$0xf]
      %v598 = vld [vmem:[%s7 + $0x38] sm:$0xf]
      %v599 = vld [vmem:[%s7 + $0x3c] sm:$0xf]
      %v600 = vld [vmem:[%s7 + $0x40] sm:$0xf]
      %v601 = vld [vmem:[%s7 + $0x44] sm:$0xf]
      %v602 = vld [vmem:[%s7 + $0x48] sm:$0xf]
      %v603 = vld [vmem:[%s7 + $0x4c] sm:$0xf]
      %v604 = vld [vmem:[%s7 + $0x50] sm:$0xf]
      %v605 = vld [vmem:[%s7 + $0x54] sm:$0xf]
      %v606 = vld [vmem:[%s7 + $0x58] sm:$0xf]
      %v607 = vld [vmem:[%s7 + $0x5c] sm:$0xf]
      %v608 = vld [vmem:[%s7 + $0x60] sm:$0xf]
      %v609 = vld [vmem:[%s7 + $0x64] sm:$0xf]
      %v610 = vld [vmem:[%s7 + $0x68] sm:$0xf]
      %v611 = vld [vmem:[%s7 + $0x6c] sm:$0xf]
      %v612 = vld [vmem:[%s7 + $0x70] sm:$0xf]
      %v613 = vld [vmem:[%s7 + $0x74] sm:$0xf]
      %v614 = vld [vmem:[%s7 + $0x78] sm:$0xf]
      %v615 = vld [vmem:[%s7 + $0x7c] sm:$0xf]
      %v616 = vld [vmem:[%s7 + $0x80] sm:$0xf]
      %v617 = vld [vmem:[%s7 + $0x84] sm:$0xf]
      %v618 = vld [vmem:[%s7 + $0x88] sm:$0xf]
      %v619 = vld [vmem:[%s7 + $0x8c] sm:$0xf]
      %v656 = vunpack.c.l.b16 %v584
      %v657 = vunpack.c.l.b16 %v585
      %v658 = vunpack.c.l.b16 %v586
      %v659 = vunpack.c.l.b16 %v587
      %v660 = vunpack.c.l.b16 %v588
      %v661 = vunpack.c.l.b16 %v589
      %v662 = vunpack.c.l.b16 %v590
      %v663 = vunpack.c.l.b16 %v591
      %v664 = vunpack.c.l.b16 %v592
      %v665 = vunpack.c.l.b16 %v593
      %v666 = vunpack.c.l.b16 %v594
      %v667 = vunpack.c.l.b16 %v595
      %v668 = vunpack.c.l.b16 %v596
      %v669 = vunpack.c.l.b16 %v597
      %v670 = vunpack.c.l.b16 %v598
      %v671 = vunpack.c.l.b16 %v599
      %v672 = vunpack.c.l.b16 %v600
      %v673 = vunpack.c.l.b16 %v601
      %v674 = vunpack.c.l.b16 %v602
      %v675 = vunpack.c.l.b16 %v603
      %v676 = vunpack.c.l.b16 %v604
      %v677 = vunpack.c.l.b16 %v605
      %v678 = vunpack.c.l.b16 %v606
      %v679 = vunpack.c.l.b16 %v607
      %v680 = vunpack.c.l.b16 %v608
      %v681 = vunpack.c.l.b16 %v609
      %v682 = vunpack.c.l.b16 %v610
      %v683 = vunpack.c.l.b16 %v611
      %v684 = vunpack.c.l.b16 %v612
      %v685 = vunpack.c.l.b16 %v613
      %v686 = vunpack.c.l.b16 %v614
      %v687 = vunpack.c.l.b16 %v615
      %v688 = vunpack.c.l.b16 %v616
      %v689 = vunpack.c.l.b16 %v617
      %v690 = vunpack.c.l.b16 %v618
      %v691 = vunpack.c.l.b16 %v619
      %v692 = vpack.c.b16 %v657, %v656
      %v693 = vpack.c.b16 %v659, %v658
      %v694 = vpack.c.b16 %v661, %v660
      %v695 = vpack.c.b16 %v663, %v662
      %v696 = vpack.c.b16 %v665, %v664
      %v697 = vpack.c.b16 %v667, %v666
      %v698 = vpack.c.b16 %v669, %v668
      %v699 = vpack.c.b16 %v671, %v670
      %v700 = vpack.c.b16 %v673, %v672
      %v701 = vpack.c.b16 %v675, %v674
      %v702 = vpack.c.b16 %v677, %v676
      %v703 = vpack.c.b16 %v679, %v678
      %v704 = vpack.c.b16 %v681, %v680
      %v705 = vpack.c.b16 %v683, %v682
      %v706 = vpack.c.b16 %v685, %v684
      %v707 = vpack.c.b16 %v687, %v686
      %v708 = vpack.c.b16 %v689, %v688
      %v709 = vpack.c.b16 %v691, %v690
      %vm728 = vcmask 261120
      %v730 = vsel %vm728, %v583, 0
      %732 = vmatprep.subr.bf16.mxu0 0
      %733 = vmatpush1.bf16.msra.mxu0 %v699
      %734 = vmatprep.subr.bf16.mxu0 0
      %735 = vmatpush1.bf16.msra.mxu0 %v698
      %736 = vmatprep.subr.bf16.mxu0 0
      %737 = vmatpush1.bf16.msra.mxu0 %v697
      %738 = vmatprep.subr.bf16.mxu0 0
      %739 = vmatpush1.bf16.msra.mxu0 %v696
      %740 = vmatprep.subr.bf16.mxu0 0
      %741 = vmatpush1.bf16.msra.mxu0 %v695
      %742 = vmatprep.subr.bf16.mxu0 0
      %743 = vmatpush1.bf16.msra.mxu0 %v694
      %744 = vmatprep.subr.bf16.mxu0 0
      %745 = vmatpush1.bf16.msra.mxu0 %v693
      %746 = vmatprep.subr.bf16.mxu0 0
      %747 = vmatpush1.bf16.msra.mxu0 %v692
      %748 = vmatprep.subr.bf16.mxu0 0
      %749 = vmatpush2.bf16.msra.mxu0 %v707
      %750 = vmatprep.subr.bf16.mxu0 0
      %751 = vmatpush2.bf16.msra.mxu0 %v706
      %752 = vmatprep.subr.bf16.mxu0 0
      %753 = vmatpush2.bf16.msra.mxu0 %v705
      %754 = vmatprep.subr.bf16.mxu0 0
      %755 = vmatpush2.bf16.msra.mxu0 %v704
      %756 = vmatprep.subr.bf16.mxu0 0
      %757 = vmatpush2.bf16.msra.mxu0 %v703
      %758 = vmatprep.subr.bf16.mxu0 0
      %759 = vmatpush2.bf16.msra.mxu0 %v702
      %760 = vmatprep.subr.bf16.mxu0 0
      %761 = vmatpush2.bf16.msra.mxu0 %v701
      %762 = vmatprep.subr.bf16.mxu0 0
      %763 = vmatpush2.bf16.msra.mxu0 %v700
      %764 = vmatprep.mubr.bf16.mxu0 %v582
      %765 = vmatmul.mubr.bf16.gmra.mxu0 %v581
      %v766 = vpop.f32.mrf.mxu0
      %v767 = vadd.f32 0.0, %v766
      %v768 = vpop.f32.mrf.mxu0
      %v769 = vpop.f32.mrf.mxu0
      %v770 = vpop.f32.mrf.mxu0
      %771 = vdwg.mxu0
      %772 = vmatprep.subr.bf16.mxu0 0
      %773 = vmatpush1.bf16.msra.mxu0 0
      %774 = vmatprep.subr.bf16.mxu0 0
      %775 = vmatpush1.bf16.msra.mxu0 0
      %776 = vmatprep.subr.bf16.mxu0 0
      %777 = vmatpush1.bf16.msra.mxu0 0
      %778 = vmatprep.subr.bf16.mxu0 0
      %779 = vmatpush1.bf16.msra.mxu0 0
      %780 = vmatprep.subr.bf16.mxu0 0
      %781 = vmatpush1.bf16.msra.mxu0 0
      %782 = vmatprep.subr.bf16.mxu0 0
      %783 = vmatpush1.bf16.msra.mxu0 0
      %784 = vmatprep.subr.bf16.mxu0 0
      %785 = vmatpush1.bf16.msra.mxu0 %v709
      %786 = vmatprep.subr.bf16.mxu0 0
      %787 = vmatpush1.bf16.msra.mxu0 %v708
      %788 = vmatprep.subr.bf16.mxu0 0
      %789 = vmatpush2.bf16.msra.mxu0 0
      %790 = vmatprep.subr.bf16.mxu0 0
      %791 = vmatpush2.bf16.msra.mxu0 0
      %792 = vmatprep.subr.bf16.mxu0 0
      %793 = vmatpush2.bf16.msra.mxu0 0
      %794 = vmatprep.subr.bf16.mxu0 0
      %795 = vmatpush2.bf16.msra.mxu0 0
      %796 = vmatprep.subr.bf16.mxu0 0
      %797 = vmatpush2.bf16.msra.mxu0 0
      %798 = vmatprep.subr.bf16.mxu0 0
      %799 = vmatpush2.bf16.msra.mxu0 0
      %800 = vmatprep.subr.bf16.mxu0 0
      %801 = vmatpush2.bf16.msra.mxu0 0
      %802 = vmatprep.subr.bf16.mxu0 0
      %803 = vmatpush2.bf16.msra.mxu0 0
      %804 = vmatprep.mubr.bf16.mxu0 0
      %805 = vmatmul.mubr.bf16.gmra.mxu0 %v730
      %v806 = vpop.f32.mrf.mxu0
      %v807 = vadd.f32 %v767, %v806
      %v808 = vpop.f32.mrf.mxu0
      %v809 = vpop.f32.mrf.mxu0
      %v810 = vpop.f32.mrf.mxu0
      %811 = vdwg.mxu0
      %v812 = vadd.f32 %v384, %v807
      %s813 = scalar_lea.vmem %s2, 1
      %v814 = vld [vmem:[%s813] sm:$0x1]
      %v816 = vlaneseq
      %v817 = vshrl.u32 %v816, 7
      %v818 = vsub.s32 0, %v817
      %v819 = vrot.slane %v814, %v818
      %v821 = vmul.f32 %v812, %v819
      %s822 = scalar_lea.vmem %s3, 1
      %v823 = vld [vmem:[%s822] sm:$0x1]
      %v825 = vlaneseq
      %v826 = vshrl.u32 %v825, 7
      %v827 = vsub.s32 0, %v826
      %v828 = vrot.slane %v823, %v827
      %v830 = vadd.f32 %v821, %v828
      %v831 = vmax.f32 %v830, 0.0
      %v832 = vpack.c.bf16 %v831, %v831
      %s833 = scalar_lea.vmem %s4, 64
      %v834 = vld [vmem:[%s833] sm:$0xf]
      %v835 = vld [vmem:[%s833 + $0x4] sm:$0xf]
      %v836 = vld [vmem:[%s833 + $0x8] sm:$0xf]
      %v837 = vld [vmem:[%s833 + $0xc] sm:$0xf]
      %v838 = vld [vmem:[%s833 + $0x10] sm:$0xf]
      %v839 = vld [vmem:[%s833 + $0x14] sm:$0xf]
      %v840 = vld [vmem:[%s833 + $0x18] sm:$0xf]
      %v841 = vld [vmem:[%s833 + $0x1c] sm:$0xf]
      %v842 = vld [vmem:[%s833 + $0x20] sm:$0xf]
      %v843 = vld [vmem:[%s833 + $0x24] sm:$0xf]
      %v844 = vld [vmem:[%s833 + $0x28] sm:$0xf]
      %v845 = vld [vmem:[%s833 + $0x2c] sm:$0xf]
      %v846 = vld [vmem:[%s833 + $0x30] sm:$0xf]
      %v847 = vld [vmem:[%s833 + $0x34] sm:$0xf]
      %v848 = vld [vmem:[%s833 + $0x38] sm:$0xf]
      %v849 = vld [vmem:[%s833 + $0x3c] sm:$0xf]
      %v866 = vunpack.c.l.b16 %v834
      %v867 = vunpack.c.l.b16 %v835
      %v868 = vunpack.c.l.b16 %v836
      %v869 = vunpack.c.l.b16 %v837
      %v870 = vunpack.c.l.b16 %v838
      %v871 = vunpack.c.l.b16 %v839
      %v872 = vunpack.c.l.b16 %v840
      %v873 = vunpack.c.l.b16 %v841
      %v874 = vunpack.c.l.b16 %v842
      %v875 = vunpack.c.l.b16 %v843
      %v876 = vunpack.c.l.b16 %v844
      %v877 = vunpack.c.l.b16 %v845
      %v878 = vunpack.c.l.b16 %v846
      %v879 = vunpack.c.l.b16 %v847
      %v880 = vunpack.c.l.b16 %v848
      %v881 = vunpack.c.l.b16 %v849
      %v882 = vpack.c.b16 %v867, %v866
      %v883 = vpack.c.b16 %v869, %v868
      %v884 = vpack.c.b16 %v871, %v870
      %v885 = vpack.c.b16 %v873, %v872
      %v886 = vpack.c.b16 %v875, %v874
      %v887 = vpack.c.b16 %v877, %v876
      %v888 = vpack.c.b16 %v879, %v878
      %v889 = vpack.c.b16 %v881, %v880
      %898 = vmatprep.subr.bf16.mxu0 0
      %899 = vmatpush1.bf16.msra.mxu0 %v889
      %900 = vmatprep.subr.bf16.mxu0 0
      %901 = vmatpush1.bf16.msra.mxu0 %v888
      %902 = vmatprep.subr.bf16.mxu0 0
      %903 = vmatpush1.bf16.msra.mxu0 %v887
      %904 = vmatprep.subr.bf16.mxu0 0
      %905 = vmatpush1.bf16.msra.mxu0 %v886
      %906 = vmatprep.subr.bf16.mxu0 0
      %907 = vmatpush1.bf16.msra.mxu0 %v885
      %908 = vmatprep.subr.bf16.mxu0 0
      %909 = vmatpush1.bf16.msra.mxu0 %v884
      %910 = vmatprep.subr.bf16.mxu0 0
      %911 = vmatpush1.bf16.msra.mxu0 %v883
      %912 = vmatprep.subr.bf16.mxu0 0
      %913 = vmatpush1.bf16.msra.mxu0 %v882
      %914 = vmatprep.subr.bf16.mxu0 0
      %915 = vmatpush2.bf16.msra.mxu0 0
      %916 = vmatprep.subr.bf16.mxu0 0
      %917 = vmatpush2.bf16.msra.mxu0 0
      %918 = vmatprep.subr.bf16.mxu0 0
      %919 = vmatpush2.bf16.msra.mxu0 0
      %920 = vmatprep.subr.bf16.mxu0 0
      %921 = vmatpush2.bf16.msra.mxu0 0
      %922 = vmatprep.subr.bf16.mxu0 0
      %923 = vmatpush2.bf16.msra.mxu0 0
      %924 = vmatprep.subr.bf16.mxu0 0
      %925 = vmatpush2.bf16.msra.mxu0 0
      %926 = vmatprep.subr.bf16.mxu0 0
      %927 = vmatpush2.bf16.msra.mxu0 0
      %928 = vmatprep.subr.bf16.mxu0 0
      %929 = vmatpush2.bf16.msra.mxu0 0
      %930 = vmatprep.mubr.bf16.mxu0 0
      %931 = vmatmul.mubr.bf16.gmra.mxu0 %v832
      %v932 = vpop.f32.mrf.mxu0
      %v933 = vadd.f32 0.0, %v932
      %v934 = vpop.f32.mrf.mxu0
      %v935 = vpop.f32.mrf.mxu0
      %v936 = vpop.f32.mrf.mxu0
      %937 = vdwg.mxu0
      %s938 = scalar_lea.vmem %s5, 1
      %v939 = vld [vmem:[%s938] sm:$0x1]
      %v941 = vlaneseq
      %v942 = vshrl.u32 %v941, 7
      %v943 = vsub.s32 0, %v942
      %v944 = vrot.slane %v939, %v943
      %v946 = vmul.f32 %v933, %v944
      %s947 = scalar_lea.vmem %s6, 1
      %v948 = vld [vmem:[%s947] sm:$0x1]
      %v950 = vlaneseq
      %v951 = vshrl.u32 %v950, 7
      %v952 = vsub.s32 0, %v951
      %v953 = vrot.slane %v948, %v952
      %v955 = vadd.f32 %v946, %v953
      %v956 = vmax.f32 %v955, 0.0
      %v957 = vmul.f32 %v956, %v531
      %v959 = vrot.slane %v957, 4
      %961 = vst.msk [vmem:[#allocation2] sm:$0x30] %vm537, %v959
      %v962 = vrot.slane %v957, 5
      %963 = vrot.lane.b32.xlu0 %v962, 32
      %v964 = vpop.permute.xlu0 %963
      %966 = vst.msk [vmem:[#allocation2] sm:$0x38] %vm543, %v964
      %v967 = vrot.slane %v957, 6
      %968 = vrot.lane.b32.xlu0 %v967, 64
      %v969 = vpop.permute.xlu0 %968
      %971 = vst.msk [vmem:[#allocation2] sm:$0x3c] %vm549, %v969
      %v972 = vrot.slane %v957, 7
      %973 = vrot.lane.b32.xlu0 %v972, 96
      %v974 = vpop.permute.xlu0 %973
      %976 = vst.msk [vmem:[#allocation2] sm:$0x3e] %vm555, %v974
      %977 = vst.msk [vmem:[#allocation2 + $0x8] sm:$0x3f] %vm387, %v957
      %v978 = vrot.slane %v957, 1
      %979 = vrot.lane.b32.xlu0 %v978, 32
      %v980 = vpop.permute.xlu0 %979
      %982 = vst.msk [vmem:[#allocation2 + $0x8] sm:$0x1f] %vm562, %v980
      %v983 = vrot.slane %v957, 2
      %984 = vrot.lane.b32.xlu0 %v983, 64
      %v985 = vpop.permute.xlu0 %984
      %987 = vst.msk [vmem:[#allocation2 + $0x8] sm:$0xf] %vm568, %v985
      %v988 = vrot.slane %v957, 3
      %989 = vrot.lane.b32.xlu0 %v988, 96
      %v990 = vpop.permute.xlu0 %989
      %992 = vst.msk [vmem:[#allocation2 + $0x8] sm:$0x7] %vm574, %v990
      %993 = vst.msk [vmem:[#allocation2 + $0x10] sm:$0x3] %vm576, %v959
      %v994 = vld [vmem:[#allocation2] sm:$0x3f]
      %v995 = vld [vmem:[#allocation2 + $0x8] sm:$0x3f]
      %v996 = vld [vmem:[#allocation2 + $0x10] sm:$0x3f]
      %v997 = vpack.c.bf16 %v994, %v994
      %v998 = vpack.c.bf16 %v995, %v995
      %v999 = vpack.c.bf16 %v996, %v996
      %s1000 = scalar_lea.vmem %s7, 144
      %v1001 = vld [vmem:[%s1000] sm:$0xf]
      %v1002 = vld [vmem:[%s1000 + $0x4] sm:$0xf]
      %v1003 = vld [vmem:[%s1000 + $0x8] sm:$0xf]
      %v1004 = vld [vmem:[%s1000 + $0xc] sm:$0xf]
      %v1005 = vld [vmem:[%s1000 + $0x10] sm:$0xf]
      %v1006 = vld [vmem:[%s1000 + $0x14] sm:$0xf]
      %v1007 = vld [vmem:[%s1000 + $0x18] sm:$0xf]
      %v1008 = vld [vmem:[%s1000 + $0x1c] sm:$0xf]
      %v1009 = vld [vmem:[%s1000 + $0x20] sm:$0xf]
      %v1010 = vld [vmem:[%s1000 + $0x24] sm:$0xf]
      %v1011 = vld [vmem:[%s1000 + $0x28] sm:$0xf]
      %v1012 = vld [vmem:[%s1000 + $0x2c] sm:$0xf]
      %v1013 = vld [vmem:[%s1000 + $0x30] sm:$0xf]
      %v1014 = vld [vmem:[%s1000 + $0x34] sm:$0xf]
      %v1015 = vld [vmem:[%s1000 + $0x38] sm:$0xf]
      %v1016 = vld [vmem:[%s1000 + $0x3c] sm:$0xf]
      %v1017 = vld [vmem:[%s1000 + $0x40] sm:$0xf]
      %v1018 = vld [vmem:[%s1000 + $0x44] sm:$0xf]
      %v1019 = vld [vmem:[%s1000 + $0x48] sm:$0xf]
      %v1020 = vld [vmem:[%s1000 + $0x4c] sm:$0xf]
      %v1021 = vld [vmem:[%s1000 + $0x50] sm:$0xf]
      %v1022 = vld [vmem:[%s1000 + $0x54] sm:$0xf]
      %v1023 = vld [vmem:[%s1000 + $0x58] sm:$0xf]
      %v1024 = vld [vmem:[%s1000 + $0x5c] sm:$0xf]
      %v1025 = vld [vmem:[%s1000 + $0x60] sm:$0xf]
      %v1026 = vld [vmem:[%s1000 + $0x64] sm:$0xf]
      %v1027 = vld [vmem:[%s1000 + $0x68] sm:$0xf]
      %v1028 = vld [vmem:[%s1000 + $0x6c] sm:$0xf]
      %v1029 = vld [vmem:[%s1000 + $0x70] sm:$0xf]
      %v1030 = vld [vmem:[%s1000 + $0x74] sm:$0xf]
      %v1031 = vld [vmem:[%s1000 + $0x78] sm:$0xf]
      %v1032 = vld [vmem:[%s1000 + $0x7c] sm:$0xf]
      %v1033 = vld [vmem:[%s1000 + $0x80] sm:$0xf]
      %v1034 = vld [vmem:[%s1000 + $0x84] sm:$0xf]
      %v1035 = vld [vmem:[%s1000 + $0x88] sm:$0xf]
      %v1036 = vld [vmem:[%s1000 + $0x8c] sm:$0xf]
      %v1073 = vunpack.c.l.b16 %v1001
      %v1074 = vunpack.c.l.b16 %v1002
      %v1075 = vunpack.c.l.b16 %v1003
      %v1076 = vunpack.c.l.b16 %v1004
      %v1077 = vunpack.c.l.b16 %v1005
      %v1078 = vunpack.c.l.b16 %v1006
      %v1079 = vunpack.c.l.b16 %v1007
      %v1080 = vunpack.c.l.b16 %v1008
      %v1081 = vunpack.c.l.b16 %v1009
      %v1082 = vunpack.c.l.b16 %v1010
      %v1083 = vunpack.c.l.b16 %v1011
      %v1084 = vunpack.c.l.b16 %v1012
      %v1085 = vunpack.c.l.b16 %v1013
      %v1086 = vunpack.c.l.b16 %v1014
      %v1087 = vunpack.c.l.b16 %v1015
      %v1088 = vunpack.c.l.b16 %v1016
      %v1089 = vunpack.c.l.b16 %v1017
      %v1090 = vunpack.c.l.b16 %v1018
      %v1091 = vunpack.c.l.b16 %v1019
      %v1092 = vunpack.c.l.b16 %v1020
      %v1093 = vunpack.c.l.b16 %v1021
      %v1094 = vunpack.c.l.b16 %v1022
      %v1095 = vunpack.c.l.b16 %v1023
      %v1096 = vunpack.c.l.b16 %v1024
      %v1097 = vunpack.c.l.b16 %v1025
      %v1098 = vunpack.c.l.b16 %v1026
      %v1099 = vunpack.c.l.b16 %v1027
      %v1100 = vunpack.c.l.b16 %v1028
      %v1101 = vunpack.c.l.b16 %v1029
      %v1102 = vunpack.c.l.b16 %v1030
      %v1103 = vunpack.c.l.b16 %v1031
      %v1104 = vunpack.c.l.b16 %v1032
      %v1105 = vunpack.c.l.b16 %v1033
      %v1106 = vunpack.c.l.b16 %v1034
      %v1107 = vunpack.c.l.b16 %v1035
      %v1108 = vunpack.c.l.b16 %v1036
      %v1109 = vpack.c.b16 %v1074, %v1073
      %v1110 = vpack.c.b16 %v1076, %v1075
      %v1111 = vpack.c.b16 %v1078, %v1077
      %v1112 = vpack.c.b16 %v1080, %v1079
      %v1113 = vpack.c.b16 %v1082, %v1081
      %v1114 = vpack.c.b16 %v1084, %v1083
      %v1115 = vpack.c.b16 %v1086, %v1085
      %v1116 = vpack.c.b16 %v1088, %v1087
      %v1117 = vpack.c.b16 %v1090, %v1089
      %v1118 = vpack.c.b16 %v1092, %v1091
      %v1119 = vpack.c.b16 %v1094, %v1093
      %v1120 = vpack.c.b16 %v1096, %v1095
      %v1121 = vpack.c.b16 %v1098, %v1097
      %v1122 = vpack.c.b16 %v1100, %v1099
      %v1123 = vpack.c.b16 %v1102, %v1101
      %v1124 = vpack.c.b16 %v1104, %v1103
      %v1125 = vpack.c.b16 %v1106, %v1105
      %v1126 = vpack.c.b16 %v1108, %v1107
      %v1146 = vsel %vm728, %v999, 0
      %1148 = vmatprep.subr.bf16.mxu0 0
      %1149 = vmatpush1.bf16.msra.mxu0 %v1116
      %1150 = vmatprep.subr.bf16.mxu0 0
      %1151 = vmatpush1.bf16.msra.mxu0 %v1115
      %1152 = vmatprep.subr.bf16.mxu0 0
      %1153 = vmatpush1.bf16.msra.mxu0 %v1114
      %1154 = vmatprep.subr.bf16.mxu0 0
      %1155 = vmatpush1.bf16.msra.mxu0 %v1113
      %1156 = vmatprep.subr.bf16.mxu0 0
      %1157 = vmatpush1.bf16.msra.mxu0 %v1112
      %1158 = vmatprep.subr.bf16.mxu0 0
      %1159 = vmatpush1.bf16.msra.mxu0 %v1111
      %1160 = vmatprep.subr.bf16.mxu0 0
      %1161 = vmatpush1.bf16.msra.mxu0 %v1110
      %1162 = vmatprep.subr.bf16.mxu0 0
      %1163 = vmatpush1.bf16.msra.mxu0 %v1109
      %1164 = vmatprep.subr.bf16.mxu0 0
      %1165 = vmatpush2.bf16.msra.mxu0 %v1124
      %1166 = vmatprep.subr.bf16.mxu0 0
      %1167 = vmatpush2.bf16.msra.mxu0 %v1123
      %1168 = vmatprep.subr.bf16.mxu0 0
      %1169 = vmatpush2.bf16.msra.mxu0 %v1122
      %1170 = vmatprep.subr.bf16.mxu0 0
      %1171 = vmatpush2.bf16.msra.mxu0 %v1121
      %1172 = vmatprep.subr.bf16.mxu0 0
      %1173 = vmatpush2.bf16.msra.mxu0 %v1120
      %1174 = vmatprep.subr.bf16.mxu0 0
      %1175 = vmatpush2.bf16.msra.mxu0 %v1119
      %1176 = vmatprep.subr.bf16.mxu0 0
      %1177 = vmatpush2.bf16.msra.mxu0 %v1118
      %1178 = vmatprep.subr.bf16.mxu0 0
      %1179 = vmatpush2.bf16.msra.mxu0 %v1117
      %1180 = vmatprep.mubr.bf16.mxu0 %v998
      %1181 = vmatmul.mubr.bf16.gmra.mxu0 %v997
      %v1182 = vpop.f32.mrf.mxu0
      %v1183 = vadd.f32 0.0, %v1182
      %v1184 = vpop.f32.mrf.mxu0
      %v1185 = vpop.f32.mrf.mxu0
      %v1186 = vpop.f32.mrf.mxu0
      %1187 = vdwg.mxu0
      %1188 = vmatprep.subr.bf16.mxu0 0
      %1189 = vmatpush1.bf16.msra.mxu0 0
      %1190 = vmatprep.subr.bf16.mxu0 0
      %1191 = vmatpush1.bf16.msra.mxu0 0
      %1192 = vmatprep.subr.bf16.mxu0 0
      %1193 = vmatpush1.bf16.msra.mxu0 0
      %1194 = vmatprep.subr.bf16.mxu0 0
      %1195 = vmatpush1.bf16.msra.mxu0 0
      %1196 = vmatprep.subr.bf16.mxu0 0
      %1197 = vmatpush1.bf16.msra.mxu0 0
      %1198 = vmatprep.subr.bf16.mxu0 0
      %1199 = vmatpush1.bf16.msra.mxu0 0
      %1200 = vmatprep.subr.bf16.mxu0 0
      %1201 = vmatpush1.bf16.msra.mxu0 %v1126
      %1202 = vmatprep.subr.bf16.mxu0 0
      %1203 = vmatpush1.bf16.msra.mxu0 %v1125
      %1204 = vmatprep.subr.bf16.mxu0 0
      %1205 = vmatpush2.bf16.msra.mxu0 0
      %1206 = vmatprep.subr.bf16.mxu0 0
      %1207 = vmatpush2.bf16.msra.mxu0 0
      %1208 = vmatprep.subr.bf16.mxu0 0
      %1209 = vmatpush2.bf16.msra.mxu0 0
      %1210 = vmatprep.subr.bf16.mxu0 0
      %1211 = vmatpush2.bf16.msra.mxu0 0
      %1212 = vmatprep.subr.bf16.mxu0 0
      %1213 = vmatpush2.bf16.msra.mxu0 0
      %1214 = vmatprep.subr.bf16.mxu0 0
      %1215 = vmatpush2.bf16.msra.mxu0 0
      %1216 = vmatprep.subr.bf16.mxu0 0
      %1217 = vmatpush2.bf16.msra.mxu0 0
      %1218 = vmatprep.subr.bf16.mxu0 0
      %1219 = vmatpush2.bf16.msra.mxu0 0
      %1220 = vmatprep.mubr.bf16.mxu0 0
      %1221 = vmatmul.mubr.bf16.gmra.mxu0 %v1146
      %v1222 = vpop.f32.mrf.mxu0
      %v1223 = vadd.f32 %v1183, %v1222
      %v1224 = vpop.f32.mrf.mxu0
      %v1225 = vpop.f32.mrf.mxu0
      %v1226 = vpop.f32.mrf.mxu0
      %1227 = vdwg.mxu0
      %v1228 = vadd.f32 %v812, %v1223
      %v1229 = vld [vmem:[%s8] sm:$0x1]
      %v1231 = vlaneseq
      %v1232 = vshrl.u32 %v1231, 7
      %v1233 = vsub.s32 0, %v1232
      %v1234 = vrot.slane %v1229, %v1233
      %v1236 = vmul.f32 %v1228, %v1234
      %v1237 = vld [vmem:[%s9] sm:$0x1]
      %v1239 = vlaneseq
      %v1240 = vshrl.u32 %v1239, 7
      %v1241 = vsub.s32 0, %v1240
      %v1242 = vrot.slane %v1237, %v1241
      %v1244 = vadd.f32 %v1236, %v1242
      %v1245 = vmax.f32 %v1244, 0.0
      %v1246 = vpack.c.bf16 %v1245, %v1245
      %v1247 = vld [vmem:[%s10] sm:$0xf]
      %v1248 = vld [vmem:[%s10 + $0x4] sm:$0xf]
      %v1249 = vld [vmem:[%s10 + $0x8] sm:$0xf]
      %v1250 = vld [vmem:[%s10 + $0xc] sm:$0xf]
      %v1251 = vld [vmem:[%s10 + $0x10] sm:$0xf]
      %v1252 = vld [vmem:[%s10 + $0x14] sm:$0xf]
      %v1253 = vld [vmem:[%s10 + $0x18] sm:$0xf]
      %v1254 = vld [vmem:[%s10 + $0x1c] sm:$0xf]
      %v1255 = vld [vmem:[%s10 + $0x20] sm:$0xf]
      %v1256 = vld [vmem:[%s10 + $0x24] sm:$0xf]
      %v1257 = vld [vmem:[%s10 + $0x28] sm:$0xf]
      %v1258 = vld [vmem:[%s10 + $0x2c] sm:$0xf]
      %v1259 = vld [vmem:[%s10 + $0x30] sm:$0xf]
      %v1260 = vld [vmem:[%s10 + $0x34] sm:$0xf]
      %v1261 = vld [vmem:[%s10 + $0x38] sm:$0xf]
      %v1262 = vld [vmem:[%s10 + $0x3c] sm:$0xf]
      %v1279 = vunpack.c.l.b16 %v1247
      %v1280 = vunpack.c.l.b16 %v1248
      %v1281 = vunpack.c.l.b16 %v1249
      %v1282 = vunpack.c.l.b16 %v1250
      %v1283 = vunpack.c.l.b16 %v1251
      %v1284 = vunpack.c.l.b16 %v1252
      %v1285 = vunpack.c.l.b16 %v1253
      %v1286 = vunpack.c.l.b16 %v1254
      %v1287 = vunpack.c.l.b16 %v1255
      %v1288 = vunpack.c.l.b16 %v1256
      %v1289 = vunpack.c.l.b16 %v1257
      %v1290 = vunpack.c.l.b16 %v1258
      %v1291 = vunpack.c.l.b16 %v1259
      %v1292 = vunpack.c.l.b16 %v1260
      %v1293 = vunpack.c.l.b16 %v1261
      %v1294 = vunpack.c.l.b16 %v1262
      %v1295 = vpack.c.b16 %v1280, %v1279
      %v1296 = vpack.c.b16 %v1282, %v1281
      %v1297 = vpack.c.b16 %v1284, %v1283
      %v1298 = vpack.c.b16 %v1286, %v1285
      %v1299 = vpack.c.b16 %v1288, %v1287
      %v1300 = vpack.c.b16 %v1290, %v1289
      %v1301 = vpack.c.b16 %v1292, %v1291
      %v1302 = vpack.c.b16 %v1294, %v1293
      %1311 = vmatprep.subr.bf16.mxu0 0
      %1312 = vmatpush1.bf16.msra.mxu0 %v1302
      %1313 = vmatprep.subr.bf16.mxu0 0
      %1314 = vmatpush1.bf16.msra.mxu0 %v1301
      %1315 = vmatprep.subr.bf16.mxu0 0
      %1316 = vmatpush1.bf16.msra.mxu0 %v1300
      %1317 = vmatprep.subr.bf16.mxu0 0
      %1318 = vmatpush1.bf16.msra.mxu0 %v1299
      %1319 = vmatprep.subr.bf16.mxu0 0
      %1320 = vmatpush1.bf16.msra.mxu0 %v1298
      %1321 = vmatprep.subr.bf16.mxu0 0
      %1322 = vmatpush1.bf16.msra.mxu0 %v1297
      %1323 = vmatprep.subr.bf16.mxu0 0
      %1324 = vmatpush1.bf16.msra.mxu0 %v1296
      %1325 = vmatprep.subr.bf16.mxu0 0
      %1326 = vmatpush1.bf16.msra.mxu0 %v1295
      %1327 = vmatprep.subr.bf16.mxu0 0
      %1328 = vmatpush2.bf16.msra.mxu0 0
      %1329 = vmatprep.subr.bf16.mxu0 0
      %1330 = vmatpush2.bf16.msra.mxu0 0
      %1331 = vmatprep.subr.bf16.mxu0 0
      %1332 = vmatpush2.bf16.msra.mxu0 0
      %1333 = vmatprep.subr.bf16.mxu0 0
      %1334 = vmatpush2.bf16.msra.mxu0 0
      %1335 = vmatprep.subr.bf16.mxu0 0
      %1336 = vmatpush2.bf16.msra.mxu0 0
      %1337 = vmatprep.subr.bf16.mxu0 0
      %1338 = vmatpush2.bf16.msra.mxu0 0
      %1339 = vmatprep.subr.bf16.mxu0 0
      %1340 = vmatpush2.bf16.msra.mxu0 0
      %1341 = vmatprep.subr.bf16.mxu0 0
      %1342 = vmatpush2.bf16.msra.mxu0 0
      %1343 = vmatprep.mubr.bf16.mxu0 0
      %1344 = vmatmul.mubr.bf16.gmra.mxu0 %v1246
      %v1345 = vpop.f32.mrf.mxu0
      %v1346 = vadd.f32 0.0, %v1345
      %v1347 = vpop.f32.mrf.mxu0
      %v1348 = vpop.f32.mrf.mxu0
      %v1349 = vpop.f32.mrf.mxu0
      %1350 = vdwg.mxu0
      %1351 = vst [vmem:[%s381] sm:$0x3f] %v1346
      %p1352 = scmp.lt.s32.totalorder %s22, 1
      %s1353 = scalar_select %p1352, %s22, 1
      %s1354 = smul.addr %s1353, 8
      %s1355 = scalar_lea.vmem %s11, %s1354
      // Predicated region
      $region65: #{densenet_forward.8} parent=63 // pred_check
        %p1356 = pneg %p276
      $region66: #{densenet_forward.8} parent=63 // pred_check_branch
        %1358 = sbr.rel (%p1356) target = $region68
      $region67: #{densenet_forward.8} parent=63 // pred_region
        _
      $region68: #{densenet_forward.8} parent=63 // pred_fallthru
        _
    $region64: #{densenet_forward.8} parent=5 // pred_fallthru
      _
    %p1359 = scmp.le.s32.totalorder 2, %s17
    // Predicated region
    $region69: #{densenet_forward.8} parent=5 // pred_check
      %p1360 = pneg %p1359
    $region70: #{densenet_forward.8} parent=5 // pred_check_branch
      %1362 = sbr.rel (%p1360) target = $region72
    $region71: #{densenet_forward.8} parent=5 // pred_region
      %s1363 = ssub.s32 %s17, 2
      // Predicated region
      $region73: #{densenet_forward.8} parent=71 // pred_check
        %p1364 = pneg %p282
      $region74: #{densenet_forward.8} parent=71 // pred_check_branch
        %1366 = sbr.rel (%p1364) target = $region76
      $region75: #{densenet_forward.8} parent=71 // pred_region
        %p1367 = scmp.lt.s32.totalorder %s23, 1
        %s1368 = scalar_select %p1367, %s23, 1
        %s1369 = smul.addr %s1368, 8
        %s1370 = scalar_lea.vmem %s11, %s1369
      $region76: #{densenet_forward.8} parent=71 // pred_fallthru
        _
    $region72: #{densenet_forward.8} parent=5 // pred_fallthru
      _
  $region6: #{densenet_forward.8} parent=0 // loop_footer
    %s21 = sadd.s32 1, %s17
  $region7: #{densenet_forward.8} parent=0 // loop_footer_branch
    %16 = sbr.rel target = $region3
  $region8: #{densenet_forward.8} parent=0 // loop_exit
    _

// kernel: densenet_forward.9
$region0: #{densenet_forward.9}
  #allocation0 [shape = 'u32[]', space=smem, size = 0x4, offset = 0x4, fixed_abs, tag = 'smem constant byte address 0x4 - core index']
  #allocation1 [shape = 'u32[144,128]{1,0:T(1,128)}', space=vmem, size = 0x12000, scoped, tag = 'internal scratch']
  #allocation2 [shape = 'f32[2,288]{1,0:T(2,128)}', space=vmem, size = 0xc00, scoped, tag = 'scratch operand']
  %s0 = inlined_call_operand.vmem [shape: f32[2,2,128], index: 0, kind: input, shape index: {}]
  %s1 = inlined_call_operand.vmem [shape: f32[2,1], index: 1, kind: input, shape index: {}]
  %s2 = inlined_call_operand.vmem [shape: f32[2,1,128], index: 2, kind: input, shape index: {}]
  %s3 = inlined_call_operand.vmem [shape: f32[2,1,128], index: 3, kind: input, shape index: {}]
  %s4 = inlined_call_operand.vmem [shape: bf16[2,128,32], index: 4, kind: input, shape index: {}]
  %s5 = inlined_call_operand.vmem [shape: f32[2,1,32], index: 5, kind: input, shape index: {}]
  %s6 = inlined_call_operand.vmem [shape: f32[2,1,32], index: 6, kind: input, shape index: {}]
  %s7 = inlined_call_operand.vmem [shape: bf16[2,288,128], index: 7, kind: input, shape index: {}]
  %s8 = inlined_call_operand.vmem [shape: f32[1,128], index: 8, kind: input, shape index: {}]
  %s9 = inlined_call_operand.vmem [shape: f32[1,128], index: 9, kind: input, shape index: {}]
  %s10 = inlined_call_operand.vmem [shape: bf16[128,128], index: 10, kind: input, shape index: {}]
  %s11 = inlined_call_operand.vmem [shape: f32[1,128], index: 11, kind: input, shape index: {}]
  %s12 = inlined_call_operand.hbm [shape: f32[2,1,128], index: 12, kind: output, shape index: {}]
  %s13 = sld [smem:[#allocation0]]
  $region81: #{densenet_forward.9} parent=0
    _
  %s15 = ssub.s32 1, %s13
  %s16 = scalar_select 0, %s15, %s13
  $region1: #{densenet_forward.9} parent=0
    #allocation3 [shape = 'u8[1024]{0}', space=vmem, size = 0x400, scoped, tag = 'output window, operand 0']
    #allocation4 [shape = 's32[2]{0}', space=sflag, size = 0x8, scoped, tag = 'scoped memory for densenet_forward.9']
    %17 = vsyncpa [#allocation4], 0
    %s18 = scalar_lea.sflag [#allocation4], 1
    %19 = vsyncpa %s18, 0
    loop: start=0, step=1, limit=4
    $region2: #{densenet_forward.9} parent=1 // loop_pre_header
      _
    $region3: #{densenet_forward.9} parent=1 // loop_header
      %s21 = sphi 0, %s25
      %p22 = scmp.ge.s32.totalorder %s21, 4
      %s31 = sphi 0, %s33
      %s34 = sphi 0, %s31
      %s35 = sphi 0, %s34
      %s51 = sphi 0, %s35
      %s55 = sphi 0, %s55
      %s57 = sphi 0, %s55
      %s58 = sphi 0, %s57
      %s72 = sphi 0, %s58
      %s76 = sphi 0, %s76
      %s78 = sphi 0, %s76
      %s79 = sphi 0, %s78
      %s93 = sphi 0, %s79
      %s97 = sphi 0, %s97
      %s99 = sphi 0, %s97
      %s100 = sphi 0, %s99
      %s114 = sphi 0, %s100
      %s118 = sphi 0, %s118
      %s120 = sphi 0, %s118
      %s121 = sphi 0, %s120
      %s135 = sphi 0, %s121
      %s139 = sphi 0, %s139
      %s141 = sphi 0, %s139
      %s142 = sphi 0, %s141
      %s156 = sphi 0, %s142
      %s160 = sphi 0, %s160
      %s162 = sphi 0, %s160
      %s163 = sphi 0, %s162
      %s177 = sphi 0, %s163
      %s181 = sphi 0, %s181
      %s183 = sphi 0, %s181
      %s184 = sphi 0, %s183
      %s198 = sphi 0, %s184
      %s202 = sphi 0, %s202
      %s204 = sphi 0, %s202
      %s205 = sphi 0, %s204
      %s219 = sphi 0, %s205
      %s223 = sphi 0, %s223
      %s225 = sphi 0, %s223
      %s226 = sphi 0, %s225
      %s240 = sphi 0, %s226
      %s244 = sphi 0, %s244
      %s246 = sphi 0, %s244
      %s247 = sphi 0, %s246
      %s261 = sphi 0, %s247
      %s265 = sphi 0, %s265
      %s267 = sphi 0, %s265
      %s268 = sphi 0, %s267
      %s282 = sphi 0, %s268
      %s288 = sphi 0, %s290
      %s291 = sphi 0, %s288
      %s292 = sphi 0, %s291
      %s308 = sphi 0, %s292
    $region4: #{densenet_forward.9} parent=1 // loop_header_branch
      %24 = sbr.rel (%p22) target = $region8
    $region5: #{densenet_forward.9} parent=1 // loop_body
      %s26 = ssub.s32 %s21, 1
      %s27 = ssub.s32 %s21, 2
      %s28 = sadd.s32 %s21, 1
      %s29 = ssub.s32 %s21, %s28
      %p30 = scmp.eq.s32.totalorder %s29, 0
      %s32 = sadd.s32 %s31, 1
      %s33 = scalar_select %p30, %s31, %s32
      %p36 = pneg %p30
      %p37 = scmp.eq.s32.totalorder %s21, 1
      %p38 = por %p36, %p37
      %p39 = scmp.ne.s32.totalorder %s31, %s34
      %p40 = scmp.eq.s32.totalorder %s21, 0
      %p41 = por %p39, %p40
      %p42 = scmp.ne.s32.totalorder %s31, %s34
      %p43 = scmp.eq.s32.totalorder %s26, 1
      %p44 = por %p42, %p43
      %p45 = scmp.ne.s32.totalorder %s34, %s35
      %p46 = scmp.eq.s32.totalorder %s26, 0
      %p47 = por %p45, %p46
      %p48 = scmp.ne.s32.totalorder %s34, %s35
      %p49 = scmp.eq.s32.totalorder %s27, 1
      %p50 = por %p48, %p49
      %p52 = scmp.ne.s32.totalorder %s35, %s51
      %p53 = scmp.eq.s32.totalorder %s27, 0
      %p54 = por %p52, %p53
      %s56 = sadd.s32 %s55, 1
      %p59 = scmp.eq.s32.totalorder %s21, 1
      %p60 = scmp.ne.s32.totalorder %s55, %s57
      %p61 = scmp.eq.s32.totalorder %s21, 0
      %p62 = por %p60, %p61
      %p63 = scmp.ne.s32.totalorder %s55, %s57
      %p64 = scmp.eq.s32.totalorder %s26, 1
      %p65 = por %p63, %p64
      %p66 = scmp.ne.s32.totalorder %s57, %s58
      %p67 = scmp.eq.s32.totalorder %s26, 0
      %p68 = por %p66, %p67
      %p69 = scmp.ne.s32.totalorder %s57, %s58
      %p70 = scmp.eq.s32.totalorder %s27, 1
      %p71 = por %p69, %p70
      %p73 = scmp.ne.s32.totalorder %s58, %s72
      %p74 = scmp.eq.s32.totalorder %s27, 0
      %p75 = por %p73, %p74
      %s77 = sadd.s32 %s76, 1
      %p80 = scmp.eq.s32.totalorder %s21, 1
      %p81 = scmp.ne.s32.totalorder %s76, %s78
      %p82 = scmp.eq.s32.totalorder %s21, 0
      %p83 = por %p81, %p82
      %p84 = scmp.ne.s32.totalorder %s76, %s78
      %p85 = scmp.eq.s32.totalorder %s26, 1
      %p86 = por %p84, %p85
      %p87 = scmp.ne.s32.totalorder %s78, %s79
      %p88 = scmp.eq.s32.totalorder %s26, 0
      %p89 = por %p87, %p88
      %p90 = scmp.ne.s32.totalorder %s78, %s79
      %p91 = scmp.eq.s32.totalorder %s27, 1
      %p92 = por %p90, %p91
      %p94 = scmp.ne.s32.totalorder %s79, %s93
      %p95 = scmp.eq.s32.totalorder %s27, 0
      %p96 = por %p94, %p95
      %s98 = sadd.s32 %s97, 1
      %p101 = scmp.eq.s32.totalorder %s21, 1
      %p102 = scmp.ne.s32.totalorder %s97, %s99
      %p103 = scmp.eq.s32.totalorder %s21, 0
      %p104 = por %p102, %p103
      %p105 = scmp.ne.s32.totalorder %s97, %s99
      %p106 = scmp.eq.s32.totalorder %s26, 1
      %p107 = por %p105, %p106
      %p108 = scmp.ne.s32.totalorder %s99, %s100
      %p109 = scmp.eq.s32.totalorder %s26, 0
      %p110 = por %p108, %p109
      %p111 = scmp.ne.s32.totalorder %s99, %s100
      %p112 = scmp.eq.s32.totalorder %s27, 1
      %p113 = por %p111, %p112
      %p115 = scmp.ne.s32.totalorder %s100, %s114
      %p116 = scmp.eq.s32.totalorder %s27, 0
      %p117 = por %p115, %p116
      %s119 = sadd.s32 %s118, 1
      %p122 = scmp.eq.s32.totalorder %s21, 1
      %p123 = scmp.ne.s32.totalorder %s118, %s120
      %p124 = scmp.eq.s32.totalorder %s21, 0
      %p125 = por %p123, %p124
      %p126 = scmp.ne.s32.totalorder %s118, %s120
      %p127 = scmp.eq.s32.totalorder %s26, 1
      %p128 = por %p126, %p127
      %p129 = scmp.ne.s32.totalorder %s120, %s121
      %p130 = scmp.eq.s32.totalorder %s26, 0
      %p131 = por %p129, %p130
      %p132 = scmp.ne.s32.totalorder %s120, %s121
      %p133 = scmp.eq.s32.totalorder %s27, 1
      %p134 = por %p132, %p133
      %p136 = scmp.ne.s32.totalorder %s121, %s135
      %p137 = scmp.eq.s32.totalorder %s27, 0
      %p138 = por %p136, %p137
      %s140 = sadd.s32 %s139, 1
      %p143 = scmp.eq.s32.totalorder %s21, 1
      %p144 = scmp.ne.s32.totalorder %s139, %s141
      %p145 = scmp.eq.s32.totalorder %s21, 0
      %p146 = por %p144, %p145
      %p147 = scmp.ne.s32.totalorder %s139, %s141
      %p148 = scmp.eq.s32.totalorder %s26, 1
      %p149 = por %p147, %p148
      %p150 = scmp.ne.s32.totalorder %s141, %s142
      %p151 = scmp.eq.s32.totalorder %s26, 0
      %p152 = por %p150, %p151
      %p153 = scmp.ne.s32.totalorder %s141, %s142
      %p154 = scmp.eq.s32.totalorder %s27, 1
      %p155 = por %p153, %p154
      %p157 = scmp.ne.s32.totalorder %s142, %s156
      %p158 = scmp.eq.s32.totalorder %s27, 0
      %p159 = por %p157, %p158
      %s161 = sadd.s32 %s160, 1
      %p164 = scmp.eq.s32.totalorder %s21, 1
      %p165 = scmp.ne.s32.totalorder %s160, %s162
      %p166 = scmp.eq.s32.totalorder %s21, 0
      %p167 = por %p165, %p166
      %p168 = scmp.ne.s32.totalorder %s160, %s162
      %p169 = scmp.eq.s32.totalorder %s26, 1
      %p170 = por %p168, %p169
      %p171 = scmp.ne.s32.totalorder %s162, %s163
      %p172 = scmp.eq.s32.totalorder %s26, 0
      %p173 = por %p171, %p172
      %p174 = scmp.ne.s32.totalorder %s162, %s163
      %p175 = scmp.eq.s32.totalorder %s27, 1
      %p176 = por %p174, %p175
      %p178 = scmp.ne.s32.totalorder %s163, %s177
      %p179 = scmp.eq.s32.totalorder %s27, 0
      %p180 = por %p178, %p179
      %s182 = sadd.s32 %s181, 1
      %p185 = scmp.eq.s32.totalorder %s21, 1
      %p186 = scmp.ne.s32.totalorder %s181, %s183
      %p187 = scmp.eq.s32.totalorder %s21, 0
      %p188 = por %p186, %p187
      %p189 = scmp.ne.s32.totalorder %s181, %s183
      %p190 = scmp.eq.s32.totalorder %s26, 1
      %p191 = por %p189, %p190
      %p192 = scmp.ne.s32.totalorder %s183, %s184
      %p193 = scmp.eq.s32.totalorder %s26, 0
      %p194 = por %p192, %p193
      %p195 = scmp.ne.s32.totalorder %s183, %s184
      %p196 = scmp.eq.s32.totalorder %s27, 1
      %p197 = por %p195, %p196
      %p199 = scmp.ne.s32.totalorder %s184, %s198
      %p200 = scmp.eq.s32.totalorder %s27, 0
      %p201 = por %p199, %p200
      %s203 = sadd.s32 %s202, 1
      %p206 = scmp.eq.s32.totalorder %s21, 1
      %p207 = scmp.ne.s32.totalorder %s202, %s204
      %p208 = scmp.eq.s32.totalorder %s21, 0
      %p209 = por %p207, %p208
      %p210 = scmp.ne.s32.totalorder %s202, %s204
      %p211 = scmp.eq.s32.totalorder %s26, 1
      %p212 = por %p210, %p211
      %p213 = scmp.ne.s32.totalorder %s204, %s205
      %p214 = scmp.eq.s32.totalorder %s26, 0
      %p215 = por %p213, %p214
      %p216 = scmp.ne.s32.totalorder %s204, %s205
      %p217 = scmp.eq.s32.totalorder %s27, 1
      %p218 = por %p216, %p217
      %p220 = scmp.ne.s32.totalorder %s205, %s219
      %p221 = scmp.eq.s32.totalorder %s27, 0
      %p222 = por %p220, %p221
      %s224 = sadd.s32 %s223, 1
      %p227 = scmp.eq.s32.totalorder %s21, 1
      %p228 = scmp.ne.s32.totalorder %s223, %s225
      %p229 = scmp.eq.s32.totalorder %s21, 0
      %p230 = por %p228, %p229
      %p231 = scmp.ne.s32.totalorder %s223, %s225
      %p232 = scmp.eq.s32.totalorder %s26, 1
      %p233 = por %p231, %p232
      %p234 = scmp.ne.s32.totalorder %s225, %s226
      %p235 = scmp.eq.s32.totalorder %s26, 0
      %p236 = por %p234, %p235
      %p237 = scmp.ne.s32.totalorder %s225, %s226
      %p238 = scmp.eq.s32.totalorder %s27, 1
      %p239 = por %p237, %p238
      %p241 = scmp.ne.s32.totalorder %s226, %s240
      %p242 = scmp.eq.s32.totalorder %s27, 0
      %p243 = por %p241, %p242
      %s245 = sadd.s32 %s244, 1
      %p248 = scmp.eq.s32.totalorder %s21, 1
      %p249 = scmp.ne.s32.totalorder %s244, %s246
      %p250 = scmp.eq.s32.totalorder %s21, 0
      %p251 = por %p249, %p250
      %p252 = scmp.ne.s32.totalorder %s244, %s246
      %p253 = scmp.eq.s32.totalorder %s26, 1
      %p254 = por %p252, %p253
      %p255 = scmp.ne.s32.totalorder %s246, %s247
      %p256 = scmp.eq.s32.totalorder %s26, 0
      %p257 = por %p255, %p256
      %p258 = scmp.ne.s32.totalorder %s246, %s247
      %p259 = scmp.eq.s32.totalorder %s27, 1
      %p260 = por %p258, %p259
      %p262 = scmp.ne.s32.totalorder %s247, %s261
      %p263 = scmp.eq.s32.totalorder %s27, 0
      %p264 = por %p262, %p263
      %s266 = sadd.s32 %s265, 1
      %p269 = scmp.eq.s32.totalorder %s21, 1
      %p270 = scmp.ne.s32.totalorder %s265, %s267
      %p271 = scmp.eq.s32.totalorder %s21, 0
      %p272 = por %p270, %p271
      %p273 = scmp.ne.s32.totalorder %s265, %s267
      %p274 = scmp.eq.s32.totalorder %s26, 1
      %p275 = por %p273, %p274
      %p276 = scmp.ne.s32.totalorder %s267, %s268
      %p277 = scmp.eq.s32.totalorder %s26, 0
      %p278 = por %p276, %p277
      %p279 = scmp.ne.s32.totalorder %s267, %s268
      %p280 = scmp.eq.s32.totalorder %s27, 1
      %p281 = por %p279, %p280
      %p283 = scmp.ne.s32.totalorder %s268, %s282
      %p284 = scmp.eq.s32.totalorder %s27, 0
      %p285 = por %p283, %p284
      %s286 = ssub.s32 %s21, %s28
      %p287 = scmp.eq.s32.totalorder %s286, 0
      %s289 = sadd.s32 %s288, 1
      %s290 = scalar_select %p287, %s288, %s289
      %p293 = pneg %p287
      %p294 = scmp.eq.s32.totalorder %s21, 1
      %p295 = por %p293, %p294
      %p296 = scmp.ne.s32.totalorder %s288, %s291
      %p297 = scmp.eq.s32.totalorder %s21, 0
      %p298 = por %p296, %p297
      %p299 = scmp.ne.s32.totalorder %s288, %s291
      %p300 = scmp.eq.s32.totalorder %s26, 1
      %p301 = por %p299, %p300
      %p302 = scmp.ne.s32.totalorder %s291, %s292
      %p303 = scmp.eq.s32.totalorder %s26, 0
      %p304 = por %p302, %p303
      %p305 = scmp.ne.s32.totalorder %s291, %s292
      %p306 = scmp.eq.s32.totalorder %s27, 1
      %p307 = por %p305, %p306
      %p309 = scmp.ne.s32.totalorder %s292, %s308
      %p310 = scmp.eq.s32.totalorder %s27, 0
      %p311 = por %p309, %p310
      %p312 = scmp.le.s32.totalorder 1, %s21
      %p313 = scmp.lt.s32.totalorder %s21, 3
      %p314 = pnand %p312, %p313
      %p315 = pneg %p314
      // Predicated region
      $region9: #{densenet_forward.9} parent=5 // pred_check
        _
      $region10: #{densenet_forward.9} parent=5 // pred_check_branch
        %317 = sbr.rel (%p314) target = $region12
      $region11: #{densenet_forward.9} parent=5 // pred_region
        %s318 = ssub.s32 %s21, 1
        // Predicated region
        $region13: #{densenet_forward.9} parent=11 // pred_check
          %p319 = pneg %p68
        $region14: #{densenet_forward.9} parent=11 // pred_check_branch
          %321 = sbr.rel (%p319) target = $region16
        $region15: #{densenet_forward.9} parent=11 // pred_region
          _
        $region16: #{densenet_forward.9} parent=11 // pred_fallthru
          _
        // Predicated region
        $region17: #{densenet_forward.9} parent=11 // pred_check
          %p322 = pneg %p89
        $region18: #{densenet_forward.9} parent=11 // pred_check_branch
          %324 = sbr.rel (%p322) target = $region20
        $region19: #{densenet_forward.9} parent=11 // pred_region
          _
        $region20: #{densenet_forward.9} parent=11 // pred_fallthru
          _
        // Predicated region
        $region21: #{densenet_forward.9} parent=11 // pred_check
          %p325 = pneg %p110
        $region22: #{densenet_forward.9} parent=11 // pred_check_branch
          %327 = sbr.rel (%p325) target = $region24
        $region23: #{densenet_forward.9} parent=11 // pred_region
          _
        $region24: #{densenet_forward.9} parent=11 // pred_fallthru
          _
        // Predicated region
        $region25: #{densenet_forward.9} parent=11 // pred_check
          %p328 = pneg %p131
        $region26: #{densenet_forward.9} parent=11 // pred_check_branch
          %330 = sbr.rel (%p328) target = $region28
        $region27: #{densenet_forward.9} parent=11 // pred_region
          _
        $region28: #{densenet_forward.9} parent=11 // pred_fallthru
          _
        // Predicated region
        $region29: #{densenet_forward.9} parent=11 // pred_check
          %p331 = pneg %p152
        $region30: #{densenet_forward.9} parent=11 // pred_check_branch
          %333 = sbr.rel (%p331) target = $region32
        $region31: #{densenet_forward.9} parent=11 // pred_region
          _
        $region32: #{densenet_forward.9} parent=11 // pred_fallthru
          _
        // Predicated region
        $region33: #{densenet_forward.9} parent=11 // pred_check
          %p334 = pneg %p173
        $region34: #{densenet_forward.9} parent=11 // pred_check_branch
          %336 = sbr.rel (%p334) target = $region36
        $region35: #{densenet_forward.9} parent=11 // pred_region
          _
        $region36: #{densenet_forward.9} parent=11 // pred_fallthru
          _
        // Predicated region
        $region37: #{densenet_forward.9} parent=11 // pred_check
          %p337 = pneg %p194
        $region38: #{densenet_forward.9} parent=11 // pred_check_branch
          %339 = sbr.rel (%p337) target = $region40
        $region39: #{densenet_forward.9} parent=11 // pred_region
          _
        $region40: #{densenet_forward.9} parent=11 // pred_fallthru
          _
        // Predicated region
        $region41: #{densenet_forward.9} parent=11 // pred_check
          %p340 = pneg %p215
        $region42: #{densenet_forward.9} parent=11 // pred_check_branch
          %342 = sbr.rel (%p340) target = $region44
        $region43: #{densenet_forward.9} parent=11 // pred_region
          _
        $region44: #{densenet_forward.9} parent=11 // pred_fallthru
          _
        // Predicated region
        $region45: #{densenet_forward.9} parent=11 // pred_check
          %p343 = pneg %p236
        $region46: #{densenet_forward.9} parent=11 // pred_check_branch
          %345 = sbr.rel (%p343) target = $region48
        $region47: #{densenet_forward.9} parent=11 // pred_region
          _
        $region48: #{densenet_forward.9} parent=11 // pred_fallthru
          _
        // Predicated region
        $region49: #{densenet_forward.9} parent=11 // pred_check
          %p346 = pneg %p257
        $region50: #{densenet_forward.9} parent=11 // pred_check_branch
          %348 = sbr.rel (%p346) target = $region52
        $region51: #{densenet_forward.9} parent=11 // pred_region
          _
        $region52: #{densenet_forward.9} parent=11 // pred_fallthru
          _
        // Predicated region
        $region53: #{densenet_forward.9} parent=11 // pred_check
          %p349 = pneg %p278
        $region54: #{densenet_forward.9} parent=11 // pred_check_branch
          %351 = sbr.rel (%p349) target = $region56
        $region55: #{densenet_forward.9} parent=11 // pred_region
          _
        $region56: #{densenet_forward.9} parent=11 // pred_fallthru
          _
      $region12: #{densenet_forward.9} parent=5 // pred_fallthru
        _
      %p352 = scmp.lt.s32.totalorder %s21, 2
      // Predicated region
      $region57: #{densenet_forward.9} parent=5 // pred_check
        %p353 = pneg %p352
      $region58: #{densenet_forward.9} parent=5 // pred_check_branch
        %355 = sbr.rel (%p353) target = $region60
      $region59: #{densenet_forward.9} parent=5 // pred_region
        // Predicated region
        $region61: #{densenet_forward.9} parent=59 // pred_check
          %p356 = pneg %p41
        $region62: #{densenet_forward.9} parent=59 // pred_check_branch
          %358 = sbr.rel (%p356) target = $region64
        $region63: #{densenet_forward.9} parent=59 // pred_region
          %p359 = scmp.lt.s32.totalorder %s21, 1
          %s360 = scalar_select %p359, %s21, 1
          %s361 = smul.addr %s360, 2
          %s362 = scalar_lea.vmem %s0, %s361
        $region64: #{densenet_forward.9} parent=59 // pred_fallthru
          _
      $region60: #{densenet_forward.9} parent=5 // pred_fallthru
        _
      %p363 = scmp.le.s32.totalorder 1, %s21
      %p364 = scmp.lt.s32.totalorder %s21, 3
      %p365 = pnand %p363, %p364
      %p366 = pneg %p365
      // Predicated region
      $region65: #{densenet_forward.9} parent=5 // pred_check
        _
      $region66: #{densenet_forward.9} parent=5 // pred_check_branch
        %368 = sbr.rel (%p365) target = $region68
      $region67: #{densenet_forward.9} parent=5 // pred_region
        %s369 = ssub.s32 %s21, 1
        %p370 = scmp.lt.s32.totalorder %s26, 1
        %s371 = scalar_select %p370, %s26, 1
        %s372 = smul.addr %s371, 2
        %s373 = scalar_lea.vmem %s0, %s372
        %p374 = pneg %p47
        %p375 = pneg %p44
        %p376 = pneg %p68
        %p377 = pneg %p65
        %p378 = pneg %p89
        %p379 = pneg %p86
        %p380 = pneg %p110
        %p381 = pneg %p107
        %p382 = pneg %p131
        %p383 = pneg %p128
        %p384 = pneg %p152
        %p385 = pneg %p149
        %p386 = pneg %p173
        %p387 = pneg %p170
        %p388 = pneg %p194
        %p389 = pneg %p191
        %p390 = pneg %p215
        %p391 = pneg %p212
        %p392 = pneg %p236
        %p393 = pneg %p233
        %p394 = pneg %p257
        %p395 = pneg %p254
        %p396 = pneg %p278
        %p397 = pneg %p275
        %p398 = pneg %p304
        %p399 = pneg %p301
        %s400 = sand.u32 %s291, 1
        %s401 = scalar_lea.sflag [#allocation4], %s400
        %s402 = sand.u32 %s291, 1
        %s403 = scalar_lea.vmem [#allocation3], %s402
        %p404 = scmp.lt.s32.totalorder %s26, 1
        %s405 = scalar_select %p404, %s26, 1
        %s406 = smul.addr %s405, 2
        %s407 = scalar_lea.vmem %s0, %s406
        %v409 = vld [vmem:[%s1] sm:$0x3]
        %v410 = vld [vmem:[%s407] sm:$0x3]
        %vm411 = vcmask 1041408
        %vm412 = vcmask 1043458
        %vm413 = vmor %vm412, %vm411
        %vm414 = vcmask 259076
        %vm415 = vmor %vm414, %vm413
        %416 = vst.msk [vmem:[#allocation2] sm:$0x3f] %vm415, 0.0
        %v417 = vld [vmem:[%s2] sm:$0x1]
        %v419 = vlaneseq
        %v420 = vshrl.u32 %v419, 7
        %v421 = vsub.s32 0, %v420
        %v422 = vrot.slane %v417, %v421
        %v424 = vmul.f32 %v410, %v422
        %v425 = vld [vmem:[%s3] sm:$0x1]
        %v427 = vlaneseq
        %v428 = vshrl.u32 %v427, 7
        %v429 = vsub.s32 0, %v428
        %v430 = vrot.slane %v425, %v429
        %v432 = vadd.f32 %v424, %v430
        %v433 = vmax.f32 %v432, 0.0
        %v434 = vpack.c.bf16 %v433, %v433
        %v435 = vld [vmem:[%s4] sm:$0xf]
        %v436 = vld [vmem:[%s4 + $0x4] sm:$0xf]
        %v437 = vld [vmem:[%s4 + $0x8] sm:$0xf]
        %v438 = vld [vmem:[%s4 + $0xc] sm:$0xf]
        %v439 = vld [vmem:[%s4 + $0x10] sm:$0xf]
        %v440 = vld [vmem:[%s4 + $0x14] sm:$0xf]
        %v441 = vld [vmem:[%s4 + $0x18] sm:$0xf]
        %v442 = vld [vmem:[%s4 + $0x1c] sm:$0xf]
        %v443 = vld [vmem:[%s4 + $0x20] sm:$0xf]
        %v444 = vld [vmem:[%s4 + $0x24] sm:$0xf]
        %v445 = vld [vmem:[%s4 + $0x28] sm:$0xf]
        %v446 = vld [vmem:[%s4 + $0x2c] sm:$0xf]
        %v447 = vld [vmem:[%s4 + $0x30] sm:$0xf]
        %v448 = vld [vmem:[%s4 + $0x34] sm:$0xf]
        %v449 = vld [vmem:[%s4 + $0x38] sm:$0xf]
        %v450 = vld [vmem:[%s4 + $0x3c] sm:$0xf]
        %v467 = vunpack.c.l.b16 %v435
        %v468 = vunpack.c.l.b16 %v436
        %v469 = vunpack.c.l.b16 %v437
        %v470 = vunpack.c.l.b16 %v438
        %v471 = vunpack.c.l.b16 %v439
        %v472 = vunpack.c.l.b16 %v440
        %v473 = vunpack.c.l.b16 %v441
        %v474 = vunpack.c.l.b16 %v442
        %v475 = vunpack.c.l.b16 %v443
        %v476 = vunpack.c.l.b16 %v444
        %v477 = vunpack.c.l.b16 %v445
        %v478 = vunpack.c.l.b16 %v446
        %v479 = vunpack.c.l.b16 %v447
        %v480 = vunpack.c.l.b16 %v448
        %v481 = vunpack.c.l.b16 %v449
        %v482 = vunpack.c.l.b16 %v450
        %v483 = vpack.c.b16 %v468, %v467
        %v484 = vpack.c.b16 %v470, %v469
        %v485 = vpack.c.b16 %v472, %v471
        %v486 = vpack.c.b16 %v474, %v473
        %v487 = vpack.c.b16 %v476, %v475
        %v488 = vpack.c.b16 %v478, %v477
        %v489 = vpack.c.b16 %v480, %v479
        %v490 = vpack.c.b16 %v482, %v481
        %499 = vmatprep.subr.bf16.mxu0 0
        %500 = vmatpush1.bf16.msra.mxu0 %v490
        %501 = vmatprep.subr.bf16.mxu0 0
        %502 = vmatpush1.bf16.msra.mxu0 %v489
        %503 = vmatprep.subr.bf16.mxu0 0
        %504 = vmatpush1.bf16.msra.mxu0 %v488
        %505 = vmatprep.subr.bf16.mxu0 0
        %506 = vmatpush1.bf16.msra.mxu0 %v487
        %507 = vmatprep.subr.bf16.mxu0 0
        %508 = vmatpush1.bf16.msra.mxu0 %v486
        %509 = vmatprep.subr.bf16.mxu0 0
        %510 = vmatpush1.bf16.msra.mxu0 %v485
        %511 = vmatprep.subr.bf16.mxu0 0
        %512 = vmatpush1.bf16.msra.mxu0 %v484
        %513 = vmatprep.subr.bf16.mxu0 0
        %514 = vmatpush1.bf16.msra.mxu0 %v483
        %515 = vmatprep.subr.bf16.mxu0 0
        %516 = vmatpush2.bf16.msra.mxu0 0
        %517 = vmatprep.subr.bf16.mxu0 0
        %518 = vmatpush2.bf16.msra.mxu0 0
        %519 = vmatprep.subr.bf16.mxu0 0
        %520 = vmatpush2.bf16.msra.mxu0 0
        %521 = vmatprep.subr.bf16.mxu0 0
        %522 = vmatpush2.bf16.msra.mxu0 0
        %523 = vmatprep.subr.bf16.mxu0 0
        %524 = vmatpush2.bf16.msra.mxu0 0
        %525 = vmatprep.subr.bf16.mxu0 0
        %526 = vmatpush2.bf16.msra.mxu0 0
        %527 = vmatprep.subr.bf16.mxu0 0
        %528 = vmatpush2.bf16.msra.mxu0 0
        %529 = vmatprep.subr.bf16.mxu0 0
        %530 = vmatpush2.bf16.msra.mxu0 0
        %531 = vmatprep.mubr.bf16.mxu0 0
        %532 = vmatmul.mubr.bf16.gmra.mxu0 %v434
        %v533 = vpop.f32.mrf.mxu0
        %v534 = vadd.f32 0.0, %v533
        %v535 = vpop.f32.mrf.mxu0
        %v536 = vpop.f32.mrf.mxu0
        %v537 = vpop.f32.mrf.mxu0
        %538 = vdwg.mxu0
        %v539 = vld [vmem:[%s5] sm:$0x1]
        %v541 = vlaneseq
        %v542 = vshrl.u32 %v541, 7
        %v543 = vsub.s32 0, %v542
        %v544 = vrot.slane %v539, %v543
        %v546 = vmul.f32 %v534, %v544
        %v547 = vld [vmem:[%s6] sm:$0x1]
        %v549 = vlaneseq
        %v550 = vshrl.u32 %v549, 7
        %v551 = vsub.s32 0, %v550
        %v552 = vrot.slane %v547, %v551
        %v554 = vadd.f32 %v546, %v552
        %v555 = vmax.f32 %v554, 0.0
        %557 = vset.pattern.permute.xlu0 0
        %558 = vperm.xlu0 %557, %v409
        %v559 = vpop.permute.xlu0 %558
        %v561 = vmul.f32 %v555, %v559
        %v564 = vunpack.c.l.s4 1983009808
        %v565 = vunpack.c.0.s8 %v564
        %v566 = vlaneseq
        %v567 = vshrl.u32 %v566, 7
        %v568 = vsub.s32 %v565, %v567
        %v569 = vrot.slane %v561, %v568
        %570 = vrot.lane.b32.xlu0 %v569, 64
        %v571 = vpop.permute.xlu0 %570
        %vm573 = vcmask 778752
        %574 = vst.msk [vmem:[#allocation2 + $0x1] sm:$0x1] %vm573, %v571
        %575 = vrot.lane.b32.xlu0 %v569, 96
        %v576 = vpop.permute.xlu0 %575
        %vm578 = vcmask 1041152
        %579 = vst.msk [vmem:[#allocation2 + $0x1] sm:$0x1] %vm578, %v576
        %vm580 = vcmask 254976
        %581 = vst.msk [vmem:[#allocation2 + $0x2] sm:$0x3] %vm580, %v561
        %v582 = vrot.slane %v569, 7
        %v583 = vrot.slane %v582, 2
        %584 = vrot.lane.b32.xlu0 %v583, 32
        %v585 = vpop.permute.xlu0 %584
        %vm587 = vcmask 516352
        %588 = vst.msk [vmem:[#allocation2 + $0x2] sm:$0x1] %vm587, %v585
        %589 = vrot.lane.b32.xlu0 %v583, 64
        %v590 = vpop.permute.xlu0 %589
        %592 = vst.msk [vmem:[#allocation2 + $0x2] sm:$0x1] %vm573, %v590
        %v593 = vld [vmem:[#allocation2] sm:$0x3f]
        %v595 = vcombine.high %v593, %v593
        %v597 = vunpack.c.l.s4 1983009808
        %v598 = vunpack.c.0.s8 %v597
        %v599 = vlaneseq
        %v600 = vshrl.u32 %v599, 7
        %v601 = vsub.s32 %v598, %v600
        %v602 = vrot.slane %v593, %v601
        %v604 = vunpack.c.l.s4 1983009808
        %v605 = vunpack.c.0.s8 %v604
        %v606 = vlaneseq
        %v607 = vshrl.u32 %v606, 7
        %v608 = vsub.s32 %v605, %v607
        %v609 = vrot.slane %v595, %v608
        %v610 = vcombine.high %v602, %v602
        %v614 = vpack.c.bf16 %v602, %v602
        %v615 = vpack.c.bf16 %v610, %v610
        %v616 = vpack.c.bf16 %v609, %v609
        %v617 = vld [vmem:[%s7] sm:$0xf]
        %v618 = vld [vmem:[%s7 + $0x4] sm:$0xf]
        %v619 = vld [vmem:[%s7 + $0x8] sm:$0xf]
        %v620 = vld [vmem:[%s7 + $0xc] sm:$0xf]
        %v621 = vld [vmem:[%s7 + $0x10] sm:$0xf]
        %v622 = vld [vmem:[%s7 + $0x14] sm:$0xf]
        %v623 = vld [vmem:[%s7 + $0x18] sm:$0xf]
        %v624 = vld [vmem:[%s7 + $0x1c] sm:$0xf]
        %v625 = vld [vmem:[%s7 + $0x20] sm:$0xf]
        %v626 = vld [vmem:[%s7 + $0x24] sm:$0xf]
        %v627 = vld [vmem:[%s7 + $0x28] sm:$0xf]
        %v628 = vld [vmem:[%s7 + $0x2c] sm:$0xf]
        %v629 = vld [vmem:[%s7 + $0x30] sm:$0xf]
        %v630 = vld [vmem:[%s7 + $0x34] sm:$0xf]
        %v631 = vld [vmem:[%s7 + $0x38] sm:$0xf]
        %v632 = vld [vmem:[%s7 + $0x3c] sm:$0xf]
        %v633 = vld [vmem:[%s7 + $0x40] sm:$0xf]
        %v634 = vld [vmem:[%s7 + $0x44] sm:$0xf]
        %v635 = vld [vmem:[%s7 + $0x48] sm:$0xf]
        %v636 = vld [vmem:[%s7 + $0x4c] sm:$0xf]
        %v637 = vld [vmem:[%s7 + $0x50] sm:$0xf]
        %v638 = vld [vmem:[%s7 + $0x54] sm:$0xf]
        %v639 = vld [vmem:[%s7 + $0x58] sm:$0xf]
        %v640 = vld [vmem:[%s7 + $0x5c] sm:$0xf]
        %v641 = vld [vmem:[%s7 + $0x60] sm:$0xf]
        %v642 = vld [vmem:[%s7 + $0x64] sm:$0xf]
        %v643 = vld [vmem:[%s7 + $0x68] sm:$0xf]
        %v644 = vld [vmem:[%s7 + $0x6c] sm:$0xf]
        %v645 = vld [vmem:[%s7 + $0x70] sm:$0xf]
        %v646 = vld [vmem:[%s7 + $0x74] sm:$0xf]
        %v647 = vld [vmem:[%s7 + $0x78] sm:$0xf]
        %v648 = vld [vmem:[%s7 + $0x7c] sm:$0xf]
        %v649 = vld [vmem:[%s7 + $0x80] sm:$0xf]
        %v650 = vld [vmem:[%s7 + $0x84] sm:$0xf]
        %v651 = vld [vmem:[%s7 + $0x88] sm:$0xf]
        %v652 = vld [vmem:[%s7 + $0x8c] sm:$0xf]
        %v689 = vunpack.c.l.b16 %v617
        %v690 = vunpack.c.l.b16 %v618
        %v691 = vunpack.c.l.b16 %v619
        %v692 = vunpack.c.l.b16 %v620
        %v693 = vunpack.c.l.b16 %v621
        %v694 = vunpack.c.l.b16 %v622
        %v695 = vunpack.c.l.b16 %v623
        %v696 = vunpack.c.l.b16 %v624
        %v697 = vunpack.c.l.b16 %v625
        %v698 = vunpack.c.l.b16 %v626
        %v699 = vunpack.c.l.b16 %v627
        %v700 = vunpack.c.l.b16 %v628
        %v701 = vunpack.c.l.b16 %v629
        %v702 = vunpack.c.l.b16 %v630
        %v703 = vunpack.c.l.b16 %v631
        %v704 = vunpack.c.l.b16 %v632
        %v705 = vunpack.c.l.b16 %v633
        %v706 = vunpack.c.l.b16 %v634
        %v707 = vunpack.c.l.b16 %v635
        %v708 = vunpack.c.l.b16 %v636
        %v709 = vunpack.c.l.b16 %v637
        %v710 = vunpack.c.l.b16 %v638
        %v711 = vunpack.c.l.b16 %v639
        %v712 = vunpack.c.l.b16 %v640
        %v713 = vunpack.c.l.b16 %v641
        %v714 = vunpack.c.l.b16 %v642
        %v715 = vunpack.c.l.b16 %v643
        %v716 = vunpack.c.l.b16 %v644
        %v717 = vunpack.c.l.b16 %v645
        %v718 = vunpack.c.l.b16 %v646
        %v719 = vunpack.c.l.b16 %v647
        %v720 = vunpack.c.l.b16 %v648
        %v721 = vunpack.c.l.b16 %v649
        %v722 = vunpack.c.l.b16 %v650
        %v723 = vunpack.c.l.b16 %v651
        %v724 = vunpack.c.l.b16 %v652
        %v725 = vpack.c.b16 %v690, %v689
        %v726 = vpack.c.b16 %v692, %v691
        %v727 = vpack.c.b16 %v694, %v693
        %v728 = vpack.c.b16 %v696, %v695
        %v729 = vpack.c.b16 %v698, %v697
        %v730 = vpack.c.b16 %v700, %v699
        %v731 = vpack.c.b16 %v702, %v701
        %v732 = vpack.c.b16 %v704, %v703
        %v733 = vpack.c.b16 %v706, %v705
        %v734 = vpack.c.b16 %v708, %v707
        %v735 = vpack.c.b16 %v710, %v709
        %v736 = vpack.c.b16 %v712, %v711
        %v737 = vpack.c.b16 %v714, %v713
        %v738 = vpack.c.b16 %v716, %v715
        %v739 = vpack.c.b16 %v718, %v717
        %v740 = vpack.c.b16 %v720, %v719
        %v741 = vpack.c.b16 %v722, %v721
        %v742 = vpack.c.b16 %v724, %v723
        %vm761 = vcmask 261120
        %v763 = vsel %vm761, %v616, 0
        %765 = vmatprep.subr.bf16.mxu0 0
        %766 = vmatpush1.bf16.msra.mxu0 %v732
        %767 = vmatprep.subr.bf16.mxu0 0
        %768 = vmatpush1.bf16.msra.mxu0 %v731
        %769 = vmatprep.subr.bf16.mxu0 0
        %770 = vmatpush1.bf16.msra.mxu0 %v730
        %771 = vmatprep.subr.bf16.mxu0 0
        %772 = vmatpush1.bf16.msra.mxu0 %v729
        %773 = vmatprep.subr.bf16.mxu0 0
        %774 = vmatpush1.bf16.msra.mxu0 %v728
        %775 = vmatprep.subr.bf16.mxu0 0
        %776 = vmatpush1.bf16.msra.mxu0 %v727
        %777 = vmatprep.subr.bf16.mxu0 0
        %778 = vmatpush1.bf16.msra.mxu0 %v726
        %779 = vmatprep.subr.bf16.mxu0 0
        %780 = vmatpush1.bf16.msra.mxu0 %v725
        %781 = vmatprep.subr.bf16.mxu0 0
        %782 = vmatpush2.bf16.msra.mxu0 %v740
        %783 = vmatprep.subr.bf16.mxu0 0
        %784 = vmatpush2.bf16.msra.mxu0 %v739
        %785 = vmatprep.subr.bf16.mxu0 0
        %786 = vmatpush2.bf16.msra.mxu0 %v738
        %787 = vmatprep.subr.bf16.mxu0 0
        %788 = vmatpush2.bf16.msra.mxu0 %v737
        %789 = vmatprep.subr.bf16.mxu0 0
        %790 = vmatpush2.bf16.msra.mxu0 %v736
        %791 = vmatprep.subr.bf16.mxu0 0
        %792 = vmatpush2.bf16.msra.mxu0 %v735
        %793 = vmatprep.subr.bf16.mxu0 0
        %794 = vmatpush2.bf16.msra.mxu0 %v734
        %795 = vmatprep.subr.bf16.mxu0 0
        %796 = vmatpush2.bf16.msra.mxu0 %v733
        %797 = vmatprep.mubr.bf16.mxu0 %v615
        %798 = vmatmul.mubr.bf16.gmra.mxu0 %v614
        %v799 = vpop.f32.mrf.mxu0
        %v800 = vadd.f32 0.0, %v799
        %v801 = vpop.f32.mrf.mxu0
        %v802 = vpop.f32.mrf.mxu0
        %v803 = vpop.f32.mrf.mxu0
        %804 = vdwg.mxu0
        %805 = vmatprep.subr.bf16.mxu0 0
        %806 = vmatpush1.bf16.msra.mxu0 0
        %807 = vmatprep.subr.bf16.mxu0 0
        %808 = vmatpush1.bf16.msra.mxu0 0
        %809 = vmatprep.subr.bf16.mxu0 0
        %810 = vmatpush1.bf16.msra.mxu0 0
        %811 = vmatprep.subr.bf16.mxu0 0
        %812 = vmatpush1.bf16.msra.mxu0 0
        %813 = vmatprep.subr.bf16.mxu0 0
        %814 = vmatpush1.bf16.msra.mxu0 0
        %815 = vmatprep.subr.bf16.mxu0 0
        %816 = vmatpush1.bf16.msra.mxu0 0
        %817 = vmatprep.subr.bf16.mxu0 0
        %818 = vmatpush1.bf16.msra.mxu0 %v742
        %819 = vmatprep.subr.bf16.mxu0 0
        %820 = vmatpush1.bf16.msra.mxu0 %v741
        %821 = vmatprep.subr.bf16.mxu0 0
        %822 = vmatpush2.bf16.msra.mxu0 0
        %823 = vmatprep.subr.bf16.mxu0 0
        %824 = vmatpush2.bf16.msra.mxu0 0
        %825 = vmatprep.subr.bf16.mxu0 0
        %826 = vmatpush2.bf16.msra.mxu0 0
        %827 = vmatprep.subr.bf16.mxu0 0
        %828 = vmatpush2.bf16.msra.mxu0 0
        %829 = vmatprep.subr.bf16.mxu0 0
        %830 = vmatpush2.bf16.msra.mxu0 0
        %831 = vmatprep.subr.bf16.mxu0 0
        %832 = vmatpush2.bf16.msra.mxu0 0
        %833 = vmatprep.subr.bf16.mxu0 0
        %834 = vmatpush2.bf16.msra.mxu0 0
        %835 = vmatprep.subr.bf16.mxu0 0
        %836 = vmatpush2.bf16.msra.mxu0 0
        %837 = vmatprep.mubr.bf16.mxu0 0
        %838 = vmatmul.mubr.bf16.gmra.mxu0 %v763
        %v839 = vpop.f32.mrf.mxu0
        %v840 = vadd.f32 %v800, %v839
        %v841 = vpop.f32.mrf.mxu0
        %v842 = vpop.f32.mrf.mxu0
        %v843 = vpop.f32.mrf.mxu0
        %844 = vdwg.mxu0
        %v845 = vadd.f32 %v410, %v840
        %s846 = scalar_lea.vmem %s2, 1
        %v847 = vld [vmem:[%s846] sm:$0x1]
        %v849 = vlaneseq
        %v850 = vshrl.u32 %v849, 7
        %v851 = vsub.s32 0, %v850
        %v852 = vrot.slane %v847, %v851
        %v854 = vmul.f32 %v845, %v852
        %s855 = scalar_lea.vmem %s3, 1
        %v856 = vld [vmem:[%s855] sm:$0x1]
        %v858 = vlaneseq
        %v859 = vshrl.u32 %v858, 7
        %v860 = vsub.s32 0, %v859
        %v861 = vrot.slane %v856, %v860
        %v863 = vadd.f32 %v854, %v861
        %v864 = vmax.f32 %v863, 0.0
        %v865 = vpack.c.bf16 %v864, %v864
        %s866 = scalar_lea.vmem %s4, 64
        %v867 = vld [vmem:[%s866] sm:$0xf]
        %v868 = vld [vmem:[%s866 + $0x4] sm:$0xf]
        %v869 = vld [vmem:[%s866 + $0x8] sm:$0xf]
        %v870 = vld [vmem:[%s866 + $0xc] sm:$0xf]
        %v871 = vld [vmem:[%s866 + $0x10] sm:$0xf]
        %v872 = vld [vmem:[%s866 + $0x14] sm:$0xf]
        %v873 = vld [vmem:[%s866 + $0x18] sm:$0xf]
        %v874 = vld [vmem:[%s866 + $0x1c] sm:$0xf]
        %v875 = vld [vmem:[%s866 + $0x20] sm:$0xf]
        %v876 = vld [vmem:[%s866 + $0x24] sm:$0xf]
        %v877 = vld [vmem:[%s866 + $0x28] sm:$0xf]
        %v878 = vld [vmem:[%s866 + $0x2c] sm:$0xf]
        %v879 = vld [vmem:[%s866 + $0x30] sm:$0xf]
        %v880 = vld [vmem:[%s866 + $0x34] sm:$0xf]
        %v881 = vld [vmem:[%s866 + $0x38] sm:$0xf]
        %v882 = vld [vmem:[%s866 + $0x3c] sm:$0xf]
        %v899 = vunpack.c.l.b16 %v867
        %v900 = vunpack.c.l.b16 %v868
        %v901 = vunpack.c.l.b16 %v869
        %v902 = vunpack.c.l.b16 %v870
        %v903 = vunpack.c.l.b16 %v871
        %v904 = vunpack.c.l.b16 %v872
        %v905 = vunpack.c.l.b16 %v873
        %v906 = vunpack.c.l.b16 %v874
        %v907 = vunpack.c.l.b16 %v875
        %v908 = vunpack.c.l.b16 %v876
        %v909 = vunpack.c.l.b16 %v877
        %v910 = vunpack.c.l.b16 %v878
        %v911 = vunpack.c.l.b16 %v879
        %v912 = vunpack.c.l.b16 %v880
        %v913 = vunpack.c.l.b16 %v881
        %v914 = vunpack.c.l.b16 %v882
        %v915 = vpack.c.b16 %v900, %v899
        %v916 = vpack.c.b16 %v902, %v901
        %v917 = vpack.c.b16 %v904, %v903
        %v918 = vpack.c.b16 %v906, %v905
        %v919 = vpack.c.b16 %v908, %v907
        %v920 = vpack.c.b16 %v910, %v909
        %v921 = vpack.c.b16 %v912, %v911
        %v922 = vpack.c.b16 %v914, %v913
        %931 = vmatprep.subr.bf16.mxu0 0
        %932 = vmatpush1.bf16.msra.mxu0 %v922
        %933 = vmatprep.subr.bf16.mxu0 0
        %934 = vmatpush1.bf16.msra.mxu0 %v921
        %935 = vmatprep.subr.bf16.mxu0 0
        %936 = vmatpush1.bf16.msra.mxu0 %v920
        %937 = vmatprep.subr.bf16.mxu0 0
        %938 = vmatpush1.bf16.msra.mxu0 %v919
        %939 = vmatprep.subr.bf16.mxu0 0
        %940 = vmatpush1.bf16.msra.mxu0 %v918
        %941 = vmatprep.subr.bf16.mxu0 0
        %942 = vmatpush1.bf16.msra.mxu0 %v917
        %943 = vmatprep.subr.bf16.mxu0 0
        %944 = vmatpush1.bf16.msra.mxu0 %v916
        %945 = vmatprep.subr.bf16.mxu0 0
        %946 = vmatpush1.bf16.msra.mxu0 %v915
        %947 = vmatprep.subr.bf16.mxu0 0
        %948 = vmatpush2.bf16.msra.mxu0 0
        %949 = vmatprep.subr.bf16.mxu0 0
        %950 = vmatpush2.bf16.msra.mxu0 0
        %951 = vmatprep.subr.bf16.mxu0 0
        %952 = vmatpush2.bf16.msra.mxu0 0
        %953 = vmatprep.subr.bf16.mxu0 0
        %954 = vmatpush2.bf16.msra.mxu0 0
        %955 = vmatprep.subr.bf16.mxu0 0
        %956 = vmatpush2.bf16.msra.mxu0 0
        %957 = vmatprep.subr.bf16.mxu0 0
        %958 = vmatpush2.bf16.msra.mxu0 0
        %959 = vmatprep.subr.bf16.mxu0 0
        %960 = vmatpush2.bf16.msra.mxu0 0
        %961 = vmatprep.subr.bf16.mxu0 0
        %962 = vmatpush2.bf16.msra.mxu0 0
        %963 = vmatprep.mubr.bf16.mxu0 0
        %964 = vmatmul.mubr.bf16.gmra.mxu0 %v865
        %v965 = vpop.f32.mrf.mxu0
        %v966 = vadd.f32 0.0, %v965
        %v967 = vpop.f32.mrf.mxu0
        %v968 = vpop.f32.mrf.mxu0
        %v969 = vpop.f32.mrf.mxu0
        %970 = vdwg.mxu0
        %s971 = scalar_lea.vmem %s5, 1
        %v972 = vld [vmem:[%s971] sm:$0x1]
        %v974 = vlaneseq
        %v975 = vshrl.u32 %v974, 7
        %v976 = vsub.s32 0, %v975
        %v977 = vrot.slane %v972, %v976
        %v979 = vmul.f32 %v966, %v977
        %s980 = scalar_lea.vmem %s6, 1
        %v981 = vld [vmem:[%s980] sm:$0x1]
        %v983 = vlaneseq
        %v984 = vshrl.u32 %v983, 7
        %v985 = vsub.s32 0, %v984
        %v986 = vrot.slane %v981, %v985
        %v988 = vadd.f32 %v979, %v986
        %v989 = vmax.f32 %v988, 0.0
        %v990 = vmul.f32 %v989, %v559
        %v993 = vunpack.c.l.s4 1983009808
        %v994 = vunpack.c.0.s8 %v993
        %v995 = vlaneseq
        %v996 = vshrl.u32 %v995, 7
        %v997 = vsub.s32 %v994, %v996
        %v998 = vrot.slane %v990, %v997
        %999 = vrot.lane.b32.xlu0 %v998, 64
        %v1000 = vpop.permute.xlu0 %999
        %1002 = vst.msk [vmem:[#allocation2 + $0x1] sm:$0x1] %vm573, %v1000
        %1003 = vrot.lane.b32.xlu0 %v998, 96
        %v1004 = vpop.permute.xlu0 %1003
        %1006 = vst.msk [vmem:[#allocation2 + $0x1] sm:$0x1] %vm578, %v1004
        %1007 = vst.msk [vmem:[#allocation2 + $0x2] sm:$0x3] %vm580, %v990
        %v1008 = vrot.slane %v998, 7
        %v1009 = vrot.slane %v1008, 2
        %1010 = vrot.lane.b32.xlu0 %v1009, 32
        %v1011 = vpop.permute.xlu0 %1010
        %1013 = vst.msk [vmem:[#allocation2 + $0x2] sm:$0x1] %vm587, %v1011
        %1014 = vrot.lane.b32.xlu0 %v1009, 64
        %v1015 = vpop.permute.xlu0 %1014
        %1017 = vst.msk [vmem:[#allocation2 + $0x2] sm:$0x1] %vm573, %v1015
        %v1018 = vld [vmem:[#allocation2] sm:$0x3f]
        %v1020 = vcombine.high %v1018, %v1018
        %v1022 = vunpack.c.l.s4 1983009808
        %v1023 = vunpack.c.0.s8 %v1022
        %v1024 = vlaneseq
        %v1025 = vshrl.u32 %v1024, 7
        %v1026 = vsub.s32 %v1023, %v1025
        %v1027 = vrot.slane %v1018, %v1026
        %v1029 = vunpack.c.l.s4 1983009808
        %v1030 = vunpack.c.0.s8 %v1029
        %v1031 = vlaneseq
        %v1032 = vshrl.u32 %v1031, 7
        %v1033 = vsub.s32 %v1030, %v1032
        %v1034 = vrot.slane %v1020, %v1033
        %v1035 = vcombine.high %v1027, %v1027
        %v1039 = vpack.c.bf16 %v1027, %v1027
        %v1040 = vpack.c.bf16 %v1035, %v1035
        %v1041 = vpack.c.bf16 %v1034, %v1034
        %s1042 = scalar_lea.vmem %s7, 144
        %v1043 = vld [vmem:[%s1042] sm:$0xf]
        %v1044 = vld [vmem:[%s1042 + $0x4] sm:$0xf]
        %v1045 = vld [vmem:[%s1042 + $0x8] sm:$0xf]
        %v1046 = vld [vmem:[%s1042 + $0xc] sm:$0xf]
        %v1047 = vld [vmem:[%s1042 + $0x10] sm:$0xf]
        %v1048 = vld [vmem:[%s1042 + $0x14] sm:$0xf]
        %v1049 = vld [vmem:[%s1042 + $0x18] sm:$0xf]
        %v1050 = vld [vmem:[%s1042 + $0x1c] sm:$0xf]
        %v1051 = vld [vmem:[%s1042 + $0x20] sm:$0xf]
        %v1052 = vld [vmem:[%s1042 + $0x24] sm:$0xf]
        %v1053 = vld [vmem:[%s1042 + $0x28] sm:$0xf]
        %v1054 = vld [vmem:[%s1042 + $0x2c] sm:$0xf]
        %v1055 = vld [vmem:[%s1042 + $0x30] sm:$0xf]
        %v1056 = vld [vmem:[%s1042 + $0x34] sm:$0xf]
        %v1057 = vld [vmem:[%s1042 + $0x38] sm:$0xf]
        %v1058 = vld [vmem:[%s1042 + $0x3c] sm:$0xf]
        %v1059 = vld [vmem:[%s1042 + $0x40] sm:$0xf]
        %v1060 = vld [vmem:[%s1042 + $0x44] sm:$0xf]
        %v1061 = vld [vmem:[%s1042 + $0x48] sm:$0xf]
        %v1062 = vld [vmem:[%s1042 + $0x4c] sm:$0xf]
        %v1063 = vld [vmem:[%s1042 + $0x50] sm:$0xf]
        %v1064 = vld [vmem:[%s1042 + $0x54] sm:$0xf]
        %v1065 = vld [vmem:[%s1042 + $0x58] sm:$0xf]
        %v1066 = vld [vmem:[%s1042 + $0x5c] sm:$0xf]
        %v1067 = vld [vmem:[%s1042 + $0x60] sm:$0xf]
        %v1068 = vld [vmem:[%s1042 + $0x64] sm:$0xf]
        %v1069 = vld [vmem:[%s1042 + $0x68] sm:$0xf]
        %v1070 = vld [vmem:[%s1042 + $0x6c] sm:$0xf]
        %v1071 = vld [vmem:[%s1042 + $0x70] sm:$0xf]
        %v1072 = vld [vmem:[%s1042 + $0x74] sm:$0xf]
        %v1073 = vld [vmem:[%s1042 + $0x78] sm:$0xf]
        %v1074 = vld [vmem:[%s1042 + $0x7c] sm:$0xf]
        %v1075 = vld [vmem:[%s1042 + $0x80] sm:$0xf]
        %v1076 = vld [vmem:[%s1042 + $0x84] sm:$0xf]
        %v1077 = vld [vmem:[%s1042 + $0x88] sm:$0xf]
        %v1078 = vld [vmem:[%s1042 + $0x8c] sm:$0xf]
        %v1115 = vunpack.c.l.b16 %v1043
        %v1116 = vunpack.c.l.b16 %v1044
        %v1117 = vunpack.c.l.b16 %v1045
        %v1118 = vunpack.c.l.b16 %v1046
        %v1119 = vunpack.c.l.b16 %v1047
        %v1120 = vunpack.c.l.b16 %v1048
        %v1121 = vunpack.c.l.b16 %v1049
        %v1122 = vunpack.c.l.b16 %v1050
        %v1123 = vunpack.c.l.b16 %v1051
        %v1124 = vunpack.c.l.b16 %v1052
        %v1125 = vunpack.c.l.b16 %v1053
        %v1126 = vunpack.c.l.b16 %v1054
        %v1127 = vunpack.c.l.b16 %v1055
        %v1128 = vunpack.c.l.b16 %v1056
        %v1129 = vunpack.c.l.b16 %v1057
        %v1130 = vunpack.c.l.b16 %v1058
        %v1131 = vunpack.c.l.b16 %v1059
        %v1132 = vunpack.c.l.b16 %v1060
        %v1133 = vunpack.c.l.b16 %v1061
        %v1134 = vunpack.c.l.b16 %v1062
        %v1135 = vunpack.c.l.b16 %v1063
        %v1136 = vunpack.c.l.b16 %v1064
        %v1137 = vunpack.c.l.b16 %v1065
        %v1138 = vunpack.c.l.b16 %v1066
        %v1139 = vunpack.c.l.b16 %v1067
        %v1140 = vunpack.c.l.b16 %v1068
        %v1141 = vunpack.c.l.b16 %v1069
        %v1142 = vunpack.c.l.b16 %v1070
        %v1143 = vunpack.c.l.b16 %v1071
        %v1144 = vunpack.c.l.b16 %v1072
        %v1145 = vunpack.c.l.b16 %v1073
        %v1146 = vunpack.c.l.b16 %v1074
        %v1147 = vunpack.c.l.b16 %v1075
        %v1148 = vunpack.c.l.b16 %v1076
        %v1149 = vunpack.c.l.b16 %v1077
        %v1150 = vunpack.c.l.b16 %v1078
        %v1151 = vpack.c.b16 %v1116, %v1115
        %v1152 = vpack.c.b16 %v1118, %v1117
        %v1153 = vpack.c.b16 %v1120, %v1119
        %v1154 = vpack.c.b16 %v1122, %v1121
        %v1155 = vpack.c.b16 %v1124, %v1123
        %v1156 = vpack.c.b16 %v1126, %v1125
        %v1157 = vpack.c.b16 %v1128, %v1127
        %v1158 = vpack.c.b16 %v1130, %v1129
        %v1159 = vpack.c.b16 %v1132, %v1131
        %v1160 = vpack.c.b16 %v1134, %v1133
        %v1161 = vpack.c.b16 %v1136, %v1135
        %v1162 = vpack.c.b16 %v1138, %v1137
        %v1163 = vpack.c.b16 %v1140, %v1139
        %v1164 = vpack.c.b16 %v1142, %v1141
        %v1165 = vpack.c.b16 %v1144, %v1143
        %v1166 = vpack.c.b16 %v1146, %v1145
        %v1167 = vpack.c.b16 %v1148, %v1147
        %v1168 = vpack.c.b16 %v1150, %v1149
        %v1188 = vsel %vm761, %v1041, 0
        %1190 = vmatprep.subr.bf16.mxu0 0
        %1191 = vmatpush1.bf16.msra.mxu0 %v1158
        %1192 = vmatprep.subr.bf16.mxu0 0
        %1193 = vmatpush1.bf16.msra.mxu0 %v1157
        %1194 = vmatprep.subr.bf16.mxu0 0
        %1195 = vmatpush1.bf16.msra.mxu0 %v1156
        %1196 = vmatprep.subr.bf16.mxu0 0
        %1197 = vmatpush1.bf16.msra.mxu0 %v1155
        %1198 = vmatprep.subr.bf16.mxu0 0
        %1199 = vmatpush1.bf16.msra.mxu0 %v1154
        %1200 = vmatprep.subr.bf16.mxu0 0
        %1201 = vmatpush1.bf16.msra.mxu0 %v1153
        %1202 = vmatprep.subr.bf16.mxu0 0
        %1203 = vmatpush1.bf16.msra.mxu0 %v1152
        %1204 = vmatprep.subr.bf16.mxu0 0
        %1205 = vmatpush1.bf16.msra.mxu0 %v1151
        %1206 = vmatprep.subr.bf16.mxu0 0
        %1207 = vmatpush2.bf16.msra.mxu0 %v1166
        %1208 = vmatprep.subr.bf16.mxu0 0
        %1209 = vmatpush2.bf16.msra.mxu0 %v1165
        %1210 = vmatprep.subr.bf16.mxu0 0
        %1211 = vmatpush2.bf16.msra.mxu0 %v1164
        %1212 = vmatprep.subr.bf16.mxu0 0
        %1213 = vmatpush2.bf16.msra.mxu0 %v1163
        %1214 = vmatprep.subr.bf16.mxu0 0
        %1215 = vmatpush2.bf16.msra.mxu0 %v1162
        %1216 = vmatprep.subr.bf16.mxu0 0
        %1217 = vmatpush2.bf16.msra.mxu0 %v1161
        %1218 = vmatprep.subr.bf16.mxu0 0
        %1219 = vmatpush2.bf16.msra.mxu0 %v1160
        %1220 = vmatprep.subr.bf16.mxu0 0
        %1221 = vmatpush2.bf16.msra.mxu0 %v1159
        %1222 = vmatprep.mubr.bf16.mxu0 %v1040
        %1223 = vmatmul.mubr.bf16.gmra.mxu0 %v1039
        %v1224 = vpop.f32.mrf.mxu0
        %v1225 = vadd.f32 0.0, %v1224
        %v1226 = vpop.f32.mrf.mxu0
        %v1227 = vpop.f32.mrf.mxu0
        %v1228 = vpop.f32.mrf.mxu0
        %1229 = vdwg.mxu0
        %1230 = vmatprep.subr.bf16.mxu0 0
        %1231 = vmatpush1.bf16.msra.mxu0 0
        %1232 = vmatprep.subr.bf16.mxu0 0
        %1233 = vmatpush1.bf16.msra.mxu0 0
        %1234 = vmatprep.subr.bf16.mxu0 0
        %1235 = vmatpush1.bf16.msra.mxu0 0
        %1236 = vmatprep.subr.bf16.mxu0 0
        %1237 = vmatpush1.bf16.msra.mxu0 0
        %1238 = vmatprep.subr.bf16.mxu0 0
        %1239 = vmatpush1.bf16.msra.mxu0 0
        %1240 = vmatprep.subr.bf16.mxu0 0
        %1241 = vmatpush1.bf16.msra.mxu0 0
        %1242 = vmatprep.subr.bf16.mxu0 0
        %1243 = vmatpush1.bf16.msra.mxu0 %v1168
        %1244 = vmatprep.subr.bf16.mxu0 0
        %1245 = vmatpush1.bf16.msra.mxu0 %v1167
        %1246 = vmatprep.subr.bf16.mxu0 0
        %1247 = vmatpush2.bf16.msra.mxu0 0
        %1248 = vmatprep.subr.bf16.mxu0 0
        %1249 = vmatpush2.bf16.msra.mxu0 0
        %1250 = vmatprep.subr.bf16.mxu0 0
        %1251 = vmatpush2.bf16.msra.mxu0 0
        %1252 = vmatprep.subr.bf16.mxu0 0
        %1253 = vmatpush2.bf16.msra.mxu0 0
        %1254 = vmatprep.subr.bf16.mxu0 0
        %1255 = vmatpush2.bf16.msra.mxu0 0
        %1256 = vmatprep.subr.bf16.mxu0 0
        %1257 = vmatpush2.bf16.msra.mxu0 0
        %1258 = vmatprep.subr.bf16.mxu0 0
        %1259 = vmatpush2.bf16.msra.mxu0 0
        %1260 = vmatprep.subr.bf16.mxu0 0
        %1261 = vmatpush2.bf16.msra.mxu0 0
        %1262 = vmatprep.mubr.bf16.mxu0 0
        %1263 = vmatmul.mubr.bf16.gmra.mxu0 %v1188
        %v1264 = vpop.f32.mrf.mxu0
        %v1265 = vadd.f32 %v1225, %v1264
        %v1266 = vpop.f32.mrf.mxu0
        %v1267 = vpop.f32.mrf.mxu0
        %v1268 = vpop.f32.mrf.mxu0
        %1269 = vdwg.mxu0
        %v1270 = vadd.f32 %v845, %v1265
        %v1271 = vld [vmem:[%s8] sm:$0x1]
        %v1273 = vlaneseq
        %v1274 = vshrl.u32 %v1273, 7
        %v1275 = vsub.s32 0, %v1274
        %v1276 = vrot.slane %v1271, %v1275
        %v1278 = vmul.f32 %v1270, %v1276
        %v1279 = vld [vmem:[%s9] sm:$0x1]
        %v1281 = vlaneseq
        %v1282 = vshrl.u32 %v1281, 7
        %v1283 = vsub.s32 0, %v1282
        %v1284 = vrot.slane %v1279, %v1283
        %v1286 = vadd.f32 %v1278, %v1284
        %v1287 = vmax.f32 %v1286, 0.0
        %v1288 = vmul.f32 %v1287, %v559
        %v1289 = vsel %vm411, %v1288, 0.0
        %v1290 = vrot.slane %v1289, 4
        %v1291 = vadd.f32 %v1289, %v1290
        %v1292 = vrot.slane %v1291, 2
        %v1293 = vadd.f32 %v1291, %v1292
        %v1294 = vrot.slane %v1293, 1
        %v1295 = vadd.f32 %v1293, %v1294
        %v1296 = vpack.c.bf16 %v1295, %v1295
        %v1297 = vld [vmem:[%s10] sm:$0xf]
        %v1298 = vld [vmem:[%s10 + $0x4] sm:$0xf]
        %v1299 = vld [vmem:[%s10 + $0x8] sm:$0xf]
        %v1300 = vld [vmem:[%s10 + $0xc] sm:$0xf]
        %v1301 = vld [vmem:[%s10 + $0x10] sm:$0xf]
        %v1302 = vld [vmem:[%s10 + $0x14] sm:$0xf]
        %v1303 = vld [vmem:[%s10 + $0x18] sm:$0xf]
        %v1304 = vld [vmem:[%s10 + $0x1c] sm:$0xf]
        %v1305 = vld [vmem:[%s10 + $0x20] sm:$0xf]
        %v1306 = vld [vmem:[%s10 + $0x24] sm:$0xf]
        %v1307 = vld [vmem:[%s10 + $0x28] sm:$0xf]
        %v1308 = vld [vmem:[%s10 + $0x2c] sm:$0xf]
        %v1309 = vld [vmem:[%s10 + $0x30] sm:$0xf]
        %v1310 = vld [vmem:[%s10 + $0x34] sm:$0xf]
        %v1311 = vld [vmem:[%s10 + $0x38] sm:$0xf]
        %v1312 = vld [vmem:[%s10 + $0x3c] sm:$0xf]
        %v1313 = vld [vmem:[%s11] sm:$0x1]
        %v1330 = vunpack.c.l.b16 %v1297
        %v1331 = vunpack.c.l.b16 %v1298
        %v1332 = vunpack.c.l.b16 %v1299
        %v1333 = vunpack.c.l.b16 %v1300
        %v1334 = vunpack.c.l.b16 %v1301
        %v1335 = vunpack.c.l.b16 %v1302
        %v1336 = vunpack.c.l.b16 %v1303
        %v1337 = vunpack.c.l.b16 %v1304
        %v1338 = vunpack.c.l.b16 %v1305
        %v1339 = vunpack.c.l.b16 %v1306
        %v1340 = vunpack.c.l.b16 %v1307
        %v1341 = vunpack.c.l.b16 %v1308
        %v1342 = vunpack.c.l.b16 %v1309
        %v1343 = vunpack.c.l.b16 %v1310
        %v1344 = vunpack.c.l.b16 %v1311
        %v1345 = vunpack.c.l.b16 %v1312
        %v1346 = vpack.c.b16 %v1331, %v1330
        %v1347 = vpack.c.b16 %v1333, %v1332
        %v1348 = vpack.c.b16 %v1335, %v1334
        %v1349 = vpack.c.b16 %v1337, %v1336
        %v1350 = vpack.c.b16 %v1339, %v1338
        %v1351 = vpack.c.b16 %v1341, %v1340
        %v1352 = vpack.c.b16 %v1343, %v1342
        %v1353 = vpack.c.b16 %v1345, %v1344
        %1362 = vmatprep.subr.bf16.mxu0 0
        %1363 = vmatpush1.bf16.msra.mxu0 %v1353
        %1364 = vmatprep.subr.bf16.mxu0 0
        %1365 = vmatpush1.bf16.msra.mxu0 %v1352
        %1366 = vmatprep.subr.bf16.mxu0 0
        %1367 = vmatpush1.bf16.msra.mxu0 %v1351
        %1368 = vmatprep.subr.bf16.mxu0 0
        %1369 = vmatpush1.bf16.msra.mxu0 %v1350
        %1370 = vmatprep.subr.bf16.mxu0 0
        %1371 = vmatpush1.bf16.msra.mxu0 %v1349
        %1372 = vmatprep.subr.bf16.mxu0 0
        %1373 = vmatpush1.bf16.msra.mxu0 %v1348
        %1374 = vmatprep.subr.bf16.mxu0 0
        %1375 = vmatpush1.bf16.msra.mxu0 %v1347
        %1376 = vmatprep.subr.bf16.mxu0 0
        %1377 = vmatpush1.bf16.msra.mxu0 %v1346
        %1378 = vmatprep.subr.bf16.mxu0 0
        %1379 = vmatpush2.bf16.msra.mxu0 0
        %1380 = vmatprep.subr.bf16.mxu0 0
        %1381 = vmatpush2.bf16.msra.mxu0 0
        %1382 = vmatprep.subr.bf16.mxu0 0
        %1383 = vmatpush2.bf16.msra.mxu0 0
        %1384 = vmatprep.subr.bf16.mxu0 0
        %1385 = vmatpush2.bf16.msra.mxu0 0
        %1386 = vmatprep.subr.bf16.mxu0 0
        %1387 = vmatpush2.bf16.msra.mxu0 0
        %1388 = vmatprep.subr.bf16.mxu0 0
        %1389 = vmatpush2.bf16.msra.mxu0 0
        %1390 = vmatprep.subr.bf16.mxu0 0
        %1391 = vmatpush2.bf16.msra.mxu0 0
        %1392 = vmatprep.subr.bf16.mxu0 0
        %1393 = vmatpush2.bf16.msra.mxu0 0
        %1394 = vmatprep.mubr.bf16.mxu0 0
        %1395 = vmatmul.mubr.bf16.gmra.mxu0 %v1296
        %v1396 = vpop.f32.mrf.mxu0
        %v1397 = vadd.f32 %v1313, %v1396
        %v1398 = vpop.f32.mrf.mxu0
        %v1399 = vpop.f32.mrf.mxu0
        %v1400 = vpop.f32.mrf.mxu0
        %1401 = vdwg.mxu0
        %1402 = vst [vmem:[%s403] sm:$0x1] %v1397
        %s1403 = sand.u32 %s291, 1
        %s1404 = scalar_lea.sflag [#allocation4], %s1403
        %s1405 = sand.u32 %s291, 1
        %s1406 = scalar_lea.vmem [#allocation3], %s1405
        // Predicated region
        $region69: #{densenet_forward.9} parent=67 // pred_check
          %p1407 = pneg %p301
        $region70: #{densenet_forward.9} parent=67 // pred_check_branch
          %1409 = sbr.rel (%p1407) target = $region72
        $region71: #{densenet_forward.9} parent=67 // pred_region
          %s1411 = ssub.s32 16, 16
          %1412 = vsyncadd %s1404, %s1411
          %s1413 = smul.addr %s26, 16
          %s1414 = scalar_lea.hbm %s12, %s1413
          %s1416 = sshll.u32 %s1406, 4
          %s1417 = int_to_ptr.vmem [resolvable:$true] %s1416
          %1419 = dma.vmem_to_hbm [thread:$0]  %s1417, 16, %s1414, %s1404
        $region72: #{densenet_forward.9} parent=67 // pred_fallthru
          _
      $region68: #{densenet_forward.9} parent=5 // pred_fallthru
        _
      %p1420 = scmp.le.s32.totalorder 2, %s21
      // Predicated region
      $region73: #{densenet_forward.9} parent=5 // pred_check
        %p1421 = pneg %p1420
      $region74: #{densenet_forward.9} parent=5 // pred_check_branch
        %1423 = sbr.rel (%p1421) target = $region76
      $region75: #{densenet_forward.9} parent=5 // pred_region
        %s1424 = ssub.s32 %s21, 2
        // Predicated region
        $region77: #{densenet_forward.9} parent=75 // pred_check
          %p1425 = pneg %p307
        $region78: #{densenet_forward.9} parent=75 // pred_check_branch
          %1427 = sbr.rel (%p1425) target = $region80
        $region79: #{densenet_forward.9} parent=75 // pred_region
          %s1428 = sand.u32 %s292, 1
          %s1429 = scalar_lea.sflag [#allocation4], %s1428
          %s1430 = sand.u32 %s292, 1
          %s1431 = scalar_lea.vmem [#allocation3], %s1430
          %1432 = dma.done %s1429, 16
        $region80: #{densenet_forward.9} parent=75 // pred_fallthru
          _
      $region76: #{densenet_forward.9} parent=5 // pred_fallthru
        _
    $region6: #{densenet_forward.9} parent=1 // loop_footer
      %s25 = sadd.s32 1, %s21
    $region7: #{densenet_forward.9} parent=1 // loop_footer_branch
      %20 = sbr.rel target = $region3
    $region8: #{densenet_forward.9} parent=1 // loop_exit
      _
    %1433 = vsyncpa [#allocation4], 1
    %s1434 = scalar_lea.sflag [#allocation4], 1
    %1435 = vsyncpa %s1434, 1

</llo_original>
